<compile_context>
chip_gen: v7x
topology: tpu7x:2x2x1
jax: 0.10.0
libtpu: 0.0.40
codegen_flags: <defaults>
</compile_context>

<pallas_src>
import numpy as np
import jax
import jax.numpy as jnp
from jax import lax
from jax.experimental import pallas as pl
from jax.experimental.pallas import tpu as pltpu

SIZE, STRIDE, PAD = 5, 2, 3
LANE = 128                      # padded output-channel (lane) width
TK_TARGET = 2048                # K-tile target (fits v5e/v6e/v7x VMEM easily)

# features per layer: tuple entry i is the multiplicity of rotation order l=i
FEATURES = [(1,), (2, 2, 2, 2), (4, 4, 3, 3), (20,)]


def cdiv(a, b):
    return -(-a // b)


def round_up(a, b):
    return cdiv(a, b) * b


def irrep_dims(feat):
    """Per-copy irrep dimensions, e.g. (2,2,2,2) -> [1,1,3,3,5,5,7,7]."""
    dims = []
    for l, mult in enumerate(feat):
        dims += [2 * l + 1] * mult
    return dims


def total_channels(feat):
    return sum(irrep_dims(feat))


def copy_group_matrix(feat, n_pad):
    """Block-diagonal same-copy indicator matrix G [n_pad, n_pad] (static)."""
    dims = irrep_dims(feat)
    G = np.zeros((n_pad, n_pad), np.float32)
    c = 0
    for d in dims:
        G[c:c + d, c:c + d] = 1.0
        c += d
    return jnp.asarray(G)


# ---------------------------------------------------------------------------
# Pallas kernels
# ---------------------------------------------------------------------------
def make_conv_norm_kernel(nk):
    """Tiled im2col GEMM fused with the per-irrep norm nonlinearity.

    grid = (grid_m, nk); K is the last ("arbitrary") axis, accumulated in an
    f32 VMEM scratch. The epilogue (norm nonlinearity) runs on the last K step
    via a segment matmul with the same-copy matrix G.
    """

    def kernel(a_ref, w_ref, g_ref, b_ref, o_ref, acc_ref):
        k = pl.program_id(1)

        @pl.when(k == 0)
        def _():
            acc_ref[...] = jnp.zeros_like(acc_ref)

        acc_ref[...] += jnp.dot(a_ref[...], w_ref[...],
                                preferred_element_type=jnp.float32)

        @pl.when(k == nk - 1)
        def _():
            y = acc_ref[...]                                       # [tm, 128] f32
            sumsq = jnp.dot(y * y, g_ref[...],
                            preferred_element_type=jnp.float32)    # per-copy ||.||^2
            n = jnp.sqrt(sumsq)
            factor = jnp.maximum(n + b_ref[...], 0.0) * lax.rsqrt(sumsq + 1e-12)
            o_ref[...] = (y * factor).astype(o_ref.dtype)

    return kernel


def make_last_block_kernel(nk, batch, s_valid, s_pad):
    """Last conv block (activation=None) with the head fused in its epilogue:
    AvgSpacial -> Linear(20,50) -> ReLU -> Linear(50,2) (all lane-padded to 128).
    """

    def kernel(a_ref, w_ref, w1_ref, b1_ref, w2_ref, b2_ref, o_ref, acc_ref):
        k = pl.program_id(0)

        @pl.when(k == 0)
        def _():
            acc_ref[...] = jnp.zeros_like(acc_ref)

        acc_ref[...] += jnp.dot(a_ref[...], w_ref[...],
                                preferred_element_type=jnp.float32)

        @pl.when(k == nk - 1)
        def _():
            y = acc_ref[...]                                   # [B*Sp, 128] f32
            y = y.reshape(batch, s_pad, LANE)
            m = jnp.sum(y, axis=1) * (1.0 / s_valid)           # AvgSpacial -> [B, 128]
            h = jnp.dot(m, w1_ref[...],
                        preferred_element_type=jnp.float32) + b1_ref[...]
            h = jnp.maximum(h, 0.0)                            # ReLU
            o_ref[...] = (jnp.dot(h, w2_ref[...],
                                  preferred_element_type=jnp.float32)
                          + b2_ref[...]).astype(o_ref.dtype)

    return kernel


# ---------------------------------------------------------------------------
# Glue: channels-last im2col, block wrappers, parameters
# ---------------------------------------------------------------------------
def im2col_3d_cl(x, k, stride, pad):
    """x: [B, D, H, W, C] -> patches [B, Do*Ho*Wo, k^3*C]; (kd,kh,kw) major,
    C minor. Layout-preserving (no transposes)."""
    B, D, H, W, C = x.shape
    xp = jnp.pad(x, ((0, 0), (pad, pad), (pad, pad), (pad, pad), (0, 0)))
    Do = (D + 2 * pad - k) // stride + 1
    Ho = (H + 2 * pad - k) // stride + 1
    Wo = (W + 2 * pad - k) // stride + 1
    cols = []
    for kd in range(k):
        for kh in range(k):
            for kw in range(k):
                cols.append(xp[:,
                               kd:kd + stride * Do:stride,
                               kh:kh + stride * Ho:stride,
                               kw:kw + stride * Wo:stride, :])
    p = jnp.stack(cols, axis=4)                     # [B, Do, Ho, Wo, k^3, C]
    return p.reshape(B, Do * Ho * Wo, k ** 3 * C), (Do, Ho, Wo)


def weight_to_gemm(weight):
    """[Cout, Cin, kd, kh, kw] -> [k^3*Cin, Cout], row order (kd,kh,kw,cin)."""
    Cout, Cin = weight.shape[0], weight.shape[1]
    return weight.transpose(2, 3, 4, 1, 0).reshape(SIZE ** 3 * Cin, Cout)


def k_tiling(K):
    nk = cdiv(K, TK_TARGET)
    tk = 128 * cdiv(K, nk * 128)
    return nk, tk, nk * tk


def conv_norm_block(x, weight, norm_bias, feat_out):
    """One NormBlock with norm nonlinearity. x channels-last bf16; returns
    channels-last bf16 [B, Do, Ho, Wo, Cout]."""
    B = x.shape[0]
    Cout = weight.shape[0]
    patches, (Do, Ho, Wo) = im2col_3d_cl(x, SIZE, STRIDE, PAD)
    S = Do * Ho * Wo
    M = B * S
    K = patches.shape[-1]
    patches = patches.reshape(M, K)

    # Tiling / lane padding.
    tm = min(128, round_up(M, 8))
    Mp = round_up(M, tm)
    nk, tk, Kp = k_tiling(K)
    Np = LANE

    a = jnp.pad(patches.astype(jnp.bfloat16), ((0, Mp - M), (0, Kp - K)))
    w = jnp.pad(weight_to_gemm(weight).astype(jnp.bfloat16),
                ((0, Kp - K), (0, Np - Cout)))

    # Per-channel norm bias (copy bias broadcast to its irrep channels).
    dims = irrep_dims(feat_out)
    b_ch = jnp.repeat(norm_bias.astype(jnp.float32), np.asarray(dims))
    b_ch = jnp.pad(b_ch, (0, Np - Cout)).reshape(1, Np)
    G = copy_group_matrix(feat_out, Np)

    grid_m = Mp // tm
    out = pl.pallas_call(
        make_conv_norm_kernel(nk),
        out_shape=jax.ShapeDtypeStruct((Mp, Np), jnp.bfloat16),
        grid_spec=pltpu.PrefetchScalarGridSpec(
            num_scalar_prefetch=0,
            grid=(grid_m, nk),
            in_specs=[
                pl.BlockSpec((tm, tk), lambda m, k: (m, k)),
                pl.BlockSpec((tk, Np), lambda m, k: (k, 0)),
                pl.BlockSpec((Np, Np), lambda m, k: (0, 0)),
                pl.BlockSpec((1, Np), lambda m, k: (0, 0)),
            ],
            out_specs=pl.BlockSpec((tm, Np), lambda m, k: (m, 0)),
            scratch_shapes=[pltpu.VMEM((tm, Np), jnp.float32)],
        ),
        compiler_params=pltpu.CompilerParams(
            dimension_semantics=("parallel", "arbitrary")),
    )(a, w, G, b_ch)

    return out[:M, :Cout].reshape(B, Do, Ho, Wo, Cout)


def last_block_and_head(x, weight, w1, b1, w2, b2):
    """Last conv block (activation=None) + AvgSpacial + MLP head, fused."""
    B = x.shape[0]
    Cout = weight.shape[0]                                     # 20
    patches, (Do, Ho, Wo) = im2col_3d_cl(x, SIZE, STRIDE, PAD)  # [B, S, K]
    S = Do * Ho * Wo
    K = patches.shape[-1]
    Sp = round_up(S, 8)
    nk, tk, Kp = k_tiling(K)
    Np = LANE

    a = jnp.pad(patches.astype(jnp.bfloat16),
                ((0, 0), (0, Sp - S), (0, Kp - K))).reshape(B * Sp, Kp)
    w = jnp.pad(weight_to_gemm(weight).astype(jnp.bfloat16),
                ((0, Kp - K), (0, Np - Cout)))

    # Lane-padded head parameters (zero padding keeps results exact).
    w1p = jnp.pad(w1.astype(jnp.float32),
                  ((0, Np - w1.shape[0]), (0, Np - w1.shape[1])))
    b1p = jnp.pad(b1.astype(jnp.float32).reshape(1, -1),
                  ((0, 0), (0, Np - b1.shape[-1])))
    w2p = jnp.pad(w2.astype(jnp.float32),
                  ((0, Np - w2.shape[0]), (0, Np - w2.shape[1])))
    b2p = jnp.pad(b2.astype(jnp.float32).reshape(1, -1),
                  ((0, 0), (0, Np - b2.shape[-1])))

    out = pl.pallas_call(
        make_last_block_kernel(nk, B, S, Sp),
        out_shape=jax.ShapeDtypeStruct((B, Np), jnp.float32),
        grid_spec=pltpu.PrefetchScalarGridSpec(
            num_scalar_prefetch=0,
            grid=(nk,),
            in_specs=[
                pl.BlockSpec((B * Sp, tk), lambda k: (0, k)),
                pl.BlockSpec((tk, Np), lambda k: (k, 0)),
                pl.BlockSpec((Np, Np), lambda k: (0, 0)),
                pl.BlockSpec((1, Np), lambda k: (0, 0)),
                pl.BlockSpec((Np, Np), lambda k: (0, 0)),
                pl.BlockSpec((1, Np), lambda k: (0, 0)),
            ],
            out_specs=pl.BlockSpec((B, Np), lambda k: (0, 0)),
            scratch_shapes=[pltpu.VMEM((B * Sp, Np), jnp.float32)],
        ),
        compiler_params=pltpu.CompilerParams(
            dimension_semantics=("arbitrary",)),
    )(a, w, w1p, b1p, w2p, b2p)

    return out[:, :2]


def init_params(key):
    chans = [total_channels(f) for f in FEATURES]      # [1, 32, 52, 20]
    keys = jax.random.split(key, 10)
    conv_w, norm_b = [], []
    for i in range(3):
        cin, cout = chans[i], chans[i + 1]
        fan_in = cin * SIZE ** 3
        conv_w.append(
            jax.random.normal(keys[2 * i], (cout, cin, SIZE, SIZE, SIZE),
                              jnp.float32) / jnp.sqrt(float(fan_in)))
        n_copies = sum(FEATURES[i + 1])
        norm_b.append(0.1 * jax.random.normal(keys[2 * i + 1], (n_copies,),
                                              jnp.float32))
    w1 = jax.random.normal(keys[6], (20, 50), jnp.float32) / jnp.sqrt(20.0)
    b1 = 0.01 * jax.random.normal(keys[7], (50,), jnp.float32)
    w2 = jax.random.normal(keys[8], (50, 2), jnp.float32) / jnp.sqrt(50.0)
    b2 = 0.01 * jax.random.normal(keys[9], (2,), jnp.float32)
    return {"conv_w": conv_w, "norm_b": norm_b,
            "w1": w1, "b1": b1, "w2": w2, "b2": b2}


@jax.jit
def cnn_forward(inp, params):
    """inp: [batch, features, x, y, z] -> [batch, 2]."""
    # Channels-last, bf16 for the MXU (f32 accumulation inside the kernels).
    x = jnp.transpose(inp, (0, 2, 3, 4, 1)).astype(jnp.bfloat16)
    for i in range(2):                                  # blocks with relu-norm
        x = conv_norm_block(x, params["conv_w"][i], params["norm_b"][i],
                            FEATURES[i + 1])
    # Last block (activation=None) fused with AvgSpacial + MLP head.
    return last_block_and_head(x, params["conv_w"][2],
                               params["w1"], params["b1"],
                               params["w2"], params["b2"])


if __name__ == "__main__":
    key = jax.random.PRNGKey(0)
    pkey, xkey = jax.random.split(key)
    params = init_params(pkey)
    # [batch=2, features=1 (one scalar field), x=y=z=8]
    inp = jax.random.normal(xkey, (2, 1, 8, 8, 8), jnp.float32)
    out = cnn_forward(inp, params)
    jax.block_until_ready(out)
    assert out.shape == (2, 2) and out.dtype == jnp.float32
    print("KERNEL_OK")
</pallas_src>

<mosaic_0001>
module attributes {stable_mosaic.version = 11 : i64} {
  func.func @kernel(%arg0: i32, %arg1: i32, %arg2: memref<128x128xbf16, #tpu.memory_space<vmem>>, %arg3: memref<128x128xbf16, #tpu.memory_space<vmem>>, %arg4: memref<128x128xf32, #tpu.memory_space<vmem>>, %arg5: memref<1x128xf32, #tpu.memory_space<vmem>>, %arg6: memref<128x128xbf16, #tpu.memory_space<vmem>>, %arg7: memref<128x128xf32, #tpu.memory_space<vmem>>) attributes {dimension_semantics = [#tpu.dimension_semantics<parallel>, #tpu.dimension_semantics<arbitrary>], iteration_bounds = array<i64: 2, 1>, scalar_prefetch = 0 : i64, scratch_operands = 1 : i64, tpu.core_type = #tpu.core_type<tc>, window_params = [{transform_indices = @transform_0, window_bounds = array<i64: 128, 128>}, {transform_indices = @transform_1, window_bounds = array<i64: 128, 128>}, {pipeline_mode = #tpu.pipeline_mode<synchronous>, transform_indices = @transform_2, window_bounds = array<i64: 128, 128>}, {pipeline_mode = #tpu.pipeline_mode<synchronous>, transform_indices = @transform_3, window_bounds = array<i64: 1, 128>}, {transform_indices = @transform_4, window_bounds = array<i64: 128, 128>}]} {
    %c0_i32 = arith.constant 0 : i32
    %0 = arith.cmpi eq, %arg1, %c0_i32 : i32
    %1 = arith.extui %0 : i1 to i32
    %c0_i32_0 = arith.constant 0 : i32
    %2 = arith.cmpi ne, %1, %c0_i32_0 : i32
    scf.if %2 {
      %cst_10 = arith.constant 0.000000e+00 : f32
      %12 = vector.broadcast %cst_10 : f32 to vector<128x128xf32>
      %c0_11 = arith.constant 0 : index
      %c0_12 = arith.constant 0 : index
      %13 = vector.load %arg7[%c0_11, %c0_12] : memref<128x128xf32, #tpu.memory_space<vmem>>, vector<128x128xf32>
      tpu.vector_store %arg7[%c0_11, %c0_12], %12 {strides = array<i32>} : memref<128x128xf32, #tpu.memory_space<vmem>>, vector<128x128xf32>,
    } else {
    }
    %c0 = arith.constant 0 : index
    %c0_1 = arith.constant 0 : index
    %3 = vector.load %arg7[%c0, %c0_1] : memref<128x128xf32, #tpu.memory_space<vmem>>, vector<128x128xf32>
    %c0_2 = arith.constant 0 : index
    %c0_3 = arith.constant 0 : index
    %4 = vector.load %arg2[%c0_2, %c0_3] : memref<128x128xbf16, #tpu.memory_space<vmem>>, vector<128x128xbf16>
    %c0_4 = arith.constant 0 : index
    %c0_5 = arith.constant 0 : index
    %5 = vector.load %arg3[%c0_4, %c0_5] : memref<128x128xbf16, #tpu.memory_space<vmem>>, vector<128x128xbf16>
    %cst = arith.constant dense<0.000000e+00> : vector<128x128xf32>
    %6 = tpu.matmul %4, %5, %cst {dimension_numbers = #tpu.dot_dimension_numbers<[1], [0], [0], [1], [0, 0, 1, 1], [], []>} : vector<128x128xbf16>, vector<128x128xbf16>, vector<128x128xf32> -> vector<128x128xf32>
    %7 = arith.addf %3, %6 : vector<128x128xf32>
    %c0_6 = arith.constant 0 : index
    %c0_7 = arith.constant 0 : index
    %8 = vector.load %arg7[%c0_6, %c0_7] : memref<128x128xf32, #tpu.memory_space<vmem>>, vector<128x128xf32>
    tpu.vector_store %arg7[%c0_6, %c0_7], %7 {strides = array<i32>} : memref<128x128xf32, #tpu.memory_space<vmem>>, vector<128x128xf32>,
    %c0_i32_8 = arith.constant 0 : i32
    %9 = arith.cmpi eq, %arg1, %c0_i32_8 : i32
    %10 = arith.extui %9 : i1 to i32
    %c0_i32_9 = arith.constant 0 : i32
    %11 = arith.cmpi ne, %10, %c0_i32_9 : i32
    scf.if %11 {
      %c0_10 = arith.constant 0 : index
      %c0_11 = arith.constant 0 : index
      %12 = vector.load %arg7[%c0_10, %c0_11] : memref<128x128xf32, #tpu.memory_space<vmem>>, vector<128x128xf32>
      %13 = arith.mulf %12, %12 : vector<128x128xf32>
      %c0_12 = arith.constant 0 : index
      %c0_13 = arith.constant 0 : index
      %14 = vector.load %arg4[%c0_12, %c0_13] : memref<128x128xf32, #tpu.memory_space<vmem>>, vector<128x128xf32>
      %cst_14 = arith.constant dense<0.000000e+00> : vector<128x128xf32>
      %15 = tpu.matmul %13, %14, %cst_14 {dimension_numbers = #tpu.dot_dimension_numbers<[1], [0], [0], [1], [0, 0, 1, 1], [], []>} : vector<128x128xf32>, vector<128x128xf32>, vector<128x128xf32> -> vector<128x128xf32>
      %16 = math.sqrt %15 : vector<128x128xf32>
      %c0_15 = arith.constant 0 : index
      %c0_16 = arith.constant 0 : index
      %17 = vector.load %arg5[%c0_15, %c0_16] : memref<1x128xf32, #tpu.memory_space<vmem>>, vector<1x128xf32>
      %18 = vector.broadcast %17 : vector<1x128xf32> to vector<128x128xf32>
      %19 = arith.addf %16, %18 : vector<128x128xf32>
      %cst_17 = arith.constant 0.000000e+00 : f32
      %20 = vector.broadcast %cst_17 : f32 to vector<128x128xf32>
      %21 = arith.maximumf %19, %20 : vector<128x128xf32>
      %cst_18 = arith.constant 9.99999996E-13 : f32
      %22 = vector.broadcast %cst_18 : f32 to vector<128x128xf32>
      %23 = arith.addf %15, %22 : vector<128x128xf32>
      %24 = math.rsqrt %23 : vector<128x128xf32>
      %25 = arith.mulf %21, %24 : vector<128x128xf32>
      %26 = arith.mulf %12, %25 : vector<128x128xf32>
      %27 = arith.truncf %26 : vector<128x128xf32> to vector<128x128xbf16>
      %c0_19 = arith.constant 0 : index
      %c0_20 = arith.constant 0 : index
      %28 = vector.load %arg6[%c0_19, %c0_20] : memref<128x128xbf16, #tpu.memory_space<vmem>>, vector<128x128xbf16>
      tpu.vector_store %arg6[%c0_19, %c0_20], %27 {strides = array<i32>} : memref<128x128xbf16, #tpu.memory_space<vmem>>, vector<128x128xbf16>,
    } else {
    }
    return
  }
  func.func @transform_0(%arg0: i32, %arg1: i32) -> (i32, i32) {
    %c0_i32 = arith.constant 0 : i32
    return %arg0, %arg1 : i32, i32
  }
  func.func @transform_1(%arg0: i32, %arg1: i32) -> (i32, i32) {
    %c0_i32 = arith.constant 0 : i32
    %c0_i32_0 = arith.constant 0 : i32
    return %arg1, %c0_i32 : i32, i32
  }
  func.func @transform_2(%arg0: i32, %arg1: i32) -> (i32, i32) {
    %c0_i32 = arith.constant 0 : i32
    %c0_i32_0 = arith.constant 0 : i32
    %c0_i32_1 = arith.constant 0 : i32
    return %c0_i32, %c0_i32_0 : i32, i32
  }
  func.func @transform_3(%arg0: i32, %arg1: i32) -> (i32, i32) {
    %c0_i32 = arith.constant 0 : i32
    %c0_i32_0 = arith.constant 0 : i32
    %c0_i32_1 = arith.constant 0 : i32
    return %c0_i32, %c0_i32_0 : i32, i32
  }
  func.func @transform_4(%arg0: i32, %arg1: i32) -> (i32, i32) {
    %c0_i32 = arith.constant 0 : i32
    %c0_i32_0 = arith.constant 0 : i32
    return %arg0, %c0_i32 : i32, i32
  }
}

module attributes {stable_mosaic.version = 11 : i64} {
  func.func @kernel(%arg0: i32, %arg1: i32, %arg2: memref<128x2048xbf16, #tpu.memory_space<vmem>>, %arg3: memref<2048x128xbf16, #tpu.memory_space<vmem>>, %arg4: memref<128x128xf32, #tpu.memory_space<vmem>>, %arg5: memref<1x128xf32, #tpu.memory_space<vmem>>, %arg6: memref<128x128xbf16, #tpu.memory_space<vmem>>, %arg7: memref<128x128xf32, #tpu.memory_space<vmem>>) attributes {dimension_semantics = [#tpu.dimension_semantics<parallel>, #tpu.dimension_semantics<arbitrary>], iteration_bounds = array<i64: 1, 2>, scalar_prefetch = 0 : i64, scratch_operands = 1 : i64, tpu.core_type = #tpu.core_type<tc>, window_params = [{transform_indices = @transform_0, window_bounds = array<i64: 128, 2048>}, {transform_indices = @transform_1, window_bounds = array<i64: 2048, 128>}, {pipeline_mode = #tpu.pipeline_mode<synchronous>, transform_indices = @transform_2, window_bounds = array<i64: 128, 128>}, {pipeline_mode = #tpu.pipeline_mode<synchronous>, transform_indices = @transform_3, window_bounds = array<i64: 1, 128>}, {transform_indices = @transform_4, window_bounds = array<i64: 128, 128>}]} {
    %c0_i32 = arith.constant 0 : i32
    %0 = arith.cmpi eq, %arg1, %c0_i32 : i32
    %1 = arith.extui %0 : i1 to i32
    %c0_i32_0 = arith.constant 0 : i32
    %2 = arith.cmpi ne, %1, %c0_i32_0 : i32
    scf.if %2 {
      %cst_9 = arith.constant 0.000000e+00 : f32
      %12 = vector.broadcast %cst_9 : f32 to vector<128x128xf32>
      %c0_10 = arith.constant 0 : index
      %c0_11 = arith.constant 0 : index
      %13 = vector.load %arg7[%c0_10, %c0_11] : memref<128x128xf32, #tpu.memory_space<vmem>>, vector<128x128xf32>
      tpu.vector_store %arg7[%c0_10, %c0_11], %12 {strides = array<i32>} : memref<128x128xf32, #tpu.memory_space<vmem>>, vector<128x128xf32>,
    } else {
    }
    %c0 = arith.constant 0 : index
    %c0_1 = arith.constant 0 : index
    %3 = vector.load %arg7[%c0, %c0_1] : memref<128x128xf32, #tpu.memory_space<vmem>>, vector<128x128xf32>
    %c0_2 = arith.constant 0 : index
    %c0_3 = arith.constant 0 : index
    %4 = vector.load %arg2[%c0_2, %c0_3] : memref<128x2048xbf16, #tpu.memory_space<vmem>>, vector<128x2048xbf16>
    %c0_4 = arith.constant 0 : index
    %c0_5 = arith.constant 0 : index
    %5 = vector.load %arg3[%c0_4, %c0_5] : memref<2048x128xbf16, #tpu.memory_space<vmem>>, vector<2048x128xbf16>
    %cst = arith.constant dense<0.000000e+00> : vector<128x128xf32>
    %6 = tpu.matmul %4, %5, %cst {dimension_numbers = #tpu.dot_dimension_numbers<[1], [0], [0], [1], [0, 0, 1, 1], [], []>} : vector<128x2048xbf16>, vector<2048x128xbf16>, vector<128x128xf32> -> vector<128x128xf32>
    %7 = arith.addf %3, %6 : vector<128x128xf32>
    %c0_6 = arith.constant 0 : index
    %c0_7 = arith.constant 0 : index
    %8 = vector.load %arg7[%c0_6, %c0_7] : memref<128x128xf32, #tpu.memory_space<vmem>>, vector<128x128xf32>
    tpu.vector_store %arg7[%c0_6, %c0_7], %7 {strides = array<i32>} : memref<128x128xf32, #tpu.memory_space<vmem>>, vector<128x128xf32>,
    %c1_i32 = arith.constant 1 : i32
    %9 = arith.cmpi eq, %arg1, %c1_i32 : i32
    %10 = arith.extui %9 : i1 to i32
    %c0_i32_8 = arith.constant 0 : i32
    %11 = arith.cmpi ne, %10, %c0_i32_8 : i32
    scf.if %11 {
      %c0_9 = arith.constant 0 : index
      %c0_10 = arith.constant 0 : index
      %12 = vector.load %arg7[%c0_9, %c0_10] : memref<128x128xf32, #tpu.memory_space<vmem>>, vector<128x128xf32>
      %13 = arith.mulf %12, %12 : vector<128x128xf32>
      %c0_11 = arith.constant 0 : index
      %c0_12 = arith.constant 0 : index
      %14 = vector.load %arg4[%c0_11, %c0_12] : memref<128x128xf32, #tpu.memory_space<vmem>>, vector<128x128xf32>
      %cst_13 = arith.constant dense<0.000000e+00> : vector<128x128xf32>
      %15 = tpu.matmul %13, %14, %cst_13 {dimension_numbers = #tpu.dot_dimension_numbers<[1], [0], [0], [1], [0, 0, 1, 1], [], []>} : vector<128x128xf32>, vector<128x128xf32>, vector<128x128xf32> -> vector<128x128xf32>
      %16 = math.sqrt %15 : vector<128x128xf32>
      %c0_14 = arith.constant 0 : index
      %c0_15 = arith.constant 0 : index
      %17 = vector.load %arg5[%c0_14, %c0_15] : memref<1x128xf32, #tpu.memory_space<vmem>>, vector<1x128xf32>
      %18 = vector.broadcast %17 : vector<1x128xf32> to vector<128x128xf32>
      %19 = arith.addf %16, %18 : vector<128x128xf32>
      %cst_16 = arith.constant 0.000000e+00 : f32
      %20 = vector.broadcast %cst_16 : f32 to vector<128x128xf32>
      %21 = arith.maximumf %19, %20 : vector<128x128xf32>
      %cst_17 = arith.constant 9.99999996E-13 : f32
      %22 = vector.broadcast %cst_17 : f32 to vector<128x128xf32>
      %23 = arith.addf %15, %22 : vector<128x128xf32>
      %24 = math.rsqrt %23 : vector<128x128xf32>
      %25 = arith.mulf %21, %24 : vector<128x128xf32>
      %26 = arith.mulf %12, %25 : vector<128x128xf32>
      %27 = arith.truncf %26 : vector<128x128xf32> to vector<128x128xbf16>
      %c0_18 = arith.constant 0 : index
      %c0_19 = arith.constant 0 : index
      %28 = vector.load %arg6[%c0_18, %c0_19] : memref<128x128xbf16, #tpu.memory_space<vmem>>, vector<128x128xbf16>
      tpu.vector_store %arg6[%c0_18, %c0_19], %27 {strides = array<i32>} : memref<128x128xbf16, #tpu.memory_space<vmem>>, vector<128x128xbf16>,
    } else {
    }
    return
  }
  func.func @transform_0(%arg0: i32, %arg1: i32) -> (i32, i32) {
    %c0_i32 = arith.constant 0 : i32
    return %arg0, %arg1 : i32, i32
  }
  func.func @transform_1(%arg0: i32, %arg1: i32) -> (i32, i32) {
    %c0_i32 = arith.constant 0 : i32
    %c0_i32_0 = arith.constant 0 : i32
    return %arg1, %c0_i32 : i32, i32
  }
  func.func @transform_2(%arg0: i32, %arg1: i32) -> (i32, i32) {
    %c0_i32 = arith.constant 0 : i32
    %c0_i32_0 = arith.constant 0 : i32
    %c0_i32_1 = arith.constant 0 : i32
    return %c0_i32, %c0_i32_0 : i32, i32
  }
  func.func @transform_3(%arg0: i32, %arg1: i32) -> (i32, i32) {
    %c0_i32 = arith.constant 0 : i32
    %c0_i32_0 = arith.constant 0 : i32
    %c0_i32_1 = arith.constant 0 : i32
    return %c0_i32, %c0_i32_0 : i32, i32
  }
  func.func @transform_4(%arg0: i32, %arg1: i32) -> (i32, i32) {
    %c0_i32 = arith.constant 0 : i32
    %c0_i32_0 = arith.constant 0 : i32
    return %arg0, %c0_i32 : i32, i32
  }
}

module attributes {stable_mosaic.version = 11 : i64} {
  func.func @kernel(%arg0: i32, %arg1: memref<64x1664xbf16, #tpu.memory_space<vmem>>, %arg2: memref<1664x128xbf16, #tpu.memory_space<vmem>>, %arg3: memref<128x128xf32, #tpu.memory_space<vmem>>, %arg4: memref<1x128xf32, #tpu.memory_space<vmem>>, %arg5: memref<128x128xf32, #tpu.memory_space<vmem>>, %arg6: memref<1x128xf32, #tpu.memory_space<vmem>>, %arg7: memref<2x128xf32, #tpu.memory_space<vmem>>, %arg8: memref<64x128xf32, #tpu.memory_space<vmem>>) attributes {dimension_semantics = [#tpu.dimension_semantics<arbitrary>], iteration_bounds = array<i64: 4>, scalar_prefetch = 0 : i64, scratch_operands = 1 : i64, tpu.core_type = #tpu.core_type<tc>, window_params = [{transform_indices = @transform_0, window_bounds = array<i64: 64, 1664>}, {transform_indices = @transform_1, window_bounds = array<i64: 1664, 128>}, {pipeline_mode = #tpu.pipeline_mode<synchronous>, transform_indices = @transform_2, window_bounds = array<i64: 128, 128>}, {pipeline_mode = #tpu.pipeline_mode<synchronous>, transform_indices = @transform_3, window_bounds = array<i64: 1, 128>}, {pipeline_mode = #tpu.pipeline_mode<synchronous>, transform_indices = @transform_4, window_bounds = array<i64: 128, 128>}, {pipeline_mode = #tpu.pipeline_mode<synchronous>, transform_indices = @transform_5, window_bounds = array<i64: 1, 128>}, {pipeline_mode = #tpu.pipeline_mode<synchronous>, transform_indices = @transform_6, window_bounds = array<i64: 2, 128>}]} {
    %c0_i32 = arith.constant 0 : i32
    %0 = arith.cmpi eq, %arg0, %c0_i32 : i32
    %1 = arith.extui %0 : i1 to i32
    %c0_i32_0 = arith.constant 0 : i32
    %2 = arith.cmpi ne, %1, %c0_i32_0 : i32
    scf.if %2 {
      %cst_9 = arith.constant 0.000000e+00 : f32
      %12 = vector.broadcast %cst_9 : f32 to vector<64x128xf32>
      %c0_10 = arith.constant 0 : index
      %c0_11 = arith.constant 0 : index
      %13 = vector.load %arg8[%c0_10, %c0_11] : memref<64x128xf32, #tpu.memory_space<vmem>>, vector<64x128xf32>
      tpu.vector_store %arg8[%c0_10, %c0_11], %12 {strides = array<i32>} : memref<64x128xf32, #tpu.memory_space<vmem>>, vector<64x128xf32>,
    } else {
    }
    %c0 = arith.constant 0 : index
    %c0_1 = arith.constant 0 : index
    %3 = vector.load %arg8[%c0, %c0_1] : memref<64x128xf32, #tpu.memory_space<vmem>>, vector<64x128xf32>
    %c0_2 = arith.constant 0 : index
    %c0_3 = arith.constant 0 : index
    %4 = vector.load %arg1[%c0_2, %c0_3] : memref<64x1664xbf16, #tpu.memory_space<vmem>>, vector<64x1664xbf16>
    %c0_4 = arith.constant 0 : index
    %c0_5 = arith.constant 0 : index
    %5 = vector.load %arg2[%c0_4, %c0_5] : memref<1664x128xbf16, #tpu.memory_space<vmem>>, vector<1664x128xbf16>
    %cst = arith.constant dense<0.000000e+00> : vector<64x128xf32>
    %6 = tpu.matmul %4, %5, %cst {dimension_numbers = #tpu.dot_dimension_numbers<[1], [0], [0], [1], [0, 0, 1, 1], [], []>} : vector<64x1664xbf16>, vector<1664x128xbf16>, vector<64x128xf32> -> vector<64x128xf32>
    %7 = arith.addf %3, %6 : vector<64x128xf32>
    %c0_6 = arith.constant 0 : index
    %c0_7 = arith.constant 0 : index
    %8 = vector.load %arg8[%c0_6, %c0_7] : memref<64x128xf32, #tpu.memory_space<vmem>>, vector<64x128xf32>
    tpu.vector_store %arg8[%c0_6, %c0_7], %7 {strides = array<i32>} : memref<64x128xf32, #tpu.memory_space<vmem>>, vector<64x128xf32>,
    %c3_i32 = arith.constant 3 : i32
    %9 = arith.cmpi eq, %arg0, %c3_i32 : i32
    %10 = arith.extui %9 : i1 to i32
    %c0_i32_8 = arith.constant 0 : i32
    %11 = arith.cmpi ne, %10, %c0_i32_8 : i32
    scf.if %11 {
      %c0_9 = arith.constant 0 : index
      %c0_10 = arith.constant 0 : index
      %12 = vector.load %arg8[%c0_9, %c0_10] : memref<64x128xf32, #tpu.memory_space<vmem>>, vector<64x128xf32>
      %13 = vector.shape_cast %12 : vector<64x128xf32> to vector<2x32x128xf32>
      %cst_11 = arith.constant dense<0.000000e+00> : vector<2x128xf32>
      %14 = vector.multi_reduction <add>, %13, %cst_11 [1] : vector<2x32x128xf32> to vector<2x128xf32>
      %cst_12 = arith.constant 0.0370370373 : f32
      %15 = vector.broadcast %cst_12 : f32 to vector<2x128xf32>
      %16 = arith.mulf %14, %15 : vector<2x128xf32>
      %c0_13 = arith.constant 0 : index
      %c0_14 = arith.constant 0 : index
      %17 = vector.load %arg3[%c0_13, %c0_14] : memref<128x128xf32, #tpu.memory_space<vmem>>, vector<128x128xf32>
      %cst_15 = arith.constant dense<0.000000e+00> : vector<2x128xf32>
      %18 = tpu.matmul %16, %17, %cst_15 {dimension_numbers = #tpu.dot_dimension_numbers<[1], [0], [0], [1], [0, 0, 1, 1], [], []>} : vector<2x128xf32>, vector<128x128xf32>, vector<2x128xf32> -> vector<2x128xf32>
      %c0_16 = arith.constant 0 : index
      %c0_17 = arith.constant 0 : index
      %19 = vector.load %arg4[%c0_16, %c0_17] : memref<1x128xf32, #tpu.memory_space<vmem>>, vector<1x128xf32>
      %20 = vector.broadcast %19 : vector<1x128xf32> to vector<2x128xf32>
      %21 = arith.addf %18, %20 : vector<2x128xf32>
      %cst_18 = arith.constant 0.000000e+00 : f32
      %22 = vector.broadcast %cst_18 : f32 to vector<2x128xf32>
      %23 = arith.maximumf %21, %22 : vector<2x128xf32>
      %c0_19 = arith.constant 0 : index
      %c0_20 = arith.constant 0 : index
      %24 = vector.load %arg5[%c0_19, %c0_20] : memref<128x128xf32, #tpu.memory_space<vmem>>, vector<128x128xf32>
      %cst_21 = arith.constant dense<0.000000e+00> : vector<2x128xf32>
      %25 = tpu.matmul %23, %24, %cst_21 {dimension_numbers = #tpu.dot_dimension_numbers<[1], [0], [0], [1], [0, 0, 1, 1], [], []>} : vector<2x128xf32>, vector<128x128xf32>, vector<2x128xf32> -> vector<2x128xf32>
      %c0_22 = arith.constant 0 : index
      %c0_23 = arith.constant 0 : index
      %26 = vector.load %arg6[%c0_22, %c0_23] : memref<1x128xf32, #tpu.memory_space<vmem>>, vector<1x128xf32>
      %27 = vector.broadcast %26 : vector<1x128xf32> to vector<2x128xf32>
      %28 = arith.addf %25, %27 : vector<2x128xf32>
      %c0_24 = arith.constant 0 : index
      %c0_25 = arith.constant 0 : index
      %29 = vector.load %arg7[%c0_24, %c0_25] : memref<2x128xf32, #tpu.memory_space<vmem>>, vector<2x128xf32>
      tpu.vector_store %arg7[%c0_24, %c0_25], %28 {strides = array<i32>} : memref<2x128xf32, #tpu.memory_space<vmem>>, vector<2x128xf32>,
    } else {
    }
    return
  }
  func.func @transform_0(%arg0: i32) -> (i32, i32) {
    %c0_i32 = arith.constant 0 : i32
    %c0_i32_0 = arith.constant 0 : i32
    return %c0_i32, %arg0 : i32, i32
  }
  func.func @transform_1(%arg0: i32) -> (i32, i32) {
    %c0_i32 = arith.constant 0 : i32
    %c0_i32_0 = arith.constant 0 : i32
    return %arg0, %c0_i32 : i32, i32
  }
  func.func @transform_2(%arg0: i32) -> (i32, i32) {
    %c0_i32 = arith.constant 0 : i32
    %c0_i32_0 = arith.constant 0 : i32
    %c0_i32_1 = arith.constant 0 : i32
    return %c0_i32, %c0_i32_0 : i32, i32
  }
  func.func @transform_3(%arg0: i32) -> (i32, i32) {
    %c0_i32 = arith.constant 0 : i32
    %c0_i32_0 = arith.constant 0 : i32
    %c0_i32_1 = arith.constant 0 : i32
    return %c0_i32, %c0_i32_0 : i32, i32
  }
  func.func @transform_4(%arg0: i32) -> (i32, i32) {
    %c0_i32 = arith.constant 0 : i32
    %c0_i32_0 = arith.constant 0 : i32
    %c0_i32_1 = arith.constant 0 : i32
    return %c0_i32, %c0_i32_0 : i32, i32
  }
  func.func @transform_5(%arg0: i32) -> (i32, i32) {
    %c0_i32 = arith.constant 0 : i32
    %c0_i32_0 = arith.constant 0 : i32
    %c0_i32_1 = arith.constant 0 : i32
    return %c0_i32, %c0_i32_0 : i32, i32
  }
  func.func @transform_6(%arg0: i32) -> (i32, i32) {
    %c0_i32 = arith.constant 0 : i32
    %c0_i32_0 = arith.constant 0 : i32
    %c0_i32_1 = arith.constant 0 : i32
    return %c0_i32, %c0_i32_0 : i32, i32
  }
}

</mosaic_0001>

<llo_original>
// kernel: cnn_forward.3
$region0: #{cnn_forward.3}
  #allocation0 [shape = 'u32[]', space=smem, size = 0x4, offset = 0x4, fixed_abs, tag = 'smem constant byte address 0x4 - core index']
  #allocation1 [shape = 'u32[144,128]{1,0:T(1,128)}', space=vmem, size = 0x12000, scoped, tag = 'internal scratch']
  #allocation2 [shape = 'f32[128,128]{1,0:T(8,128)}', space=vmem, size = 0x10000, scoped, tag = 'scratch operand']
  %s0 = inlined_call_operand.vmem [shape: bf16[256,128], index: 0, kind: input, shape index: {}]
  %s1 = inlined_call_operand.vmem [shape: bf16[128,128], index: 1, kind: input, shape index: {}]
  %s2 = inlined_call_operand.vmem [shape: f32[128,128], index: 2, kind: input, shape index: {}]
  %s3 = inlined_call_operand.vmem [shape: f32[1,128], index: 3, kind: input, shape index: {}]
  %s4 = inlined_call_operand.vmem [shape: bf16[256,128], index: 4, kind: output, shape index: {}]
  %s5 = sld [smem:[#allocation0]]
  $region57: #{cnn_forward.3} parent=0
    _
  %s7 = ssub.s32 1, %s5
  %s8 = scalar_select 0, %s7, %s5
  loop: start=0, step=1, limit=4
  $region2: #{cnn_forward.3} parent=0 // loop_pre_header
    _
  $region3: #{cnn_forward.3} parent=0 // loop_header
    %s10 = sphi 0, %s14
    %p11 = scmp.ge.s32.totalorder %s10, 4
    %s17 = sphi 0, %s29
    %s18 = sphi 0, %s25
    %s19 = sphi 0, %s17
    %s20 = sphi 0, %s18
    %s21 = sphi 0, %s19
    %s22 = sphi 0, %s20
    %s34 = sphi 0, %s36
    %s37 = sphi 0, %s34
    %s38 = sphi 0, %s37
    %s54 = sphi 0, %s38
    %s60 = sphi 0, %s62
    %s63 = sphi 0, %s60
    %s64 = sphi 0, %s63
    %s80 = sphi 0, %s64
    %s84 = sphi 0, %s84
    %s86 = sphi 0, %s84
    %s87 = sphi 0, %s86
    %s101 = sphi 0, %s87
    %s105 = sphi 0, %s105
    %s107 = sphi 0, %s105
    %s108 = sphi 0, %s107
    %s122 = sphi 0, %s108
    %s128 = sphi 0, %s130
    %s131 = sphi 0, %s128
    %s132 = sphi 0, %s131
    %s148 = sphi 0, %s132
  $region4: #{cnn_forward.3} parent=0 // loop_header_branch
    %13 = sbr.rel (%p11) target = $region8
  $region5: #{cnn_forward.3} parent=0 // loop_body
    %s15 = ssub.s32 %s10, 1
    %s16 = ssub.s32 %s10, 2
    %s23 = sadd.s32 1, %s18
    %p24 = scmp.ge.s32.totalorder %s23, 1
    %s25 = scalar_select %p24, 0, %s23
    %s26 = sadd.s32 1, %s17
    %s27 = scalar_select %p24, %s26, %s17
    %p28 = scmp.ge.s32.totalorder %s27, 2
    %s29 = scalar_select %p28, 0, %s27
    %s30 = ssub.s32 %s17, %s29
    %s31 = ssub.s32 %s18, %s25
    %s32 = sor.u32 %s30, %s31
    %p33 = scmp.eq.s32.totalorder %s32, 0
    %s35 = sadd.s32 %s34, 1
    %s36 = scalar_select %p33, %s34, %s35
    %p39 = pneg %p33
    %p40 = scmp.eq.s32.totalorder %s10, 1
    %p41 = por %p39, %p40
    %p42 = scmp.ne.s32.totalorder %s34, %s37
    %p43 = scmp.eq.s32.totalorder %s10, 0
    %p44 = por %p42, %p43
    %p45 = scmp.ne.s32.totalorder %s34, %s37
    %p46 = scmp.eq.s32.totalorder %s15, 1
    %p47 = por %p45, %p46
    %p48 = scmp.ne.s32.totalorder %s37, %s38
    %p49 = scmp.eq.s32.totalorder %s15, 0
    %p50 = por %p48, %p49
    %p51 = scmp.ne.s32.totalorder %s37, %s38
    %p52 = scmp.eq.s32.totalorder %s16, 1
    %p53 = por %p51, %p52
    %p55 = scmp.ne.s32.totalorder %s38, %s54
    %p56 = scmp.eq.s32.totalorder %s16, 0
    %p57 = por %p55, %p56
    %s58 = ssub.s32 %s18, %s25
    %p59 = scmp.eq.s32.totalorder %s58, 0
    %s61 = sadd.s32 %s60, 1
    %s62 = scalar_select %p59, %s60, %s61
    %p65 = pneg %p59
    %p66 = scmp.eq.s32.totalorder %s10, 1
    %p67 = por %p65, %p66
    %p68 = scmp.ne.s32.totalorder %s60, %s63
    %p69 = scmp.eq.s32.totalorder %s10, 0
    %p70 = por %p68, %p69
    %p71 = scmp.ne.s32.totalorder %s60, %s63
    %p72 = scmp.eq.s32.totalorder %s15, 1
    %p73 = por %p71, %p72
    %p74 = scmp.ne.s32.totalorder %s63, %s64
    %p75 = scmp.eq.s32.totalorder %s15, 0
    %p76 = por %p74, %p75
    %p77 = scmp.ne.s32.totalorder %s63, %s64
    %p78 = scmp.eq.s32.totalorder %s16, 1
    %p79 = por %p77, %p78
    %p81 = scmp.ne.s32.totalorder %s64, %s80
    %p82 = scmp.eq.s32.totalorder %s16, 0
    %p83 = por %p81, %p82
    %s85 = sadd.s32 %s84, 1
    %p88 = scmp.eq.s32.totalorder %s10, 1
    %p89 = scmp.ne.s32.totalorder %s84, %s86
    %p90 = scmp.eq.s32.totalorder %s10, 0
    %p91 = por %p89, %p90
    %p92 = scmp.ne.s32.totalorder %s84, %s86
    %p93 = scmp.eq.s32.totalorder %s15, 1
    %p94 = por %p92, %p93
    %p95 = scmp.ne.s32.totalorder %s86, %s87
    %p96 = scmp.eq.s32.totalorder %s15, 0
    %p97 = por %p95, %p96
    %p98 = scmp.ne.s32.totalorder %s86, %s87
    %p99 = scmp.eq.s32.totalorder %s16, 1
    %p100 = por %p98, %p99
    %p102 = scmp.ne.s32.totalorder %s87, %s101
    %p103 = scmp.eq.s32.totalorder %s16, 0
    %p104 = por %p102, %p103
    %s106 = sadd.s32 %s105, 1
    %p109 = scmp.eq.s32.totalorder %s10, 1
    %p110 = scmp.ne.s32.totalorder %s105, %s107
    %p111 = scmp.eq.s32.totalorder %s10, 0
    %p112 = por %p110, %p111
    %p113 = scmp.ne.s32.totalorder %s105, %s107
    %p114 = scmp.eq.s32.totalorder %s15, 1
    %p115 = por %p113, %p114
    %p116 = scmp.ne.s32.totalorder %s107, %s108
    %p117 = scmp.eq.s32.totalorder %s15, 0
    %p118 = por %p116, %p117
    %p119 = scmp.ne.s32.totalorder %s107, %s108
    %p120 = scmp.eq.s32.totalorder %s16, 1
    %p121 = por %p119, %p120
    %p123 = scmp.ne.s32.totalorder %s108, %s122
    %p124 = scmp.eq.s32.totalorder %s16, 0
    %p125 = por %p123, %p124
    %s126 = ssub.s32 %s17, %s29
    %p127 = scmp.eq.s32.totalorder %s126, 0
    %s129 = sadd.s32 %s128, 1
    %s130 = scalar_select %p127, %s128, %s129
    %p133 = pneg %p127
    %p134 = scmp.eq.s32.totalorder %s10, 1
    %p135 = por %p133, %p134
    %p136 = scmp.ne.s32.totalorder %s128, %s131
    %p137 = scmp.eq.s32.totalorder %s10, 0
    %p138 = por %p136, %p137
    %p139 = scmp.ne.s32.totalorder %s128, %s131
    %p140 = scmp.eq.s32.totalorder %s15, 1
    %p141 = por %p139, %p140
    %p142 = scmp.ne.s32.totalorder %s131, %s132
    %p143 = scmp.eq.s32.totalorder %s15, 0
    %p144 = por %p142, %p143
    %p145 = scmp.ne.s32.totalorder %s131, %s132
    %p146 = scmp.eq.s32.totalorder %s16, 1
    %p147 = por %p145, %p146
    %p149 = scmp.ne.s32.totalorder %s132, %s148
    %p150 = scmp.eq.s32.totalorder %s16, 0
    %p151 = por %p149, %p150
    %p152 = scmp.le.s32.totalorder 1, %s10
    %p153 = scmp.lt.s32.totalorder %s10, 3
    %p154 = pnand %p152, %p153
    %p155 = pneg %p154
    // Predicated region
    $region9: #{cnn_forward.3} parent=5 // pred_check
      _
    $region10: #{cnn_forward.3} parent=5 // pred_check_branch
      %157 = sbr.rel (%p154) target = $region12
    $region11: #{cnn_forward.3} parent=5 // pred_region
      %s158 = ssub.s32 %s10, 1
      // Predicated region
      $region13: #{cnn_forward.3} parent=11 // pred_check
        %p159 = pneg %p76
      $region14: #{cnn_forward.3} parent=11 // pred_check_branch
        %161 = sbr.rel (%p159) target = $region16
      $region15: #{cnn_forward.3} parent=11 // pred_region
        %s162 = smul.u32 16, %s20
        %p163 = scmp.lt.s32.totalorder %s162, 15
        %s164 = scalar_select %p163, %s162, 15
        %s165 = smul.addr %s164, 4
        %s166 = scalar_lea.vmem %s1, %s165
        %s167 = smul.u32 16, %s20
      $region16: #{cnn_forward.3} parent=11 // pred_fallthru
        _
      // Predicated region
      $region17: #{cnn_forward.3} parent=11 // pred_check
        %p168 = pneg %p97
      $region18: #{cnn_forward.3} parent=11 // pred_check_branch
        %170 = sbr.rel (%p168) target = $region20
      $region19: #{cnn_forward.3} parent=11 // pred_region
        _
      $region20: #{cnn_forward.3} parent=11 // pred_fallthru
        _
      // Predicated region
      $region21: #{cnn_forward.3} parent=11 // pred_check
        %p171 = pneg %p118
      $region22: #{cnn_forward.3} parent=11 // pred_check_branch
        %173 = sbr.rel (%p171) target = $region24
      $region23: #{cnn_forward.3} parent=11 // pred_region
        _
      $region24: #{cnn_forward.3} parent=11 // pred_fallthru
        _
    $region12: #{cnn_forward.3} parent=5 // pred_fallthru
      _
    %p174 = scmp.lt.s32.totalorder %s10, 2
    // Predicated region
    $region25: #{cnn_forward.3} parent=5 // pred_check
      %p175 = pneg %p174
    $region26: #{cnn_forward.3} parent=5 // pred_check_branch
      %177 = sbr.rel (%p175) target = $region28
    $region27: #{cnn_forward.3} parent=5 // pred_region
      // Predicated region
      $region29: #{cnn_forward.3} parent=27 // pred_check
        %p178 = pneg %p44
      $region30: #{cnn_forward.3} parent=27 // pred_check_branch
        %180 = sbr.rel (%p178) target = $region32
      $region31: #{cnn_forward.3} parent=27 // pred_region
        %s181 = smul.u32 16, %s17
        %p182 = scmp.lt.s32.totalorder %s181, 31
        %s183 = scalar_select %p182, %s181, 31
        %p184 = scmp.lt.s32.totalorder %s18, 0
        %s185 = scalar_select %p184, %s18, 0
        %s186 = sadd.s32 %s185, %s183
        %s187 = smul.addr %s186, 4
        %s188 = scalar_lea.vmem %s0, %s187
        %s189 = smul.u32 16, %s17
      $region32: #{cnn_forward.3} parent=27 // pred_fallthru
        _
    $region28: #{cnn_forward.3} parent=5 // pred_fallthru
      _
    %p190 = scmp.le.s32.totalorder 1, %s10
    %p191 = scmp.lt.s32.totalorder %s10, 3
    %p192 = pnand %p190, %p191
    %p193 = pneg %p192
    // Predicated region
    $region33: #{cnn_forward.3} parent=5 // pred_check
      _
    $region34: #{cnn_forward.3} parent=5 // pred_check_branch
      %195 = sbr.rel (%p192) target = $region36
    $region35: #{cnn_forward.3} parent=5 // pred_region
      %s196 = ssub.s32 %s10, 1
      %s197 = smul.u32 16, %s19
      %p198 = scmp.lt.s32.totalorder %s197, 31
      %s199 = scalar_select %p198, %s197, 31
      %p200 = scmp.lt.s32.totalorder %s20, 0
      %s201 = scalar_select %p200, %s20, 0
      %s202 = sadd.s32 %s201, %s199
      %s203 = smul.addr %s202, 4
      %s204 = scalar_lea.vmem %s0, %s203
      %p205 = pneg %p50
      %p206 = pneg %p47
      %s207 = smul.u32 16, %s20
      %p208 = scmp.lt.s32.totalorder %s207, 15
      %s209 = scalar_select %p208, %s207, 15
      %s210 = smul.addr %s209, 4
      %s211 = scalar_lea.vmem %s1, %s210
      %p212 = pneg %p76
      %p213 = pneg %p73
      %p214 = pneg %p97
      %p215 = pneg %p94
      %p216 = pneg %p118
      %p217 = pneg %p115
      %p218 = pneg %p144
      %p219 = pneg %p141
      %s220 = smul.u32 16, %s19
      %p221 = scmp.lt.s32.totalorder %s220, 31
      %s222 = scalar_select %p221, %s220, 31
      %s223 = smul.addr %s222, 4
      %s224 = scalar_lea.vmem %s4, %s223
      %s225 = smul.u32 16, %s19
      %p226 = scmp.lt.s32.totalorder %s225, 31
      %s227 = scalar_select %p226, %s225, 31
      %p228 = scmp.lt.s32.totalorder %s20, 0
      %s229 = scalar_select %p228, %s20, 0
      %s230 = sadd.s32 %s229, %s227
      %s231 = smul.addr %s230, 4
      %s232 = scalar_lea.vmem %s0, %s231
      %s233 = smul.u32 16, %s19
      %s234 = smul.u32 16, %s20
      %p235 = scmp.lt.s32.totalorder %s234, 15
      %s236 = scalar_select %p235, %s234, 15
      %s237 = smul.addr %s236, 4
      %s238 = scalar_lea.vmem %s1, %s237
      %s239 = smul.u32 16, %s20
      %s240 = smul.u32 16, %s19
      %p241 = scmp.lt.s32.totalorder %s240, 31
      %s242 = scalar_select %p241, %s240, 31
      %s243 = smul.addr %s242, 4
      %s244 = scalar_lea.vmem %s4, %s243
      %s245 = smul.u32 16, %s19
      %p247 = scmp.eq.s32.totalorder %s20, 0
      // Predicated region
      $region37: #{cnn_forward.3} parent=35 // pred_check
        %p248 = pneg %p247
      $region38: #{cnn_forward.3} parent=35 // pred_check_branch
        %250 = sbr.rel (%p248) target = $region40
      $region39: #{cnn_forward.3} parent=35 // pred_region
        %251 = vst [vmem:[#allocation2] sm:$0xff] 0.0
        %252 = vst [vmem:[#allocation2 + $0x8] sm:$0xff] 0.0
        %253 = vst [vmem:[#allocation2 + $0x10] sm:$0xff] 0.0
        %254 = vst [vmem:[#allocation2 + $0x18] sm:$0xff] 0.0
        %255 = vst [vmem:[#allocation2 + $0x20] sm:$0xff] 0.0
        %256 = vst [vmem:[#allocation2 + $0x28] sm:$0xff] 0.0
        %257 = vst [vmem:[#allocation2 + $0x30] sm:$0xff] 0.0
        %258 = vst [vmem:[#allocation2 + $0x38] sm:$0xff] 0.0
        %259 = vst [vmem:[#allocation2 + $0x40] sm:$0xff] 0.0
        %260 = vst [vmem:[#allocation2 + $0x48] sm:$0xff] 0.0
        %261 = vst [vmem:[#allocation2 + $0x50] sm:$0xff] 0.0
        %262 = vst [vmem:[#allocation2 + $0x58] sm:$0xff] 0.0
        %263 = vst [vmem:[#allocation2 + $0x60] sm:$0xff] 0.0
        %264 = vst [vmem:[#allocation2 + $0x68] sm:$0xff] 0.0
        %265 = vst [vmem:[#allocation2 + $0x70] sm:$0xff] 0.0
        %266 = vst [vmem:[#allocation2 + $0x78] sm:$0xff] 0.0
      $region40: #{cnn_forward.3} parent=35 // pred_fallthru
        _
      %v267 = vld [vmem:[#allocation2] sm:$0xff]
      %v268 = vld [vmem:[#allocation2 + $0x8] sm:$0xff]
      %v269 = vld [vmem:[#allocation2 + $0x10] sm:$0xff]
      %v270 = vld [vmem:[#allocation2 + $0x18] sm:$0xff]
      %v271 = vld [vmem:[#allocation2 + $0x20] sm:$0xff]
      %v272 = vld [vmem:[#allocation2 + $0x28] sm:$0xff]
      %v273 = vld [vmem:[#allocation2 + $0x30] sm:$0xff]
      %v274 = vld [vmem:[#allocation2 + $0x38] sm:$0xff]
      %v275 = vld [vmem:[#allocation2 + $0x40] sm:$0xff]
      %v276 = vld [vmem:[#allocation2 + $0x48] sm:$0xff]
      %v277 = vld [vmem:[#allocation2 + $0x50] sm:$0xff]
      %v278 = vld [vmem:[#allocation2 + $0x58] sm:$0xff]
      %v279 = vld [vmem:[#allocation2 + $0x60] sm:$0xff]
      %v280 = vld [vmem:[#allocation2 + $0x68] sm:$0xff]
      %v281 = vld [vmem:[#allocation2 + $0x70] sm:$0xff]
      %v282 = vld [vmem:[#allocation2 + $0x78] sm:$0xff]
      %v283 = vld [vmem:[%s232] sm:$0xf]
      %v284 = vld [vmem:[%s232 + $0x4] sm:$0xf]
      %v285 = vld [vmem:[%s232 + $0x8] sm:$0xf]
      %v286 = vld [vmem:[%s232 + $0xc] sm:$0xf]
      %v287 = vld [vmem:[%s232 + $0x10] sm:$0xf]
      %v288 = vld [vmem:[%s232 + $0x14] sm:$0xf]
      %v289 = vld [vmem:[%s232 + $0x18] sm:$0xf]
      %v290 = vld [vmem:[%s232 + $0x1c] sm:$0xf]
      %v291 = vld [vmem:[%s232 + $0x20] sm:$0xf]
      %v292 = vld [vmem:[%s232 + $0x24] sm:$0xf]
      %v293 = vld [vmem:[%s232 + $0x28] sm:$0xf]
      %v294 = vld [vmem:[%s232 + $0x2c] sm:$0xf]
      %v295 = vld [vmem:[%s232 + $0x30] sm:$0xf]
      %v296 = vld [vmem:[%s232 + $0x34] sm:$0xf]
      %v297 = vld [vmem:[%s232 + $0x38] sm:$0xf]
      %v298 = vld [vmem:[%s232 + $0x3c] sm:$0xf]
      %v299 = vld [vmem:[%s238] sm:$0xf]
      %v300 = vld [vmem:[%s238 + $0x4] sm:$0xf]
      %v301 = vld [vmem:[%s238 + $0x8] sm:$0xf]
      %v302 = vld [vmem:[%s238 + $0xc] sm:$0xf]
      %v303 = vld [vmem:[%s238 + $0x10] sm:$0xf]
      %v304 = vld [vmem:[%s238 + $0x14] sm:$0xf]
      %v305 = vld [vmem:[%s238 + $0x18] sm:$0xf]
      %v306 = vld [vmem:[%s238 + $0x1c] sm:$0xf]
      %v307 = vld [vmem:[%s238 + $0x20] sm:$0xf]
      %v308 = vld [vmem:[%s238 + $0x24] sm:$0xf]
      %v309 = vld [vmem:[%s238 + $0x28] sm:$0xf]
      %v310 = vld [vmem:[%s238 + $0x2c] sm:$0xf]
      %v311 = vld [vmem:[%s238 + $0x30] sm:$0xf]
      %v312 = vld [vmem:[%s238 + $0x34] sm:$0xf]
      %v313 = vld [vmem:[%s238 + $0x38] sm:$0xf]
      %v314 = vld [vmem:[%s238 + $0x3c] sm:$0xf]
      %v331 = vunpack.c.l.b16 %v283
      %v332 = vunpack.c.l.b16 %v284
      %v333 = vunpack.c.l.b16 %v285
      %v334 = vunpack.c.l.b16 %v286
      %v335 = vunpack.c.l.b16 %v287
      %v336 = vunpack.c.l.b16 %v288
      %v337 = vunpack.c.l.b16 %v289
      %v338 = vunpack.c.l.b16 %v290
      %v339 = vunpack.c.l.b16 %v291
      %v340 = vunpack.c.l.b16 %v292
      %v341 = vunpack.c.l.b16 %v293
      %v342 = vunpack.c.l.b16 %v294
      %v343 = vunpack.c.l.b16 %v295
      %v344 = vunpack.c.l.b16 %v296
      %v345 = vunpack.c.l.b16 %v297
      %v346 = vunpack.c.l.b16 %v298
      %v347 = vpack.c.b16 %v332, %v331
      %v348 = vpack.c.b16 %v334, %v333
      %v349 = vpack.c.b16 %v336, %v335
      %v350 = vpack.c.b16 %v338, %v337
      %v351 = vpack.c.b16 %v340, %v339
      %v352 = vpack.c.b16 %v342, %v341
      %v353 = vpack.c.b16 %v344, %v343
      %v354 = vpack.c.b16 %v346, %v345
      %v379 = vunpack.c.l.b16 %v299
      %v380 = vunpack.c.l.b16 %v300
      %v381 = vunpack.c.l.b16 %v301
      %v382 = vunpack.c.l.b16 %v302
      %v383 = vunpack.c.l.b16 %v303
      %v384 = vunpack.c.l.b16 %v304
      %v385 = vunpack.c.l.b16 %v305
      %v386 = vunpack.c.l.b16 %v306
      %v387 = vunpack.c.l.b16 %v307
      %v388 = vunpack.c.l.b16 %v308
      %v389 = vunpack.c.l.b16 %v309
      %v390 = vunpack.c.l.b16 %v310
      %v391 = vunpack.c.l.b16 %v311
      %v392 = vunpack.c.l.b16 %v312
      %v393 = vunpack.c.l.b16 %v313
      %v394 = vunpack.c.l.b16 %v314
      %v395 = vpack.c.b16 %v380, %v379
      %v396 = vpack.c.b16 %v382, %v381
      %v397 = vpack.c.b16 %v384, %v383
      %v398 = vpack.c.b16 %v386, %v385
      %v399 = vpack.c.b16 %v388, %v387
      %v400 = vpack.c.b16 %v390, %v389
      %v401 = vpack.c.b16 %v392, %v391
      %v402 = vpack.c.b16 %v394, %v393
      %411 = vmatprep.subr.bf16.mxu0 0
      %412 = vmatpush1.bf16.msra.mxu0 %v395
      %413 = vmatprep.subr.bf16.mxu0 0
      %414 = vmatpush1.bf16.msra.mxu0 %v396
      %415 = vmatprep.subr.bf16.mxu0 0
      %416 = vmatpush1.bf16.msra.mxu0 %v397
      %417 = vmatprep.subr.bf16.mxu0 0
      %418 = vmatpush1.bf16.msra.mxu0 %v398
      %419 = vmatprep.subr.bf16.mxu0 0
      %420 = vmatpush1.bf16.msra.mxu0 %v399
      %421 = vmatprep.subr.bf16.mxu0 0
      %422 = vmatpush1.bf16.msra.mxu0 %v400
      %423 = vmatprep.subr.bf16.mxu0 0
      %424 = vmatpush1.bf16.msra.mxu0 %v401
      %425 = vmatprep.subr.bf16.mxu0 0
      %426 = vmatpush1.bf16.msra.mxu0 %v402
      %427 = vmatprep.subr.bf16.mxu0 0
      %428 = vmatpush1.bf16.msra.mxu0 0
      %429 = vmatprep.subr.bf16.mxu0 0
      %430 = vmatpush1.bf16.msra.mxu0 0
      %431 = vmatprep.subr.bf16.mxu0 0
      %432 = vmatpush1.bf16.msra.mxu0 0
      %433 = vmatprep.subr.bf16.mxu0 0
      %434 = vmatpush1.bf16.msra.mxu0 0
      %435 = vmatprep.subr.bf16.mxu0 0
      %436 = vmatpush1.bf16.msra.mxu0 0
      %437 = vmatprep.subr.bf16.mxu0 0
      %438 = vmatpush1.bf16.msra.mxu0 0
      %439 = vmatprep.subr.bf16.mxu0 0
      %440 = vmatpush1.bf16.msra.mxu0 0
      %441 = vmatprep.subr.bf16.mxu0 0
      %442 = vmatpush1.bf16.msra.mxu0 0
      %443 = vmatprep.mubr.bf16.mxu0 0
      %444 = vmatmul.mubr.bf16.gmra.mrb[0].mxu0 %v347
      %v445 = vpop.f32.mrb[0].mxu0
      %v446 = vadd.f32 0.0, %v445
      %v447 = vpop.f32.mrb[0].mxu0
      %v448 = vpop.f32.mrb[0].mxu0
      %v449 = vadd.f32 0.0, %v448
      %v450 = vpop.f32.mrb[0].mxu0
      %451 = vmatprep.mubr.bf16.mxu0 0
      %452 = vmatmul.mubr.bf16.gmra.mrb[0].mxu0 %v348
      %v453 = vpop.f32.mrb[0].mxu0
      %v454 = vadd.f32 0.0, %v453
      %v455 = vpop.f32.mrb[0].mxu0
      %v456 = vpop.f32.mrb[0].mxu0
      %v457 = vadd.f32 0.0, %v456
      %v458 = vpop.f32.mrb[0].mxu0
      %459 = vmatprep.mubr.bf16.mxu0 0
      %460 = vmatmul.mubr.bf16.gmra.mrb[0].mxu0 %v349
      %v461 = vpop.f32.mrb[0].mxu0
      %v462 = vadd.f32 0.0, %v461
      %v463 = vpop.f32.mrb[0].mxu0
      %v464 = vpop.f32.mrb[0].mxu0
      %v465 = vadd.f32 0.0, %v464
      %v466 = vpop.f32.mrb[0].mxu0
      %467 = vmatprep.mubr.bf16.mxu0 0
      %468 = vmatmul.mubr.bf16.gmra.mrb[0].mxu0 %v350
      %v469 = vpop.f32.mrb[0].mxu0
      %v470 = vadd.f32 0.0, %v469
      %v471 = vpop.f32.mrb[0].mxu0
      %v472 = vpop.f32.mrb[0].mxu0
      %v473 = vadd.f32 0.0, %v472
      %v474 = vpop.f32.mrb[0].mxu0
      %475 = vmatprep.mubr.bf16.mxu0 0
      %476 = vmatmul.mubr.bf16.gmra.mrb[0].mxu0 %v351
      %v477 = vpop.f32.mrb[0].mxu0
      %v478 = vadd.f32 0.0, %v477
      %v479 = vpop.f32.mrb[0].mxu0
      %v480 = vpop.f32.mrb[0].mxu0
      %v481 = vadd.f32 0.0, %v480
      %v482 = vpop.f32.mrb[0].mxu0
      %483 = vmatprep.mubr.bf16.mxu0 0
      %484 = vmatmul.mubr.bf16.gmra.mrb[0].mxu0 %v352
      %v485 = vpop.f32.mrb[0].mxu0
      %v486 = vadd.f32 0.0, %v485
      %v487 = vpop.f32.mrb[0].mxu0
      %v488 = vpop.f32.mrb[0].mxu0
      %v489 = vadd.f32 0.0, %v488
      %v490 = vpop.f32.mrb[0].mxu0
      %491 = vmatprep.mubr.bf16.mxu0 0
      %492 = vmatmul.mubr.bf16.gmra.mrb[0].mxu0 %v353
      %v493 = vpop.f32.mrb[0].mxu0
      %v494 = vadd.f32 0.0, %v493
      %v495 = vpop.f32.mrb[0].mxu0
      %v496 = vpop.f32.mrb[0].mxu0
      %v497 = vadd.f32 0.0, %v496
      %v498 = vpop.f32.mrb[0].mxu0
      %499 = vmatprep.mubr.bf16.mxu0 0
      %500 = vmatmul.mubr.bf16.gmra.mrb[0].mxu0 %v354
      %v501 = vpop.f32.mrb[0].mxu0
      %v502 = vadd.f32 0.0, %v501
      %v503 = vpop.f32.mrb[0].mxu0
      %v504 = vpop.f32.mrb[0].mxu0
      %v505 = vadd.f32 0.0, %v504
      %v506 = vpop.f32.mrb[0].mxu0
      %507 = vdwg.mxu0
      %v508 = vadd.f32 %v267, %v446
      %v509 = vadd.f32 %v268, %v449
      %v510 = vadd.f32 %v269, %v454
      %v511 = vadd.f32 %v270, %v457
      %v512 = vadd.f32 %v271, %v462
      %v513 = vadd.f32 %v272, %v465
      %v514 = vadd.f32 %v273, %v470
      %v515 = vadd.f32 %v274, %v473
      %v516 = vadd.f32 %v275, %v478
      %v517 = vadd.f32 %v276, %v481
      %v518 = vadd.f32 %v277, %v486
      %v519 = vadd.f32 %v278, %v489
      %v520 = vadd.f32 %v279, %v494
      %v521 = vadd.f32 %v280, %v497
      %v522 = vadd.f32 %v281, %v502
      %v523 = vadd.f32 %v282, %v505
      %524 = vst [vmem:[#allocation2] sm:$0xff] %v508
      %525 = vst [vmem:[#allocation2 + $0x8] sm:$0xff] %v509
      %526 = vst [vmem:[#allocation2 + $0x10] sm:$0xff] %v510
      %527 = vst [vmem:[#allocation2 + $0x18] sm:$0xff] %v511
      %528 = vst [vmem:[#allocation2 + $0x20] sm:$0xff] %v512
      %529 = vst [vmem:[#allocation2 + $0x28] sm:$0xff] %v513
      %530 = vst [vmem:[#allocation2 + $0x30] sm:$0xff] %v514
      %531 = vst [vmem:[#allocation2 + $0x38] sm:$0xff] %v515
      %532 = vst [vmem:[#allocation2 + $0x40] sm:$0xff] %v516
      %533 = vst [vmem:[#allocation2 + $0x48] sm:$0xff] %v517
      %534 = vst [vmem:[#allocation2 + $0x50] sm:$0xff] %v518
      %535 = vst [vmem:[#allocation2 + $0x58] sm:$0xff] %v519
      %536 = vst [vmem:[#allocation2 + $0x60] sm:$0xff] %v520
      %537 = vst [vmem:[#allocation2 + $0x68] sm:$0xff] %v521
      %538 = vst [vmem:[#allocation2 + $0x70] sm:$0xff] %v522
      %539 = vst [vmem:[#allocation2 + $0x78] sm:$0xff] %v523
      // Predicated region
      $region41: #{cnn_forward.3} parent=35 // pred_check
        %p540 = pneg %p247
      $region42: #{cnn_forward.3} parent=35 // pred_check_branch
        %542 = sbr.rel (%p540) target = $region44
      $region43: #{cnn_forward.3} parent=35 // pred_region
        %v543 = vld [vmem:[#allocation2] sm:$0xff]
        %v544 = vld [vmem:[#allocation2 + $0x8] sm:$0xff]
        %v545 = vld [vmem:[#allocation2 + $0x10] sm:$0xff]
        %v546 = vld [vmem:[#allocation2 + $0x18] sm:$0xff]
        %v547 = vld [vmem:[#allocation2 + $0x20] sm:$0xff]
        %v548 = vld [vmem:[#allocation2 + $0x28] sm:$0xff]
        %v549 = vld [vmem:[#allocation2 + $0x30] sm:$0xff]
        %v550 = vld [vmem:[#allocation2 + $0x38] sm:$0xff]
        %v551 = vld [vmem:[#allocation2 + $0x40] sm:$0xff]
        %v552 = vld [vmem:[#allocation2 + $0x48] sm:$0xff]
        %v553 = vld [vmem:[#allocation2 + $0x50] sm:$0xff]
        %v554 = vld [vmem:[#allocation2 + $0x58] sm:$0xff]
        %v555 = vld [vmem:[#allocation2 + $0x60] sm:$0xff]
        %v556 = vld [vmem:[#allocation2 + $0x68] sm:$0xff]
        %v557 = vld [vmem:[#allocation2 + $0x70] sm:$0xff]
        %v558 = vld [vmem:[#allocation2 + $0x78] sm:$0xff]
        %v559 = vmul.f32 %v543, %v543
        %v560 = vmul.f32 %v544, %v544
        %v561 = vmul.f32 %v545, %v545
        %v562 = vmul.f32 %v546, %v546
        %v563 = vmul.f32 %v547, %v547
        %v564 = vmul.f32 %v548, %v548
        %v565 = vmul.f32 %v549, %v549
        %v566 = vmul.f32 %v550, %v550
        %v567 = vmul.f32 %v551, %v551
        %v568 = vmul.f32 %v552, %v552
        %v569 = vmul.f32 %v553, %v553
        %v570 = vmul.f32 %v554, %v554
        %v571 = vmul.f32 %v555, %v555
        %v572 = vmul.f32 %v556, %v556
        %v573 = vmul.f32 %v557, %v557
        %v574 = vmul.f32 %v558, %v558
        %v575 = vld [vmem:[%s2] sm:$0xff]
        %v576 = vld [vmem:[%s2 + $0x8] sm:$0xff]
        %v577 = vld [vmem:[%s2 + $0x10] sm:$0xff]
        %v578 = vld [vmem:[%s2 + $0x18] sm:$0xff]
        %v579 = vld [vmem:[%s2 + $0x20] sm:$0xff]
        %v580 = vld [vmem:[%s2 + $0x28] sm:$0xff]
        %v581 = vld [vmem:[%s2 + $0x30] sm:$0xff]
        %v582 = vld [vmem:[%s2 + $0x38] sm:$0xff]
        %v583 = vld [vmem:[%s2 + $0x40] sm:$0xff]
        %v584 = vld [vmem:[%s2 + $0x48] sm:$0xff]
        %v585 = vld [vmem:[%s2 + $0x50] sm:$0xff]
        %v586 = vld [vmem:[%s2 + $0x58] sm:$0xff]
        %v587 = vld [vmem:[%s2 + $0x60] sm:$0xff]
        %v588 = vld [vmem:[%s2 + $0x68] sm:$0xff]
        %v589 = vld [vmem:[%s2 + $0x70] sm:$0xff]
        %v590 = vld [vmem:[%s2 + $0x78] sm:$0xff]
        %591 = vmatprep.subr.mxu0 0.0
        %592 = vmatpush1.msra.mxu0 %v575
        %593 = vmatprep.subr.mxu0 0.0
        %594 = vmatpush1.msra.mxu0 %v576
        %595 = vmatprep.subr.mxu0 0.0
        %596 = vmatpush1.msra.mxu0 %v577
        %597 = vmatprep.subr.mxu0 0.0
        %598 = vmatpush1.msra.mxu0 %v578
        %599 = vmatprep.subr.mxu0 0.0
        %600 = vmatpush1.msra.mxu0 %v579
        %601 = vmatprep.subr.mxu0 0.0
        %602 = vmatpush1.msra.mxu0 %v580
        %603 = vmatprep.subr.mxu0 0.0
        %604 = vmatpush1.msra.mxu0 %v581
        %605 = vmatprep.subr.mxu0 0.0
        %606 = vmatpush1.msra.mxu0 %v582
        %607 = vmatprep.subr.mxu0 0.0
        %608 = vmatpush1.msra.mxu0 %v583
        %609 = vmatprep.subr.mxu0 0.0
        %610 = vmatpush1.msra.mxu0 %v584
        %611 = vmatprep.subr.mxu0 0.0
        %612 = vmatpush1.msra.mxu0 %v585
        %613 = vmatprep.subr.mxu0 0.0
        %614 = vmatpush1.msra.mxu0 %v586
        %615 = vmatprep.subr.mxu0 0.0
        %616 = vmatpush1.msra.mxu0 %v587
        %617 = vmatprep.subr.mxu0 0.0
        %618 = vmatpush1.msra.mxu0 %v588
        %619 = vmatprep.subr.mxu0 0.0
        %620 = vmatpush1.msra.mxu0 %v589
        %621 = vmatprep.subr.mxu0 0.0
        %622 = vmatpush1.msra.mxu0 %v590
        %623 = vmatprep.subr.mxu0 0.0
        %624 = vmatpush1.msra.mxu0 0.0
        %625 = vmatprep.subr.mxu0 0.0
        %626 = vmatpush1.msra.mxu0 0.0
        %627 = vmatprep.subr.mxu0 0.0
        %628 = vmatpush1.msra.mxu0 0.0
        %629 = vmatprep.subr.mxu0 0.0
        %630 = vmatpush1.msra.mxu0 0.0
        %631 = vmatprep.subr.mxu0 0.0
        %632 = vmatpush1.msra.mxu0 0.0
        %633 = vmatprep.subr.mxu0 0.0
        %634 = vmatpush1.msra.mxu0 0.0
        %635 = vmatprep.subr.mxu0 0.0
        %636 = vmatpush1.msra.mxu0 0.0
        %637 = vmatprep.subr.mxu0 0.0
        %638 = vmatpush1.msra.mxu0 0.0
        %639 = vmatprep.subr.mxu0 0.0
        %640 = vmatpush1.msra.mxu0 0.0
        %641 = vmatprep.subr.mxu0 0.0
        %642 = vmatpush1.msra.mxu0 0.0
        %643 = vmatprep.subr.mxu0 0.0
        %644 = vmatpush1.msra.mxu0 0.0
        %645 = vmatprep.subr.mxu0 0.0
        %646 = vmatpush1.msra.mxu0 0.0
        %647 = vmatprep.subr.mxu0 0.0
        %648 = vmatpush1.msra.mxu0 0.0
        %649 = vmatprep.subr.mxu0 0.0
        %650 = vmatpush1.msra.mxu0 0.0
        %651 = vmatprep.subr.mxu0 0.0
        %652 = vmatpush1.msra.mxu0 0.0
        %653 = vmatprep.subr.mxu0 0.0
        %654 = vmatpush1.msra.mxu0 0.0
        %655 = vmatprep.mubr.f32.mxu0 0.0
        %656 = vmatmul.mubr.f32.gmra.mrb[0].mxu0 %v559
        %v657 = vpop.f32.mrb[0].mxu0
        %v658 = vadd.f32 0.0, %v657
        %v659 = vpop.f32.mrb[0].mxu0
        %660 = vmatprep.mubr.f32.mxu0 0.0
        %661 = vmatmul.mubr.f32.gmra.mrb[0].mxu0 %v560
        %v662 = vpop.f32.mrb[0].mxu0
        %v663 = vadd.f32 0.0, %v662
        %v664 = vpop.f32.mrb[0].mxu0
        %665 = vmatprep.mubr.f32.mxu0 0.0
        %666 = vmatmul.mubr.f32.gmra.mrb[0].mxu0 %v561
        %v667 = vpop.f32.mrb[0].mxu0
        %v668 = vadd.f32 0.0, %v667
        %v669 = vpop.f32.mrb[0].mxu0
        %670 = vmatprep.mubr.f32.mxu0 0.0
        %671 = vmatmul.mubr.f32.gmra.mrb[0].mxu0 %v562
        %v672 = vpop.f32.mrb[0].mxu0
        %v673 = vadd.f32 0.0, %v672
        %v674 = vpop.f32.mrb[0].mxu0
        %675 = vmatprep.mubr.f32.mxu0 0.0
        %676 = vmatmul.mubr.f32.gmra.mrb[0].mxu0 %v563
        %v677 = vpop.f32.mrb[0].mxu0
        %v678 = vadd.f32 0.0, %v677
        %v679 = vpop.f32.mrb[0].mxu0
        %680 = vmatprep.mubr.f32.mxu0 0.0
        %681 = vmatmul.mubr.f32.gmra.mrb[0].mxu0 %v564
        %v682 = vpop.f32.mrb[0].mxu0
        %v683 = vadd.f32 0.0, %v682
        %v684 = vpop.f32.mrb[0].mxu0
        %685 = vmatprep.mubr.f32.mxu0 0.0
        %686 = vmatmul.mubr.f32.gmra.mrb[0].mxu0 %v565
        %v687 = vpop.f32.mrb[0].mxu0
        %v688 = vadd.f32 0.0, %v687
        %v689 = vpop.f32.mrb[0].mxu0
        %690 = vmatprep.mubr.f32.mxu0 0.0
        %691 = vmatmul.mubr.f32.gmra.mrb[0].mxu0 %v566
        %v692 = vpop.f32.mrb[0].mxu0
        %v693 = vadd.f32 0.0, %v692
        %v694 = vpop.f32.mrb[0].mxu0
        %695 = vmatprep.mubr.f32.mxu0 0.0
        %696 = vmatmul.mubr.f32.gmra.mrb[0].mxu0 %v567
        %v697 = vpop.f32.mrb[0].mxu0
        %v698 = vadd.f32 0.0, %v697
        %v699 = vpop.f32.mrb[0].mxu0
        %700 = vmatprep.mubr.f32.mxu0 0.0
        %701 = vmatmul.mubr.f32.gmra.mrb[0].mxu0 %v568
        %v702 = vpop.f32.mrb[0].mxu0
        %v703 = vadd.f32 0.0, %v702
        %v704 = vpop.f32.mrb[0].mxu0
        %705 = vmatprep.mubr.f32.mxu0 0.0
        %706 = vmatmul.mubr.f32.gmra.mrb[0].mxu0 %v569
        %v707 = vpop.f32.mrb[0].mxu0
        %v708 = vadd.f32 0.0, %v707
        %v709 = vpop.f32.mrb[0].mxu0
        %710 = vmatprep.mubr.f32.mxu0 0.0
        %711 = vmatmul.mubr.f32.gmra.mrb[0].mxu0 %v570
        %v712 = vpop.f32.mrb[0].mxu0
        %v713 = vadd.f32 0.0, %v712
        %v714 = vpop.f32.mrb[0].mxu0
        %715 = vmatprep.mubr.f32.mxu0 0.0
        %716 = vmatmul.mubr.f32.gmra.mrb[0].mxu0 %v571
        %v717 = vpop.f32.mrb[0].mxu0
        %v718 = vadd.f32 0.0, %v717
        %v719 = vpop.f32.mrb[0].mxu0
        %720 = vmatprep.mubr.f32.mxu0 0.0
        %721 = vmatmul.mubr.f32.gmra.mrb[0].mxu0 %v572
        %v722 = vpop.f32.mrb[0].mxu0
        %v723 = vadd.f32 0.0, %v722
        %v724 = vpop.f32.mrb[0].mxu0
        %725 = vmatprep.mubr.f32.mxu0 0.0
        %726 = vmatmul.mubr.f32.gmra.mrb[0].mxu0 %v573
        %v727 = vpop.f32.mrb[0].mxu0
        %v728 = vadd.f32 0.0, %v727
        %v729 = vpop.f32.mrb[0].mxu0
        %730 = vmatprep.mubr.f32.mxu0 0.0
        %731 = vmatmul.mubr.f32.gmra.mrb[0].mxu0 %v574
        %v732 = vpop.f32.mrb[0].mxu0
        %v733 = vadd.f32 0.0, %v732
        %v734 = vpop.f32.mrb[0].mxu0
        %735 = vdwg.mxu0
        %v736 = vrsqrt.pop %v658
        %v737 = vmul.f32 %v658, %v736
        %vm738 = vcmp.eq.f32.partialorder %v658, inf
        %v739 = vsel %vm738, %v658, %v737
        %vm740 = vcmp.eq.f32.partialorder %v658, 0.0
        %v741 = vand.u32 %v658, 2147483648
        %v742 = vsel %vm740, %v741, %v739
        %v743 = vrsqrt.pop %v663
        %v744 = vmul.f32 %v663, %v743
        %vm745 = vcmp.eq.f32.partialorder %v663, inf
        %v746 = vsel %vm745, %v663, %v744
        %vm747 = vcmp.eq.f32.partialorder %v663, 0.0
        %v748 = vand.u32 %v663, 2147483648
        %v749 = vsel %vm747, %v748, %v746
        %v750 = vrsqrt.pop %v668
        %v751 = vmul.f32 %v668, %v750
        %vm752 = vcmp.eq.f32.partialorder %v668, inf
        %v753 = vsel %vm752, %v668, %v751
        %vm754 = vcmp.eq.f32.partialorder %v668, 0.0
        %v755 = vand.u32 %v668, 2147483648
        %v756 = vsel %vm754, %v755, %v753
        %v757 = vrsqrt.pop %v673
        %v758 = vmul.f32 %v673, %v757
        %vm759 = vcmp.eq.f32.partialorder %v673, inf
        %v760 = vsel %vm759, %v673, %v758
        %vm761 = vcmp.eq.f32.partialorder %v673, 0.0
        %v762 = vand.u32 %v673, 2147483648
        %v763 = vsel %vm761, %v762, %v760
        %v764 = vrsqrt.pop %v678
        %v765 = vmul.f32 %v678, %v764
        %vm766 = vcmp.eq.f32.partialorder %v678, inf
        %v767 = vsel %vm766, %v678, %v765
        %vm768 = vcmp.eq.f32.partialorder %v678, 0.0
        %v769 = vand.u32 %v678, 2147483648
        %v770 = vsel %vm768, %v769, %v767
        %v771 = vrsqrt.pop %v683
        %v772 = vmul.f32 %v683, %v771
        %vm773 = vcmp.eq.f32.partialorder %v683, inf
        %v774 = vsel %vm773, %v683, %v772
        %vm775 = vcmp.eq.f32.partialorder %v683, 0.0
        %v776 = vand.u32 %v683, 2147483648
        %v777 = vsel %vm775, %v776, %v774
        %v778 = vrsqrt.pop %v688
        %v779 = vmul.f32 %v688, %v778
        %vm780 = vcmp.eq.f32.partialorder %v688, inf
        %v781 = vsel %vm780, %v688, %v779
        %vm782 = vcmp.eq.f32.partialorder %v688, 0.0
        %v783 = vand.u32 %v688, 2147483648
        %v784 = vsel %vm782, %v783, %v781
        %v785 = vrsqrt.pop %v693
        %v786 = vmul.f32 %v693, %v785
        %vm787 = vcmp.eq.f32.partialorder %v693, inf
        %v788 = vsel %vm787, %v693, %v786
        %vm789 = vcmp.eq.f32.partialorder %v693, 0.0
        %v790 = vand.u32 %v693, 2147483648
        %v791 = vsel %vm789, %v790, %v788
        %v792 = vrsqrt.pop %v698
        %v793 = vmul.f32 %v698, %v792
        %vm794 = vcmp.eq.f32.partialorder %v698, inf
        %v795 = vsel %vm794, %v698, %v793
        %vm796 = vcmp.eq.f32.partialorder %v698, 0.0
        %v797 = vand.u32 %v698, 2147483648
        %v798 = vsel %vm796, %v797, %v795
        %v799 = vrsqrt.pop %v703
        %v800 = vmul.f32 %v703, %v799
        %vm801 = vcmp.eq.f32.partialorder %v703, inf
        %v802 = vsel %vm801, %v703, %v800
        %vm803 = vcmp.eq.f32.partialorder %v703, 0.0
        %v804 = vand.u32 %v703, 2147483648
        %v805 = vsel %vm803, %v804, %v802
        %v806 = vrsqrt.pop %v708
        %v807 = vmul.f32 %v708, %v806
        %vm808 = vcmp.eq.f32.partialorder %v708, inf
        %v809 = vsel %vm808, %v708, %v807
        %vm810 = vcmp.eq.f32.partialorder %v708, 0.0
        %v811 = vand.u32 %v708, 2147483648
        %v812 = vsel %vm810, %v811, %v809
        %v813 = vrsqrt.pop %v713
        %v814 = vmul.f32 %v713, %v813
        %vm815 = vcmp.eq.f32.partialorder %v713, inf
        %v816 = vsel %vm815, %v713, %v814
        %vm817 = vcmp.eq.f32.partialorder %v713, 0.0
        %v818 = vand.u32 %v713, 2147483648
        %v819 = vsel %vm817, %v818, %v816
        %v820 = vrsqrt.pop %v718
        %v821 = vmul.f32 %v718, %v820
        %vm822 = vcmp.eq.f32.partialorder %v718, inf
        %v823 = vsel %vm822, %v718, %v821
        %vm824 = vcmp.eq.f32.partialorder %v718, 0.0
        %v825 = vand.u32 %v718, 2147483648
        %v826 = vsel %vm824, %v825, %v823
        %v827 = vrsqrt.pop %v723
        %v828 = vmul.f32 %v723, %v827
        %vm829 = vcmp.eq.f32.partialorder %v723, inf
        %v830 = vsel %vm829, %v723, %v828
        %vm831 = vcmp.eq.f32.partialorder %v723, 0.0
        %v832 = vand.u32 %v723, 2147483648
        %v833 = vsel %vm831, %v832, %v830
        %v834 = vrsqrt.pop %v728
        %v835 = vmul.f32 %v728, %v834
        %vm836 = vcmp.eq.f32.partialorder %v728, inf
        %v837 = vsel %vm836, %v728, %v835
        %vm838 = vcmp.eq.f32.partialorder %v728, 0.0
        %v839 = vand.u32 %v728, 2147483648
        %v840 = vsel %vm838, %v839, %v837
        %v841 = vrsqrt.pop %v733
        %v842 = vmul.f32 %v733, %v841
        %vm843 = vcmp.eq.f32.partialorder %v733, inf
        %v844 = vsel %vm843, %v733, %v842
        %vm845 = vcmp.eq.f32.partialorder %v733, 0.0
        %v846 = vand.u32 %v733, 2147483648
        %v847 = vsel %vm845, %v846, %v844
        %v848 = vld [vmem:[%s3] sm:$0x1]
        %v850 = vlaneseq
        %v851 = vshrl.u32 %v850, 7
        %v852 = vsub.s32 0, %v851
        %v853 = vrot.slane %v848, %v852
        %v855 = vadd.f32 %v742, %v853
        %v856 = vadd.f32 %v749, %v853
        %v857 = vadd.f32 %v756, %v853
        %v858 = vadd.f32 %v763, %v853
        %v859 = vadd.f32 %v770, %v853
        %v860 = vadd.f32 %v777, %v853
        %v861 = vadd.f32 %v784, %v853
        %v862 = vadd.f32 %v791, %v853
        %v863 = vadd.f32 %v798, %v853
        %v864 = vadd.f32 %v805, %v853
        %v865 = vadd.f32 %v812, %v853
        %v866 = vadd.f32 %v819, %v853
        %v867 = vadd.f32 %v826, %v853
        %v868 = vadd.f32 %v833, %v853
        %v869 = vadd.f32 %v840, %v853
        %v870 = vadd.f32 %v847, %v853
        %v871 = vmax.f32 %v855, 0.0
        %v872 = vmax.f32 %v856, 0.0
        %v873 = vmax.f32 %v857, 0.0
        %v874 = vmax.f32 %v858, 0.0
        %v875 = vmax.f32 %v859, 0.0
        %v876 = vmax.f32 %v860, 0.0
        %v877 = vmax.f32 %v861, 0.0
        %v878 = vmax.f32 %v862, 0.0
        %v879 = vmax.f32 %v863, 0.0
        %v880 = vmax.f32 %v864, 0.0
        %v881 = vmax.f32 %v865, 0.0
        %v882 = vmax.f32 %v866, 0.0
        %v883 = vmax.f32 %v867, 0.0
        %v884 = vmax.f32 %v868, 0.0
        %v885 = vmax.f32 %v869, 0.0
        %v886 = vmax.f32 %v870, 0.0
        %v887 = vadd.f32 %v658, 1e-12
        %v888 = vadd.f32 %v663, 1e-12
        %v889 = vadd.f32 %v668, 1e-12
        %v890 = vadd.f32 %v673, 1e-12
        %v891 = vadd.f32 %v678, 1e-12
        %v892 = vadd.f32 %v683, 1e-12
        %v893 = vadd.f32 %v688, 1e-12
        %v894 = vadd.f32 %v693, 1e-12
        %v895 = vadd.f32 %v698, 1e-12
        %v896 = vadd.f32 %v703, 1e-12
        %v897 = vadd.f32 %v708, 1e-12
        %v898 = vadd.f32 %v713, 1e-12
        %v899 = vadd.f32 %v718, 1e-12
        %v900 = vadd.f32 %v723, 1e-12
        %v901 = vadd.f32 %v728, 1e-12
        %v902 = vadd.f32 %v733, 1e-12
        %v903 = vrsqrt.pop %v887
        %v904 = vrsqrt.pop %v888
        %v905 = vrsqrt.pop %v889
        %v906 = vrsqrt.pop %v890
        %v907 = vrsqrt.pop %v891
        %v908 = vrsqrt.pop %v892
        %v909 = vrsqrt.pop %v893
        %v910 = vrsqrt.pop %v894
        %v911 = vrsqrt.pop %v895
        %v912 = vrsqrt.pop %v896
        %v913 = vrsqrt.pop %v897
        %v914 = vrsqrt.pop %v898
        %v915 = vrsqrt.pop %v899
        %v916 = vrsqrt.pop %v900
        %v917 = vrsqrt.pop %v901
        %v918 = vrsqrt.pop %v902
        %v919 = vmul.f32 %v871, %v903
        %v920 = vmul.f32 %v872, %v904
        %v921 = vmul.f32 %v873, %v905
        %v922 = vmul.f32 %v874, %v906
        %v923 = vmul.f32 %v875, %v907
        %v924 = vmul.f32 %v876, %v908
        %v925 = vmul.f32 %v877, %v909
        %v926 = vmul.f32 %v878, %v910
        %v927 = vmul.f32 %v879, %v911
        %v928 = vmul.f32 %v880, %v912
        %v929 = vmul.f32 %v881, %v913
        %v930 = vmul.f32 %v882, %v914
        %v931 = vmul.f32 %v883, %v915
        %v932 = vmul.f32 %v884, %v916
        %v933 = vmul.f32 %v885, %v917
        %v934 = vmul.f32 %v886, %v918
        %v935 = vmul.f32 %v543, %v919
        %v936 = vmul.f32 %v544, %v920
        %v937 = vmul.f32 %v545, %v921
        %v938 = vmul.f32 %v546, %v922
        %v939 = vmul.f32 %v547, %v923
        %v940 = vmul.f32 %v548, %v924
        %v941 = vmul.f32 %v549, %v925
        %v942 = vmul.f32 %v550, %v926
        %v943 = vmul.f32 %v551, %v927
        %v944 = vmul.f32 %v552, %v928
        %v945 = vmul.f32 %v553, %v929
        %v946 = vmul.f32 %v554, %v930
        %v947 = vmul.f32 %v555, %v931
        %v948 = vmul.f32 %v556, %v932
        %v949 = vmul.f32 %v557, %v933
        %v950 = vmul.f32 %v558, %v934
        %v951 = vpack.c.bf16 %v936, %v935
        %v952 = vpack.c.bf16 %v938, %v937
        %v953 = vpack.c.bf16 %v940, %v939
        %v954 = vpack.c.bf16 %v942, %v941
        %v955 = vpack.c.bf16 %v944, %v943
        %v956 = vpack.c.bf16 %v946, %v945
        %v957 = vpack.c.bf16 %v948, %v947
        %v958 = vpack.c.bf16 %v950, %v949
        %v967 = vunpack.c.l.b16 %v951
        %v968 = vunpack.c.h.b16 %v951
        %v969 = vunpack.c.l.b16 %v952
        %v970 = vunpack.c.h.b16 %v952
        %v971 = vunpack.c.l.b16 %v953
        %v972 = vunpack.c.h.b16 %v953
        %v973 = vunpack.c.l.b16 %v954
        %v974 = vunpack.c.h.b16 %v954
        %v975 = vunpack.c.l.b16 %v955
        %v976 = vunpack.c.h.b16 %v955
        %v977 = vunpack.c.l.b16 %v956
        %v978 = vunpack.c.h.b16 %v956
        %v979 = vunpack.c.l.b16 %v957
        %v980 = vunpack.c.h.b16 %v957
        %v981 = vunpack.c.l.b16 %v958
        %v982 = vunpack.c.h.b16 %v958
        %v983 = vpack.c.b16 %v967, %v967
        %v984 = vpack.c.b16 %v968, %v968
        %v985 = vpack.c.b16 %v969, %v969
        %v986 = vpack.c.b16 %v970, %v970
        %v987 = vpack.c.b16 %v971, %v971
        %v988 = vpack.c.b16 %v972, %v972
        %v989 = vpack.c.b16 %v973, %v973
        %v990 = vpack.c.b16 %v974, %v974
        %v991 = vpack.c.b16 %v975, %v975
        %v992 = vpack.c.b16 %v976, %v976
        %v993 = vpack.c.b16 %v977, %v977
        %v994 = vpack.c.b16 %v978, %v978
        %v995 = vpack.c.b16 %v979, %v979
        %v996 = vpack.c.b16 %v980, %v980
        %v997 = vpack.c.b16 %v981, %v981
        %v998 = vpack.c.b16 %v982, %v982
        %1015 = vst [vmem:[%s244] sm:$0xf] %v983
        %1016 = vst [vmem:[%s244 + $0x4] sm:$0xf] %v984
        %1017 = vst [vmem:[%s244 + $0x8] sm:$0xf] %v985
        %1018 = vst [vmem:[%s244 + $0xc] sm:$0xf] %v986
        %1019 = vst [vmem:[%s244 + $0x10] sm:$0xf] %v987
        %1020 = vst [vmem:[%s244 + $0x14] sm:$0xf] %v988
        %1021 = vst [vmem:[%s244 + $0x18] sm:$0xf] %v989
        %1022 = vst [vmem:[%s244 + $0x1c] sm:$0xf] %v990
        %1023 = vst [vmem:[%s244 + $0x20] sm:$0xf] %v991
        %1024 = vst [vmem:[%s244 + $0x24] sm:$0xf] %v992
        %1025 = vst [vmem:[%s244 + $0x28] sm:$0xf] %v993
        %1026 = vst [vmem:[%s244 + $0x2c] sm:$0xf] %v994
        %1027 = vst [vmem:[%s244 + $0x30] sm:$0xf] %v995
        %1028 = vst [vmem:[%s244 + $0x34] sm:$0xf] %v996
        %1029 = vst [vmem:[%s244 + $0x38] sm:$0xf] %v997
        %1030 = vst [vmem:[%s244 + $0x3c] sm:$0xf] %v998
      $region44: #{cnn_forward.3} parent=35 // pred_fallthru
        _
      %s1031 = smul.u32 16, %s19
      %p1032 = scmp.lt.s32.totalorder %s1031, 31
      %s1033 = scalar_select %p1032, %s1031, 31
      %s1034 = smul.addr %s1033, 4
      %s1035 = scalar_lea.vmem %s4, %s1034
      // Predicated region
      $region45: #{cnn_forward.3} parent=35 // pred_check
        %p1036 = pneg %p141
      $region46: #{cnn_forward.3} parent=35 // pred_check_branch
        %1038 = sbr.rel (%p1036) target = $region48
      $region47: #{cnn_forward.3} parent=35 // pred_region
        %s1039 = smul.u32 16, %s19
      $region48: #{cnn_forward.3} parent=35 // pred_fallthru
        _
    $region36: #{cnn_forward.3} parent=5 // pred_fallthru
      _
    %p1040 = scmp.le.s32.totalorder 2, %s10
    // Predicated region
    $region49: #{cnn_forward.3} parent=5 // pred_check
      %p1041 = pneg %p1040
    $region50: #{cnn_forward.3} parent=5 // pred_check_branch
      %1043 = sbr.rel (%p1041) target = $region52
    $region51: #{cnn_forward.3} parent=5 // pred_region
      %s1044 = ssub.s32 %s10, 2
      // Predicated region
      $region53: #{cnn_forward.3} parent=51 // pred_check
        %p1045 = pneg %p147
      $region54: #{cnn_forward.3} parent=51 // pred_check_branch
        %1047 = sbr.rel (%p1045) target = $region56
      $region55: #{cnn_forward.3} parent=51 // pred_region
        %s1048 = smul.u32 16, %s21
        %p1049 = scmp.lt.s32.totalorder %s1048, 31
        %s1050 = scalar_select %p1049, %s1048, 31
        %s1051 = smul.addr %s1050, 4
        %s1052 = scalar_lea.vmem %s4, %s1051
      $region56: #{cnn_forward.3} parent=51 // pred_fallthru
        _
    $region52: #{cnn_forward.3} parent=5 // pred_fallthru
      _
  $region6: #{cnn_forward.3} parent=0 // loop_footer
    %s14 = sadd.s32 1, %s10
  $region7: #{cnn_forward.3} parent=0 // loop_footer_branch
    %9 = sbr.rel target = $region3
  $region8: #{cnn_forward.3} parent=0 // loop_exit
    _

// kernel: cnn_forward.4
$region0: #{cnn_forward.4}
  #allocation0 [shape = 'u32[]', space=smem, size = 0x4, offset = 0x4, fixed_abs, tag = 'smem constant byte address 0x4 - core index']
  #allocation1 [shape = 'u32[144,128]{1,0:T(1,128)}', space=vmem, size = 0x12000, scoped, tag = 'internal scratch']
  #allocation2 [shape = 'f32[128,128]{1,0:T(8,128)}', space=vmem, size = 0x10000, scoped, tag = 'scratch operand']
  %s0 = inlined_call_operand.vmem [shape: bf16[128,4096], index: 0, kind: input, shape index: {}]
  %s1 = inlined_call_operand.vmem [shape: bf16[4096,128], index: 1, kind: input, shape index: {}]
  %s2 = inlined_call_operand.vmem [shape: f32[128,128], index: 2, kind: input, shape index: {}]
  %s3 = inlined_call_operand.vmem [shape: f32[1,128], index: 3, kind: input, shape index: {}]
  %s4 = inlined_call_operand.vmem [shape: bf16[128,128], index: 4, kind: output, shape index: {}]
  %s5 = sld [smem:[#allocation0]]
  $region80: #{cnn_forward.4} parent=0
    _
  %s7 = ssub.s32 1, %s5
  %s8 = scalar_select 0, %s7, %s5
  $region1: #{cnn_forward.4} parent=0
    #allocation3 [shape = 'u8[1048576]{0}', space=vmem, size = 0x100000, scoped, tag = 'input window, operand 0']
    loop: start=0, step=1, limit=4
    $region2: #{cnn_forward.4} parent=1 // loop_pre_header
      _
    $region3: #{cnn_forward.4} parent=1 // loop_header
      %s10 = sphi 0, %s14
      %p11 = scmp.ge.s32.totalorder %s10, 4
      %s17 = sphi 0, %s29
      %s18 = sphi 0, %s25
      %s19 = sphi 0, %s17
      %s20 = sphi 0, %s18
      %s21 = sphi 0, %s19
      %s22 = sphi 0, %s20
      %s34 = sphi 0, %s36
      %s37 = sphi 0, %s34
      %s38 = sphi 0, %s37
      %s54 = sphi 0, %s38
      %s60 = sphi 0, %s62
      %s63 = sphi 0, %s60
      %s64 = sphi 0, %s63
      %s80 = sphi 0, %s64
      %s84 = sphi 0, %s84
      %s86 = sphi 0, %s84
      %s87 = sphi 0, %s86
      %s101 = sphi 0, %s87
      %s105 = sphi 0, %s105
      %s107 = sphi 0, %s105
      %s108 = sphi 0, %s107
      %s122 = sphi 0, %s108
      %s128 = sphi 0, %s130
      %s131 = sphi 0, %s128
      %s132 = sphi 0, %s131
      %s148 = sphi 0, %s132
    $region4: #{cnn_forward.4} parent=1 // loop_header_branch
      %13 = sbr.rel (%p11) target = $region8
    $region5: #{cnn_forward.4} parent=1 // loop_body
      %s15 = ssub.s32 %s10, 1
      %s16 = ssub.s32 %s10, 2
      %s23 = sadd.s32 1, %s18
      %p24 = scmp.ge.s32.totalorder %s23, 2
      %s25 = scalar_select %p24, 0, %s23
      %s26 = sadd.s32 1, %s17
      %s27 = scalar_select %p24, %s26, %s17
      %p28 = scmp.ge.s32.totalorder %s27, 1
      %s29 = scalar_select %p28, 0, %s27
      %s30 = ssub.s32 %s17, %s29
      %s31 = ssub.s32 %s18, %s25
      %s32 = sor.u32 %s30, %s31
      %p33 = scmp.eq.s32.totalorder %s32, 0
      %s35 = sadd.s32 %s34, 1
      %s36 = scalar_select %p33, %s34, %s35
      %p39 = pneg %p33
      %p40 = scmp.eq.s32.totalorder %s10, 1
      %p41 = por %p39, %p40
      %p42 = scmp.ne.s32.totalorder %s34, %s37
      %p43 = scmp.eq.s32.totalorder %s10, 0
      %p44 = por %p42, %p43
      %p45 = scmp.ne.s32.totalorder %s34, %s37
      %p46 = scmp.eq.s32.totalorder %s15, 1
      %p47 = por %p45, %p46
      %p48 = scmp.ne.s32.totalorder %s37, %s38
      %p49 = scmp.eq.s32.totalorder %s15, 0
      %p50 = por %p48, %p49
      %p51 = scmp.ne.s32.totalorder %s37, %s38
      %p52 = scmp.eq.s32.totalorder %s16, 1
      %p53 = por %p51, %p52
      %p55 = scmp.ne.s32.totalorder %s38, %s54
      %p56 = scmp.eq.s32.totalorder %s16, 0
      %p57 = por %p55, %p56
      %s58 = ssub.s32 %s18, %s25
      %p59 = scmp.eq.s32.totalorder %s58, 0
      %s61 = sadd.s32 %s60, 1
      %s62 = scalar_select %p59, %s60, %s61
      %p65 = pneg %p59
      %p66 = scmp.eq.s32.totalorder %s10, 1
      %p67 = por %p65, %p66
      %p68 = scmp.ne.s32.totalorder %s60, %s63
      %p69 = scmp.eq.s32.totalorder %s10, 0
      %p70 = por %p68, %p69
      %p71 = scmp.ne.s32.totalorder %s60, %s63
      %p72 = scmp.eq.s32.totalorder %s15, 1
      %p73 = por %p71, %p72
      %p74 = scmp.ne.s32.totalorder %s63, %s64
      %p75 = scmp.eq.s32.totalorder %s15, 0
      %p76 = por %p74, %p75
      %p77 = scmp.ne.s32.totalorder %s63, %s64
      %p78 = scmp.eq.s32.totalorder %s16, 1
      %p79 = por %p77, %p78
      %p81 = scmp.ne.s32.totalorder %s64, %s80
      %p82 = scmp.eq.s32.totalorder %s16, 0
      %p83 = por %p81, %p82
      %s85 = sadd.s32 %s84, 1
      %p88 = scmp.eq.s32.totalorder %s10, 1
      %p89 = scmp.ne.s32.totalorder %s84, %s86
      %p90 = scmp.eq.s32.totalorder %s10, 0
      %p91 = por %p89, %p90
      %p92 = scmp.ne.s32.totalorder %s84, %s86
      %p93 = scmp.eq.s32.totalorder %s15, 1
      %p94 = por %p92, %p93
      %p95 = scmp.ne.s32.totalorder %s86, %s87
      %p96 = scmp.eq.s32.totalorder %s15, 0
      %p97 = por %p95, %p96
      %p98 = scmp.ne.s32.totalorder %s86, %s87
      %p99 = scmp.eq.s32.totalorder %s16, 1
      %p100 = por %p98, %p99
      %p102 = scmp.ne.s32.totalorder %s87, %s101
      %p103 = scmp.eq.s32.totalorder %s16, 0
      %p104 = por %p102, %p103
      %s106 = sadd.s32 %s105, 1
      %p109 = scmp.eq.s32.totalorder %s10, 1
      %p110 = scmp.ne.s32.totalorder %s105, %s107
      %p111 = scmp.eq.s32.totalorder %s10, 0
      %p112 = por %p110, %p111
      %p113 = scmp.ne.s32.totalorder %s105, %s107
      %p114 = scmp.eq.s32.totalorder %s15, 1
      %p115 = por %p113, %p114
      %p116 = scmp.ne.s32.totalorder %s107, %s108
      %p117 = scmp.eq.s32.totalorder %s15, 0
      %p118 = por %p116, %p117
      %p119 = scmp.ne.s32.totalorder %s107, %s108
      %p120 = scmp.eq.s32.totalorder %s16, 1
      %p121 = por %p119, %p120
      %p123 = scmp.ne.s32.totalorder %s108, %s122
      %p124 = scmp.eq.s32.totalorder %s16, 0
      %p125 = por %p123, %p124
      %s126 = ssub.s32 %s17, %s29
      %p127 = scmp.eq.s32.totalorder %s126, 0
      %s129 = sadd.s32 %s128, 1
      %s130 = scalar_select %p127, %s128, %s129
      %p133 = pneg %p127
      %p134 = scmp.eq.s32.totalorder %s10, 1
      %p135 = por %p133, %p134
      %p136 = scmp.ne.s32.totalorder %s128, %s131
      %p137 = scmp.eq.s32.totalorder %s10, 0
      %p138 = por %p136, %p137
      %p139 = scmp.ne.s32.totalorder %s128, %s131
      %p140 = scmp.eq.s32.totalorder %s15, 1
      %p141 = por %p139, %p140
      %p142 = scmp.ne.s32.totalorder %s131, %s132
      %p143 = scmp.eq.s32.totalorder %s15, 0
      %p144 = por %p142, %p143
      %p145 = scmp.ne.s32.totalorder %s131, %s132
      %p146 = scmp.eq.s32.totalorder %s16, 1
      %p147 = por %p145, %p146
      %p149 = scmp.ne.s32.totalorder %s132, %s148
      %p150 = scmp.eq.s32.totalorder %s16, 0
      %p151 = por %p149, %p150
      %p152 = scmp.le.s32.totalorder 1, %s10
      %p153 = scmp.lt.s32.totalorder %s10, 3
      %p154 = pnand %p152, %p153
      %p155 = pneg %p154
      // Predicated region
      $region9: #{cnn_forward.4} parent=5 // pred_check
        _
      $region10: #{cnn_forward.4} parent=5 // pred_check_branch
        %157 = sbr.rel (%p154) target = $region12
      $region11: #{cnn_forward.4} parent=5 // pred_region
        %s158 = ssub.s32 %s10, 1
        // Predicated region
        $region13: #{cnn_forward.4} parent=11 // pred_check
          %p159 = pneg %p97
        $region14: #{cnn_forward.4} parent=11 // pred_check_branch
          %161 = sbr.rel (%p159) target = $region16
        $region15: #{cnn_forward.4} parent=11 // pred_region
          _
        $region16: #{cnn_forward.4} parent=11 // pred_fallthru
          _
        // Predicated region
        $region17: #{cnn_forward.4} parent=11 // pred_check
          %p162 = pneg %p118
        $region18: #{cnn_forward.4} parent=11 // pred_check_branch
          %164 = sbr.rel (%p162) target = $region20
        $region19: #{cnn_forward.4} parent=11 // pred_region
          _
        $region20: #{cnn_forward.4} parent=11 // pred_fallthru
          _
      $region12: #{cnn_forward.4} parent=5 // pred_fallthru
        _
      %p165 = scmp.lt.s32.totalorder %s10, 2
      // Predicated region
      $region21: #{cnn_forward.4} parent=5 // pred_check
        %p166 = pneg %p165
      $region22: #{cnn_forward.4} parent=5 // pred_check_branch
        %168 = sbr.rel (%p166) target = $region24
      $region23: #{cnn_forward.4} parent=5 // pred_region
        // Predicated region
        $region25: #{cnn_forward.4} parent=23 // pred_check
          %p169 = pneg %p44
        $region26: #{cnn_forward.4} parent=23 // pred_check_branch
          %171 = sbr.rel (%p169) target = $region28
        $region27: #{cnn_forward.4} parent=23 // pred_region
          %s172 = sand.u32 %s34, 1
          %s173 = sand.u32 %s34, 1
          %s174 = smul.addr %s173, 1024
          %s175 = scalar_lea.vmem [#allocation3], %s174
          %s176 = smul.u32 16, %s17
          %s177 = smul.u32 16, %s18
          %s178 = smul.addr %s176, 32
          %s179 = sadd.s32 %s177, %s178
          %s180 = smul.addr %s179, 4
          %s181 = scalar_lea.vmem %s0, %s180
          // Predicated region
          $region29: #{cnn_forward.4} parent=27 // pred_check
            _
          $region30: #{cnn_forward.4} parent=27 // pred_check_branch
            %183 = sbr.rel (0) target = $region32
          $region31: #{cnn_forward.4} parent=27 // pred_region
            // Predicated region
            $region33: #{cnn_forward.4} parent=31 // pred_check
              _
            $region34: #{cnn_forward.4} parent=31 // pred_check_branch
              %185 = sbr.rel (0) target = $region36
            $region35: #{cnn_forward.4} parent=31 // pred_region
              loop: start=0, step=1, limit=1
              $region37: #{cnn_forward.4} parent=35 // loop_pre_header
                _
              $region38: #{cnn_forward.4} parent=35 // loop_header
                %s187 = sphi 0, %s191
                %p188 = scmp.ge.s32.totalorder %s187, 1
                %s192 = sphi %s181, %s181
                %s193 = sphi %s175, %s175
              $region39: #{cnn_forward.4} parent=35 // loop_header_branch
                %190 = sbr.rel (%p188) target = $region43
              $region40: #{cnn_forward.4} parent=35 // loop_body
                %v194 = vld [vmem:[%s192] sm:$0xff]
                %195 = vst [vmem:[%s193] sm:$0xff] %v194
                %v196 = vld [vmem:[%s192 + $0x8] sm:$0xff]
                %197 = vst [vmem:[%s193 + $0x8] sm:$0xff] %v196
                %v198 = vld [vmem:[%s192 + $0x10] sm:$0xff]
                %199 = vst [vmem:[%s193 + $0x10] sm:$0xff] %v198
                %v200 = vld [vmem:[%s192 + $0x18] sm:$0xff]
                %201 = vst [vmem:[%s193 + $0x18] sm:$0xff] %v200
                %v202 = vld [vmem:[%s192 + $0x20] sm:$0xff]
                %203 = vst [vmem:[%s193 + $0x20] sm:$0xff] %v202
                %v204 = vld [vmem:[%s192 + $0x28] sm:$0xff]
                %205 = vst [vmem:[%s193 + $0x28] sm:$0xff] %v204
                %v206 = vld [vmem:[%s192 + $0x30] sm:$0xff]
                %207 = vst [vmem:[%s193 + $0x30] sm:$0xff] %v206
                %v208 = vld [vmem:[%s192 + $0x38] sm:$0xff]
                %209 = vst [vmem:[%s193 + $0x38] sm:$0xff] %v208
                %v210 = vld [vmem:[%s192 + $0x80] sm:$0xff]
                %211 = vst [vmem:[%s193 + $0x40] sm:$0xff] %v210
                %v212 = vld [vmem:[%s192 + $0x88] sm:$0xff]
                %213 = vst [vmem:[%s193 + $0x48] sm:$0xff] %v212
                %v214 = vld [vmem:[%s192 + $0x90] sm:$0xff]
                %215 = vst [vmem:[%s193 + $0x50] sm:$0xff] %v214
                %v216 = vld [vmem:[%s192 + $0x98] sm:$0xff]
                %217 = vst [vmem:[%s193 + $0x58] sm:$0xff] %v216
                %v218 = vld [vmem:[%s192 + $0xa0] sm:$0xff]
                %219 = vst [vmem:[%s193 + $0x60] sm:$0xff] %v218
                %v220 = vld [vmem:[%s192 + $0xa8] sm:$0xff]
                %221 = vst [vmem:[%s193 + $0x68] sm:$0xff] %v220
                %v222 = vld [vmem:[%s192 + $0xb0] sm:$0xff]
                %223 = vst [vmem:[%s193 + $0x70] sm:$0xff] %v222
                %v224 = vld [vmem:[%s192 + $0xb8] sm:$0xff]
                %225 = vst [vmem:[%s193 + $0x78] sm:$0xff] %v224
                %v226 = vld [vmem:[%s192 + $0x100] sm:$0xff]
                %227 = vst [vmem:[%s193 + $0x80] sm:$0xff] %v226
                %v228 = vld [vmem:[%s192 + $0x108] sm:$0xff]
                %229 = vst [vmem:[%s193 + $0x88] sm:$0xff] %v228
                %v230 = vld [vmem:[%s192 + $0x110] sm:$0xff]
                %231 = vst [vmem:[%s193 + $0x90] sm:$0xff] %v230
                %v232 = vld [vmem:[%s192 + $0x118] sm:$0xff]
                %233 = vst [vmem:[%s193 + $0x98] sm:$0xff] %v232
                %v234 = vld [vmem:[%s192 + $0x120] sm:$0xff]
                %235 = vst [vmem:[%s193 + $0xa0] sm:$0xff] %v234
                %v236 = vld [vmem:[%s192 + $0x128] sm:$0xff]
                %237 = vst [vmem:[%s193 + $0xa8] sm:$0xff] %v236
                %v238 = vld [vmem:[%s192 + $0x130] sm:$0xff]
                %239 = vst [vmem:[%s193 + $0xb0] sm:$0xff] %v238
                %v240 = vld [vmem:[%s192 + $0x138] sm:$0xff]
                %241 = vst [vmem:[%s193 + $0xb8] sm:$0xff] %v240
                %v242 = vld [vmem:[%s192 + $0x180] sm:$0xff]
                %243 = vst [vmem:[%s193 + $0xc0] sm:$0xff] %v242
                %v244 = vld [vmem:[%s192 + $0x188] sm:$0xff]
                %245 = vst [vmem:[%s193 + $0xc8] sm:$0xff] %v244
                %v246 = vld [vmem:[%s192 + $0x190] sm:$0xff]
                %247 = vst [vmem:[%s193 + $0xd0] sm:$0xff] %v246
                %v248 = vld [vmem:[%s192 + $0x198] sm:$0xff]
                %249 = vst [vmem:[%s193 + $0xd8] sm:$0xff] %v248
                %v250 = vld [vmem:[%s192 + $0x1a0] sm:$0xff]
                %251 = vst [vmem:[%s193 + $0xe0] sm:$0xff] %v250
                %v252 = vld [vmem:[%s192 + $0x1a8] sm:$0xff]
                %253 = vst [vmem:[%s193 + $0xe8] sm:$0xff] %v252
                %v254 = vld [vmem:[%s192 + $0x1b0] sm:$0xff]
                %255 = vst [vmem:[%s193 + $0xf0] sm:$0xff] %v254
                %v256 = vld [vmem:[%s192 + $0x1b8] sm:$0xff]
                %257 = vst [vmem:[%s193 + $0xf8] sm:$0xff] %v256
                %v258 = vld [vmem:[%s192 + $0x200] sm:$0xff]
                %259 = vst [vmem:[%s193 + $0x100] sm:$0xff] %v258
                %v260 = vld [vmem:[%s192 + $0x208] sm:$0xff]
                %261 = vst [vmem:[%s193 + $0x108] sm:$0xff] %v260
                %v262 = vld [vmem:[%s192 + $0x210] sm:$0xff]
                %263 = vst [vmem:[%s193 + $0x110] sm:$0xff] %v262
                %v264 = vld [vmem:[%s192 + $0x218] sm:$0xff]
                %265 = vst [vmem:[%s193 + $0x118] sm:$0xff] %v264
                %v266 = vld [vmem:[%s192 + $0x220] sm:$0xff]
                %267 = vst [vmem:[%s193 + $0x120] sm:$0xff] %v266
                %v268 = vld [vmem:[%s192 + $0x228] sm:$0xff]
                %269 = vst [vmem:[%s193 + $0x128] sm:$0xff] %v268
                %v270 = vld [vmem:[%s192 + $0x230] sm:$0xff]
                %271 = vst [vmem:[%s193 + $0x130] sm:$0xff] %v270
                %v272 = vld [vmem:[%s192 + $0x238] sm:$0xff]
                %273 = vst [vmem:[%s193 + $0x138] sm:$0xff] %v272
                %v274 = vld [vmem:[%s192 + $0x280] sm:$0xff]
                %275 = vst [vmem:[%s193 + $0x140] sm:$0xff] %v274
                %v276 = vld [vmem:[%s192 + $0x288] sm:$0xff]
                %277 = vst [vmem:[%s193 + $0x148] sm:$0xff] %v276
                %v278 = vld [vmem:[%s192 + $0x290] sm:$0xff]
                %279 = vst [vmem:[%s193 + $0x150] sm:$0xff] %v278
                %v280 = vld [vmem:[%s192 + $0x298] sm:$0xff]
                %281 = vst [vmem:[%s193 + $0x158] sm:$0xff] %v280
                %v282 = vld [vmem:[%s192 + $0x2a0] sm:$0xff]
                %283 = vst [vmem:[%s193 + $0x160] sm:$0xff] %v282
                %v284 = vld [vmem:[%s192 + $0x2a8] sm:$0xff]
                %285 = vst [vmem:[%s193 + $0x168] sm:$0xff] %v284
                %v286 = vld [vmem:[%s192 + $0x2b0] sm:$0xff]
                %287 = vst [vmem:[%s193 + $0x170] sm:$0xff] %v286
                %v288 = vld [vmem:[%s192 + $0x2b8] sm:$0xff]
                %289 = vst [vmem:[%s193 + $0x178] sm:$0xff] %v288
                %v290 = vld [vmem:[%s192 + $0x300] sm:$0xff]
                %291 = vst [vmem:[%s193 + $0x180] sm:$0xff] %v290
                %v292 = vld [vmem:[%s192 + $0x308] sm:$0xff]
                %293 = vst [vmem:[%s193 + $0x188] sm:$0xff] %v292
                %v294 = vld [vmem:[%s192 + $0x310] sm:$0xff]
                %295 = vst [vmem:[%s193 + $0x190] sm:$0xff] %v294
                %v296 = vld [vmem:[%s192 + $0x318] sm:$0xff]
                %297 = vst [vmem:[%s193 + $0x198] sm:$0xff] %v296
                %v298 = vld [vmem:[%s192 + $0x320] sm:$0xff]
                %299 = vst [vmem:[%s193 + $0x1a0] sm:$0xff] %v298
                %v300 = vld [vmem:[%s192 + $0x328] sm:$0xff]
                %301 = vst [vmem:[%s193 + $0x1a8] sm:$0xff] %v300
                %v302 = vld [vmem:[%s192 + $0x330] sm:$0xff]
                %303 = vst [vmem:[%s193 + $0x1b0] sm:$0xff] %v302
                %v304 = vld [vmem:[%s192 + $0x338] sm:$0xff]
                %305 = vst [vmem:[%s193 + $0x1b8] sm:$0xff] %v304
                %v306 = vld [vmem:[%s192 + $0x380] sm:$0xff]
                %307 = vst [vmem:[%s193 + $0x1c0] sm:$0xff] %v306
                %v308 = vld [vmem:[%s192 + $0x388] sm:$0xff]
                %309 = vst [vmem:[%s193 + $0x1c8] sm:$0xff] %v308
                %v310 = vld [vmem:[%s192 + $0x390] sm:$0xff]
                %311 = vst [vmem:[%s193 + $0x1d0] sm:$0xff] %v310
                %v312 = vld [vmem:[%s192 + $0x398] sm:$0xff]
                %313 = vst [vmem:[%s193 + $0x1d8] sm:$0xff] %v312
                %v314 = vld [vmem:[%s192 + $0x3a0] sm:$0xff]
                %315 = vst [vmem:[%s193 + $0x1e0] sm:$0xff] %v314
                %v316 = vld [vmem:[%s192 + $0x3a8] sm:$0xff]
                %317 = vst [vmem:[%s193 + $0x1e8] sm:$0xff] %v316
                %v318 = vld [vmem:[%s192 + $0x3b0] sm:$0xff]
                %319 = vst [vmem:[%s193 + $0x1f0] sm:$0xff] %v318
                %v320 = vld [vmem:[%s192 + $0x3b8] sm:$0xff]
                %321 = vst [vmem:[%s193 + $0x1f8] sm:$0xff] %v320
                %v322 = vld [vmem:[%s192 + $0x400] sm:$0xff]
                %323 = vst [vmem:[%s193 + $0x200] sm:$0xff] %v322
                %v324 = vld [vmem:[%s192 + $0x408] sm:$0xff]
                %325 = vst [vmem:[%s193 + $0x208] sm:$0xff] %v324
                %v326 = vld [vmem:[%s192 + $0x410] sm:$0xff]
                %327 = vst [vmem:[%s193 + $0x210] sm:$0xff] %v326
                %v328 = vld [vmem:[%s192 + $0x418] sm:$0xff]
                %329 = vst [vmem:[%s193 + $0x218] sm:$0xff] %v328
                %v330 = vld [vmem:[%s192 + $0x420] sm:$0xff]
                %331 = vst [vmem:[%s193 + $0x220] sm:$0xff] %v330
                %v332 = vld [vmem:[%s192 + $0x428] sm:$0xff]
                %333 = vst [vmem:[%s193 + $0x228] sm:$0xff] %v332
                %v334 = vld [vmem:[%s192 + $0x430] sm:$0xff]
                %335 = vst [vmem:[%s193 + $0x230] sm:$0xff] %v334
                %v336 = vld [vmem:[%s192 + $0x438] sm:$0xff]
                %337 = vst [vmem:[%s193 + $0x238] sm:$0xff] %v336
                %v338 = vld [vmem:[%s192 + $0x480] sm:$0xff]
                %339 = vst [vmem:[%s193 + $0x240] sm:$0xff] %v338
                %v340 = vld [vmem:[%s192 + $0x488] sm:$0xff]
                %341 = vst [vmem:[%s193 + $0x248] sm:$0xff] %v340
                %v342 = vld [vmem:[%s192 + $0x490] sm:$0xff]
                %343 = vst [vmem:[%s193 + $0x250] sm:$0xff] %v342
                %v344 = vld [vmem:[%s192 + $0x498] sm:$0xff]
                %345 = vst [vmem:[%s193 + $0x258] sm:$0xff] %v344
                %v346 = vld [vmem:[%s192 + $0x4a0] sm:$0xff]
                %347 = vst [vmem:[%s193 + $0x260] sm:$0xff] %v346
                %v348 = vld [vmem:[%s192 + $0x4a8] sm:$0xff]
                %349 = vst [vmem:[%s193 + $0x268] sm:$0xff] %v348
                %v350 = vld [vmem:[%s192 + $0x4b0] sm:$0xff]
                %351 = vst [vmem:[%s193 + $0x270] sm:$0xff] %v350
                %v352 = vld [vmem:[%s192 + $0x4b8] sm:$0xff]
                %353 = vst [vmem:[%s193 + $0x278] sm:$0xff] %v352
                %v354 = vld [vmem:[%s192 + $0x500] sm:$0xff]
                %355 = vst [vmem:[%s193 + $0x280] sm:$0xff] %v354
                %v356 = vld [vmem:[%s192 + $0x508] sm:$0xff]
                %357 = vst [vmem:[%s193 + $0x288] sm:$0xff] %v356
                %v358 = vld [vmem:[%s192 + $0x510] sm:$0xff]
                %359 = vst [vmem:[%s193 + $0x290] sm:$0xff] %v358
                %v360 = vld [vmem:[%s192 + $0x518] sm:$0xff]
                %361 = vst [vmem:[%s193 + $0x298] sm:$0xff] %v360
                %v362 = vld [vmem:[%s192 + $0x520] sm:$0xff]
                %363 = vst [vmem:[%s193 + $0x2a0] sm:$0xff] %v362
                %v364 = vld [vmem:[%s192 + $0x528] sm:$0xff]
                %365 = vst [vmem:[%s193 + $0x2a8] sm:$0xff] %v364
                %v366 = vld [vmem:[%s192 + $0x530] sm:$0xff]
                %367 = vst [vmem:[%s193 + $0x2b0] sm:$0xff] %v366
                %v368 = vld [vmem:[%s192 + $0x538] sm:$0xff]
                %369 = vst [vmem:[%s193 + $0x2b8] sm:$0xff] %v368
                %v370 = vld [vmem:[%s192 + $0x580] sm:$0xff]
                %371 = vst [vmem:[%s193 + $0x2c0] sm:$0xff] %v370
                %v372 = vld [vmem:[%s192 + $0x588] sm:$0xff]
                %373 = vst [vmem:[%s193 + $0x2c8] sm:$0xff] %v372
                %v374 = vld [vmem:[%s192 + $0x590] sm:$0xff]
                %375 = vst [vmem:[%s193 + $0x2d0] sm:$0xff] %v374
                %v376 = vld [vmem:[%s192 + $0x598] sm:$0xff]
                %377 = vst [vmem:[%s193 + $0x2d8] sm:$0xff] %v376
                %v378 = vld [vmem:[%s192 + $0x5a0] sm:$0xff]
                %379 = vst [vmem:[%s193 + $0x2e0] sm:$0xff] %v378
                %v380 = vld [vmem:[%s192 + $0x5a8] sm:$0xff]
                %381 = vst [vmem:[%s193 + $0x2e8] sm:$0xff] %v380
                %v382 = vld [vmem:[%s192 + $0x5b0] sm:$0xff]
                %383 = vst [vmem:[%s193 + $0x2f0] sm:$0xff] %v382
                %v384 = vld [vmem:[%s192 + $0x5b8] sm:$0xff]
                %385 = vst [vmem:[%s193 + $0x2f8] sm:$0xff] %v384
                %v386 = vld [vmem:[%s192 + $0x600] sm:$0xff]
                %387 = vst [vmem:[%s193 + $0x300] sm:$0xff] %v386
                %v388 = vld [vmem:[%s192 + $0x608] sm:$0xff]
                %389 = vst [vmem:[%s193 + $0x308] sm:$0xff] %v388
                %v390 = vld [vmem:[%s192 + $0x610] sm:$0xff]
                %391 = vst [vmem:[%s193 + $0x310] sm:$0xff] %v390
                %v392 = vld [vmem:[%s192 + $0x618] sm:$0xff]
                %393 = vst [vmem:[%s193 + $0x318] sm:$0xff] %v392
                %v394 = vld [vmem:[%s192 + $0x620] sm:$0xff]
                %395 = vst [vmem:[%s193 + $0x320] sm:$0xff] %v394
                %v396 = vld [vmem:[%s192 + $0x628] sm:$0xff]
                %397 = vst [vmem:[%s193 + $0x328] sm:$0xff] %v396
                %v398 = vld [vmem:[%s192 + $0x630] sm:$0xff]
                %399 = vst [vmem:[%s193 + $0x330] sm:$0xff] %v398
                %v400 = vld [vmem:[%s192 + $0x638] sm:$0xff]
                %401 = vst [vmem:[%s193 + $0x338] sm:$0xff] %v400
                %v402 = vld [vmem:[%s192 + $0x680] sm:$0xff]
                %403 = vst [vmem:[%s193 + $0x340] sm:$0xff] %v402
                %v404 = vld [vmem:[%s192 + $0x688] sm:$0xff]
                %405 = vst [vmem:[%s193 + $0x348] sm:$0xff] %v404
                %v406 = vld [vmem:[%s192 + $0x690] sm:$0xff]
                %407 = vst [vmem:[%s193 + $0x350] sm:$0xff] %v406
                %v408 = vld [vmem:[%s192 + $0x698] sm:$0xff]
                %409 = vst [vmem:[%s193 + $0x358] sm:$0xff] %v408
                %v410 = vld [vmem:[%s192 + $0x6a0] sm:$0xff]
                %411 = vst [vmem:[%s193 + $0x360] sm:$0xff] %v410
                %v412 = vld [vmem:[%s192 + $0x6a8] sm:$0xff]
                %413 = vst [vmem:[%s193 + $0x368] sm:$0xff] %v412
                %v414 = vld [vmem:[%s192 + $0x6b0] sm:$0xff]
                %415 = vst [vmem:[%s193 + $0x370] sm:$0xff] %v414
                %v416 = vld [vmem:[%s192 + $0x6b8] sm:$0xff]
                %417 = vst [vmem:[%s193 + $0x378] sm:$0xff] %v416
                %v418 = vld [vmem:[%s192 + $0x700] sm:$0xff]
                %419 = vst [vmem:[%s193 + $0x380] sm:$0xff] %v418
                %v420 = vld [vmem:[%s192 + $0x708] sm:$0xff]
                %421 = vst [vmem:[%s193 + $0x388] sm:$0xff] %v420
                %v422 = vld [vmem:[%s192 + $0x710] sm:$0xff]
                %423 = vst [vmem:[%s193 + $0x390] sm:$0xff] %v422
                %v424 = vld [vmem:[%s192 + $0x718] sm:$0xff]
                %425 = vst [vmem:[%s193 + $0x398] sm:$0xff] %v424
                %v426 = vld [vmem:[%s192 + $0x720] sm:$0xff]
                %427 = vst [vmem:[%s193 + $0x3a0] sm:$0xff] %v426
                %v428 = vld [vmem:[%s192 + $0x728] sm:$0xff]
                %429 = vst [vmem:[%s193 + $0x3a8] sm:$0xff] %v428
                %v430 = vld [vmem:[%s192 + $0x730] sm:$0xff]
                %431 = vst [vmem:[%s193 + $0x3b0] sm:$0xff] %v430
                %v432 = vld [vmem:[%s192 + $0x738] sm:$0xff]
                %433 = vst [vmem:[%s193 + $0x3b8] sm:$0xff] %v432
                %v434 = vld [vmem:[%s192 + $0x780] sm:$0xff]
                %435 = vst [vmem:[%s193 + $0x3c0] sm:$0xff] %v434
                %v436 = vld [vmem:[%s192 + $0x788] sm:$0xff]
                %437 = vst [vmem:[%s193 + $0x3c8] sm:$0xff] %v436
                %v438 = vld [vmem:[%s192 + $0x790] sm:$0xff]
                %439 = vst [vmem:[%s193 + $0x3d0] sm:$0xff] %v438
                %v440 = vld [vmem:[%s192 + $0x798] sm:$0xff]
                %441 = vst [vmem:[%s193 + $0x3d8] sm:$0xff] %v440
                %v442 = vld [vmem:[%s192 + $0x7a0] sm:$0xff]
                %443 = vst [vmem:[%s193 + $0x3e0] sm:$0xff] %v442
                %v444 = vld [vmem:[%s192 + $0x7a8] sm:$0xff]
                %445 = vst [vmem:[%s193 + $0x3e8] sm:$0xff] %v444
                %v446 = vld [vmem:[%s192 + $0x7b0] sm:$0xff]
                %447 = vst [vmem:[%s193 + $0x3f0] sm:$0xff] %v446
                %v448 = vld [vmem:[%s192 + $0x7b8] sm:$0xff]
                %449 = vst [vmem:[%s193 + $0x3f8] sm:$0xff] %v448
              $region41: #{cnn_forward.4} parent=35 // loop_footer
                %s191 = sadd.s32 1, %s187
              $region42: #{cnn_forward.4} parent=35 // loop_footer_branch
                %186 = sbr.rel target = $region38
              $region43: #{cnn_forward.4} parent=35 // loop_exit
                _
            $region36: #{cnn_forward.4} parent=31 // pred_fallthru
              _
            // Predicated region
            $region44: #{cnn_forward.4} parent=31 // pred_check
              _
            $region45: #{cnn_forward.4} parent=31 // pred_check_branch
              %451 = sbr.rel target = $region47
            $region46: #{cnn_forward.4} parent=31 // pred_region
              _
            $region47: #{cnn_forward.4} parent=31 // pred_fallthru
              _
          $region32: #{cnn_forward.4} parent=27 // pred_fallthru
            _
          %452 = vnop
        $region28: #{cnn_forward.4} parent=23 // pred_fallthru
          _
        // Predicated region
        $region48: #{cnn_forward.4} parent=23 // pred_check
          %p453 = pneg %p70
        $region49: #{cnn_forward.4} parent=23 // pred_check_branch
          %455 = sbr.rel (%p453) target = $region51
        $region50: #{cnn_forward.4} parent=23 // pred_region
          %s456 = smul.u32 256, %s18
          %p457 = scmp.lt.s32.totalorder %s456, 511
          %s458 = scalar_select %p457, %s456, 511
          %s459 = smul.addr %s458, 4
          %s460 = scalar_lea.vmem %s1, %s459
          %s461 = smul.u32 256, %s18
        $region51: #{cnn_forward.4} parent=23 // pred_fallthru
          _
      $region24: #{cnn_forward.4} parent=5 // pred_fallthru
        _
      %p462 = scmp.le.s32.totalorder 1, %s10
      %p463 = scmp.lt.s32.totalorder %s10, 3
      %p464 = pnand %p462, %p463
      %p465 = pneg %p464
      // Predicated region
      $region52: #{cnn_forward.4} parent=5 // pred_check
        _
      $region53: #{cnn_forward.4} parent=5 // pred_check_branch
        %467 = sbr.rel (%p464) target = $region55
      $region54: #{cnn_forward.4} parent=5 // pred_region
        %s468 = ssub.s32 %s10, 1
        %s469 = sand.u32 %s37, 1
        %s470 = sand.u32 %s37, 1
        %s471 = smul.addr %s470, 1024
        %s472 = scalar_lea.vmem [#allocation3], %s471
        // Predicated region
        $region56: #{cnn_forward.4} parent=54 // pred_check
          %p473 = pneg %p50
        $region57: #{cnn_forward.4} parent=54 // pred_check_branch
          %475 = sbr.rel (%p473) target = $region59
        $region58: #{cnn_forward.4} parent=54 // pred_region
          _
        $region59: #{cnn_forward.4} parent=54 // pred_fallthru
          _
        %s476 = sand.u32 %s37, 1
        %s477 = sand.u32 %s37, 1
        %s478 = smul.addr %s477, 1024
        %s479 = scalar_lea.vmem [#allocation3], %s478
        %p480 = pneg %p50
        %p481 = pneg %p47
        %s482 = smul.u32 256, %s20
        %p483 = scmp.lt.s32.totalorder %s482, 511
        %s484 = scalar_select %p483, %s482, 511
        %s485 = smul.addr %s484, 4
        %s486 = scalar_lea.vmem %s1, %s485
        %p487 = pneg %p76
        %p488 = pneg %p73
        %p489 = pneg %p97
        %p490 = pneg %p94
        %p491 = pneg %p118
        %p492 = pneg %p115
        %p493 = pneg %p144
        %p494 = pneg %p141
        %s495 = smul.u32 16, %s19
        %p496 = scmp.lt.s32.totalorder %s495, 15
        %s497 = scalar_select %p496, %s495, 15
        %s498 = smul.addr %s497, 4
        %s499 = scalar_lea.vmem %s4, %s498
        %s500 = smul.u32 16, %s19
        %s501 = smul.u32 16, %s20
        %s502 = smul.u32 256, %s20
        %p503 = scmp.lt.s32.totalorder %s502, 511
        %s504 = scalar_select %p503, %s502, 511
        %s505 = smul.addr %s504, 4
        %s506 = scalar_lea.vmem %s1, %s505
        %s507 = smul.u32 256, %s20
        %s508 = smul.u32 16, %s19
        %p509 = scmp.lt.s32.totalorder %s508, 15
        %s510 = scalar_select %p509, %s508, 15
        %s511 = smul.addr %s510, 4
        %s512 = scalar_lea.vmem %s4, %s511
        %s513 = smul.u32 16, %s19
        %p515 = scmp.eq.s32.totalorder %s20, 0
        // Predicated region
        $region60: #{cnn_forward.4} parent=54 // pred_check
          %p516 = pneg %p515
        $region61: #{cnn_forward.4} parent=54 // pred_check_branch
          %518 = sbr.rel (%p516) target = $region63
        $region62: #{cnn_forward.4} parent=54 // pred_region
          %519 = vst [vmem:[#allocation2] sm:$0xff] 0.0
          %520 = vst [vmem:[#allocation2 + $0x8] sm:$0xff] 0.0
          %521 = vst [vmem:[#allocation2 + $0x10] sm:$0xff] 0.0
          %522 = vst [vmem:[#allocation2 + $0x18] sm:$0xff] 0.0
          %523 = vst [vmem:[#allocation2 + $0x20] sm:$0xff] 0.0
          %524 = vst [vmem:[#allocation2 + $0x28] sm:$0xff] 0.0
          %525 = vst [vmem:[#allocation2 + $0x30] sm:$0xff] 0.0
          %526 = vst [vmem:[#allocation2 + $0x38] sm:$0xff] 0.0
          %527 = vst [vmem:[#allocation2 + $0x40] sm:$0xff] 0.0
          %528 = vst [vmem:[#allocation2 + $0x48] sm:$0xff] 0.0
          %529 = vst [vmem:[#allocation2 + $0x50] sm:$0xff] 0.0
          %530 = vst [vmem:[#allocation2 + $0x58] sm:$0xff] 0.0
          %531 = vst [vmem:[#allocation2 + $0x60] sm:$0xff] 0.0
          %532 = vst [vmem:[#allocation2 + $0x68] sm:$0xff] 0.0
          %533 = vst [vmem:[#allocation2 + $0x70] sm:$0xff] 0.0
          %534 = vst [vmem:[#allocation2 + $0x78] sm:$0xff] 0.0
        $region63: #{cnn_forward.4} parent=54 // pred_fallthru
          _
        %v535 = vld [vmem:[#allocation2] sm:$0xff]
        %v536 = vld [vmem:[#allocation2 + $0x8] sm:$0xff]
        %v537 = vld [vmem:[#allocation2 + $0x10] sm:$0xff]
        %v538 = vld [vmem:[#allocation2 + $0x18] sm:$0xff]
        %v539 = vld [vmem:[#allocation2 + $0x20] sm:$0xff]
        %v540 = vld [vmem:[#allocation2 + $0x28] sm:$0xff]
        %v541 = vld [vmem:[#allocation2 + $0x30] sm:$0xff]
        %v542 = vld [vmem:[#allocation2 + $0x38] sm:$0xff]
        %v543 = vld [vmem:[#allocation2 + $0x40] sm:$0xff]
        %v544 = vld [vmem:[#allocation2 + $0x48] sm:$0xff]
        %v545 = vld [vmem:[#allocation2 + $0x50] sm:$0xff]
        %v546 = vld [vmem:[#allocation2 + $0x58] sm:$0xff]
        %v547 = vld [vmem:[#allocation2 + $0x60] sm:$0xff]
        %v548 = vld [vmem:[#allocation2 + $0x68] sm:$0xff]
        %v549 = vld [vmem:[#allocation2 + $0x70] sm:$0xff]
        %v550 = vld [vmem:[#allocation2 + $0x78] sm:$0xff]
        %v551 = vld [vmem:[%s472] sm:$0xff]
        %v552 = vld [vmem:[%s472 + $0x8] sm:$0xff]
        %v553 = vld [vmem:[%s472 + $0x10] sm:$0xff]
        %v554 = vld [vmem:[%s472 + $0x18] sm:$0xff]
        %v555 = vld [vmem:[%s472 + $0x20] sm:$0xff]
        %v556 = vld [vmem:[%s472 + $0x28] sm:$0xff]
        %v557 = vld [vmem:[%s472 + $0x30] sm:$0xff]
        %v558 = vld [vmem:[%s472 + $0x38] sm:$0xff]
        %v559 = vld [vmem:[%s472 + $0x40] sm:$0xff]
        %v560 = vld [vmem:[%s472 + $0x48] sm:$0xff]
        %v561 = vld [vmem:[%s472 + $0x50] sm:$0xff]
        %v562 = vld [vmem:[%s472 + $0x58] sm:$0xff]
        %v563 = vld [vmem:[%s472 + $0x60] sm:$0xff]
        %v564 = vld [vmem:[%s472 + $0x68] sm:$0xff]
        %v565 = vld [vmem:[%s472 + $0x70] sm:$0xff]
        %v566 = vld [vmem:[%s472 + $0x78] sm:$0xff]
        %v567 = vld [vmem:[%s472 + $0x80] sm:$0xff]
        %v568 = vld [vmem:[%s472 + $0x88] sm:$0xff]
        %v569 = vld [vmem:[%s472 + $0x90] sm:$0xff]
        %v570 = vld [vmem:[%s472 + $0x98] sm:$0xff]
        %v571 = vld [vmem:[%s472 + $0xa0] sm:$0xff]
        %v572 = vld [vmem:[%s472 + $0xa8] sm:$0xff]
        %v573 = vld [vmem:[%s472 + $0xb0] sm:$0xff]
        %v574 = vld [vmem:[%s472 + $0xb8] sm:$0xff]
        %v575 = vld [vmem:[%s472 + $0xc0] sm:$0xff]
        %v576 = vld [vmem:[%s472 + $0xc8] sm:$0xff]
        %v577 = vld [vmem:[%s472 + $0xd0] sm:$0xff]
        %v578 = vld [vmem:[%s472 + $0xd8] sm:$0xff]
        %v579 = vld [vmem:[%s472 + $0xe0] sm:$0xff]
        %v580 = vld [vmem:[%s472 + $0xe8] sm:$0xff]
        %v581 = vld [vmem:[%s472 + $0xf0] sm:$0xff]
        %v582 = vld [vmem:[%s472 + $0xf8] sm:$0xff]
        %v583 = vld [vmem:[%s472 + $0x100] sm:$0xff]
        %v584 = vld [vmem:[%s472 + $0x108] sm:$0xff]
        %v585 = vld [vmem:[%s472 + $0x110] sm:$0xff]
        %v586 = vld [vmem:[%s472 + $0x118] sm:$0xff]
        %v587 = vld [vmem:[%s472 + $0x120] sm:$0xff]
        %v588 = vld [vmem:[%s472 + $0x128] sm:$0xff]
        %v589 = vld [vmem:[%s472 + $0x130] sm:$0xff]
        %v590 = vld [vmem:[%s472 + $0x138] sm:$0xff]
        %v591 = vld [vmem:[%s472 + $0x140] sm:$0xff]
        %v592 = vld [vmem:[%s472 + $0x148] sm:$0xff]
        %v593 = vld [vmem:[%s472 + $0x150] sm:$0xff]
        %v594 = vld [vmem:[%s472 + $0x158] sm:$0xff]
        %v595 = vld [vmem:[%s472 + $0x160] sm:$0xff]
        %v596 = vld [vmem:[%s472 + $0x168] sm:$0xff]
        %v597 = vld [vmem:[%s472 + $0x170] sm:$0xff]
        %v598 = vld [vmem:[%s472 + $0x178] sm:$0xff]
        %v599 = vld [vmem:[%s472 + $0x180] sm:$0xff]
        %v600 = vld [vmem:[%s472 + $0x188] sm:$0xff]
        %v601 = vld [vmem:[%s472 + $0x190] sm:$0xff]
        %v602 = vld [vmem:[%s472 + $0x198] sm:$0xff]
        %v603 = vld [vmem:[%s472 + $0x1a0] sm:$0xff]
        %v604 = vld [vmem:[%s472 + $0x1a8] sm:$0xff]
        %v605 = vld [vmem:[%s472 + $0x1b0] sm:$0xff]
        %v606 = vld [vmem:[%s472 + $0x1b8] sm:$0xff]
        %v607 = vld [vmem:[%s472 + $0x1c0] sm:$0xff]
        %v608 = vld [vmem:[%s472 + $0x1c8] sm:$0xff]
        %v609 = vld [vmem:[%s472 + $0x1d0] sm:$0xff]
        %v610 = vld [vmem:[%s472 + $0x1d8] sm:$0xff]
        %v611 = vld [vmem:[%s472 + $0x1e0] sm:$0xff]
        %v612 = vld [vmem:[%s472 + $0x1e8] sm:$0xff]
        %v613 = vld [vmem:[%s472 + $0x1f0] sm:$0xff]
        %v614 = vld [vmem:[%s472 + $0x1f8] sm:$0xff]
        %v615 = vld [vmem:[%s472 + $0x200] sm:$0xff]
        %v616 = vld [vmem:[%s472 + $0x208] sm:$0xff]
        %v617 = vld [vmem:[%s472 + $0x210] sm:$0xff]
        %v618 = vld [vmem:[%s472 + $0x218] sm:$0xff]
        %v619 = vld [vmem:[%s472 + $0x220] sm:$0xff]
        %v620 = vld [vmem:[%s472 + $0x228] sm:$0xff]
        %v621 = vld [vmem:[%s472 + $0x230] sm:$0xff]
        %v622 = vld [vmem:[%s472 + $0x238] sm:$0xff]
        %v623 = vld [vmem:[%s472 + $0x240] sm:$0xff]
        %v624 = vld [vmem:[%s472 + $0x248] sm:$0xff]
        %v625 = vld [vmem:[%s472 + $0x250] sm:$0xff]
        %v626 = vld [vmem:[%s472 + $0x258] sm:$0xff]
        %v627 = vld [vmem:[%s472 + $0x260] sm:$0xff]
        %v628 = vld [vmem:[%s472 + $0x268] sm:$0xff]
        %v629 = vld [vmem:[%s472 + $0x270] sm:$0xff]
        %v630 = vld [vmem:[%s472 + $0x278] sm:$0xff]
        %v631 = vld [vmem:[%s472 + $0x280] sm:$0xff]
        %v632 = vld [vmem:[%s472 + $0x288] sm:$0xff]
        %v633 = vld [vmem:[%s472 + $0x290] sm:$0xff]
        %v634 = vld [vmem:[%s472 + $0x298] sm:$0xff]
        %v635 = vld [vmem:[%s472 + $0x2a0] sm:$0xff]
        %v636 = vld [vmem:[%s472 + $0x2a8] sm:$0xff]
        %v637 = vld [vmem:[%s472 + $0x2b0] sm:$0xff]
        %v638 = vld [vmem:[%s472 + $0x2b8] sm:$0xff]
        %v639 = vld [vmem:[%s472 + $0x2c0] sm:$0xff]
        %v640 = vld [vmem:[%s472 + $0x2c8] sm:$0xff]
        %v641 = vld [vmem:[%s472 + $0x2d0] sm:$0xff]
        %v642 = vld [vmem:[%s472 + $0x2d8] sm:$0xff]
        %v643 = vld [vmem:[%s472 + $0x2e0] sm:$0xff]
        %v644 = vld [vmem:[%s472 + $0x2e8] sm:$0xff]
        %v645 = vld [vmem:[%s472 + $0x2f0] sm:$0xff]
        %v646 = vld [vmem:[%s472 + $0x2f8] sm:$0xff]
        %v647 = vld [vmem:[%s472 + $0x300] sm:$0xff]
        %v648 = vld [vmem:[%s472 + $0x308] sm:$0xff]
        %v649 = vld [vmem:[%s472 + $0x310] sm:$0xff]
        %v650 = vld [vmem:[%s472 + $0x318] sm:$0xff]
        %v651 = vld [vmem:[%s472 + $0x320] sm:$0xff]
        %v652 = vld [vmem:[%s472 + $0x328] sm:$0xff]
        %v653 = vld [vmem:[%s472 + $0x330] sm:$0xff]
        %v654 = vld [vmem:[%s472 + $0x338] sm:$0xff]
        %v655 = vld [vmem:[%s472 + $0x340] sm:$0xff]
        %v656 = vld [vmem:[%s472 + $0x348] sm:$0xff]
        %v657 = vld [vmem:[%s472 + $0x350] sm:$0xff]
        %v658 = vld [vmem:[%s472 + $0x358] sm:$0xff]
        %v659 = vld [vmem:[%s472 + $0x360] sm:$0xff]
        %v660 = vld [vmem:[%s472 + $0x368] sm:$0xff]
        %v661 = vld [vmem:[%s472 + $0x370] sm:$0xff]
        %v662 = vld [vmem:[%s472 + $0x378] sm:$0xff]
        %v663 = vld [vmem:[%s472 + $0x380] sm:$0xff]
        %v664 = vld [vmem:[%s472 + $0x388] sm:$0xff]
        %v665 = vld [vmem:[%s472 + $0x390] sm:$0xff]
        %v666 = vld [vmem:[%s472 + $0x398] sm:$0xff]
        %v667 = vld [vmem:[%s472 + $0x3a0] sm:$0xff]
        %v668 = vld [vmem:[%s472 + $0x3a8] sm:$0xff]
        %v669 = vld [vmem:[%s472 + $0x3b0] sm:$0xff]
        %v670 = vld [vmem:[%s472 + $0x3b8] sm:$0xff]
        %v671 = vld [vmem:[%s472 + $0x3c0] sm:$0xff]
        %v672 = vld [vmem:[%s472 + $0x3c8] sm:$0xff]
        %v673 = vld [vmem:[%s472 + $0x3d0] sm:$0xff]
        %v674 = vld [vmem:[%s472 + $0x3d8] sm:$0xff]
        %v675 = vld [vmem:[%s472 + $0x3e0] sm:$0xff]
        %v676 = vld [vmem:[%s472 + $0x3e8] sm:$0xff]
        %v677 = vld [vmem:[%s472 + $0x3f0] sm:$0xff]
        %v678 = vld [vmem:[%s472 + $0x3f8] sm:$0xff]
        %v679 = vld [vmem:[%s506] sm:$0xf]
        %v680 = vld [vmem:[%s506 + $0x4] sm:$0xf]
        %v681 = vld [vmem:[%s506 + $0x8] sm:$0xf]
        %v682 = vld [vmem:[%s506 + $0xc] sm:$0xf]
        %v683 = vld [vmem:[%s506 + $0x10] sm:$0xf]
        %v684 = vld [vmem:[%s506 + $0x14] sm:$0xf]
        %v685 = vld [vmem:[%s506 + $0x18] sm:$0xf]
        %v686 = vld [vmem:[%s506 + $0x1c] sm:$0xf]
        %v687 = vld [vmem:[%s506 + $0x20] sm:$0xf]
        %v688 = vld [vmem:[%s506 + $0x24] sm:$0xf]
        %v689 = vld [vmem:[%s506 + $0x28] sm:$0xf]
        %v690 = vld [vmem:[%s506 + $0x2c] sm:$0xf]
        %v691 = vld [vmem:[%s506 + $0x30] sm:$0xf]
        %v692 = vld [vmem:[%s506 + $0x34] sm:$0xf]
        %v693 = vld [vmem:[%s506 + $0x38] sm:$0xf]
        %v694 = vld [vmem:[%s506 + $0x3c] sm:$0xf]
        %v695 = vld [vmem:[%s506 + $0x40] sm:$0xf]
        %v696 = vld [vmem:[%s506 + $0x44] sm:$0xf]
        %v697 = vld [vmem:[%s506 + $0x48] sm:$0xf]
        %v698 = vld [vmem:[%s506 + $0x4c] sm:$0xf]
        %v699 = vld [vmem:[%s506 + $0x50] sm:$0xf]
        %v700 = vld [vmem:[%s506 + $0x54] sm:$0xf]
        %v701 = vld [vmem:[%s506 + $0x58] sm:$0xf]
        %v702 = vld [vmem:[%s506 + $0x5c] sm:$0xf]
        %v703 = vld [vmem:[%s506 + $0x60] sm:$0xf]
        %v704 = vld [vmem:[%s506 + $0x64] sm:$0xf]
        %v705 = vld [vmem:[%s506 + $0x68] sm:$0xf]
        %v706 = vld [vmem:[%s506 + $0x6c] sm:$0xf]
        %v707 = vld [vmem:[%s506 + $0x70] sm:$0xf]
        %v708 = vld [vmem:[%s506 + $0x74] sm:$0xf]
        %v709 = vld [vmem:[%s506 + $0x78] sm:$0xf]
        %v710 = vld [vmem:[%s506 + $0x7c] sm:$0xf]
        %v711 = vld [vmem:[%s506 + $0x80] sm:$0xf]
        %v712 = vld [vmem:[%s506 + $0x84] sm:$0xf]
        %v713 = vld [vmem:[%s506 + $0x88] sm:$0xf]
        %v714 = vld [vmem:[%s506 + $0x8c] sm:$0xf]
        %v715 = vld [vmem:[%s506 + $0x90] sm:$0xf]
        %v716 = vld [vmem:[%s506 + $0x94] sm:$0xf]
        %v717 = vld [vmem:[%s506 + $0x98] sm:$0xf]
        %v718 = vld [vmem:[%s506 + $0x9c] sm:$0xf]
        %v719 = vld [vmem:[%s506 + $0xa0] sm:$0xf]
        %v720 = vld [vmem:[%s506 + $0xa4] sm:$0xf]
        %v721 = vld [vmem:[%s506 + $0xa8] sm:$0xf]
        %v722 = vld [vmem:[%s506 + $0xac] sm:$0xf]
        %v723 = vld [vmem:[%s506 + $0xb0] sm:$0xf]
        %v724 = vld [vmem:[%s506 + $0xb4] sm:$0xf]
        %v725 = vld [vmem:[%s506 + $0xb8] sm:$0xf]
        %v726 = vld [vmem:[%s506 + $0xbc] sm:$0xf]
        %v727 = vld [vmem:[%s506 + $0xc0] sm:$0xf]
        %v728 = vld [vmem:[%s506 + $0xc4] sm:$0xf]
        %v729 = vld [vmem:[%s506 + $0xc8] sm:$0xf]
        %v730 = vld [vmem:[%s506 + $0xcc] sm:$0xf]
        %v731 = vld [vmem:[%s506 + $0xd0] sm:$0xf]
        %v732 = vld [vmem:[%s506 + $0xd4] sm:$0xf]
        %v733 = vld [vmem:[%s506 + $0xd8] sm:$0xf]
        %v734 = vld [vmem:[%s506 + $0xdc] sm:$0xf]
        %v735 = vld [vmem:[%s506 + $0xe0] sm:$0xf]
        %v736 = vld [vmem:[%s506 + $0xe4] sm:$0xf]
        %v737 = vld [vmem:[%s506 + $0xe8] sm:$0xf]
        %v738 = vld [vmem:[%s506 + $0xec] sm:$0xf]
        %v739 = vld [vmem:[%s506 + $0xf0] sm:$0xf]
        %v740 = vld [vmem:[%s506 + $0xf4] sm:$0xf]
        %v741 = vld [vmem:[%s506 + $0xf8] sm:$0xf]
        %v742 = vld [vmem:[%s506 + $0xfc] sm:$0xf]
        %v743 = vld [vmem:[%s506 + $0x100] sm:$0xf]
        %v744 = vld [vmem:[%s506 + $0x104] sm:$0xf]
        %v745 = vld [vmem:[%s506 + $0x108] sm:$0xf]
        %v746 = vld [vmem:[%s506 + $0x10c] sm:$0xf]
        %v747 = vld [vmem:[%s506 + $0x110] sm:$0xf]
        %v748 = vld [vmem:[%s506 + $0x114] sm:$0xf]
        %v749 = vld [vmem:[%s506 + $0x118] sm:$0xf]
        %v750 = vld [vmem:[%s506 + $0x11c] sm:$0xf]
        %v751 = vld [vmem:[%s506 + $0x120] sm:$0xf]
        %v752 = vld [vmem:[%s506 + $0x124] sm:$0xf]
        %v753 = vld [vmem:[%s506 + $0x128] sm:$0xf]
        %v754 = vld [vmem:[%s506 + $0x12c] sm:$0xf]
        %v755 = vld [vmem:[%s506 + $0x130] sm:$0xf]
        %v756 = vld [vmem:[%s506 + $0x134] sm:$0xf]
        %v757 = vld [vmem:[%s506 + $0x138] sm:$0xf]
        %v758 = vld [vmem:[%s506 + $0x13c] sm:$0xf]
        %v759 = vld [vmem:[%s506 + $0x140] sm:$0xf]
        %v760 = vld [vmem:[%s506 + $0x144] sm:$0xf]
        %v761 = vld [vmem:[%s506 + $0x148] sm:$0xf]
        %v762 = vld [vmem:[%s506 + $0x14c] sm:$0xf]
        %v763 = vld [vmem:[%s506 + $0x150] sm:$0xf]
        %v764 = vld [vmem:[%s506 + $0x154] sm:$0xf]
        %v765 = vld [vmem:[%s506 + $0x158] sm:$0xf]
        %v766 = vld [vmem:[%s506 + $0x15c] sm:$0xf]
        %v767 = vld [vmem:[%s506 + $0x160] sm:$0xf]
        %v768 = vld [vmem:[%s506 + $0x164] sm:$0xf]
        %v769 = vld [vmem:[%s506 + $0x168] sm:$0xf]
        %v770 = vld [vmem:[%s506 + $0x16c] sm:$0xf]
        %v771 = vld [vmem:[%s506 + $0x170] sm:$0xf]
        %v772 = vld [vmem:[%s506 + $0x174] sm:$0xf]
        %v773 = vld [vmem:[%s506 + $0x178] sm:$0xf]
        %v774 = vld [vmem:[%s506 + $0x17c] sm:$0xf]
        %v775 = vld [vmem:[%s506 + $0x180] sm:$0xf]
        %v776 = vld [vmem:[%s506 + $0x184] sm:$0xf]
        %v777 = vld [vmem:[%s506 + $0x188] sm:$0xf]
        %v778 = vld [vmem:[%s506 + $0x18c] sm:$0xf]
        %v779 = vld [vmem:[%s506 + $0x190] sm:$0xf]
        %v780 = vld [vmem:[%s506 + $0x194] sm:$0xf]
        %v781 = vld [vmem:[%s506 + $0x198] sm:$0xf]
        %v782 = vld [vmem:[%s506 + $0x19c] sm:$0xf]
        %v783 = vld [vmem:[%s506 + $0x1a0] sm:$0xf]
        %v784 = vld [vmem:[%s506 + $0x1a4] sm:$0xf]
        %v785 = vld [vmem:[%s506 + $0x1a8] sm:$0xf]
        %v786 = vld [vmem:[%s506 + $0x1ac] sm:$0xf]
        %v787 = vld [vmem:[%s506 + $0x1b0] sm:$0xf]
        %v788 = vld [vmem:[%s506 + $0x1b4] sm:$0xf]
        %v789 = vld [vmem:[%s506 + $0x1b8] sm:$0xf]
        %v790 = vld [vmem:[%s506 + $0x1bc] sm:$0xf]
        %v791 = vld [vmem:[%s506 + $0x1c0] sm:$0xf]
        %v792 = vld [vmem:[%s506 + $0x1c4] sm:$0xf]
        %v793 = vld [vmem:[%s506 + $0x1c8] sm:$0xf]
        %v794 = vld [vmem:[%s506 + $0x1cc] sm:$0xf]
        %v795 = vld [vmem:[%s506 + $0x1d0] sm:$0xf]
        %v796 = vld [vmem:[%s506 + $0x1d4] sm:$0xf]
        %v797 = vld [vmem:[%s506 + $0x1d8] sm:$0xf]
        %v798 = vld [vmem:[%s506 + $0x1dc] sm:$0xf]
        %v799 = vld [vmem:[%s506 + $0x1e0] sm:$0xf]
        %v800 = vld [vmem:[%s506 + $0x1e4] sm:$0xf]
        %v801 = vld [vmem:[%s506 + $0x1e8] sm:$0xf]
        %v802 = vld [vmem:[%s506 + $0x1ec] sm:$0xf]
        %v803 = vld [vmem:[%s506 + $0x1f0] sm:$0xf]
        %v804 = vld [vmem:[%s506 + $0x1f4] sm:$0xf]
        %v805 = vld [vmem:[%s506 + $0x1f8] sm:$0xf]
        %v806 = vld [vmem:[%s506 + $0x1fc] sm:$0xf]
        %v807 = vld [vmem:[%s506 + $0x200] sm:$0xf]
        %v808 = vld [vmem:[%s506 + $0x204] sm:$0xf]
        %v809 = vld [vmem:[%s506 + $0x208] sm:$0xf]
        %v810 = vld [vmem:[%s506 + $0x20c] sm:$0xf]
        %v811 = vld [vmem:[%s506 + $0x210] sm:$0xf]
        %v812 = vld [vmem:[%s506 + $0x214] sm:$0xf]
        %v813 = vld [vmem:[%s506 + $0x218] sm:$0xf]
        %v814 = vld [vmem:[%s506 + $0x21c] sm:$0xf]
        %v815 = vld [vmem:[%s506 + $0x220] sm:$0xf]
        %v816 = vld [vmem:[%s506 + $0x224] sm:$0xf]
        %v817 = vld [vmem:[%s506 + $0x228] sm:$0xf]
        %v818 = vld [vmem:[%s506 + $0x22c] sm:$0xf]
        %v819 = vld [vmem:[%s506 + $0x230] sm:$0xf]
        %v820 = vld [vmem:[%s506 + $0x234] sm:$0xf]
        %v821 = vld [vmem:[%s506 + $0x238] sm:$0xf]
        %v822 = vld [vmem:[%s506 + $0x23c] sm:$0xf]
        %v823 = vld [vmem:[%s506 + $0x240] sm:$0xf]
        %v824 = vld [vmem:[%s506 + $0x244] sm:$0xf]
        %v825 = vld [vmem:[%s506 + $0x248] sm:$0xf]
        %v826 = vld [vmem:[%s506 + $0x24c] sm:$0xf]
        %v827 = vld [vmem:[%s506 + $0x250] sm:$0xf]
        %v828 = vld [vmem:[%s506 + $0x254] sm:$0xf]
        %v829 = vld [vmem:[%s506 + $0x258] sm:$0xf]
        %v830 = vld [vmem:[%s506 + $0x25c] sm:$0xf]
        %v831 = vld [vmem:[%s506 + $0x260] sm:$0xf]
        %v832 = vld [vmem:[%s506 + $0x264] sm:$0xf]
        %v833 = vld [vmem:[%s506 + $0x268] sm:$0xf]
        %v834 = vld [vmem:[%s506 + $0x26c] sm:$0xf]
        %v835 = vld [vmem:[%s506 + $0x270] sm:$0xf]
        %v836 = vld [vmem:[%s506 + $0x274] sm:$0xf]
        %v837 = vld [vmem:[%s506 + $0x278] sm:$0xf]
        %v838 = vld [vmem:[%s506 + $0x27c] sm:$0xf]
        %v839 = vld [vmem:[%s506 + $0x280] sm:$0xf]
        %v840 = vld [vmem:[%s506 + $0x284] sm:$0xf]
        %v841 = vld [vmem:[%s506 + $0x288] sm:$0xf]
        %v842 = vld [vmem:[%s506 + $0x28c] sm:$0xf]
        %v843 = vld [vmem:[%s506 + $0x290] sm:$0xf]
        %v844 = vld [vmem:[%s506 + $0x294] sm:$0xf]
        %v845 = vld [vmem:[%s506 + $0x298] sm:$0xf]
        %v846 = vld [vmem:[%s506 + $0x29c] sm:$0xf]
        %v847 = vld [vmem:[%s506 + $0x2a0] sm:$0xf]
        %v848 = vld [vmem:[%s506 + $0x2a4] sm:$0xf]
        %v849 = vld [vmem:[%s506 + $0x2a8] sm:$0xf]
        %v850 = vld [vmem:[%s506 + $0x2ac] sm:$0xf]
        %v851 = vld [vmem:[%s506 + $0x2b0] sm:$0xf]
        %v852 = vld [vmem:[%s506 + $0x2b4] sm:$0xf]
        %v853 = vld [vmem:[%s506 + $0x2b8] sm:$0xf]
        %v854 = vld [vmem:[%s506 + $0x2bc] sm:$0xf]
        %v855 = vld [vmem:[%s506 + $0x2c0] sm:$0xf]
        %v856 = vld [vmem:[%s506 + $0x2c4] sm:$0xf]
        %v857 = vld [vmem:[%s506 + $0x2c8] sm:$0xf]
        %v858 = vld [vmem:[%s506 + $0x2cc] sm:$0xf]
        %v859 = vld [vmem:[%s506 + $0x2d0] sm:$0xf]
        %v860 = vld [vmem:[%s506 + $0x2d4] sm:$0xf]
        %v861 = vld [vmem:[%s506 + $0x2d8] sm:$0xf]
        %v862 = vld [vmem:[%s506 + $0x2dc] sm:$0xf]
        %v863 = vld [vmem:[%s506 + $0x2e0] sm:$0xf]
        %v864 = vld [vmem:[%s506 + $0x2e4] sm:$0xf]
        %v865 = vld [vmem:[%s506 + $0x2e8] sm:$0xf]
        %v866 = vld [vmem:[%s506 + $0x2ec] sm:$0xf]
        %v867 = vld [vmem:[%s506 + $0x2f0] sm:$0xf]
        %v868 = vld [vmem:[%s506 + $0x2f4] sm:$0xf]
        %v869 = vld [vmem:[%s506 + $0x2f8] sm:$0xf]
        %v870 = vld [vmem:[%s506 + $0x2fc] sm:$0xf]
        %v871 = vld [vmem:[%s506 + $0x300] sm:$0xf]
        %v872 = vld [vmem:[%s506 + $0x304] sm:$0xf]
        %v873 = vld [vmem:[%s506 + $0x308] sm:$0xf]
        %v874 = vld [vmem:[%s506 + $0x30c] sm:$0xf]
        %v875 = vld [vmem:[%s506 + $0x310] sm:$0xf]
        %v876 = vld [vmem:[%s506 + $0x314] sm:$0xf]
        %v877 = vld [vmem:[%s506 + $0x318] sm:$0xf]
        %v878 = vld [vmem:[%s506 + $0x31c] sm:$0xf]
        %v879 = vld [vmem:[%s506 + $0x320] sm:$0xf]
        %v880 = vld [vmem:[%s506 + $0x324] sm:$0xf]
        %v881 = vld [vmem:[%s506 + $0x328] sm:$0xf]
        %v882 = vld [vmem:[%s506 + $0x32c] sm:$0xf]
        %v883 = vld [vmem:[%s506 + $0x330] sm:$0xf]
        %v884 = vld [vmem:[%s506 + $0x334] sm:$0xf]
        %v885 = vld [vmem:[%s506 + $0x338] sm:$0xf]
        %v886 = vld [vmem:[%s506 + $0x33c] sm:$0xf]
        %v887 = vld [vmem:[%s506 + $0x340] sm:$0xf]
        %v888 = vld [vmem:[%s506 + $0x344] sm:$0xf]
        %v889 = vld [vmem:[%s506 + $0x348] sm:$0xf]
        %v890 = vld [vmem:[%s506 + $0x34c] sm:$0xf]
        %v891 = vld [vmem:[%s506 + $0x350] sm:$0xf]
        %v892 = vld [vmem:[%s506 + $0x354] sm:$0xf]
        %v893 = vld [vmem:[%s506 + $0x358] sm:$0xf]
        %v894 = vld [vmem:[%s506 + $0x35c] sm:$0xf]
        %v895 = vld [vmem:[%s506 + $0x360] sm:$0xf]
        %v896 = vld [vmem:[%s506 + $0x364] sm:$0xf]
        %v897 = vld [vmem:[%s506 + $0x368] sm:$0xf]
        %v898 = vld [vmem:[%s506 + $0x36c] sm:$0xf]
        %v899 = vld [vmem:[%s506 + $0x370] sm:$0xf]
        %v900 = vld [vmem:[%s506 + $0x374] sm:$0xf]
        %v901 = vld [vmem:[%s506 + $0x378] sm:$0xf]
        %v902 = vld [vmem:[%s506 + $0x37c] sm:$0xf]
        %v903 = vld [vmem:[%s506 + $0x380] sm:$0xf]
        %v904 = vld [vmem:[%s506 + $0x384] sm:$0xf]
        %v905 = vld [vmem:[%s506 + $0x388] sm:$0xf]
        %v906 = vld [vmem:[%s506 + $0x38c] sm:$0xf]
        %v907 = vld [vmem:[%s506 + $0x390] sm:$0xf]
        %v908 = vld [vmem:[%s506 + $0x394] sm:$0xf]
        %v909 = vld [vmem:[%s506 + $0x398] sm:$0xf]
        %v910 = vld [vmem:[%s506 + $0x39c] sm:$0xf]
        %v911 = vld [vmem:[%s506 + $0x3a0] sm:$0xf]
        %v912 = vld [vmem:[%s506 + $0x3a4] sm:$0xf]
        %v913 = vld [vmem:[%s506 + $0x3a8] sm:$0xf]
        %v914 = vld [vmem:[%s506 + $0x3ac] sm:$0xf]
        %v915 = vld [vmem:[%s506 + $0x3b0] sm:$0xf]
        %v916 = vld [vmem:[%s506 + $0x3b4] sm:$0xf]
        %v917 = vld [vmem:[%s506 + $0x3b8] sm:$0xf]
        %v918 = vld [vmem:[%s506 + $0x3bc] sm:$0xf]
        %v919 = vld [vmem:[%s506 + $0x3c0] sm:$0xf]
        %v920 = vld [vmem:[%s506 + $0x3c4] sm:$0xf]
        %v921 = vld [vmem:[%s506 + $0x3c8] sm:$0xf]
        %v922 = vld [vmem:[%s506 + $0x3cc] sm:$0xf]
        %v923 = vld [vmem:[%s506 + $0x3d0] sm:$0xf]
        %v924 = vld [vmem:[%s506 + $0x3d4] sm:$0xf]
        %v925 = vld [vmem:[%s506 + $0x3d8] sm:$0xf]
        %v926 = vld [vmem:[%s506 + $0x3dc] sm:$0xf]
        %v927 = vld [vmem:[%s506 + $0x3e0] sm:$0xf]
        %v928 = vld [vmem:[%s506 + $0x3e4] sm:$0xf]
        %v929 = vld [vmem:[%s506 + $0x3e8] sm:$0xf]
        %v930 = vld [vmem:[%s506 + $0x3ec] sm:$0xf]
        %v931 = vld [vmem:[%s506 + $0x3f0] sm:$0xf]
        %v932 = vld [vmem:[%s506 + $0x3f4] sm:$0xf]
        %v933 = vld [vmem:[%s506 + $0x3f8] sm:$0xf]
        %v934 = vld [vmem:[%s506 + $0x3fc] sm:$0xf]
        %v1063 = vunpack.c.l.b16 %v551
        %v1064 = vunpack.c.h.b16 %v551
        %v1065 = vunpack.c.l.b16 %v552
        %v1066 = vunpack.c.h.b16 %v552
        %v1067 = vunpack.c.l.b16 %v553
        %v1068 = vunpack.c.h.b16 %v553
        %v1069 = vunpack.c.l.b16 %v554
        %v1070 = vunpack.c.h.b16 %v554
        %v1071 = vunpack.c.l.b16 %v555
        %v1072 = vunpack.c.h.b16 %v555
        %v1073 = vunpack.c.l.b16 %v556
        %v1074 = vunpack.c.h.b16 %v556
        %v1075 = vunpack.c.l.b16 %v557
        %v1076 = vunpack.c.h.b16 %v557
        %v1077 = vunpack.c.l.b16 %v558
        %v1078 = vunpack.c.h.b16 %v558
        %v1079 = vunpack.c.l.b16 %v559
        %v1080 = vunpack.c.h.b16 %v559
        %v1081 = vunpack.c.l.b16 %v560
        %v1082 = vunpack.c.h.b16 %v560
        %v1083 = vunpack.c.l.b16 %v561
        %v1084 = vunpack.c.h.b16 %v561
        %v1085 = vunpack.c.l.b16 %v562
        %v1086 = vunpack.c.h.b16 %v562
        %v1087 = vunpack.c.l.b16 %v563
        %v1088 = vunpack.c.h.b16 %v563
        %v1089 = vunpack.c.l.b16 %v564
        %v1090 = vunpack.c.h.b16 %v564
        %v1091 = vunpack.c.l.b16 %v565
        %v1092 = vunpack.c.h.b16 %v565
        %v1093 = vunpack.c.l.b16 %v566
        %v1094 = vunpack.c.h.b16 %v566
        %v1095 = vunpack.c.l.b16 %v567
        %v1096 = vunpack.c.h.b16 %v567
        %v1097 = vunpack.c.l.b16 %v568
        %v1098 = vunpack.c.h.b16 %v568
        %v1099 = vunpack.c.l.b16 %v569
        %v1100 = vunpack.c.h.b16 %v569
        %v1101 = vunpack.c.l.b16 %v570
        %v1102 = vunpack.c.h.b16 %v570
        %v1103 = vunpack.c.l.b16 %v571
        %v1104 = vunpack.c.h.b16 %v571
        %v1105 = vunpack.c.l.b16 %v572
        %v1106 = vunpack.c.h.b16 %v572
        %v1107 = vunpack.c.l.b16 %v573
        %v1108 = vunpack.c.h.b16 %v573
        %v1109 = vunpack.c.l.b16 %v574
        %v1110 = vunpack.c.h.b16 %v574
        %v1111 = vunpack.c.l.b16 %v575
        %v1112 = vunpack.c.h.b16 %v575
        %v1113 = vunpack.c.l.b16 %v576
        %v1114 = vunpack.c.h.b16 %v576
        %v1115 = vunpack.c.l.b16 %v577
        %v1116 = vunpack.c.h.b16 %v577
        %v1117 = vunpack.c.l.b16 %v578
        %v1118 = vunpack.c.h.b16 %v578
        %v1119 = vunpack.c.l.b16 %v579
        %v1120 = vunpack.c.h.b16 %v579
        %v1121 = vunpack.c.l.b16 %v580
        %v1122 = vunpack.c.h.b16 %v580
        %v1123 = vunpack.c.l.b16 %v581
        %v1124 = vunpack.c.h.b16 %v581
        %v1125 = vunpack.c.l.b16 %v582
        %v1126 = vunpack.c.h.b16 %v582
        %v1127 = vunpack.c.l.b16 %v583
        %v1128 = vunpack.c.h.b16 %v583
        %v1129 = vunpack.c.l.b16 %v584
        %v1130 = vunpack.c.h.b16 %v584
        %v1131 = vunpack.c.l.b16 %v585
        %v1132 = vunpack.c.h.b16 %v585
        %v1133 = vunpack.c.l.b16 %v586
        %v1134 = vunpack.c.h.b16 %v586
        %v1135 = vunpack.c.l.b16 %v587
        %v1136 = vunpack.c.h.b16 %v587
        %v1137 = vunpack.c.l.b16 %v588
        %v1138 = vunpack.c.h.b16 %v588
        %v1139 = vunpack.c.l.b16 %v589
        %v1140 = vunpack.c.h.b16 %v589
        %v1141 = vunpack.c.l.b16 %v590
        %v1142 = vunpack.c.h.b16 %v590
        %v1143 = vunpack.c.l.b16 %v591
        %v1144 = vunpack.c.h.b16 %v591
        %v1145 = vunpack.c.l.b16 %v592
        %v1146 = vunpack.c.h.b16 %v592
        %v1147 = vunpack.c.l.b16 %v593
        %v1148 = vunpack.c.h.b16 %v593
        %v1149 = vunpack.c.l.b16 %v594
        %v1150 = vunpack.c.h.b16 %v594
        %v1151 = vunpack.c.l.b16 %v595
        %v1152 = vunpack.c.h.b16 %v595
        %v1153 = vunpack.c.l.b16 %v596
        %v1154 = vunpack.c.h.b16 %v596
        %v1155 = vunpack.c.l.b16 %v597
        %v1156 = vunpack.c.h.b16 %v597
        %v1157 = vunpack.c.l.b16 %v598
        %v1158 = vunpack.c.h.b16 %v598
        %v1159 = vunpack.c.l.b16 %v599
        %v1160 = vunpack.c.h.b16 %v599
        %v1161 = vunpack.c.l.b16 %v600
        %v1162 = vunpack.c.h.b16 %v600
        %v1163 = vunpack.c.l.b16 %v601
        %v1164 = vunpack.c.h.b16 %v601
        %v1165 = vunpack.c.l.b16 %v602
        %v1166 = vunpack.c.h.b16 %v602
        %v1167 = vunpack.c.l.b16 %v603
        %v1168 = vunpack.c.h.b16 %v603
        %v1169 = vunpack.c.l.b16 %v604
        %v1170 = vunpack.c.h.b16 %v604
        %v1171 = vunpack.c.l.b16 %v605
        %v1172 = vunpack.c.h.b16 %v605
        %v1173 = vunpack.c.l.b16 %v606
        %v1174 = vunpack.c.h.b16 %v606
        %v1175 = vunpack.c.l.b16 %v607
        %v1176 = vunpack.c.h.b16 %v607
        %v1177 = vunpack.c.l.b16 %v608
        %v1178 = vunpack.c.h.b16 %v608
        %v1179 = vunpack.c.l.b16 %v609
        %v1180 = vunpack.c.h.b16 %v609
        %v1181 = vunpack.c.l.b16 %v610
        %v1182 = vunpack.c.h.b16 %v610
        %v1183 = vunpack.c.l.b16 %v611
        %v1184 = vunpack.c.h.b16 %v611
        %v1185 = vunpack.c.l.b16 %v612
        %v1186 = vunpack.c.h.b16 %v612
        %v1187 = vunpack.c.l.b16 %v613
        %v1188 = vunpack.c.h.b16 %v613
        %v1189 = vunpack.c.l.b16 %v614
        %v1190 = vunpack.c.h.b16 %v614
        %v1191 = vunpack.c.l.b16 %v615
        %v1192 = vunpack.c.h.b16 %v615
        %v1193 = vunpack.c.l.b16 %v616
        %v1194 = vunpack.c.h.b16 %v616
        %v1195 = vunpack.c.l.b16 %v617
        %v1196 = vunpack.c.h.b16 %v617
        %v1197 = vunpack.c.l.b16 %v618
        %v1198 = vunpack.c.h.b16 %v618
        %v1199 = vunpack.c.l.b16 %v619
        %v1200 = vunpack.c.h.b16 %v619
        %v1201 = vunpack.c.l.b16 %v620
        %v1202 = vunpack.c.h.b16 %v620
        %v1203 = vunpack.c.l.b16 %v621
        %v1204 = vunpack.c.h.b16 %v621
        %v1205 = vunpack.c.l.b16 %v622
        %v1206 = vunpack.c.h.b16 %v622
        %v1207 = vunpack.c.l.b16 %v623
        %v1208 = vunpack.c.h.b16 %v623
        %v1209 = vunpack.c.l.b16 %v624
        %v1210 = vunpack.c.h.b16 %v624
        %v1211 = vunpack.c.l.b16 %v625
        %v1212 = vunpack.c.h.b16 %v625
        %v1213 = vunpack.c.l.b16 %v626
        %v1214 = vunpack.c.h.b16 %v626
        %v1215 = vunpack.c.l.b16 %v627
        %v1216 = vunpack.c.h.b16 %v627
        %v1217 = vunpack.c.l.b16 %v628
        %v1218 = vunpack.c.h.b16 %v628
        %v1219 = vunpack.c.l.b16 %v629
        %v1220 = vunpack.c.h.b16 %v629
        %v1221 = vunpack.c.l.b16 %v630
        %v1222 = vunpack.c.h.b16 %v630
        %v1223 = vunpack.c.l.b16 %v631
        %v1224 = vunpack.c.h.b16 %v631
        %v1225 = vunpack.c.l.b16 %v632
        %v1226 = vunpack.c.h.b16 %v632
        %v1227 = vunpack.c.l.b16 %v633
        %v1228 = vunpack.c.h.b16 %v633
        %v1229 = vunpack.c.l.b16 %v634
        %v1230 = vunpack.c.h.b16 %v634
        %v1231 = vunpack.c.l.b16 %v635
        %v1232 = vunpack.c.h.b16 %v635
        %v1233 = vunpack.c.l.b16 %v636
        %v1234 = vunpack.c.h.b16 %v636
        %v1235 = vunpack.c.l.b16 %v637
        %v1236 = vunpack.c.h.b16 %v637
        %v1237 = vunpack.c.l.b16 %v638
        %v1238 = vunpack.c.h.b16 %v638
        %v1239 = vunpack.c.l.b16 %v639
        %v1240 = vunpack.c.h.b16 %v639
        %v1241 = vunpack.c.l.b16 %v640
        %v1242 = vunpack.c.h.b16 %v640
        %v1243 = vunpack.c.l.b16 %v641
        %v1244 = vunpack.c.h.b16 %v641
        %v1245 = vunpack.c.l.b16 %v642
        %v1246 = vunpack.c.h.b16 %v642
        %v1247 = vunpack.c.l.b16 %v643
        %v1248 = vunpack.c.h.b16 %v643
        %v1249 = vunpack.c.l.b16 %v644
        %v1250 = vunpack.c.h.b16 %v644
        %v1251 = vunpack.c.l.b16 %v645
        %v1252 = vunpack.c.h.b16 %v645
        %v1253 = vunpack.c.l.b16 %v646
        %v1254 = vunpack.c.h.b16 %v646
        %v1255 = vunpack.c.l.b16 %v647
        %v1256 = vunpack.c.h.b16 %v647
        %v1257 = vunpack.c.l.b16 %v648
        %v1258 = vunpack.c.h.b16 %v648
        %v1259 = vunpack.c.l.b16 %v649
        %v1260 = vunpack.c.h.b16 %v649
        %v1261 = vunpack.c.l.b16 %v650
        %v1262 = vunpack.c.h.b16 %v650
        %v1263 = vunpack.c.l.b16 %v651
        %v1264 = vunpack.c.h.b16 %v651
        %v1265 = vunpack.c.l.b16 %v652
        %v1266 = vunpack.c.h.b16 %v652
        %v1267 = vunpack.c.l.b16 %v653
        %v1268 = vunpack.c.h.b16 %v653
        %v1269 = vunpack.c.l.b16 %v654
        %v1270 = vunpack.c.h.b16 %v654
        %v1271 = vunpack.c.l.b16 %v655
        %v1272 = vunpack.c.h.b16 %v655
        %v1273 = vunpack.c.l.b16 %v656
        %v1274 = vunpack.c.h.b16 %v656
        %v1275 = vunpack.c.l.b16 %v657
        %v1276 = vunpack.c.h.b16 %v657
        %v1277 = vunpack.c.l.b16 %v658
        %v1278 = vunpack.c.h.b16 %v658
        %v1279 = vunpack.c.l.b16 %v659
        %v1280 = vunpack.c.h.b16 %v659
        %v1281 = vunpack.c.l.b16 %v660
        %v1282 = vunpack.c.h.b16 %v660
        %v1283 = vunpack.c.l.b16 %v661
        %v1284 = vunpack.c.h.b16 %v661
        %v1285 = vunpack.c.l.b16 %v662
        %v1286 = vunpack.c.h.b16 %v662
        %v1287 = vunpack.c.l.b16 %v663
        %v1288 = vunpack.c.h.b16 %v663
        %v1289 = vunpack.c.l.b16 %v664
        %v1290 = vunpack.c.h.b16 %v664
        %v1291 = vunpack.c.l.b16 %v665
        %v1292 = vunpack.c.h.b16 %v665
        %v1293 = vunpack.c.l.b16 %v666
        %v1294 = vunpack.c.h.b16 %v666
        %v1295 = vunpack.c.l.b16 %v667
        %v1296 = vunpack.c.h.b16 %v667
        %v1297 = vunpack.c.l.b16 %v668
        %v1298 = vunpack.c.h.b16 %v668
        %v1299 = vunpack.c.l.b16 %v669
        %v1300 = vunpack.c.h.b16 %v669
        %v1301 = vunpack.c.l.b16 %v670
        %v1302 = vunpack.c.h.b16 %v670
        %v1303 = vunpack.c.l.b16 %v671
        %v1304 = vunpack.c.h.b16 %v671
        %v1305 = vunpack.c.l.b16 %v672
        %v1306 = vunpack.c.h.b16 %v672
        %v1307 = vunpack.c.l.b16 %v673
        %v1308 = vunpack.c.h.b16 %v673
        %v1309 = vunpack.c.l.b16 %v674
        %v1310 = vunpack.c.h.b16 %v674
        %v1311 = vunpack.c.l.b16 %v675
        %v1312 = vunpack.c.h.b16 %v675
        %v1313 = vunpack.c.l.b16 %v676
        %v1314 = vunpack.c.h.b16 %v676
        %v1315 = vunpack.c.l.b16 %v677
        %v1316 = vunpack.c.h.b16 %v677
        %v1317 = vunpack.c.l.b16 %v678
        %v1318 = vunpack.c.h.b16 %v678
        %v1319 = vpack.c.b16 %v1079, %v1063
        %v1320 = vpack.c.b16 %v1080, %v1064
        %v1321 = vpack.c.b16 %v1081, %v1065
        %v1322 = vpack.c.b16 %v1082, %v1066
        %v1323 = vpack.c.b16 %v1083, %v1067
        %v1324 = vpack.c.b16 %v1084, %v1068
        %v1325 = vpack.c.b16 %v1085, %v1069
        %v1326 = vpack.c.b16 %v1086, %v1070
        %v1327 = vpack.c.b16 %v1087, %v1071
        %v1328 = vpack.c.b16 %v1088, %v1072
        %v1329 = vpack.c.b16 %v1089, %v1073
        %v1330 = vpack.c.b16 %v1090, %v1074
        %v1331 = vpack.c.b16 %v1091, %v1075
        %v1332 = vpack.c.b16 %v1092, %v1076
        %v1333 = vpack.c.b16 %v1093, %v1077
        %v1334 = vpack.c.b16 %v1094, %v1078
        %v1335 = vpack.c.b16 %v1111, %v1095
        %v1336 = vpack.c.b16 %v1112, %v1096
        %v1337 = vpack.c.b16 %v1113, %v1097
        %v1338 = vpack.c.b16 %v1114, %v1098
        %v1339 = vpack.c.b16 %v1115, %v1099
        %v1340 = vpack.c.b16 %v1116, %v1100
        %v1341 = vpack.c.b16 %v1117, %v1101
        %v1342 = vpack.c.b16 %v1118, %v1102
        %v1343 = vpack.c.b16 %v1119, %v1103
        %v1344 = vpack.c.b16 %v1120, %v1104
        %v1345 = vpack.c.b16 %v1121, %v1105
        %v1346 = vpack.c.b16 %v1122, %v1106
        %v1347 = vpack.c.b16 %v1123, %v1107
        %v1348 = vpack.c.b16 %v1124, %v1108
        %v1349 = vpack.c.b16 %v1125, %v1109
        %v1350 = vpack.c.b16 %v1126, %v1110
        %v1351 = vpack.c.b16 %v1143, %v1127
        %v1352 = vpack.c.b16 %v1144, %v1128
        %v1353 = vpack.c.b16 %v1145, %v1129
        %v1354 = vpack.c.b16 %v1146, %v1130
        %v1355 = vpack.c.b16 %v1147, %v1131
        %v1356 = vpack.c.b16 %v1148, %v1132
        %v1357 = vpack.c.b16 %v1149, %v1133
        %v1358 = vpack.c.b16 %v1150, %v1134
        %v1359 = vpack.c.b16 %v1151, %v1135
        %v1360 = vpack.c.b16 %v1152, %v1136
        %v1361 = vpack.c.b16 %v1153, %v1137
        %v1362 = vpack.c.b16 %v1154, %v1138
        %v1363 = vpack.c.b16 %v1155, %v1139
        %v1364 = vpack.c.b16 %v1156, %v1140
        %v1365 = vpack.c.b16 %v1157, %v1141
        %v1366 = vpack.c.b16 %v1158, %v1142
        %v1367 = vpack.c.b16 %v1175, %v1159
        %v1368 = vpack.c.b16 %v1176, %v1160
        %v1369 = vpack.c.b16 %v1177, %v1161
        %v1370 = vpack.c.b16 %v1178, %v1162
        %v1371 = vpack.c.b16 %v1179, %v1163
        %v1372 = vpack.c.b16 %v1180, %v1164
        %v1373 = vpack.c.b16 %v1181, %v1165
        %v1374 = vpack.c.b16 %v1182, %v1166
        %v1375 = vpack.c.b16 %v1183, %v1167
        %v1376 = vpack.c.b16 %v1184, %v1168
        %v1377 = vpack.c.b16 %v1185, %v1169
        %v1378 = vpack.c.b16 %v1186, %v1170
        %v1379 = vpack.c.b16 %v1187, %v1171
        %v1380 = vpack.c.b16 %v1188, %v1172
        %v1381 = vpack.c.b16 %v1189, %v1173
        %v1382 = vpack.c.b16 %v1190, %v1174
        %v1383 = vpack.c.b16 %v1207, %v1191
        %v1384 = vpack.c.b16 %v1208, %v1192
        %v1385 = vpack.c.b16 %v1209, %v1193
        %v1386 = vpack.c.b16 %v1210, %v1194
        %v1387 = vpack.c.b16 %v1211, %v1195
        %v1388 = vpack.c.b16 %v1212, %v1196
        %v1389 = vpack.c.b16 %v1213, %v1197
        %v1390 = vpack.c.b16 %v1214, %v1198
        %v1391 = vpack.c.b16 %v1215, %v1199
        %v1392 = vpack.c.b16 %v1216, %v1200
        %v1393 = vpack.c.b16 %v1217, %v1201
        %v1394 = vpack.c.b16 %v1218, %v1202
        %v1395 = vpack.c.b16 %v1219, %v1203
        %v1396 = vpack.c.b16 %v1220, %v1204
        %v1397 = vpack.c.b16 %v1221, %v1205
        %v1398 = vpack.c.b16 %v1222, %v1206
        %v1399 = vpack.c.b16 %v1239, %v1223
        %v1400 = vpack.c.b16 %v1240, %v1224
        %v1401 = vpack.c.b16 %v1241, %v1225
        %v1402 = vpack.c.b16 %v1242, %v1226
        %v1403 = vpack.c.b16 %v1243, %v1227
        %v1404 = vpack.c.b16 %v1244, %v1228
        %v1405 = vpack.c.b16 %v1245, %v1229
        %v1406 = vpack.c.b16 %v1246, %v1230
        %v1407 = vpack.c.b16 %v1247, %v1231
        %v1408 = vpack.c.b16 %v1248, %v1232
        %v1409 = vpack.c.b16 %v1249, %v1233
        %v1410 = vpack.c.b16 %v1250, %v1234
        %v1411 = vpack.c.b16 %v1251, %v1235
        %v1412 = vpack.c.b16 %v1252, %v1236
        %v1413 = vpack.c.b16 %v1253, %v1237
        %v1414 = vpack.c.b16 %v1254, %v1238
        %v1415 = vpack.c.b16 %v1271, %v1255
        %v1416 = vpack.c.b16 %v1272, %v1256
        %v1417 = vpack.c.b16 %v1273, %v1257
        %v1418 = vpack.c.b16 %v1274, %v1258
        %v1419 = vpack.c.b16 %v1275, %v1259
        %v1420 = vpack.c.b16 %v1276, %v1260
        %v1421 = vpack.c.b16 %v1277, %v1261
        %v1422 = vpack.c.b16 %v1278, %v1262
        %v1423 = vpack.c.b16 %v1279, %v1263
        %v1424 = vpack.c.b16 %v1280, %v1264
        %v1425 = vpack.c.b16 %v1281, %v1265
        %v1426 = vpack.c.b16 %v1282, %v1266
        %v1427 = vpack.c.b16 %v1283, %v1267
        %v1428 = vpack.c.b16 %v1284, %v1268
        %v1429 = vpack.c.b16 %v1285, %v1269
        %v1430 = vpack.c.b16 %v1286, %v1270
        %v1431 = vpack.c.b16 %v1303, %v1287
        %v1432 = vpack.c.b16 %v1304, %v1288
        %v1433 = vpack.c.b16 %v1305, %v1289
        %v1434 = vpack.c.b16 %v1306, %v1290
        %v1435 = vpack.c.b16 %v1307, %v1291
        %v1436 = vpack.c.b16 %v1308, %v1292
        %v1437 = vpack.c.b16 %v1309, %v1293
        %v1438 = vpack.c.b16 %v1310, %v1294
        %v1439 = vpack.c.b16 %v1311, %v1295
        %v1440 = vpack.c.b16 %v1312, %v1296
        %v1441 = vpack.c.b16 %v1313, %v1297
        %v1442 = vpack.c.b16 %v1314, %v1298
        %v1443 = vpack.c.b16 %v1315, %v1299
        %v1444 = vpack.c.b16 %v1316, %v1300
        %v1445 = vpack.c.b16 %v1317, %v1301
        %v1446 = vpack.c.b16 %v1318, %v1302
        %v1831 = vunpack.c.l.b16 %v679
        %v1832 = vunpack.c.l.b16 %v680
        %v1833 = vunpack.c.l.b16 %v681
        %v1834 = vunpack.c.l.b16 %v682
        %v1835 = vunpack.c.l.b16 %v683
        %v1836 = vunpack.c.l.b16 %v684
        %v1837 = vunpack.c.l.b16 %v685
        %v1838 = vunpack.c.l.b16 %v686
        %v1839 = vunpack.c.l.b16 %v687
        %v1840 = vunpack.c.l.b16 %v688
        %v1841 = vunpack.c.l.b16 %v689
        %v1842 = vunpack.c.l.b16 %v690
        %v1843 = vunpack.c.l.b16 %v691
        %v1844 = vunpack.c.l.b16 %v692
        %v1845 = vunpack.c.l.b16 %v693
        %v1846 = vunpack.c.l.b16 %v694
        %v1847 = vunpack.c.l.b16 %v695
        %v1848 = vunpack.c.l.b16 %v696
        %v1849 = vunpack.c.l.b16 %v697
        %v1850 = vunpack.c.l.b16 %v698
        %v1851 = vunpack.c.l.b16 %v699
        %v1852 = vunpack.c.l.b16 %v700
        %v1853 = vunpack.c.l.b16 %v701
        %v1854 = vunpack.c.l.b16 %v702
        %v1855 = vunpack.c.l.b16 %v703
        %v1856 = vunpack.c.l.b16 %v704
        %v1857 = vunpack.c.l.b16 %v705
        %v1858 = vunpack.c.l.b16 %v706
        %v1859 = vunpack.c.l.b16 %v707
        %v1860 = vunpack.c.l.b16 %v708
        %v1861 = vunpack.c.l.b16 %v709
        %v1862 = vunpack.c.l.b16 %v710
        %v1863 = vunpack.c.l.b16 %v711
        %v1864 = vunpack.c.l.b16 %v712
        %v1865 = vunpack.c.l.b16 %v713
        %v1866 = vunpack.c.l.b16 %v714
        %v1867 = vunpack.c.l.b16 %v715
        %v1868 = vunpack.c.l.b16 %v716
        %v1869 = vunpack.c.l.b16 %v717
        %v1870 = vunpack.c.l.b16 %v718
        %v1871 = vunpack.c.l.b16 %v719
        %v1872 = vunpack.c.l.b16 %v720
        %v1873 = vunpack.c.l.b16 %v721
        %v1874 = vunpack.c.l.b16 %v722
        %v1875 = vunpack.c.l.b16 %v723
        %v1876 = vunpack.c.l.b16 %v724
        %v1877 = vunpack.c.l.b16 %v725
        %v1878 = vunpack.c.l.b16 %v726
        %v1879 = vunpack.c.l.b16 %v727
        %v1880 = vunpack.c.l.b16 %v728
        %v1881 = vunpack.c.l.b16 %v729
        %v1882 = vunpack.c.l.b16 %v730
        %v1883 = vunpack.c.l.b16 %v731
        %v1884 = vunpack.c.l.b16 %v732
        %v1885 = vunpack.c.l.b16 %v733
        %v1886 = vunpack.c.l.b16 %v734
        %v1887 = vunpack.c.l.b16 %v735
        %v1888 = vunpack.c.l.b16 %v736
        %v1889 = vunpack.c.l.b16 %v737
        %v1890 = vunpack.c.l.b16 %v738
        %v1891 = vunpack.c.l.b16 %v739
        %v1892 = vunpack.c.l.b16 %v740
        %v1893 = vunpack.c.l.b16 %v741
        %v1894 = vunpack.c.l.b16 %v742
        %v1895 = vunpack.c.l.b16 %v743
        %v1896 = vunpack.c.l.b16 %v744
        %v1897 = vunpack.c.l.b16 %v745
        %v1898 = vunpack.c.l.b16 %v746
        %v1899 = vunpack.c.l.b16 %v747
        %v1900 = vunpack.c.l.b16 %v748
        %v1901 = vunpack.c.l.b16 %v749
        %v1902 = vunpack.c.l.b16 %v750
        %v1903 = vunpack.c.l.b16 %v751
        %v1904 = vunpack.c.l.b16 %v752
        %v1905 = vunpack.c.l.b16 %v753
        %v1906 = vunpack.c.l.b16 %v754
        %v1907 = vunpack.c.l.b16 %v755
        %v1908 = vunpack.c.l.b16 %v756
        %v1909 = vunpack.c.l.b16 %v757
        %v1910 = vunpack.c.l.b16 %v758
        %v1911 = vunpack.c.l.b16 %v759
        %v1912 = vunpack.c.l.b16 %v760
        %v1913 = vunpack.c.l.b16 %v761
        %v1914 = vunpack.c.l.b16 %v762
        %v1915 = vunpack.c.l.b16 %v763
        %v1916 = vunpack.c.l.b16 %v764
        %v1917 = vunpack.c.l.b16 %v765
        %v1918 = vunpack.c.l.b16 %v766
        %v1919 = vunpack.c.l.b16 %v767
        %v1920 = vunpack.c.l.b16 %v768
        %v1921 = vunpack.c.l.b16 %v769
        %v1922 = vunpack.c.l.b16 %v770
        %v1923 = vunpack.c.l.b16 %v771
        %v1924 = vunpack.c.l.b16 %v772
        %v1925 = vunpack.c.l.b16 %v773
        %v1926 = vunpack.c.l.b16 %v774
        %v1927 = vunpack.c.l.b16 %v775
        %v1928 = vunpack.c.l.b16 %v776
        %v1929 = vunpack.c.l.b16 %v777
        %v1930 = vunpack.c.l.b16 %v778
        %v1931 = vunpack.c.l.b16 %v779
        %v1932 = vunpack.c.l.b16 %v780
        %v1933 = vunpack.c.l.b16 %v781
        %v1934 = vunpack.c.l.b16 %v782
        %v1935 = vunpack.c.l.b16 %v783
        %v1936 = vunpack.c.l.b16 %v784
        %v1937 = vunpack.c.l.b16 %v785
        %v1938 = vunpack.c.l.b16 %v786
        %v1939 = vunpack.c.l.b16 %v787
        %v1940 = vunpack.c.l.b16 %v788
        %v1941 = vunpack.c.l.b16 %v789
        %v1942 = vunpack.c.l.b16 %v790
        %v1943 = vunpack.c.l.b16 %v791
        %v1944 = vunpack.c.l.b16 %v792
        %v1945 = vunpack.c.l.b16 %v793
        %v1946 = vunpack.c.l.b16 %v794
        %v1947 = vunpack.c.l.b16 %v795
        %v1948 = vunpack.c.l.b16 %v796
        %v1949 = vunpack.c.l.b16 %v797
        %v1950 = vunpack.c.l.b16 %v798
        %v1951 = vunpack.c.l.b16 %v799
        %v1952 = vunpack.c.l.b16 %v800
        %v1953 = vunpack.c.l.b16 %v801
        %v1954 = vunpack.c.l.b16 %v802
        %v1955 = vunpack.c.l.b16 %v803
        %v1956 = vunpack.c.l.b16 %v804
        %v1957 = vunpack.c.l.b16 %v805
        %v1958 = vunpack.c.l.b16 %v806
        %v1959 = vunpack.c.l.b16 %v807
        %v1960 = vunpack.c.l.b16 %v808
        %v1961 = vunpack.c.l.b16 %v809
        %v1962 = vunpack.c.l.b16 %v810
        %v1963 = vunpack.c.l.b16 %v811
        %v1964 = vunpack.c.l.b16 %v812
        %v1965 = vunpack.c.l.b16 %v813
        %v1966 = vunpack.c.l.b16 %v814
        %v1967 = vunpack.c.l.b16 %v815
        %v1968 = vunpack.c.l.b16 %v816
        %v1969 = vunpack.c.l.b16 %v817
        %v1970 = vunpack.c.l.b16 %v818
        %v1971 = vunpack.c.l.b16 %v819
        %v1972 = vunpack.c.l.b16 %v820
        %v1973 = vunpack.c.l.b16 %v821
        %v1974 = vunpack.c.l.b16 %v822
        %v1975 = vunpack.c.l.b16 %v823
        %v1976 = vunpack.c.l.b16 %v824
        %v1977 = vunpack.c.l.b16 %v825
        %v1978 = vunpack.c.l.b16 %v826
        %v1979 = vunpack.c.l.b16 %v827
        %v1980 = vunpack.c.l.b16 %v828
        %v1981 = vunpack.c.l.b16 %v829
        %v1982 = vunpack.c.l.b16 %v830
        %v1983 = vunpack.c.l.b16 %v831
        %v1984 = vunpack.c.l.b16 %v832
        %v1985 = vunpack.c.l.b16 %v833
        %v1986 = vunpack.c.l.b16 %v834
        %v1987 = vunpack.c.l.b16 %v835
        %v1988 = vunpack.c.l.b16 %v836
        %v1989 = vunpack.c.l.b16 %v837
        %v1990 = vunpack.c.l.b16 %v838
        %v1991 = vunpack.c.l.b16 %v839
        %v1992 = vunpack.c.l.b16 %v840
        %v1993 = vunpack.c.l.b16 %v841
        %v1994 = vunpack.c.l.b16 %v842
        %v1995 = vunpack.c.l.b16 %v843
        %v1996 = vunpack.c.l.b16 %v844
        %v1997 = vunpack.c.l.b16 %v845
        %v1998 = vunpack.c.l.b16 %v846
        %v1999 = vunpack.c.l.b16 %v847
        %v2000 = vunpack.c.l.b16 %v848
        %v2001 = vunpack.c.l.b16 %v849
        %v2002 = vunpack.c.l.b16 %v850
        %v2003 = vunpack.c.l.b16 %v851
        %v2004 = vunpack.c.l.b16 %v852
        %v2005 = vunpack.c.l.b16 %v853
        %v2006 = vunpack.c.l.b16 %v854
        %v2007 = vunpack.c.l.b16 %v855
        %v2008 = vunpack.c.l.b16 %v856
        %v2009 = vunpack.c.l.b16 %v857
        %v2010 = vunpack.c.l.b16 %v858
        %v2011 = vunpack.c.l.b16 %v859
        %v2012 = vunpack.c.l.b16 %v860
        %v2013 = vunpack.c.l.b16 %v861
        %v2014 = vunpack.c.l.b16 %v862
        %v2015 = vunpack.c.l.b16 %v863
        %v2016 = vunpack.c.l.b16 %v864
        %v2017 = vunpack.c.l.b16 %v865
        %v2018 = vunpack.c.l.b16 %v866
        %v2019 = vunpack.c.l.b16 %v867
        %v2020 = vunpack.c.l.b16 %v868
        %v2021 = vunpack.c.l.b16 %v869
        %v2022 = vunpack.c.l.b16 %v870
        %v2023 = vunpack.c.l.b16 %v871
        %v2024 = vunpack.c.l.b16 %v872
        %v2025 = vunpack.c.l.b16 %v873
        %v2026 = vunpack.c.l.b16 %v874
        %v2027 = vunpack.c.l.b16 %v875
        %v2028 = vunpack.c.l.b16 %v876
        %v2029 = vunpack.c.l.b16 %v877
        %v2030 = vunpack.c.l.b16 %v878
        %v2031 = vunpack.c.l.b16 %v879
        %v2032 = vunpack.c.l.b16 %v880
        %v2033 = vunpack.c.l.b16 %v881
        %v2034 = vunpack.c.l.b16 %v882
        %v2035 = vunpack.c.l.b16 %v883
        %v2036 = vunpack.c.l.b16 %v884
        %v2037 = vunpack.c.l.b16 %v885
        %v2038 = vunpack.c.l.b16 %v886
        %v2039 = vunpack.c.l.b16 %v887
        %v2040 = vunpack.c.l.b16 %v888
        %v2041 = vunpack.c.l.b16 %v889
        %v2042 = vunpack.c.l.b16 %v890
        %v2043 = vunpack.c.l.b16 %v891
        %v2044 = vunpack.c.l.b16 %v892
        %v2045 = vunpack.c.l.b16 %v893
        %v2046 = vunpack.c.l.b16 %v894
        %v2047 = vunpack.c.l.b16 %v895
        %v2048 = vunpack.c.l.b16 %v896
        %v2049 = vunpack.c.l.b16 %v897
        %v2050 = vunpack.c.l.b16 %v898
        %v2051 = vunpack.c.l.b16 %v899
        %v2052 = vunpack.c.l.b16 %v900
        %v2053 = vunpack.c.l.b16 %v901
        %v2054 = vunpack.c.l.b16 %v902
        %v2055 = vunpack.c.l.b16 %v903
        %v2056 = vunpack.c.l.b16 %v904
        %v2057 = vunpack.c.l.b16 %v905
        %v2058 = vunpack.c.l.b16 %v906
        %v2059 = vunpack.c.l.b16 %v907
        %v2060 = vunpack.c.l.b16 %v908
        %v2061 = vunpack.c.l.b16 %v909
        %v2062 = vunpack.c.l.b16 %v910
        %v2063 = vunpack.c.l.b16 %v911
        %v2064 = vunpack.c.l.b16 %v912
        %v2065 = vunpack.c.l.b16 %v913
        %v2066 = vunpack.c.l.b16 %v914
        %v2067 = vunpack.c.l.b16 %v915
        %v2068 = vunpack.c.l.b16 %v916
        %v2069 = vunpack.c.l.b16 %v917
        %v2070 = vunpack.c.l.b16 %v918
        %v2071 = vunpack.c.l.b16 %v919
        %v2072 = vunpack.c.l.b16 %v920
        %v2073 = vunpack.c.l.b16 %v921
        %v2074 = vunpack.c.l.b16 %v922
        %v2075 = vunpack.c.l.b16 %v923
        %v2076 = vunpack.c.l.b16 %v924
        %v2077 = vunpack.c.l.b16 %v925
        %v2078 = vunpack.c.l.b16 %v926
        %v2079 = vunpack.c.l.b16 %v927
        %v2080 = vunpack.c.l.b16 %v928
        %v2081 = vunpack.c.l.b16 %v929
        %v2082 = vunpack.c.l.b16 %v930
        %v2083 = vunpack.c.l.b16 %v931
        %v2084 = vunpack.c.l.b16 %v932
        %v2085 = vunpack.c.l.b16 %v933
        %v2086 = vunpack.c.l.b16 %v934
        %v2087 = vpack.c.b16 %v1832, %v1831
        %v2088 = vpack.c.b16 %v1834, %v1833
        %v2089 = vpack.c.b16 %v1836, %v1835
        %v2090 = vpack.c.b16 %v1838, %v1837
        %v2091 = vpack.c.b16 %v1840, %v1839
        %v2092 = vpack.c.b16 %v1842, %v1841
        %v2093 = vpack.c.b16 %v1844, %v1843
        %v2094 = vpack.c.b16 %v1846, %v1845
        %v2095 = vpack.c.b16 %v1848, %v1847
        %v2096 = vpack.c.b16 %v1850, %v1849
        %v2097 = vpack.c.b16 %v1852, %v1851
        %v2098 = vpack.c.b16 %v1854, %v1853
        %v2099 = vpack.c.b16 %v1856, %v1855
        %v2100 = vpack.c.b16 %v1858, %v1857
        %v2101 = vpack.c.b16 %v1860, %v1859
        %v2102 = vpack.c.b16 %v1862, %v1861
        %v2103 = vpack.c.b16 %v1864, %v1863
        %v2104 = vpack.c.b16 %v1866, %v1865
        %v2105 = vpack.c.b16 %v1868, %v1867
        %v2106 = vpack.c.b16 %v1870, %v1869
        %v2107 = vpack.c.b16 %v1872, %v1871
        %v2108 = vpack.c.b16 %v1874, %v1873
        %v2109 = vpack.c.b16 %v1876, %v1875
        %v2110 = vpack.c.b16 %v1878, %v1877
        %v2111 = vpack.c.b16 %v1880, %v1879
        %v2112 = vpack.c.b16 %v1882, %v1881
        %v2113 = vpack.c.b16 %v1884, %v1883
        %v2114 = vpack.c.b16 %v1886, %v1885
        %v2115 = vpack.c.b16 %v1888, %v1887
        %v2116 = vpack.c.b16 %v1890, %v1889
        %v2117 = vpack.c.b16 %v1892, %v1891
        %v2118 = vpack.c.b16 %v1894, %v1893
        %v2119 = vpack.c.b16 %v1896, %v1895
        %v2120 = vpack.c.b16 %v1898, %v1897
        %v2121 = vpack.c.b16 %v1900, %v1899
        %v2122 = vpack.c.b16 %v1902, %v1901
        %v2123 = vpack.c.b16 %v1904, %v1903
        %v2124 = vpack.c.b16 %v1906, %v1905
        %v2125 = vpack.c.b16 %v1908, %v1907
        %v2126 = vpack.c.b16 %v1910, %v1909
        %v2127 = vpack.c.b16 %v1912, %v1911
        %v2128 = vpack.c.b16 %v1914, %v1913
        %v2129 = vpack.c.b16 %v1916, %v1915
        %v2130 = vpack.c.b16 %v1918, %v1917
        %v2131 = vpack.c.b16 %v1920, %v1919
        %v2132 = vpack.c.b16 %v1922, %v1921
        %v2133 = vpack.c.b16 %v1924, %v1923
        %v2134 = vpack.c.b16 %v1926, %v1925
        %v2135 = vpack.c.b16 %v1928, %v1927
        %v2136 = vpack.c.b16 %v1930, %v1929
        %v2137 = vpack.c.b16 %v1932, %v1931
        %v2138 = vpack.c.b16 %v1934, %v1933
        %v2139 = vpack.c.b16 %v1936, %v1935
        %v2140 = vpack.c.b16 %v1938, %v1937
        %v2141 = vpack.c.b16 %v1940, %v1939
        %v2142 = vpack.c.b16 %v1942, %v1941
        %v2143 = vpack.c.b16 %v1944, %v1943
        %v2144 = vpack.c.b16 %v1946, %v1945
        %v2145 = vpack.c.b16 %v1948, %v1947
        %v2146 = vpack.c.b16 %v1950, %v1949
        %v2147 = vpack.c.b16 %v1952, %v1951
        %v2148 = vpack.c.b16 %v1954, %v1953
        %v2149 = vpack.c.b16 %v1956, %v1955
        %v2150 = vpack.c.b16 %v1958, %v1957
        %v2151 = vpack.c.b16 %v1960, %v1959
        %v2152 = vpack.c.b16 %v1962, %v1961
        %v2153 = vpack.c.b16 %v1964, %v1963
        %v2154 = vpack.c.b16 %v1966, %v1965
        %v2155 = vpack.c.b16 %v1968, %v1967
        %v2156 = vpack.c.b16 %v1970, %v1969
        %v2157 = vpack.c.b16 %v1972, %v1971
        %v2158 = vpack.c.b16 %v1974, %v1973
        %v2159 = vpack.c.b16 %v1976, %v1975
        %v2160 = vpack.c.b16 %v1978, %v1977
        %v2161 = vpack.c.b16 %v1980, %v1979
        %v2162 = vpack.c.b16 %v1982, %v1981
        %v2163 = vpack.c.b16 %v1984, %v1983
        %v2164 = vpack.c.b16 %v1986, %v1985
        %v2165 = vpack.c.b16 %v1988, %v1987
        %v2166 = vpack.c.b16 %v1990, %v1989
        %v2167 = vpack.c.b16 %v1992, %v1991
        %v2168 = vpack.c.b16 %v1994, %v1993
        %v2169 = vpack.c.b16 %v1996, %v1995
        %v2170 = vpack.c.b16 %v1998, %v1997
        %v2171 = vpack.c.b16 %v2000, %v1999
        %v2172 = vpack.c.b16 %v2002, %v2001
        %v2173 = vpack.c.b16 %v2004, %v2003
        %v2174 = vpack.c.b16 %v2006, %v2005
        %v2175 = vpack.c.b16 %v2008, %v2007
        %v2176 = vpack.c.b16 %v2010, %v2009
        %v2177 = vpack.c.b16 %v2012, %v2011
        %v2178 = vpack.c.b16 %v2014, %v2013
        %v2179 = vpack.c.b16 %v2016, %v2015
        %v2180 = vpack.c.b16 %v2018, %v2017
        %v2181 = vpack.c.b16 %v2020, %v2019
        %v2182 = vpack.c.b16 %v2022, %v2021
        %v2183 = vpack.c.b16 %v2024, %v2023
        %v2184 = vpack.c.b16 %v2026, %v2025
        %v2185 = vpack.c.b16 %v2028, %v2027
        %v2186 = vpack.c.b16 %v2030, %v2029
        %v2187 = vpack.c.b16 %v2032, %v2031
        %v2188 = vpack.c.b16 %v2034, %v2033
        %v2189 = vpack.c.b16 %v2036, %v2035
        %v2190 = vpack.c.b16 %v2038, %v2037
        %v2191 = vpack.c.b16 %v2040, %v2039
        %v2192 = vpack.c.b16 %v2042, %v2041
        %v2193 = vpack.c.b16 %v2044, %v2043
        %v2194 = vpack.c.b16 %v2046, %v2045
        %v2195 = vpack.c.b16 %v2048, %v2047
        %v2196 = vpack.c.b16 %v2050, %v2049
        %v2197 = vpack.c.b16 %v2052, %v2051
        %v2198 = vpack.c.b16 %v2054, %v2053
        %v2199 = vpack.c.b16 %v2056, %v2055
        %v2200 = vpack.c.b16 %v2058, %v2057
        %v2201 = vpack.c.b16 %v2060, %v2059
        %v2202 = vpack.c.b16 %v2062, %v2061
        %v2203 = vpack.c.b16 %v2064, %v2063
        %v2204 = vpack.c.b16 %v2066, %v2065
        %v2205 = vpack.c.b16 %v2068, %v2067
        %v2206 = vpack.c.b16 %v2070, %v2069
        %v2207 = vpack.c.b16 %v2072, %v2071
        %v2208 = vpack.c.b16 %v2074, %v2073
        %v2209 = vpack.c.b16 %v2076, %v2075
        %v2210 = vpack.c.b16 %v2078, %v2077
        %v2211 = vpack.c.b16 %v2080, %v2079
        %v2212 = vpack.c.b16 %v2082, %v2081
        %v2213 = vpack.c.b16 %v2084, %v2083
        %v2214 = vpack.c.b16 %v2086, %v2085
        %2343 = vmatprep.subr.bf16.mxu0 0
        %2344 = vmatpush1.bf16.msra.mxu0 %v2087
        %2345 = vmatprep.subr.bf16.mxu0 0
        %2346 = vmatpush1.bf16.msra.mxu0 %v2088
        %2347 = vmatprep.subr.bf16.mxu0 0
        %2348 = vmatpush1.bf16.msra.mxu0 %v2089
        %2349 = vmatprep.subr.bf16.mxu0 0
        %2350 = vmatpush1.bf16.msra.mxu0 %v2090
        %2351 = vmatprep.subr.bf16.mxu0 0
        %2352 = vmatpush1.bf16.msra.mxu0 %v2091
        %2353 = vmatprep.subr.bf16.mxu0 0
        %2354 = vmatpush1.bf16.msra.mxu0 %v2092
        %2355 = vmatprep.subr.bf16.mxu0 0
        %2356 = vmatpush1.bf16.msra.mxu0 %v2093
        %2357 = vmatprep.subr.bf16.mxu0 0
        %2358 = vmatpush1.bf16.msra.mxu0 %v2094
        %2359 = vmatprep.subr.bf16.mxu0 0
        %2360 = vmatpush1.bf16.msra.mxu0 %v2095
        %2361 = vmatprep.subr.bf16.mxu0 0
        %2362 = vmatpush1.bf16.msra.mxu0 %v2096
        %2363 = vmatprep.subr.bf16.mxu0 0
        %2364 = vmatpush1.bf16.msra.mxu0 %v2097
        %2365 = vmatprep.subr.bf16.mxu0 0
        %2366 = vmatpush1.bf16.msra.mxu0 %v2098
        %2367 = vmatprep.subr.bf16.mxu0 0
        %2368 = vmatpush1.bf16.msra.mxu0 %v2099
        %2369 = vmatprep.subr.bf16.mxu0 0
        %2370 = vmatpush1.bf16.msra.mxu0 %v2100
        %2371 = vmatprep.subr.bf16.mxu0 0
        %2372 = vmatpush1.bf16.msra.mxu0 %v2101
        %2373 = vmatprep.subr.bf16.mxu0 0
        %2374 = vmatpush1.bf16.msra.mxu0 %v2102
        %2375 = vmatprep.mubr.bf16.mxu0 %v1320
        %2376 = vmatmul.mubr.bf16.gmra.mrb[0].mxu0 %v1319
        %v2377 = vpop.f32.mrb[0].mxu0
        %v2378 = vadd.f32 0.0, %v2377
        %v2379 = vpop.f32.mrb[0].mxu0
        %v2380 = vpop.f32.mrb[0].mxu0
        %v2381 = vadd.f32 0.0, %v2380
        %v2382 = vpop.f32.mrb[0].mxu0
        %2383 = vmatprep.mubr.bf16.mxu0 %v1336
        %2384 = vmatmul.mubr.bf16.gmra.mrb[0].mxu0 %v1335
        %v2385 = vpop.f32.mrb[0].mxu0
        %v2386 = vadd.f32 0.0, %v2385
        %v2387 = vpop.f32.mrb[0].mxu0
        %v2388 = vpop.f32.mrb[0].mxu0
        %v2389 = vadd.f32 0.0, %v2388
        %v2390 = vpop.f32.mrb[0].mxu0
        %2391 = vmatprep.mubr.bf16.mxu0 %v1352
        %2392 = vmatmul.mubr.bf16.gmra.mrb[0].mxu0 %v1351
        %v2393 = vpop.f32.mrb[0].mxu0
        %v2394 = vadd.f32 0.0, %v2393
        %v2395 = vpop.f32.mrb[0].mxu0
        %v2396 = vpop.f32.mrb[0].mxu0
        %v2397 = vadd.f32 0.0, %v2396
        %v2398 = vpop.f32.mrb[0].mxu0
        %2399 = vmatprep.mubr.bf16.mxu0 %v1368
        %2400 = vmatmul.mubr.bf16.gmra.mrb[0].mxu0 %v1367
        %v2401 = vpop.f32.mrb[0].mxu0
        %v2402 = vadd.f32 0.0, %v2401
        %v2403 = vpop.f32.mrb[0].mxu0
        %v2404 = vpop.f32.mrb[0].mxu0
        %v2405 = vadd.f32 0.0, %v2404
        %v2406 = vpop.f32.mrb[0].mxu0
        %2407 = vmatprep.mubr.bf16.mxu0 %v1384
        %2408 = vmatmul.mubr.bf16.gmra.mrb[0].mxu0 %v1383
        %v2409 = vpop.f32.mrb[0].mxu0
        %v2410 = vadd.f32 0.0, %v2409
        %v2411 = vpop.f32.mrb[0].mxu0
        %v2412 = vpop.f32.mrb[0].mxu0
        %v2413 = vadd.f32 0.0, %v2412
        %v2414 = vpop.f32.mrb[0].mxu0
        %2415 = vmatprep.mubr.bf16.mxu0 %v1400
        %2416 = vmatmul.mubr.bf16.gmra.mrb[0].mxu0 %v1399
        %v2417 = vpop.f32.mrb[0].mxu0
        %v2418 = vadd.f32 0.0, %v2417
        %v2419 = vpop.f32.mrb[0].mxu0
        %v2420 = vpop.f32.mrb[0].mxu0
        %v2421 = vadd.f32 0.0, %v2420
        %v2422 = vpop.f32.mrb[0].mxu0
        %2423 = vmatprep.mubr.bf16.mxu0 %v1416
        %2424 = vmatmul.mubr.bf16.gmra.mrb[0].mxu0 %v1415
        %v2425 = vpop.f32.mrb[0].mxu0
        %v2426 = vadd.f32 0.0, %v2425
        %v2427 = vpop.f32.mrb[0].mxu0
        %v2428 = vpop.f32.mrb[0].mxu0
        %v2429 = vadd.f32 0.0, %v2428
        %v2430 = vpop.f32.mrb[0].mxu0
        %2431 = vmatprep.mubr.bf16.mxu0 %v1432
        %2432 = vmatmul.mubr.bf16.gmra.mrb[0].mxu0 %v1431
        %v2433 = vpop.f32.mrb[0].mxu0
        %v2434 = vadd.f32 0.0, %v2433
        %v2435 = vpop.f32.mrb[0].mxu0
        %v2436 = vpop.f32.mrb[0].mxu0
        %v2437 = vadd.f32 0.0, %v2436
        %v2438 = vpop.f32.mrb[0].mxu0
        %2439 = vdwg.mxu0
        %2440 = vmatprep.subr.bf16.mxu0 0
        %2441 = vmatpush1.bf16.msra.mxu0 %v2103
        %2442 = vmatprep.subr.bf16.mxu0 0
        %2443 = vmatpush1.bf16.msra.mxu0 %v2104
        %2444 = vmatprep.subr.bf16.mxu0 0
        %2445 = vmatpush1.bf16.msra.mxu0 %v2105
        %2446 = vmatprep.subr.bf16.mxu0 0
        %2447 = vmatpush1.bf16.msra.mxu0 %v2106
        %2448 = vmatprep.subr.bf16.mxu0 0
        %2449 = vmatpush1.bf16.msra.mxu0 %v2107
        %2450 = vmatprep.subr.bf16.mxu0 0
        %2451 = vmatpush1.bf16.msra.mxu0 %v2108
        %2452 = vmatprep.subr.bf16.mxu0 0
        %2453 = vmatpush1.bf16.msra.mxu0 %v2109
        %2454 = vmatprep.subr.bf16.mxu0 0
        %2455 = vmatpush1.bf16.msra.mxu0 %v2110
        %2456 = vmatprep.subr.bf16.mxu0 0
        %2457 = vmatpush1.bf16.msra.mxu0 %v2111
        %2458 = vmatprep.subr.bf16.mxu0 0
        %2459 = vmatpush1.bf16.msra.mxu0 %v2112
        %2460 = vmatprep.subr.bf16.mxu0 0
        %2461 = vmatpush1.bf16.msra.mxu0 %v2113
        %2462 = vmatprep.subr.bf16.mxu0 0
        %2463 = vmatpush1.bf16.msra.mxu0 %v2114
        %2464 = vmatprep.subr.bf16.mxu0 0
        %2465 = vmatpush1.bf16.msra.mxu0 %v2115
        %2466 = vmatprep.subr.bf16.mxu0 0
        %2467 = vmatpush1.bf16.msra.mxu0 %v2116
        %2468 = vmatprep.subr.bf16.mxu0 0
        %2469 = vmatpush1.bf16.msra.mxu0 %v2117
        %2470 = vmatprep.subr.bf16.mxu0 0
        %2471 = vmatpush1.bf16.msra.mxu0 %v2118
        %2472 = vmatprep.mubr.bf16.mxu0 %v1322
        %2473 = vmatmul.mubr.bf16.gmra.mrb[0].mxu0 %v1321
        %v2474 = vpop.f32.mrb[0].mxu0
        %v2475 = vadd.f32 %v2378, %v2474
        %v2476 = vpop.f32.mrb[0].mxu0
        %v2477 = vpop.f32.mrb[0].mxu0
        %v2478 = vadd.f32 %v2381, %v2477
        %v2479 = vpop.f32.mrb[0].mxu0
        %2480 = vmatprep.mubr.bf16.mxu0 %v1338
        %2481 = vmatmul.mubr.bf16.gmra.mrb[0].mxu0 %v1337
        %v2482 = vpop.f32.mrb[0].mxu0
        %v2483 = vadd.f32 %v2386, %v2482
        %v2484 = vpop.f32.mrb[0].mxu0
        %v2485 = vpop.f32.mrb[0].mxu0
        %v2486 = vadd.f32 %v2389, %v2485
        %v2487 = vpop.f32.mrb[0].mxu0
        %2488 = vmatprep.mubr.bf16.mxu0 %v1354
        %2489 = vmatmul.mubr.bf16.gmra.mrb[0].mxu0 %v1353
        %v2490 = vpop.f32.mrb[0].mxu0
        %v2491 = vadd.f32 %v2394, %v2490
        %v2492 = vpop.f32.mrb[0].mxu0
        %v2493 = vpop.f32.mrb[0].mxu0
        %v2494 = vadd.f32 %v2397, %v2493
        %v2495 = vpop.f32.mrb[0].mxu0
        %2496 = vmatprep.mubr.bf16.mxu0 %v1370
        %2497 = vmatmul.mubr.bf16.gmra.mrb[0].mxu0 %v1369
        %v2498 = vpop.f32.mrb[0].mxu0
        %v2499 = vadd.f32 %v2402, %v2498
        %v2500 = vpop.f32.mrb[0].mxu0
        %v2501 = vpop.f32.mrb[0].mxu0
        %v2502 = vadd.f32 %v2405, %v2501
        %v2503 = vpop.f32.mrb[0].mxu0
        %2504 = vmatprep.mubr.bf16.mxu0 %v1386
        %2505 = vmatmul.mubr.bf16.gmra.mrb[0].mxu0 %v1385
        %v2506 = vpop.f32.mrb[0].mxu0
        %v2507 = vadd.f32 %v2410, %v2506
        %v2508 = vpop.f32.mrb[0].mxu0
        %v2509 = vpop.f32.mrb[0].mxu0
        %v2510 = vadd.f32 %v2413, %v2509
        %v2511 = vpop.f32.mrb[0].mxu0
        %2512 = vmatprep.mubr.bf16.mxu0 %v1402
        %2513 = vmatmul.mubr.bf16.gmra.mrb[0].mxu0 %v1401
        %v2514 = vpop.f32.mrb[0].mxu0
        %v2515 = vadd.f32 %v2418, %v2514
        %v2516 = vpop.f32.mrb[0].mxu0
        %v2517 = vpop.f32.mrb[0].mxu0
        %v2518 = vadd.f32 %v2421, %v2517
        %v2519 = vpop.f32.mrb[0].mxu0
        %2520 = vmatprep.mubr.bf16.mxu0 %v1418
        %2521 = vmatmul.mubr.bf16.gmra.mrb[0].mxu0 %v1417
        %v2522 = vpop.f32.mrb[0].mxu0
        %v2523 = vadd.f32 %v2426, %v2522
        %v2524 = vpop.f32.mrb[0].mxu0
        %v2525 = vpop.f32.mrb[0].mxu0
        %v2526 = vadd.f32 %v2429, %v2525
        %v2527 = vpop.f32.mrb[0].mxu0
        %2528 = vmatprep.mubr.bf16.mxu0 %v1434
        %2529 = vmatmul.mubr.bf16.gmra.mrb[0].mxu0 %v1433
        %v2530 = vpop.f32.mrb[0].mxu0
        %v2531 = vadd.f32 %v2434, %v2530
        %v2532 = vpop.f32.mrb[0].mxu0
        %v2533 = vpop.f32.mrb[0].mxu0
        %v2534 = vadd.f32 %v2437, %v2533
        %v2535 = vpop.f32.mrb[0].mxu0
        %2536 = vdwg.mxu0
        %2537 = vmatprep.subr.bf16.mxu0 0
        %2538 = vmatpush1.bf16.msra.mxu0 %v2119
        %2539 = vmatprep.subr.bf16.mxu0 0
        %2540 = vmatpush1.bf16.msra.mxu0 %v2120
        %2541 = vmatprep.subr.bf16.mxu0 0
        %2542 = vmatpush1.bf16.msra.mxu0 %v2121
        %2543 = vmatprep.subr.bf16.mxu0 0
        %2544 = vmatpush1.bf16.msra.mxu0 %v2122
        %2545 = vmatprep.subr.bf16.mxu0 0
        %2546 = vmatpush1.bf16.msra.mxu0 %v2123
        %2547 = vmatprep.subr.bf16.mxu0 0
        %2548 = vmatpush1.bf16.msra.mxu0 %v2124
        %2549 = vmatprep.subr.bf16.mxu0 0
        %2550 = vmatpush1.bf16.msra.mxu0 %v2125
        %2551 = vmatprep.subr.bf16.mxu0 0
        %2552 = vmatpush1.bf16.msra.mxu0 %v2126
        %2553 = vmatprep.subr.bf16.mxu0 0
        %2554 = vmatpush1.bf16.msra.mxu0 %v2127
        %2555 = vmatprep.subr.bf16.mxu0 0
        %2556 = vmatpush1.bf16.msra.mxu0 %v2128
        %2557 = vmatprep.subr.bf16.mxu0 0
        %2558 = vmatpush1.bf16.msra.mxu0 %v2129
        %2559 = vmatprep.subr.bf16.mxu0 0
        %2560 = vmatpush1.bf16.msra.mxu0 %v2130
        %2561 = vmatprep.subr.bf16.mxu0 0
        %2562 = vmatpush1.bf16.msra.mxu0 %v2131
        %2563 = vmatprep.subr.bf16.mxu0 0
        %2564 = vmatpush1.bf16.msra.mxu0 %v2132
        %2565 = vmatprep.subr.bf16.mxu0 0
        %2566 = vmatpush1.bf16.msra.mxu0 %v2133
        %2567 = vmatprep.subr.bf16.mxu0 0
        %2568 = vmatpush1.bf16.msra.mxu0 %v2134
        %2569 = vmatprep.mubr.bf16.mxu0 %v1324
        %2570 = vmatmul.mubr.bf16.gmra.mrb[0].mxu0 %v1323
        %v2571 = vpop.f32.mrb[0].mxu0
        %v2572 = vadd.f32 %v2475, %v2571
        %v2573 = vpop.f32.mrb[0].mxu0
        %v2574 = vpop.f32.mrb[0].mxu0
        %v2575 = vadd.f32 %v2478, %v2574
        %v2576 = vpop.f32.mrb[0].mxu0
        %2577 = vmatprep.mubr.bf16.mxu0 %v1340
        %2578 = vmatmul.mubr.bf16.gmra.mrb[0].mxu0 %v1339
        %v2579 = vpop.f32.mrb[0].mxu0
        %v2580 = vadd.f32 %v2483, %v2579
        %v2581 = vpop.f32.mrb[0].mxu0
        %v2582 = vpop.f32.mrb[0].mxu0
        %v2583 = vadd.f32 %v2486, %v2582
        %v2584 = vpop.f32.mrb[0].mxu0
        %2585 = vmatprep.mubr.bf16.mxu0 %v1356
        %2586 = vmatmul.mubr.bf16.gmra.mrb[0].mxu0 %v1355
        %v2587 = vpop.f32.mrb[0].mxu0
        %v2588 = vadd.f32 %v2491, %v2587
        %v2589 = vpop.f32.mrb[0].mxu0
        %v2590 = vpop.f32.mrb[0].mxu0
        %v2591 = vadd.f32 %v2494, %v2590
        %v2592 = vpop.f32.mrb[0].mxu0
        %2593 = vmatprep.mubr.bf16.mxu0 %v1372
        %2594 = vmatmul.mubr.bf16.gmra.mrb[0].mxu0 %v1371
        %v2595 = vpop.f32.mrb[0].mxu0
        %v2596 = vadd.f32 %v2499, %v2595
        %v2597 = vpop.f32.mrb[0].mxu0
        %v2598 = vpop.f32.mrb[0].mxu0
        %v2599 = vadd.f32 %v2502, %v2598
        %v2600 = vpop.f32.mrb[0].mxu0
        %2601 = vmatprep.mubr.bf16.mxu0 %v1388
        %2602 = vmatmul.mubr.bf16.gmra.mrb[0].mxu0 %v1387
        %v2603 = vpop.f32.mrb[0].mxu0
        %v2604 = vadd.f32 %v2507, %v2603
        %v2605 = vpop.f32.mrb[0].mxu0
        %v2606 = vpop.f32.mrb[0].mxu0
        %v2607 = vadd.f32 %v2510, %v2606
        %v2608 = vpop.f32.mrb[0].mxu0
        %2609 = vmatprep.mubr.bf16.mxu0 %v1404
        %2610 = vmatmul.mubr.bf16.gmra.mrb[0].mxu0 %v1403
        %v2611 = vpop.f32.mrb[0].mxu0
        %v2612 = vadd.f32 %v2515, %v2611
        %v2613 = vpop.f32.mrb[0].mxu0
        %v2614 = vpop.f32.mrb[0].mxu0
        %v2615 = vadd.f32 %v2518, %v2614
        %v2616 = vpop.f32.mrb[0].mxu0
        %2617 = vmatprep.mubr.bf16.mxu0 %v1420
        %2618 = vmatmul.mubr.bf16.gmra.mrb[0].mxu0 %v1419
        %v2619 = vpop.f32.mrb[0].mxu0
        %v2620 = vadd.f32 %v2523, %v2619
        %v2621 = vpop.f32.mrb[0].mxu0
        %v2622 = vpop.f32.mrb[0].mxu0
        %v2623 = vadd.f32 %v2526, %v2622
        %v2624 = vpop.f32.mrb[0].mxu0
        %2625 = vmatprep.mubr.bf16.mxu0 %v1436
        %2626 = vmatmul.mubr.bf16.gmra.mrb[0].mxu0 %v1435
        %v2627 = vpop.f32.mrb[0].mxu0
        %v2628 = vadd.f32 %v2531, %v2627
        %v2629 = vpop.f32.mrb[0].mxu0
        %v2630 = vpop.f32.mrb[0].mxu0
        %v2631 = vadd.f32 %v2534, %v2630
        %v2632 = vpop.f32.mrb[0].mxu0
        %2633 = vdwg.mxu0
        %2634 = vmatprep.subr.bf16.mxu0 0
        %2635 = vmatpush1.bf16.msra.mxu0 %v2135
        %2636 = vmatprep.subr.bf16.mxu0 0
        %2637 = vmatpush1.bf16.msra.mxu0 %v2136
        %2638 = vmatprep.subr.bf16.mxu0 0
        %2639 = vmatpush1.bf16.msra.mxu0 %v2137
        %2640 = vmatprep.subr.bf16.mxu0 0
        %2641 = vmatpush1.bf16.msra.mxu0 %v2138
        %2642 = vmatprep.subr.bf16.mxu0 0
        %2643 = vmatpush1.bf16.msra.mxu0 %v2139
        %2644 = vmatprep.subr.bf16.mxu0 0
        %2645 = vmatpush1.bf16.msra.mxu0 %v2140
        %2646 = vmatprep.subr.bf16.mxu0 0
        %2647 = vmatpush1.bf16.msra.mxu0 %v2141
        %2648 = vmatprep.subr.bf16.mxu0 0
        %2649 = vmatpush1.bf16.msra.mxu0 %v2142
        %2650 = vmatprep.subr.bf16.mxu0 0
        %2651 = vmatpush1.bf16.msra.mxu0 %v2143
        %2652 = vmatprep.subr.bf16.mxu0 0
        %2653 = vmatpush1.bf16.msra.mxu0 %v2144
        %2654 = vmatprep.subr.bf16.mxu0 0
        %2655 = vmatpush1.bf16.msra.mxu0 %v2145
        %2656 = vmatprep.subr.bf16.mxu0 0
        %2657 = vmatpush1.bf16.msra.mxu0 %v2146
        %2658 = vmatprep.subr.bf16.mxu0 0
        %2659 = vmatpush1.bf16.msra.mxu0 %v2147
        %2660 = vmatprep.subr.bf16.mxu0 0
        %2661 = vmatpush1.bf16.msra.mxu0 %v2148
        %2662 = vmatprep.subr.bf16.mxu0 0
        %2663 = vmatpush1.bf16.msra.mxu0 %v2149
        %2664 = vmatprep.subr.bf16.mxu0 0
        %2665 = vmatpush1.bf16.msra.mxu0 %v2150
        %2666 = vmatprep.mubr.bf16.mxu0 %v1326
        %2667 = vmatmul.mubr.bf16.gmra.mrb[0].mxu0 %v1325
        %v2668 = vpop.f32.mrb[0].mxu0
        %v2669 = vadd.f32 %v2572, %v2668
        %v2670 = vpop.f32.mrb[0].mxu0
        %v2671 = vpop.f32.mrb[0].mxu0
        %v2672 = vadd.f32 %v2575, %v2671
        %v2673 = vpop.f32.mrb[0].mxu0
        %2674 = vmatprep.mubr.bf16.mxu0 %v1342
        %2675 = vmatmul.mubr.bf16.gmra.mrb[0].mxu0 %v1341
        %v2676 = vpop.f32.mrb[0].mxu0
        %v2677 = vadd.f32 %v2580, %v2676
        %v2678 = vpop.f32.mrb[0].mxu0
        %v2679 = vpop.f32.mrb[0].mxu0
        %v2680 = vadd.f32 %v2583, %v2679
        %v2681 = vpop.f32.mrb[0].mxu0
        %2682 = vmatprep.mubr.bf16.mxu0 %v1358
        %2683 = vmatmul.mubr.bf16.gmra.mrb[0].mxu0 %v1357
        %v2684 = vpop.f32.mrb[0].mxu0
        %v2685 = vadd.f32 %v2588, %v2684
        %v2686 = vpop.f32.mrb[0].mxu0
        %v2687 = vpop.f32.mrb[0].mxu0
        %v2688 = vadd.f32 %v2591, %v2687
        %v2689 = vpop.f32.mrb[0].mxu0
        %2690 = vmatprep.mubr.bf16.mxu0 %v1374
        %2691 = vmatmul.mubr.bf16.gmra.mrb[0].mxu0 %v1373
        %v2692 = vpop.f32.mrb[0].mxu0
        %v2693 = vadd.f32 %v2596, %v2692
        %v2694 = vpop.f32.mrb[0].mxu0
        %v2695 = vpop.f32.mrb[0].mxu0
        %v2696 = vadd.f32 %v2599, %v2695
        %v2697 = vpop.f32.mrb[0].mxu0
        %2698 = vmatprep.mubr.bf16.mxu0 %v1390
        %2699 = vmatmul.mubr.bf16.gmra.mrb[0].mxu0 %v1389
        %v2700 = vpop.f32.mrb[0].mxu0
        %v2701 = vadd.f32 %v2604, %v2700
        %v2702 = vpop.f32.mrb[0].mxu0
        %v2703 = vpop.f32.mrb[0].mxu0
        %v2704 = vadd.f32 %v2607, %v2703
        %v2705 = vpop.f32.mrb[0].mxu0
        %2706 = vmatprep.mubr.bf16.mxu0 %v1406
        %2707 = vmatmul.mubr.bf16.gmra.mrb[0].mxu0 %v1405
        %v2708 = vpop.f32.mrb[0].mxu0
        %v2709 = vadd.f32 %v2612, %v2708
        %v2710 = vpop.f32.mrb[0].mxu0
        %v2711 = vpop.f32.mrb[0].mxu0
        %v2712 = vadd.f32 %v2615, %v2711
        %v2713 = vpop.f32.mrb[0].mxu0
        %2714 = vmatprep.mubr.bf16.mxu0 %v1422
        %2715 = vmatmul.mubr.bf16.gmra.mrb[0].mxu0 %v1421
        %v2716 = vpop.f32.mrb[0].mxu0
        %v2717 = vadd.f32 %v2620, %v2716
        %v2718 = vpop.f32.mrb[0].mxu0
        %v2719 = vpop.f32.mrb[0].mxu0
        %v2720 = vadd.f32 %v2623, %v2719
        %v2721 = vpop.f32.mrb[0].mxu0
        %2722 = vmatprep.mubr.bf16.mxu0 %v1438
        %2723 = vmatmul.mubr.bf16.gmra.mrb[0].mxu0 %v1437
        %v2724 = vpop.f32.mrb[0].mxu0
        %v2725 = vadd.f32 %v2628, %v2724
        %v2726 = vpop.f32.mrb[0].mxu0
        %v2727 = vpop.f32.mrb[0].mxu0
        %v2728 = vadd.f32 %v2631, %v2727
        %v2729 = vpop.f32.mrb[0].mxu0
        %2730 = vdwg.mxu0
        %2731 = vmatprep.subr.bf16.mxu0 0
        %2732 = vmatpush1.bf16.msra.mxu0 %v2151
        %2733 = vmatprep.subr.bf16.mxu0 0
        %2734 = vmatpush1.bf16.msra.mxu0 %v2152
        %2735 = vmatprep.subr.bf16.mxu0 0
        %2736 = vmatpush1.bf16.msra.mxu0 %v2153
        %2737 = vmatprep.subr.bf16.mxu0 0
        %2738 = vmatpush1.bf16.msra.mxu0 %v2154
        %2739 = vmatprep.subr.bf16.mxu0 0
        %2740 = vmatpush1.bf16.msra.mxu0 %v2155
        %2741 = vmatprep.subr.bf16.mxu0 0
        %2742 = vmatpush1.bf16.msra.mxu0 %v2156
        %2743 = vmatprep.subr.bf16.mxu0 0
        %2744 = vmatpush1.bf16.msra.mxu0 %v2157
        %2745 = vmatprep.subr.bf16.mxu0 0
        %2746 = vmatpush1.bf16.msra.mxu0 %v2158
        %2747 = vmatprep.subr.bf16.mxu0 0
        %2748 = vmatpush1.bf16.msra.mxu0 %v2159
        %2749 = vmatprep.subr.bf16.mxu0 0
        %2750 = vmatpush1.bf16.msra.mxu0 %v2160
        %2751 = vmatprep.subr.bf16.mxu0 0
        %2752 = vmatpush1.bf16.msra.mxu0 %v2161
        %2753 = vmatprep.subr.bf16.mxu0 0
        %2754 = vmatpush1.bf16.msra.mxu0 %v2162
        %2755 = vmatprep.subr.bf16.mxu0 0
        %2756 = vmatpush1.bf16.msra.mxu0 %v2163
        %2757 = vmatprep.subr.bf16.mxu0 0
        %2758 = vmatpush1.bf16.msra.mxu0 %v2164
        %2759 = vmatprep.subr.bf16.mxu0 0
        %2760 = vmatpush1.bf16.msra.mxu0 %v2165
        %2761 = vmatprep.subr.bf16.mxu0 0
        %2762 = vmatpush1.bf16.msra.mxu0 %v2166
        %2763 = vmatprep.mubr.bf16.mxu0 %v1328
        %2764 = vmatmul.mubr.bf16.gmra.mrb[0].mxu0 %v1327
        %v2765 = vpop.f32.mrb[0].mxu0
        %v2766 = vadd.f32 %v2669, %v2765
        %v2767 = vpop.f32.mrb[0].mxu0
        %v2768 = vpop.f32.mrb[0].mxu0
        %v2769 = vadd.f32 %v2672, %v2768
        %v2770 = vpop.f32.mrb[0].mxu0
        %2771 = vmatprep.mubr.bf16.mxu0 %v1344
        %2772 = vmatmul.mubr.bf16.gmra.mrb[0].mxu0 %v1343
        %v2773 = vpop.f32.mrb[0].mxu0
        %v2774 = vadd.f32 %v2677, %v2773
        %v2775 = vpop.f32.mrb[0].mxu0
        %v2776 = vpop.f32.mrb[0].mxu0
        %v2777 = vadd.f32 %v2680, %v2776
        %v2778 = vpop.f32.mrb[0].mxu0
        %2779 = vmatprep.mubr.bf16.mxu0 %v1360
        %2780 = vmatmul.mubr.bf16.gmra.mrb[0].mxu0 %v1359
        %v2781 = vpop.f32.mrb[0].mxu0
        %v2782 = vadd.f32 %v2685, %v2781
        %v2783 = vpop.f32.mrb[0].mxu0
        %v2784 = vpop.f32.mrb[0].mxu0
        %v2785 = vadd.f32 %v2688, %v2784
        %v2786 = vpop.f32.mrb[0].mxu0
        %2787 = vmatprep.mubr.bf16.mxu0 %v1376
        %2788 = vmatmul.mubr.bf16.gmra.mrb[0].mxu0 %v1375
        %v2789 = vpop.f32.mrb[0].mxu0
        %v2790 = vadd.f32 %v2693, %v2789
        %v2791 = vpop.f32.mrb[0].mxu0
        %v2792 = vpop.f32.mrb[0].mxu0
        %v2793 = vadd.f32 %v2696, %v2792
        %v2794 = vpop.f32.mrb[0].mxu0
        %2795 = vmatprep.mubr.bf16.mxu0 %v1392
        %2796 = vmatmul.mubr.bf16.gmra.mrb[0].mxu0 %v1391
        %v2797 = vpop.f32.mrb[0].mxu0
        %v2798 = vadd.f32 %v2701, %v2797
        %v2799 = vpop.f32.mrb[0].mxu0
        %v2800 = vpop.f32.mrb[0].mxu0
        %v2801 = vadd.f32 %v2704, %v2800
        %v2802 = vpop.f32.mrb[0].mxu0
        %2803 = vmatprep.mubr.bf16.mxu0 %v1408
        %2804 = vmatmul.mubr.bf16.gmra.mrb[0].mxu0 %v1407
        %v2805 = vpop.f32.mrb[0].mxu0
        %v2806 = vadd.f32 %v2709, %v2805
        %v2807 = vpop.f32.mrb[0].mxu0
        %v2808 = vpop.f32.mrb[0].mxu0
        %v2809 = vadd.f32 %v2712, %v2808
        %v2810 = vpop.f32.mrb[0].mxu0
        %2811 = vmatprep.mubr.bf16.mxu0 %v1424
        %2812 = vmatmul.mubr.bf16.gmra.mrb[0].mxu0 %v1423
        %v2813 = vpop.f32.mrb[0].mxu0
        %v2814 = vadd.f32 %v2717, %v2813
        %v2815 = vpop.f32.mrb[0].mxu0
        %v2816 = vpop.f32.mrb[0].mxu0
        %v2817 = vadd.f32 %v2720, %v2816
        %v2818 = vpop.f32.mrb[0].mxu0
        %2819 = vmatprep.mubr.bf16.mxu0 %v1440
        %2820 = vmatmul.mubr.bf16.gmra.mrb[0].mxu0 %v1439
        %v2821 = vpop.f32.mrb[0].mxu0
        %v2822 = vadd.f32 %v2725, %v2821
        %v2823 = vpop.f32.mrb[0].mxu0
        %v2824 = vpop.f32.mrb[0].mxu0
        %v2825 = vadd.f32 %v2728, %v2824
        %v2826 = vpop.f32.mrb[0].mxu0
        %2827 = vdwg.mxu0
        %2828 = vmatprep.subr.bf16.mxu0 0
        %2829 = vmatpush1.bf16.msra.mxu0 %v2167
        %2830 = vmatprep.subr.bf16.mxu0 0
        %2831 = vmatpush1.bf16.msra.mxu0 %v2168
        %2832 = vmatprep.subr.bf16.mxu0 0
        %2833 = vmatpush1.bf16.msra.mxu0 %v2169
        %2834 = vmatprep.subr.bf16.mxu0 0
        %2835 = vmatpush1.bf16.msra.mxu0 %v2170
        %2836 = vmatprep.subr.bf16.mxu0 0
        %2837 = vmatpush1.bf16.msra.mxu0 %v2171
        %2838 = vmatprep.subr.bf16.mxu0 0
        %2839 = vmatpush1.bf16.msra.mxu0 %v2172
        %2840 = vmatprep.subr.bf16.mxu0 0
        %2841 = vmatpush1.bf16.msra.mxu0 %v2173
        %2842 = vmatprep.subr.bf16.mxu0 0
        %2843 = vmatpush1.bf16.msra.mxu0 %v2174
        %2844 = vmatprep.subr.bf16.mxu0 0
        %2845 = vmatpush1.bf16.msra.mxu0 %v2175
        %2846 = vmatprep.subr.bf16.mxu0 0
        %2847 = vmatpush1.bf16.msra.mxu0 %v2176
        %2848 = vmatprep.subr.bf16.mxu0 0
        %2849 = vmatpush1.bf16.msra.mxu0 %v2177
        %2850 = vmatprep.subr.bf16.mxu0 0
        %2851 = vmatpush1.bf16.msra.mxu0 %v2178
        %2852 = vmatprep.subr.bf16.mxu0 0
        %2853 = vmatpush1.bf16.msra.mxu0 %v2179
        %2854 = vmatprep.subr.bf16.mxu0 0
        %2855 = vmatpush1.bf16.msra.mxu0 %v2180
        %2856 = vmatprep.subr.bf16.mxu0 0
        %2857 = vmatpush1.bf16.msra.mxu0 %v2181
        %2858 = vmatprep.subr.bf16.mxu0 0
        %2859 = vmatpush1.bf16.msra.mxu0 %v2182
        %2860 = vmatprep.mubr.bf16.mxu0 %v1330
        %2861 = vmatmul.mubr.bf16.gmra.mrb[0].mxu0 %v1329
        %v2862 = vpop.f32.mrb[0].mxu0
        %v2863 = vadd.f32 %v2766, %v2862
        %v2864 = vpop.f32.mrb[0].mxu0
        %v2865 = vpop.f32.mrb[0].mxu0
        %v2866 = vadd.f32 %v2769, %v2865
        %v2867 = vpop.f32.mrb[0].mxu0
        %2868 = vmatprep.mubr.bf16.mxu0 %v1346
        %2869 = vmatmul.mubr.bf16.gmra.mrb[0].mxu0 %v1345
        %v2870 = vpop.f32.mrb[0].mxu0
        %v2871 = vadd.f32 %v2774, %v2870
        %v2872 = vpop.f32.mrb[0].mxu0
        %v2873 = vpop.f32.mrb[0].mxu0
        %v2874 = vadd.f32 %v2777, %v2873
        %v2875 = vpop.f32.mrb[0].mxu0
        %2876 = vmatprep.mubr.bf16.mxu0 %v1362
        %2877 = vmatmul.mubr.bf16.gmra.mrb[0].mxu0 %v1361
        %v2878 = vpop.f32.mrb[0].mxu0
        %v2879 = vadd.f32 %v2782, %v2878
        %v2880 = vpop.f32.mrb[0].mxu0
        %v2881 = vpop.f32.mrb[0].mxu0
        %v2882 = vadd.f32 %v2785, %v2881
        %v2883 = vpop.f32.mrb[0].mxu0
        %2884 = vmatprep.mubr.bf16.mxu0 %v1378
        %2885 = vmatmul.mubr.bf16.gmra.mrb[0].mxu0 %v1377
        %v2886 = vpop.f32.mrb[0].mxu0
        %v2887 = vadd.f32 %v2790, %v2886
        %v2888 = vpop.f32.mrb[0].mxu0
        %v2889 = vpop.f32.mrb[0].mxu0
        %v2890 = vadd.f32 %v2793, %v2889
        %v2891 = vpop.f32.mrb[0].mxu0
        %2892 = vmatprep.mubr.bf16.mxu0 %v1394
        %2893 = vmatmul.mubr.bf16.gmra.mrb[0].mxu0 %v1393
        %v2894 = vpop.f32.mrb[0].mxu0
        %v2895 = vadd.f32 %v2798, %v2894
        %v2896 = vpop.f32.mrb[0].mxu0
        %v2897 = vpop.f32.mrb[0].mxu0
        %v2898 = vadd.f32 %v2801, %v2897
        %v2899 = vpop.f32.mrb[0].mxu0
        %2900 = vmatprep.mubr.bf16.mxu0 %v1410
        %2901 = vmatmul.mubr.bf16.gmra.mrb[0].mxu0 %v1409
        %v2902 = vpop.f32.mrb[0].mxu0
        %v2903 = vadd.f32 %v2806, %v2902
        %v2904 = vpop.f32.mrb[0].mxu0
        %v2905 = vpop.f32.mrb[0].mxu0
        %v2906 = vadd.f32 %v2809, %v2905
        %v2907 = vpop.f32.mrb[0].mxu0
        %2908 = vmatprep.mubr.bf16.mxu0 %v1426
        %2909 = vmatmul.mubr.bf16.gmra.mrb[0].mxu0 %v1425
        %v2910 = vpop.f32.mrb[0].mxu0
        %v2911 = vadd.f32 %v2814, %v2910
        %v2912 = vpop.f32.mrb[0].mxu0
        %v2913 = vpop.f32.mrb[0].mxu0
        %v2914 = vadd.f32 %v2817, %v2913
        %v2915 = vpop.f32.mrb[0].mxu0
        %2916 = vmatprep.mubr.bf16.mxu0 %v1442
        %2917 = vmatmul.mubr.bf16.gmra.mrb[0].mxu0 %v1441
        %v2918 = vpop.f32.mrb[0].mxu0
        %v2919 = vadd.f32 %v2822, %v2918
        %v2920 = vpop.f32.mrb[0].mxu0
        %v2921 = vpop.f32.mrb[0].mxu0
        %v2922 = vadd.f32 %v2825, %v2921
        %v2923 = vpop.f32.mrb[0].mxu0
        %2924 = vdwg.mxu0
        %2925 = vmatprep.subr.bf16.mxu0 0
        %2926 = vmatpush1.bf16.msra.mxu0 %v2183
        %2927 = vmatprep.subr.bf16.mxu0 0
        %2928 = vmatpush1.bf16.msra.mxu0 %v2184
        %2929 = vmatprep.subr.bf16.mxu0 0
        %2930 = vmatpush1.bf16.msra.mxu0 %v2185
        %2931 = vmatprep.subr.bf16.mxu0 0
        %2932 = vmatpush1.bf16.msra.mxu0 %v2186
        %2933 = vmatprep.subr.bf16.mxu0 0
        %2934 = vmatpush1.bf16.msra.mxu0 %v2187
        %2935 = vmatprep.subr.bf16.mxu0 0
        %2936 = vmatpush1.bf16.msra.mxu0 %v2188
        %2937 = vmatprep.subr.bf16.mxu0 0
        %2938 = vmatpush1.bf16.msra.mxu0 %v2189
        %2939 = vmatprep.subr.bf16.mxu0 0
        %2940 = vmatpush1.bf16.msra.mxu0 %v2190
        %2941 = vmatprep.subr.bf16.mxu0 0
        %2942 = vmatpush1.bf16.msra.mxu0 %v2191
        %2943 = vmatprep.subr.bf16.mxu0 0
        %2944 = vmatpush1.bf16.msra.mxu0 %v2192
        %2945 = vmatprep.subr.bf16.mxu0 0
        %2946 = vmatpush1.bf16.msra.mxu0 %v2193
        %2947 = vmatprep.subr.bf16.mxu0 0
        %2948 = vmatpush1.bf16.msra.mxu0 %v2194
        %2949 = vmatprep.subr.bf16.mxu0 0
        %2950 = vmatpush1.bf16.msra.mxu0 %v2195
        %2951 = vmatprep.subr.bf16.mxu0 0
        %2952 = vmatpush1.bf16.msra.mxu0 %v2196
        %2953 = vmatprep.subr.bf16.mxu0 0
        %2954 = vmatpush1.bf16.msra.mxu0 %v2197
        %2955 = vmatprep.subr.bf16.mxu0 0
        %2956 = vmatpush1.bf16.msra.mxu0 %v2198
        %2957 = vmatprep.mubr.bf16.mxu0 %v1332
        %2958 = vmatmul.mubr.bf16.gmra.mrb[0].mxu0 %v1331
        %v2959 = vpop.f32.mrb[0].mxu0
        %v2960 = vadd.f32 %v2863, %v2959
        %v2961 = vpop.f32.mrb[0].mxu0
        %v2962 = vpop.f32.mrb[0].mxu0
        %v2963 = vadd.f32 %v2866, %v2962
        %v2964 = vpop.f32.mrb[0].mxu0
        %2965 = vmatprep.mubr.bf16.mxu0 %v1348
        %2966 = vmatmul.mubr.bf16.gmra.mrb[0].mxu0 %v1347
        %v2967 = vpop.f32.mrb[0].mxu0
        %v2968 = vadd.f32 %v2871, %v2967
        %v2969 = vpop.f32.mrb[0].mxu0
        %v2970 = vpop.f32.mrb[0].mxu0
        %v2971 = vadd.f32 %v2874, %v2970
        %v2972 = vpop.f32.mrb[0].mxu0
        %2973 = vmatprep.mubr.bf16.mxu0 %v1364
        %2974 = vmatmul.mubr.bf16.gmra.mrb[0].mxu0 %v1363
        %v2975 = vpop.f32.mrb[0].mxu0
        %v2976 = vadd.f32 %v2879, %v2975
        %v2977 = vpop.f32.mrb[0].mxu0
        %v2978 = vpop.f32.mrb[0].mxu0
        %v2979 = vadd.f32 %v2882, %v2978
        %v2980 = vpop.f32.mrb[0].mxu0
        %2981 = vmatprep.mubr.bf16.mxu0 %v1380
        %2982 = vmatmul.mubr.bf16.gmra.mrb[0].mxu0 %v1379
        %v2983 = vpop.f32.mrb[0].mxu0
        %v2984 = vadd.f32 %v2887, %v2983
        %v2985 = vpop.f32.mrb[0].mxu0
        %v2986 = vpop.f32.mrb[0].mxu0
        %v2987 = vadd.f32 %v2890, %v2986
        %v2988 = vpop.f32.mrb[0].mxu0
        %2989 = vmatprep.mubr.bf16.mxu0 %v1396
        %2990 = vmatmul.mubr.bf16.gmra.mrb[0].mxu0 %v1395
        %v2991 = vpop.f32.mrb[0].mxu0
        %v2992 = vadd.f32 %v2895, %v2991
        %v2993 = vpop.f32.mrb[0].mxu0
        %v2994 = vpop.f32.mrb[0].mxu0
        %v2995 = vadd.f32 %v2898, %v2994
        %v2996 = vpop.f32.mrb[0].mxu0
        %2997 = vmatprep.mubr.bf16.mxu0 %v1412
        %2998 = vmatmul.mubr.bf16.gmra.mrb[0].mxu0 %v1411
        %v2999 = vpop.f32.mrb[0].mxu0
        %v3000 = vadd.f32 %v2903, %v2999
        %v3001 = vpop.f32.mrb[0].mxu0
        %v3002 = vpop.f32.mrb[0].mxu0
        %v3003 = vadd.f32 %v2906, %v3002
        %v3004 = vpop.f32.mrb[0].mxu0
        %3005 = vmatprep.mubr.bf16.mxu0 %v1428
        %3006 = vmatmul.mubr.bf16.gmra.mrb[0].mxu0 %v1427
        %v3007 = vpop.f32.mrb[0].mxu0
        %v3008 = vadd.f32 %v2911, %v3007
        %v3009 = vpop.f32.mrb[0].mxu0
        %v3010 = vpop.f32.mrb[0].mxu0
        %v3011 = vadd.f32 %v2914, %v3010
        %v3012 = vpop.f32.mrb[0].mxu0
        %3013 = vmatprep.mubr.bf16.mxu0 %v1444
        %3014 = vmatmul.mubr.bf16.gmra.mrb[0].mxu0 %v1443
        %v3015 = vpop.f32.mrb[0].mxu0
        %v3016 = vadd.f32 %v2919, %v3015
        %v3017 = vpop.f32.mrb[0].mxu0
        %v3018 = vpop.f32.mrb[0].mxu0
        %v3019 = vadd.f32 %v2922, %v3018
        %v3020 = vpop.f32.mrb[0].mxu0
        %3021 = vdwg.mxu0
        %3022 = vmatprep.subr.bf16.mxu0 0
        %3023 = vmatpush1.bf16.msra.mxu0 %v2199
        %3024 = vmatprep.subr.bf16.mxu0 0
        %3025 = vmatpush1.bf16.msra.mxu0 %v2200
        %3026 = vmatprep.subr.bf16.mxu0 0
        %3027 = vmatpush1.bf16.msra.mxu0 %v2201
        %3028 = vmatprep.subr.bf16.mxu0 0
        %3029 = vmatpush1.bf16.msra.mxu0 %v2202
        %3030 = vmatprep.subr.bf16.mxu0 0
        %3031 = vmatpush1.bf16.msra.mxu0 %v2203
        %3032 = vmatprep.subr.bf16.mxu0 0
        %3033 = vmatpush1.bf16.msra.mxu0 %v2204
        %3034 = vmatprep.subr.bf16.mxu0 0
        %3035 = vmatpush1.bf16.msra.mxu0 %v2205
        %3036 = vmatprep.subr.bf16.mxu0 0
        %3037 = vmatpush1.bf16.msra.mxu0 %v2206
        %3038 = vmatprep.subr.bf16.mxu0 0
        %3039 = vmatpush1.bf16.msra.mxu0 %v2207
        %3040 = vmatprep.subr.bf16.mxu0 0
        %3041 = vmatpush1.bf16.msra.mxu0 %v2208
        %3042 = vmatprep.subr.bf16.mxu0 0
        %3043 = vmatpush1.bf16.msra.mxu0 %v2209
        %3044 = vmatprep.subr.bf16.mxu0 0
        %3045 = vmatpush1.bf16.msra.mxu0 %v2210
        %3046 = vmatprep.subr.bf16.mxu0 0
        %3047 = vmatpush1.bf16.msra.mxu0 %v2211
        %3048 = vmatprep.subr.bf16.mxu0 0
        %3049 = vmatpush1.bf16.msra.mxu0 %v2212
        %3050 = vmatprep.subr.bf16.mxu0 0
        %3051 = vmatpush1.bf16.msra.mxu0 %v2213
        %3052 = vmatprep.subr.bf16.mxu0 0
        %3053 = vmatpush1.bf16.msra.mxu0 %v2214
        %3054 = vmatprep.mubr.bf16.mxu0 %v1334
        %3055 = vmatmul.mubr.bf16.gmra.mrb[0].mxu0 %v1333
        %v3056 = vpop.f32.mrb[0].mxu0
        %v3057 = vadd.f32 %v2960, %v3056
        %v3058 = vpop.f32.mrb[0].mxu0
        %v3059 = vpop.f32.mrb[0].mxu0
        %v3060 = vadd.f32 %v2963, %v3059
        %v3061 = vpop.f32.mrb[0].mxu0
        %3062 = vmatprep.mubr.bf16.mxu0 %v1350
        %3063 = vmatmul.mubr.bf16.gmra.mrb[0].mxu0 %v1349
        %v3064 = vpop.f32.mrb[0].mxu0
        %v3065 = vadd.f32 %v2968, %v3064
        %v3066 = vpop.f32.mrb[0].mxu0
        %v3067 = vpop.f32.mrb[0].mxu0
        %v3068 = vadd.f32 %v2971, %v3067
        %v3069 = vpop.f32.mrb[0].mxu0
        %3070 = vmatprep.mubr.bf16.mxu0 %v1366
        %3071 = vmatmul.mubr.bf16.gmra.mrb[0].mxu0 %v1365
        %v3072 = vpop.f32.mrb[0].mxu0
        %v3073 = vadd.f32 %v2976, %v3072
        %v3074 = vpop.f32.mrb[0].mxu0
        %v3075 = vpop.f32.mrb[0].mxu0
        %v3076 = vadd.f32 %v2979, %v3075
        %v3077 = vpop.f32.mrb[0].mxu0
        %3078 = vmatprep.mubr.bf16.mxu0 %v1382
        %3079 = vmatmul.mubr.bf16.gmra.mrb[0].mxu0 %v1381
        %v3080 = vpop.f32.mrb[0].mxu0
        %v3081 = vadd.f32 %v2984, %v3080
        %v3082 = vpop.f32.mrb[0].mxu0
        %v3083 = vpop.f32.mrb[0].mxu0
        %v3084 = vadd.f32 %v2987, %v3083
        %v3085 = vpop.f32.mrb[0].mxu0
        %3086 = vmatprep.mubr.bf16.mxu0 %v1398
        %3087 = vmatmul.mubr.bf16.gmra.mrb[0].mxu0 %v1397
        %v3088 = vpop.f32.mrb[0].mxu0
        %v3089 = vadd.f32 %v2992, %v3088
        %v3090 = vpop.f32.mrb[0].mxu0
        %v3091 = vpop.f32.mrb[0].mxu0
        %v3092 = vadd.f32 %v2995, %v3091
        %v3093 = vpop.f32.mrb[0].mxu0
        %3094 = vmatprep.mubr.bf16.mxu0 %v1414
        %3095 = vmatmul.mubr.bf16.gmra.mrb[0].mxu0 %v1413
        %v3096 = vpop.f32.mrb[0].mxu0
        %v3097 = vadd.f32 %v3000, %v3096
        %v3098 = vpop.f32.mrb[0].mxu0
        %v3099 = vpop.f32.mrb[0].mxu0
        %v3100 = vadd.f32 %v3003, %v3099
        %v3101 = vpop.f32.mrb[0].mxu0
        %3102 = vmatprep.mubr.bf16.mxu0 %v1430
        %3103 = vmatmul.mubr.bf16.gmra.mrb[0].mxu0 %v1429
        %v3104 = vpop.f32.mrb[0].mxu0
        %v3105 = vadd.f32 %v3008, %v3104
        %v3106 = vpop.f32.mrb[0].mxu0
        %v3107 = vpop.f32.mrb[0].mxu0
        %v3108 = vadd.f32 %v3011, %v3107
        %v3109 = vpop.f32.mrb[0].mxu0
        %3110 = vmatprep.mubr.bf16.mxu0 %v1446
        %3111 = vmatmul.mubr.bf16.gmra.mrb[0].mxu0 %v1445
        %v3112 = vpop.f32.mrb[0].mxu0
        %v3113 = vadd.f32 %v3016, %v3112
        %v3114 = vpop.f32.mrb[0].mxu0
        %v3115 = vpop.f32.mrb[0].mxu0
        %v3116 = vadd.f32 %v3019, %v3115
        %v3117 = vpop.f32.mrb[0].mxu0
        %3118 = vdwg.mxu0
        %v3119 = vadd.f32 %v535, %v3057
        %v3120 = vadd.f32 %v536, %v3060
        %v3121 = vadd.f32 %v537, %v3065
        %v3122 = vadd.f32 %v538, %v3068
        %v3123 = vadd.f32 %v539, %v3073
        %v3124 = vadd.f32 %v540, %v3076
        %v3125 = vadd.f32 %v541, %v3081
        %v3126 = vadd.f32 %v542, %v3084
        %v3127 = vadd.f32 %v543, %v3089
        %v3128 = vadd.f32 %v544, %v3092
        %v3129 = vadd.f32 %v545, %v3097
        %v3130 = vadd.f32 %v546, %v3100
        %v3131 = vadd.f32 %v547, %v3105
        %v3132 = vadd.f32 %v548, %v3108
        %v3133 = vadd.f32 %v549, %v3113
        %v3134 = vadd.f32 %v550, %v3116
        %3135 = vst [vmem:[#allocation2] sm:$0xff] %v3119
        %3136 = vst [vmem:[#allocation2 + $0x8] sm:$0xff] %v3120
        %3137 = vst [vmem:[#allocation2 + $0x10] sm:$0xff] %v3121
        %3138 = vst [vmem:[#allocation2 + $0x18] sm:$0xff] %v3122
        %3139 = vst [vmem:[#allocation2 + $0x20] sm:$0xff] %v3123
        %3140 = vst [vmem:[#allocation2 + $0x28] sm:$0xff] %v3124
        %3141 = vst [vmem:[#allocation2 + $0x30] sm:$0xff] %v3125
        %3142 = vst [vmem:[#allocation2 + $0x38] sm:$0xff] %v3126
        %3143 = vst [vmem:[#allocation2 + $0x40] sm:$0xff] %v3127
        %3144 = vst [vmem:[#allocation2 + $0x48] sm:$0xff] %v3128
        %3145 = vst [vmem:[#allocation2 + $0x50] sm:$0xff] %v3129
        %3146 = vst [vmem:[#allocation2 + $0x58] sm:$0xff] %v3130
        %3147 = vst [vmem:[#allocation2 + $0x60] sm:$0xff] %v3131
        %3148 = vst [vmem:[#allocation2 + $0x68] sm:$0xff] %v3132
        %3149 = vst [vmem:[#allocation2 + $0x70] sm:$0xff] %v3133
        %3150 = vst [vmem:[#allocation2 + $0x78] sm:$0xff] %v3134
        %p3151 = scmp.eq.s32.totalorder %s20, 1
        // Predicated region
        $region64: #{cnn_forward.4} parent=54 // pred_check
          %p3152 = pneg %p3151
        $region65: #{cnn_forward.4} parent=54 // pred_check_branch
          %3154 = sbr.rel (%p3152) target = $region67
        $region66: #{cnn_forward.4} parent=54 // pred_region
          %v3155 = vld [vmem:[#allocation2] sm:$0xff]
          %v3156 = vld [vmem:[#allocation2 + $0x8] sm:$0xff]
          %v3157 = vld [vmem:[#allocation2 + $0x10] sm:$0xff]
          %v3158 = vld [vmem:[#allocation2 + $0x18] sm:$0xff]
          %v3159 = vld [vmem:[#allocation2 + $0x20] sm:$0xff]
          %v3160 = vld [vmem:[#allocation2 + $0x28] sm:$0xff]
          %v3161 = vld [vmem:[#allocation2 + $0x30] sm:$0xff]
          %v3162 = vld [vmem:[#allocation2 + $0x38] sm:$0xff]
          %v3163 = vld [vmem:[#allocation2 + $0x40] sm:$0xff]
          %v3164 = vld [vmem:[#allocation2 + $0x48] sm:$0xff]
          %v3165 = vld [vmem:[#allocation2 + $0x50] sm:$0xff]
          %v3166 = vld [vmem:[#allocation2 + $0x58] sm:$0xff]
          %v3167 = vld [vmem:[#allocation2 + $0x60] sm:$0xff]
          %v3168 = vld [vmem:[#allocation2 + $0x68] sm:$0xff]
          %v3169 = vld [vmem:[#allocation2 + $0x70] sm:$0xff]
          %v3170 = vld [vmem:[#allocation2 + $0x78] sm:$0xff]
          %v3171 = vmul.f32 %v3155, %v3155
          %v3172 = vmul.f32 %v3156, %v3156
          %v3173 = vmul.f32 %v3157, %v3157
          %v3174 = vmul.f32 %v3158, %v3158
          %v3175 = vmul.f32 %v3159, %v3159
          %v3176 = vmul.f32 %v3160, %v3160
          %v3177 = vmul.f32 %v3161, %v3161
          %v3178 = vmul.f32 %v3162, %v3162
          %v3179 = vmul.f32 %v3163, %v3163
          %v3180 = vmul.f32 %v3164, %v3164
          %v3181 = vmul.f32 %v3165, %v3165
          %v3182 = vmul.f32 %v3166, %v3166
          %v3183 = vmul.f32 %v3167, %v3167
          %v3184 = vmul.f32 %v3168, %v3168
          %v3185 = vmul.f32 %v3169, %v3169
          %v3186 = vmul.f32 %v3170, %v3170
          %v3187 = vld [vmem:[%s2] sm:$0xff]
          %v3188 = vld [vmem:[%s2 + $0x8] sm:$0xff]
          %v3189 = vld [vmem:[%s2 + $0x10] sm:$0xff]
          %v3190 = vld [vmem:[%s2 + $0x18] sm:$0xff]
          %v3191 = vld [vmem:[%s2 + $0x20] sm:$0xff]
          %v3192 = vld [vmem:[%s2 + $0x28] sm:$0xff]
          %v3193 = vld [vmem:[%s2 + $0x30] sm:$0xff]
          %v3194 = vld [vmem:[%s2 + $0x38] sm:$0xff]
          %v3195 = vld [vmem:[%s2 + $0x40] sm:$0xff]
          %v3196 = vld [vmem:[%s2 + $0x48] sm:$0xff]
          %v3197 = vld [vmem:[%s2 + $0x50] sm:$0xff]
          %v3198 = vld [vmem:[%s2 + $0x58] sm:$0xff]
          %v3199 = vld [vmem:[%s2 + $0x60] sm:$0xff]
          %v3200 = vld [vmem:[%s2 + $0x68] sm:$0xff]
          %v3201 = vld [vmem:[%s2 + $0x70] sm:$0xff]
          %v3202 = vld [vmem:[%s2 + $0x78] sm:$0xff]
          %3203 = vmatprep.subr.mxu0 0.0
          %3204 = vmatpush1.msra.mxu0 %v3187
          %3205 = vmatprep.subr.mxu0 0.0
          %3206 = vmatpush1.msra.mxu0 %v3188
          %3207 = vmatprep.subr.mxu0 0.0
          %3208 = vmatpush1.msra.mxu0 %v3189
          %3209 = vmatprep.subr.mxu0 0.0
          %3210 = vmatpush1.msra.mxu0 %v3190
          %3211 = vmatprep.subr.mxu0 0.0
          %3212 = vmatpush1.msra.mxu0 %v3191
          %3213 = vmatprep.subr.mxu0 0.0
          %3214 = vmatpush1.msra.mxu0 %v3192
          %3215 = vmatprep.subr.mxu0 0.0
          %3216 = vmatpush1.msra.mxu0 %v3193
          %3217 = vmatprep.subr.mxu0 0.0
          %3218 = vmatpush1.msra.mxu0 %v3194
          %3219 = vmatprep.subr.mxu0 0.0
          %3220 = vmatpush1.msra.mxu0 %v3195
          %3221 = vmatprep.subr.mxu0 0.0
          %3222 = vmatpush1.msra.mxu0 %v3196
          %3223 = vmatprep.subr.mxu0 0.0
          %3224 = vmatpush1.msra.mxu0 %v3197
          %3225 = vmatprep.subr.mxu0 0.0
          %3226 = vmatpush1.msra.mxu0 %v3198
          %3227 = vmatprep.subr.mxu0 0.0
          %3228 = vmatpush1.msra.mxu0 %v3199
          %3229 = vmatprep.subr.mxu0 0.0
          %3230 = vmatpush1.msra.mxu0 %v3200
          %3231 = vmatprep.subr.mxu0 0.0
          %3232 = vmatpush1.msra.mxu0 %v3201
          %3233 = vmatprep.subr.mxu0 0.0
          %3234 = vmatpush1.msra.mxu0 %v3202
          %3235 = vmatprep.subr.mxu0 0.0
          %3236 = vmatpush1.msra.mxu0 0.0
          %3237 = vmatprep.subr.mxu0 0.0
          %3238 = vmatpush1.msra.mxu0 0.0
          %3239 = vmatprep.subr.mxu0 0.0
          %3240 = vmatpush1.msra.mxu0 0.0
          %3241 = vmatprep.subr.mxu0 0.0
          %3242 = vmatpush1.msra.mxu0 0.0
          %3243 = vmatprep.subr.mxu0 0.0
          %3244 = vmatpush1.msra.mxu0 0.0
          %3245 = vmatprep.subr.mxu0 0.0
          %3246 = vmatpush1.msra.mxu0 0.0
          %3247 = vmatprep.subr.mxu0 0.0
          %3248 = vmatpush1.msra.mxu0 0.0
          %3249 = vmatprep.subr.mxu0 0.0
          %3250 = vmatpush1.msra.mxu0 0.0
          %3251 = vmatprep.subr.mxu0 0.0
          %3252 = vmatpush1.msra.mxu0 0.0
          %3253 = vmatprep.subr.mxu0 0.0
          %3254 = vmatpush1.msra.mxu0 0.0
          %3255 = vmatprep.subr.mxu0 0.0
          %3256 = vmatpush1.msra.mxu0 0.0
          %3257 = vmatprep.subr.mxu0 0.0
          %3258 = vmatpush1.msra.mxu0 0.0
          %3259 = vmatprep.subr.mxu0 0.0
          %3260 = vmatpush1.msra.mxu0 0.0
          %3261 = vmatprep.subr.mxu0 0.0
          %3262 = vmatpush1.msra.mxu0 0.0
          %3263 = vmatprep.subr.mxu0 0.0
          %3264 = vmatpush1.msra.mxu0 0.0
          %3265 = vmatprep.subr.mxu0 0.0
          %3266 = vmatpush1.msra.mxu0 0.0
          %3267 = vmatprep.mubr.f32.mxu0 0.0
          %3268 = vmatmul.mubr.f32.gmra.mrb[0].mxu0 %v3171
          %v3269 = vpop.f32.mrb[0].mxu0
          %v3270 = vadd.f32 0.0, %v3269
          %v3271 = vpop.f32.mrb[0].mxu0
          %3272 = vmatprep.mubr.f32.mxu0 0.0
          %3273 = vmatmul.mubr.f32.gmra.mrb[0].mxu0 %v3172
          %v3274 = vpop.f32.mrb[0].mxu0
          %v3275 = vadd.f32 0.0, %v3274
          %v3276 = vpop.f32.mrb[0].mxu0
          %3277 = vmatprep.mubr.f32.mxu0 0.0
          %3278 = vmatmul.mubr.f32.gmra.mrb[0].mxu0 %v3173
          %v3279 = vpop.f32.mrb[0].mxu0
          %v3280 = vadd.f32 0.0, %v3279
          %v3281 = vpop.f32.mrb[0].mxu0
          %3282 = vmatprep.mubr.f32.mxu0 0.0
          %3283 = vmatmul.mubr.f32.gmra.mrb[0].mxu0 %v3174
          %v3284 = vpop.f32.mrb[0].mxu0
          %v3285 = vadd.f32 0.0, %v3284
          %v3286 = vpop.f32.mrb[0].mxu0
          %3287 = vmatprep.mubr.f32.mxu0 0.0
          %3288 = vmatmul.mubr.f32.gmra.mrb[0].mxu0 %v3175
          %v3289 = vpop.f32.mrb[0].mxu0
          %v3290 = vadd.f32 0.0, %v3289
          %v3291 = vpop.f32.mrb[0].mxu0
          %3292 = vmatprep.mubr.f32.mxu0 0.0
          %3293 = vmatmul.mubr.f32.gmra.mrb[0].mxu0 %v3176
          %v3294 = vpop.f32.mrb[0].mxu0
          %v3295 = vadd.f32 0.0, %v3294
          %v3296 = vpop.f32.mrb[0].mxu0
          %3297 = vmatprep.mubr.f32.mxu0 0.0
          %3298 = vmatmul.mubr.f32.gmra.mrb[0].mxu0 %v3177
          %v3299 = vpop.f32.mrb[0].mxu0
          %v3300 = vadd.f32 0.0, %v3299
          %v3301 = vpop.f32.mrb[0].mxu0
          %3302 = vmatprep.mubr.f32.mxu0 0.0
          %3303 = vmatmul.mubr.f32.gmra.mrb[0].mxu0 %v3178
          %v3304 = vpop.f32.mrb[0].mxu0
          %v3305 = vadd.f32 0.0, %v3304
          %v3306 = vpop.f32.mrb[0].mxu0
          %3307 = vmatprep.mubr.f32.mxu0 0.0
          %3308 = vmatmul.mubr.f32.gmra.mrb[0].mxu0 %v3179
          %v3309 = vpop.f32.mrb[0].mxu0
          %v3310 = vadd.f32 0.0, %v3309
          %v3311 = vpop.f32.mrb[0].mxu0
          %3312 = vmatprep.mubr.f32.mxu0 0.0
          %3313 = vmatmul.mubr.f32.gmra.mrb[0].mxu0 %v3180
          %v3314 = vpop.f32.mrb[0].mxu0
          %v3315 = vadd.f32 0.0, %v3314
          %v3316 = vpop.f32.mrb[0].mxu0
          %3317 = vmatprep.mubr.f32.mxu0 0.0
          %3318 = vmatmul.mubr.f32.gmra.mrb[0].mxu0 %v3181
          %v3319 = vpop.f32.mrb[0].mxu0
          %v3320 = vadd.f32 0.0, %v3319
          %v3321 = vpop.f32.mrb[0].mxu0
          %3322 = vmatprep.mubr.f32.mxu0 0.0
          %3323 = vmatmul.mubr.f32.gmra.mrb[0].mxu0 %v3182
          %v3324 = vpop.f32.mrb[0].mxu0
          %v3325 = vadd.f32 0.0, %v3324
          %v3326 = vpop.f32.mrb[0].mxu0
          %3327 = vmatprep.mubr.f32.mxu0 0.0
          %3328 = vmatmul.mubr.f32.gmra.mrb[0].mxu0 %v3183
          %v3329 = vpop.f32.mrb[0].mxu0
          %v3330 = vadd.f32 0.0, %v3329
          %v3331 = vpop.f32.mrb[0].mxu0
          %3332 = vmatprep.mubr.f32.mxu0 0.0
          %3333 = vmatmul.mubr.f32.gmra.mrb[0].mxu0 %v3184
          %v3334 = vpop.f32.mrb[0].mxu0
          %v3335 = vadd.f32 0.0, %v3334
          %v3336 = vpop.f32.mrb[0].mxu0
          %3337 = vmatprep.mubr.f32.mxu0 0.0
          %3338 = vmatmul.mubr.f32.gmra.mrb[0].mxu0 %v3185
          %v3339 = vpop.f32.mrb[0].mxu0
          %v3340 = vadd.f32 0.0, %v3339
          %v3341 = vpop.f32.mrb[0].mxu0
          %3342 = vmatprep.mubr.f32.mxu0 0.0
          %3343 = vmatmul.mubr.f32.gmra.mrb[0].mxu0 %v3186
          %v3344 = vpop.f32.mrb[0].mxu0
          %v3345 = vadd.f32 0.0, %v3344
          %v3346 = vpop.f32.mrb[0].mxu0
          %3347 = vdwg.mxu0
          %v3348 = vrsqrt.pop %v3270
          %v3349 = vmul.f32 %v3270, %v3348
          %vm3350 = vcmp.eq.f32.partialorder %v3270, inf
          %v3351 = vsel %vm3350, %v3270, %v3349
          %vm3352 = vcmp.eq.f32.partialorder %v3270, 0.0
          %v3353 = vand.u32 %v3270, 2147483648
          %v3354 = vsel %vm3352, %v3353, %v3351
          %v3355 = vrsqrt.pop %v3275
          %v3356 = vmul.f32 %v3275, %v3355
          %vm3357 = vcmp.eq.f32.partialorder %v3275, inf
          %v3358 = vsel %vm3357, %v3275, %v3356
          %vm3359 = vcmp.eq.f32.partialorder %v3275, 0.0
          %v3360 = vand.u32 %v3275, 2147483648
          %v3361 = vsel %vm3359, %v3360, %v3358
          %v3362 = vrsqrt.pop %v3280
          %v3363 = vmul.f32 %v3280, %v3362
          %vm3364 = vcmp.eq.f32.partialorder %v3280, inf
          %v3365 = vsel %vm3364, %v3280, %v3363
          %vm3366 = vcmp.eq.f32.partialorder %v3280, 0.0
          %v3367 = vand.u32 %v3280, 2147483648
          %v3368 = vsel %vm3366, %v3367, %v3365
          %v3369 = vrsqrt.pop %v3285
          %v3370 = vmul.f32 %v3285, %v3369
          %vm3371 = vcmp.eq.f32.partialorder %v3285, inf
          %v3372 = vsel %vm3371, %v3285, %v3370
          %vm3373 = vcmp.eq.f32.partialorder %v3285, 0.0
          %v3374 = vand.u32 %v3285, 2147483648
          %v3375 = vsel %vm3373, %v3374, %v3372
          %v3376 = vrsqrt.pop %v3290
          %v3377 = vmul.f32 %v3290, %v3376
          %vm3378 = vcmp.eq.f32.partialorder %v3290, inf
          %v3379 = vsel %vm3378, %v3290, %v3377
          %vm3380 = vcmp.eq.f32.partialorder %v3290, 0.0
          %v3381 = vand.u32 %v3290, 2147483648
          %v3382 = vsel %vm3380, %v3381, %v3379
          %v3383 = vrsqrt.pop %v3295
          %v3384 = vmul.f32 %v3295, %v3383
          %vm3385 = vcmp.eq.f32.partialorder %v3295, inf
          %v3386 = vsel %vm3385, %v3295, %v3384
          %vm3387 = vcmp.eq.f32.partialorder %v3295, 0.0
          %v3388 = vand.u32 %v3295, 2147483648
          %v3389 = vsel %vm3387, %v3388, %v3386
          %v3390 = vrsqrt.pop %v3300
          %v3391 = vmul.f32 %v3300, %v3390
          %vm3392 = vcmp.eq.f32.partialorder %v3300, inf
          %v3393 = vsel %vm3392, %v3300, %v3391
          %vm3394 = vcmp.eq.f32.partialorder %v3300, 0.0
          %v3395 = vand.u32 %v3300, 2147483648
          %v3396 = vsel %vm3394, %v3395, %v3393
          %v3397 = vrsqrt.pop %v3305
          %v3398 = vmul.f32 %v3305, %v3397
          %vm3399 = vcmp.eq.f32.partialorder %v3305, inf
          %v3400 = vsel %vm3399, %v3305, %v3398
          %vm3401 = vcmp.eq.f32.partialorder %v3305, 0.0
          %v3402 = vand.u32 %v3305, 2147483648
          %v3403 = vsel %vm3401, %v3402, %v3400
          %v3404 = vrsqrt.pop %v3310
          %v3405 = vmul.f32 %v3310, %v3404
          %vm3406 = vcmp.eq.f32.partialorder %v3310, inf
          %v3407 = vsel %vm3406, %v3310, %v3405
          %vm3408 = vcmp.eq.f32.partialorder %v3310, 0.0
          %v3409 = vand.u32 %v3310, 2147483648
          %v3410 = vsel %vm3408, %v3409, %v3407
          %v3411 = vrsqrt.pop %v3315
          %v3412 = vmul.f32 %v3315, %v3411
          %vm3413 = vcmp.eq.f32.partialorder %v3315, inf
          %v3414 = vsel %vm3413, %v3315, %v3412
          %vm3415 = vcmp.eq.f32.partialorder %v3315, 0.0
          %v3416 = vand.u32 %v3315, 2147483648
          %v3417 = vsel %vm3415, %v3416, %v3414
          %v3418 = vrsqrt.pop %v3320
          %v3419 = vmul.f32 %v3320, %v3418
          %vm3420 = vcmp.eq.f32.partialorder %v3320, inf
          %v3421 = vsel %vm3420, %v3320, %v3419
          %vm3422 = vcmp.eq.f32.partialorder %v3320, 0.0
          %v3423 = vand.u32 %v3320, 2147483648
          %v3424 = vsel %vm3422, %v3423, %v3421
          %v3425 = vrsqrt.pop %v3325
          %v3426 = vmul.f32 %v3325, %v3425
          %vm3427 = vcmp.eq.f32.partialorder %v3325, inf
          %v3428 = vsel %vm3427, %v3325, %v3426
          %vm3429 = vcmp.eq.f32.partialorder %v3325, 0.0
          %v3430 = vand.u32 %v3325, 2147483648
          %v3431 = vsel %vm3429, %v3430, %v3428
          %v3432 = vrsqrt.pop %v3330
          %v3433 = vmul.f32 %v3330, %v3432
          %vm3434 = vcmp.eq.f32.partialorder %v3330, inf
          %v3435 = vsel %vm3434, %v3330, %v3433
          %vm3436 = vcmp.eq.f32.partialorder %v3330, 0.0
          %v3437 = vand.u32 %v3330, 2147483648
          %v3438 = vsel %vm3436, %v3437, %v3435
          %v3439 = vrsqrt.pop %v3335
          %v3440 = vmul.f32 %v3335, %v3439
          %vm3441 = vcmp.eq.f32.partialorder %v3335, inf
          %v3442 = vsel %vm3441, %v3335, %v3440
          %vm3443 = vcmp.eq.f32.partialorder %v3335, 0.0
          %v3444 = vand.u32 %v3335, 2147483648
          %v3445 = vsel %vm3443, %v3444, %v3442
          %v3446 = vrsqrt.pop %v3340
          %v3447 = vmul.f32 %v3340, %v3446
          %vm3448 = vcmp.eq.f32.partialorder %v3340, inf
          %v3449 = vsel %vm3448, %v3340, %v3447
          %vm3450 = vcmp.eq.f32.partialorder %v3340, 0.0
          %v3451 = vand.u32 %v3340, 2147483648
          %v3452 = vsel %vm3450, %v3451, %v3449
          %v3453 = vrsqrt.pop %v3345
          %v3454 = vmul.f32 %v3345, %v3453
          %vm3455 = vcmp.eq.f32.partialorder %v3345, inf
          %v3456 = vsel %vm3455, %v3345, %v3454
          %vm3457 = vcmp.eq.f32.partialorder %v3345, 0.0
          %v3458 = vand.u32 %v3345, 2147483648
          %v3459 = vsel %vm3457, %v3458, %v3456
          %v3460 = vld [vmem:[%s3] sm:$0x1]
          %v3462 = vlaneseq
          %v3463 = vshrl.u32 %v3462, 7
          %v3464 = vsub.s32 0, %v3463
          %v3465 = vrot.slane %v3460, %v3464
          %v3467 = vadd.f32 %v3354, %v3465
          %v3468 = vadd.f32 %v3361, %v3465
          %v3469 = vadd.f32 %v3368, %v3465
          %v3470 = vadd.f32 %v3375, %v3465
          %v3471 = vadd.f32 %v3382, %v3465
          %v3472 = vadd.f32 %v3389, %v3465
          %v3473 = vadd.f32 %v3396, %v3465
          %v3474 = vadd.f32 %v3403, %v3465
          %v3475 = vadd.f32 %v3410, %v3465
          %v3476 = vadd.f32 %v3417, %v3465
          %v3477 = vadd.f32 %v3424, %v3465
          %v3478 = vadd.f32 %v3431, %v3465
          %v3479 = vadd.f32 %v3438, %v3465
          %v3480 = vadd.f32 %v3445, %v3465
          %v3481 = vadd.f32 %v3452, %v3465
          %v3482 = vadd.f32 %v3459, %v3465
          %v3483 = vmax.f32 %v3467, 0.0
          %v3484 = vmax.f32 %v3468, 0.0
          %v3485 = vmax.f32 %v3469, 0.0
          %v3486 = vmax.f32 %v3470, 0.0
          %v3487 = vmax.f32 %v3471, 0.0
          %v3488 = vmax.f32 %v3472, 0.0
          %v3489 = vmax.f32 %v3473, 0.0
          %v3490 = vmax.f32 %v3474, 0.0
          %v3491 = vmax.f32 %v3475, 0.0
          %v3492 = vmax.f32 %v3476, 0.0
          %v3493 = vmax.f32 %v3477, 0.0
          %v3494 = vmax.f32 %v3478, 0.0
          %v3495 = vmax.f32 %v3479, 0.0
          %v3496 = vmax.f32 %v3480, 0.0
          %v3497 = vmax.f32 %v3481, 0.0
          %v3498 = vmax.f32 %v3482, 0.0
          %v3499 = vadd.f32 %v3270, 1e-12
          %v3500 = vadd.f32 %v3275, 1e-12
          %v3501 = vadd.f32 %v3280, 1e-12
          %v3502 = vadd.f32 %v3285, 1e-12
          %v3503 = vadd.f32 %v3290, 1e-12
          %v3504 = vadd.f32 %v3295, 1e-12
          %v3505 = vadd.f32 %v3300, 1e-12
          %v3506 = vadd.f32 %v3305, 1e-12
          %v3507 = vadd.f32 %v3310, 1e-12
          %v3508 = vadd.f32 %v3315, 1e-12
          %v3509 = vadd.f32 %v3320, 1e-12
          %v3510 = vadd.f32 %v3325, 1e-12
          %v3511 = vadd.f32 %v3330, 1e-12
          %v3512 = vadd.f32 %v3335, 1e-12
          %v3513 = vadd.f32 %v3340, 1e-12
          %v3514 = vadd.f32 %v3345, 1e-12
          %v3515 = vrsqrt.pop %v3499
          %v3516 = vrsqrt.pop %v3500
          %v3517 = vrsqrt.pop %v3501
          %v3518 = vrsqrt.pop %v3502
          %v3519 = vrsqrt.pop %v3503
          %v3520 = vrsqrt.pop %v3504
          %v3521 = vrsqrt.pop %v3505
          %v3522 = vrsqrt.pop %v3506
          %v3523 = vrsqrt.pop %v3507
          %v3524 = vrsqrt.pop %v3508
          %v3525 = vrsqrt.pop %v3509
          %v3526 = vrsqrt.pop %v3510
          %v3527 = vrsqrt.pop %v3511
          %v3528 = vrsqrt.pop %v3512
          %v3529 = vrsqrt.pop %v3513
          %v3530 = vrsqrt.pop %v3514
          %v3531 = vmul.f32 %v3483, %v3515
          %v3532 = vmul.f32 %v3484, %v3516
          %v3533 = vmul.f32 %v3485, %v3517
          %v3534 = vmul.f32 %v3486, %v3518
          %v3535 = vmul.f32 %v3487, %v3519
          %v3536 = vmul.f32 %v3488, %v3520
          %v3537 = vmul.f32 %v3489, %v3521
          %v3538 = vmul.f32 %v3490, %v3522
          %v3539 = vmul.f32 %v3491, %v3523
          %v3540 = vmul.f32 %v3492, %v3524
          %v3541 = vmul.f32 %v3493, %v3525
          %v3542 = vmul.f32 %v3494, %v3526
          %v3543 = vmul.f32 %v3495, %v3527
          %v3544 = vmul.f32 %v3496, %v3528
          %v3545 = vmul.f32 %v3497, %v3529
          %v3546 = vmul.f32 %v3498, %v3530
          %v3547 = vmul.f32 %v3155, %v3531
          %v3548 = vmul.f32 %v3156, %v3532
          %v3549 = vmul.f32 %v3157, %v3533
          %v3550 = vmul.f32 %v3158, %v3534
          %v3551 = vmul.f32 %v3159, %v3535
          %v3552 = vmul.f32 %v3160, %v3536
          %v3553 = vmul.f32 %v3161, %v3537
          %v3554 = vmul.f32 %v3162, %v3538
          %v3555 = vmul.f32 %v3163, %v3539
          %v3556 = vmul.f32 %v3164, %v3540
          %v3557 = vmul.f32 %v3165, %v3541
          %v3558 = vmul.f32 %v3166, %v3542
          %v3559 = vmul.f32 %v3167, %v3543
          %v3560 = vmul.f32 %v3168, %v3544
          %v3561 = vmul.f32 %v3169, %v3545
          %v3562 = vmul.f32 %v3170, %v3546
          %v3563 = vpack.c.bf16 %v3548, %v3547
          %v3564 = vpack.c.bf16 %v3550, %v3549
          %v3565 = vpack.c.bf16 %v3552, %v3551
          %v3566 = vpack.c.bf16 %v3554, %v3553
          %v3567 = vpack.c.bf16 %v3556, %v3555
          %v3568 = vpack.c.bf16 %v3558, %v3557
          %v3569 = vpack.c.bf16 %v3560, %v3559
          %v3570 = vpack.c.bf16 %v3562, %v3561
          %v3579 = vunpack.c.l.b16 %v3563
          %v3580 = vunpack.c.h.b16 %v3563
          %v3581 = vunpack.c.l.b16 %v3564
          %v3582 = vunpack.c.h.b16 %v3564
          %v3583 = vunpack.c.l.b16 %v3565
          %v3584 = vunpack.c.h.b16 %v3565
          %v3585 = vunpack.c.l.b16 %v3566
          %v3586 = vunpack.c.h.b16 %v3566
          %v3587 = vunpack.c.l.b16 %v3567
          %v3588 = vunpack.c.h.b16 %v3567
          %v3589 = vunpack.c.l.b16 %v3568
          %v3590 = vunpack.c.h.b16 %v3568
          %v3591 = vunpack.c.l.b16 %v3569
          %v3592 = vunpack.c.h.b16 %v3569
          %v3593 = vunpack.c.l.b16 %v3570
          %v3594 = vunpack.c.h.b16 %v3570
          %v3595 = vpack.c.b16 %v3579, %v3579
          %v3596 = vpack.c.b16 %v3580, %v3580
          %v3597 = vpack.c.b16 %v3581, %v3581
          %v3598 = vpack.c.b16 %v3582, %v3582
          %v3599 = vpack.c.b16 %v3583, %v3583
          %v3600 = vpack.c.b16 %v3584, %v3584
          %v3601 = vpack.c.b16 %v3585, %v3585
          %v3602 = vpack.c.b16 %v3586, %v3586
          %v3603 = vpack.c.b16 %v3587, %v3587
          %v3604 = vpack.c.b16 %v3588, %v3588
          %v3605 = vpack.c.b16 %v3589, %v3589
          %v3606 = vpack.c.b16 %v3590, %v3590
          %v3607 = vpack.c.b16 %v3591, %v3591
          %v3608 = vpack.c.b16 %v3592, %v3592
          %v3609 = vpack.c.b16 %v3593, %v3593
          %v3610 = vpack.c.b16 %v3594, %v3594
          %3627 = vst [vmem:[%s512] sm:$0xf] %v3595
          %3628 = vst [vmem:[%s512 + $0x4] sm:$0xf] %v3596
          %3629 = vst [vmem:[%s512 + $0x8] sm:$0xf] %v3597
          %3630 = vst [vmem:[%s512 + $0xc] sm:$0xf] %v3598
          %3631 = vst [vmem:[%s512 + $0x10] sm:$0xf] %v3599
          %3632 = vst [vmem:[%s512 + $0x14] sm:$0xf] %v3600
          %3633 = vst [vmem:[%s512 + $0x18] sm:$0xf] %v3601
          %3634 = vst [vmem:[%s512 + $0x1c] sm:$0xf] %v3602
          %3635 = vst [vmem:[%s512 + $0x20] sm:$0xf] %v3603
          %3636 = vst [vmem:[%s512 + $0x24] sm:$0xf] %v3604
          %3637 = vst [vmem:[%s512 + $0x28] sm:$0xf] %v3605
          %3638 = vst [vmem:[%s512 + $0x2c] sm:$0xf] %v3606
          %3639 = vst [vmem:[%s512 + $0x30] sm:$0xf] %v3607
          %3640 = vst [vmem:[%s512 + $0x34] sm:$0xf] %v3608
          %3641 = vst [vmem:[%s512 + $0x38] sm:$0xf] %v3609
          %3642 = vst [vmem:[%s512 + $0x3c] sm:$0xf] %v3610
        $region67: #{cnn_forward.4} parent=54 // pred_fallthru
          _
        %s3643 = smul.u32 16, %s19
        %p3644 = scmp.lt.s32.totalorder %s3643, 15
        %s3645 = scalar_select %p3644, %s3643, 15
        %s3646 = smul.addr %s3645, 4
        %s3647 = scalar_lea.vmem %s4, %s3646
        // Predicated region
        $region68: #{cnn_forward.4} parent=54 // pred_check
          %p3648 = pneg %p141
        $region69: #{cnn_forward.4} parent=54 // pred_check_branch
          %3650 = sbr.rel (%p3648) target = $region71
        $region70: #{cnn_forward.4} parent=54 // pred_region
          %s3651 = smul.u32 16, %s19
        $region71: #{cnn_forward.4} parent=54 // pred_fallthru
          _
        // Predicated region
        $region72: #{cnn_forward.4} parent=54 // pred_check
          %p3652 = pneg %p141
        $region73: #{cnn_forward.4} parent=54 // pred_check_branch
          %3654 = sbr.rel (%p3652) target = $region75
        $region74: #{cnn_forward.4} parent=54 // pred_region
          %s3655 = smul.u32 16, %s19
          %p3656 = scmp.lt.s32.totalorder %s3655, 15
          %s3657 = scalar_select %p3656, %s3655, 15
          %s3658 = smul.addr %s3657, 4
          %s3659 = scalar_lea.vmem %s4, %s3658
        $region75: #{cnn_forward.4} parent=54 // pred_fallthru
          _
      $region55: #{cnn_forward.4} parent=5 // pred_fallthru
        _
      %p3660 = scmp.le.s32.totalorder 2, %s10
      // Predicated region
      $region76: #{cnn_forward.4} parent=5 // pred_check
        %p3661 = pneg %p3660
      $region77: #{cnn_forward.4} parent=5 // pred_check_branch
        %3663 = sbr.rel (%p3661) target = $region79
      $region78: #{cnn_forward.4} parent=5 // pred_region
        %s3664 = ssub.s32 %s10, 2
      $region79: #{cnn_forward.4} parent=5 // pred_fallthru
        _
    $region6: #{cnn_forward.4} parent=1 // loop_footer
      %s14 = sadd.s32 1, %s10
    $region7: #{cnn_forward.4} parent=1 // loop_footer_branch
      %9 = sbr.rel target = $region3
    $region8: #{cnn_forward.4} parent=1 // loop_exit
      _

// kernel: cnn_forward.5
$region0: #{cnn_forward.5}
  #allocation0 [shape = 'u32[]', space=smem, size = 0x4, offset = 0x4, fixed_abs, tag = 'smem constant byte address 0x4 - core index']
  #allocation1 [shape = 'u32[144,128]{1,0:T(1,128)}', space=vmem, size = 0x12000, scoped, tag = 'internal scratch']
  #allocation2 [shape = 'f32[64,128]{1,0:T(8,128)}', space=vmem, size = 0x8000, scoped, tag = 'scratch operand']
  %s0 = inlined_call_operand.vmem [shape: bf16[64,6656], index: 0, kind: input, shape index: {}]
  %s1 = inlined_call_operand.vmem [shape: bf16[6656,128], index: 1, kind: input, shape index: {}]
  %s2 = inlined_call_operand.vmem [shape: f32[128,128], index: 2, kind: input, shape index: {}]
  %s3 = inlined_call_operand.vmem [shape: f32[1,128], index: 3, kind: input, shape index: {}]
  %s4 = inlined_call_operand.vmem [shape: f32[128,128], index: 4, kind: input, shape index: {}]
  %s5 = inlined_call_operand.vmem [shape: f32[1,128], index: 5, kind: input, shape index: {}]
  %s6 = inlined_call_operand.hbm [shape: f32[2,128], index: 6, kind: output, shape index: {}]
  %s7 = sld [smem:[#allocation0]]
  $region91: #{cnn_forward.5} parent=0
    _
  %s9 = ssub.s32 1, %s7
  %s10 = scalar_select 0, %s9, %s7
  $region1: #{cnn_forward.5} parent=0
    #allocation3 [shape = 'u8[425984]{0}', space=vmem, size = 0x68000, scoped, tag = 'input window, operand 0']
    #allocation4 [shape = 'u8[1024]{0}', space=vmem, size = 0x400, scoped, tag = 'output window, operand 0, single buffered']
    #allocation5 [shape = 's32[2]{0}', space=sflag, size = 0x8, scoped, tag = 'scoped memory for cnn_forward.5']
    %11 = vsyncpa [#allocation5], 0
    loop: start=0, step=1, limit=6
    $region2: #{cnn_forward.5} parent=1 // loop_pre_header
      _
    $region3: #{cnn_forward.5} parent=1 // loop_header
      %s13 = sphi 0, %s17
      %p14 = scmp.ge.s32.totalorder %s13, 6
      %s23 = sphi 0, %s25
      %s26 = sphi 0, %s23
      %s27 = sphi 0, %s26
      %s43 = sphi 0, %s27
      %s49 = sphi 0, %s51
      %s52 = sphi 0, %s49
      %s53 = sphi 0, %s52
      %s69 = sphi 0, %s53
      %s73 = sphi 0, %s73
      %s75 = sphi 0, %s73
      %s76 = sphi 0, %s75
      %s90 = sphi 0, %s76
      %s94 = sphi 0, %s94
      %s96 = sphi 0, %s94
      %s97 = sphi 0, %s96
      %s111 = sphi 0, %s97
      %s115 = sphi 0, %s115
      %s117 = sphi 0, %s115
      %s118 = sphi 0, %s117
      %s132 = sphi 0, %s118
      %s136 = sphi 0, %s136
      %s138 = sphi 0, %s136
      %s139 = sphi 0, %s138
      %s153 = sphi 0, %s139
      %s157 = sphi 0, %s157
      %s159 = sphi 0, %s157
      %s160 = sphi 0, %s159
      %s174 = sphi 0, %s160
    $region4: #{cnn_forward.5} parent=1 // loop_header_branch
      %16 = sbr.rel (%p14) target = $region8
    $region5: #{cnn_forward.5} parent=1 // loop_body
      %s18 = ssub.s32 %s13, 1
      %s19 = ssub.s32 %s13, 2
      %s20 = sadd.s32 %s13, 1
      %s21 = ssub.s32 %s13, %s20
      %p22 = scmp.eq.s32.totalorder %s21, 0
      %s24 = sadd.s32 %s23, 1
      %s25 = scalar_select %p22, %s23, %s24
      %p28 = pneg %p22
      %p29 = scmp.eq.s32.totalorder %s13, 3
      %p30 = por %p28, %p29
      %p31 = scmp.ne.s32.totalorder %s23, %s26
      %p32 = scmp.eq.s32.totalorder %s13, 0
      %p33 = por %p31, %p32
      %p34 = scmp.ne.s32.totalorder %s23, %s26
      %p35 = scmp.eq.s32.totalorder %s18, 3
      %p36 = por %p34, %p35
      %p37 = scmp.ne.s32.totalorder %s26, %s27
      %p38 = scmp.eq.s32.totalorder %s18, 0
      %p39 = por %p37, %p38
      %p40 = scmp.ne.s32.totalorder %s26, %s27
      %p41 = scmp.eq.s32.totalorder %s19, 3
      %p42 = por %p40, %p41
      %p44 = scmp.ne.s32.totalorder %s27, %s43
      %p45 = scmp.eq.s32.totalorder %s19, 0
      %p46 = por %p44, %p45
      %s47 = ssub.s32 %s13, %s20
      %p48 = scmp.eq.s32.totalorder %s47, 0
      %s50 = sadd.s32 %s49, 1
      %s51 = scalar_select %p48, %s49, %s50
      %p54 = pneg %p48
      %p55 = scmp.eq.s32.totalorder %s13, 3
      %p56 = por %p54, %p55
      %p57 = scmp.ne.s32.totalorder %s49, %s52
      %p58 = scmp.eq.s32.totalorder %s13, 0
      %p59 = por %p57, %p58
      %p60 = scmp.ne.s32.totalorder %s49, %s52
      %p61 = scmp.eq.s32.totalorder %s18, 3
      %p62 = por %p60, %p61
      %p63 = scmp.ne.s32.totalorder %s52, %s53
      %p64 = scmp.eq.s32.totalorder %s18, 0
      %p65 = por %p63, %p64
      %p66 = scmp.ne.s32.totalorder %s52, %s53
      %p67 = scmp.eq.s32.totalorder %s19, 3
      %p68 = por %p66, %p67
      %p70 = scmp.ne.s32.totalorder %s53, %s69
      %p71 = scmp.eq.s32.totalorder %s19, 0
      %p72 = por %p70, %p71
      %s74 = sadd.s32 %s73, 1
      %p77 = scmp.eq.s32.totalorder %s13, 3
      %p78 = scmp.ne.s32.totalorder %s73, %s75
      %p79 = scmp.eq.s32.totalorder %s13, 0
      %p80 = por %p78, %p79
      %p81 = scmp.ne.s32.totalorder %s73, %s75
      %p82 = scmp.eq.s32.totalorder %s18, 3
      %p83 = por %p81, %p82
      %p84 = scmp.ne.s32.totalorder %s75, %s76
      %p85 = scmp.eq.s32.totalorder %s18, 0
      %p86 = por %p84, %p85
      %p87 = scmp.ne.s32.totalorder %s75, %s76
      %p88 = scmp.eq.s32.totalorder %s19, 3
      %p89 = por %p87, %p88
      %p91 = scmp.ne.s32.totalorder %s76, %s90
      %p92 = scmp.eq.s32.totalorder %s19, 0
      %p93 = por %p91, %p92
      %s95 = sadd.s32 %s94, 1
      %p98 = scmp.eq.s32.totalorder %s13, 3
      %p99 = scmp.ne.s32.totalorder %s94, %s96
      %p100 = scmp.eq.s32.totalorder %s13, 0
      %p101 = por %p99, %p100
      %p102 = scmp.ne.s32.totalorder %s94, %s96
      %p103 = scmp.eq.s32.totalorder %s18, 3
      %p104 = por %p102, %p103
      %p105 = scmp.ne.s32.totalorder %s96, %s97
      %p106 = scmp.eq.s32.totalorder %s18, 0
      %p107 = por %p105, %p106
      %p108 = scmp.ne.s32.totalorder %s96, %s97
      %p109 = scmp.eq.s32.totalorder %s19, 3
      %p110 = por %p108, %p109
      %p112 = scmp.ne.s32.totalorder %s97, %s111
      %p113 = scmp.eq.s32.totalorder %s19, 0
      %p114 = por %p112, %p113
      %s116 = sadd.s32 %s115, 1
      %p119 = scmp.eq.s32.totalorder %s13, 3
      %p120 = scmp.ne.s32.totalorder %s115, %s117
      %p121 = scmp.eq.s32.totalorder %s13, 0
      %p122 = por %p120, %p121
      %p123 = scmp.ne.s32.totalorder %s115, %s117
      %p124 = scmp.eq.s32.totalorder %s18, 3
      %p125 = por %p123, %p124
      %p126 = scmp.ne.s32.totalorder %s117, %s118
      %p127 = scmp.eq.s32.totalorder %s18, 0
      %p128 = por %p126, %p127
      %p129 = scmp.ne.s32.totalorder %s117, %s118
      %p130 = scmp.eq.s32.totalorder %s19, 3
      %p131 = por %p129, %p130
      %p133 = scmp.ne.s32.totalorder %s118, %s132
      %p134 = scmp.eq.s32.totalorder %s19, 0
      %p135 = por %p133, %p134
      %s137 = sadd.s32 %s136, 1
      %p140 = scmp.eq.s32.totalorder %s13, 3
      %p141 = scmp.ne.s32.totalorder %s136, %s138
      %p142 = scmp.eq.s32.totalorder %s13, 0
      %p143 = por %p141, %p142
      %p144 = scmp.ne.s32.totalorder %s136, %s138
      %p145 = scmp.eq.s32.totalorder %s18, 3
      %p146 = por %p144, %p145
      %p147 = scmp.ne.s32.totalorder %s138, %s139
      %p148 = scmp.eq.s32.totalorder %s18, 0
      %p149 = por %p147, %p148
      %p150 = scmp.ne.s32.totalorder %s138, %s139
      %p151 = scmp.eq.s32.totalorder %s19, 3
      %p152 = por %p150, %p151
      %p154 = scmp.ne.s32.totalorder %s139, %s153
      %p155 = scmp.eq.s32.totalorder %s19, 0
      %p156 = por %p154, %p155
      %s158 = sadd.s32 %s157, 1
      %p161 = scmp.eq.s32.totalorder %s13, 3
      %p162 = scmp.ne.s32.totalorder %s157, %s159
      %p163 = scmp.eq.s32.totalorder %s13, 0
      %p164 = por %p162, %p163
      %p165 = scmp.ne.s32.totalorder %s157, %s159
      %p166 = scmp.eq.s32.totalorder %s18, 3
      %p167 = por %p165, %p166
      %p168 = scmp.ne.s32.totalorder %s159, %s160
      %p169 = scmp.eq.s32.totalorder %s18, 0
      %p170 = por %p168, %p169
      %p171 = scmp.ne.s32.totalorder %s159, %s160
      %p172 = scmp.eq.s32.totalorder %s19, 3
      %p173 = por %p171, %p172
      %p175 = scmp.ne.s32.totalorder %s160, %s174
      %p176 = scmp.eq.s32.totalorder %s19, 0
      %p177 = por %p175, %p176
      %p178 = scmp.le.s32.totalorder 1, %s13
      %p179 = scmp.lt.s32.totalorder %s13, 5
      %p180 = pnand %p178, %p179
      %p181 = pneg %p180
      // Predicated region
      $region9: #{cnn_forward.5} parent=5 // pred_check
        _
      $region10: #{cnn_forward.5} parent=5 // pred_check_branch
        %183 = sbr.rel (%p180) target = $region12
      $region11: #{cnn_forward.5} parent=5 // pred_region
        %s184 = ssub.s32 %s13, 1
        // Predicated region
        $region13: #{cnn_forward.5} parent=11 // pred_check
          %p185 = pneg %p86
        $region14: #{cnn_forward.5} parent=11 // pred_check_branch
          %187 = sbr.rel (%p185) target = $region16
        $region15: #{cnn_forward.5} parent=11 // pred_region
          _
        $region16: #{cnn_forward.5} parent=11 // pred_fallthru
          _
        // Predicated region
        $region17: #{cnn_forward.5} parent=11 // pred_check
          %p188 = pneg %p107
        $region18: #{cnn_forward.5} parent=11 // pred_check_branch
          %190 = sbr.rel (%p188) target = $region20
        $region19: #{cnn_forward.5} parent=11 // pred_region
          _
        $region20: #{cnn_forward.5} parent=11 // pred_fallthru
          _
        // Predicated region
        $region21: #{cnn_forward.5} parent=11 // pred_check
          %p191 = pneg %p128
        $region22: #{cnn_forward.5} parent=11 // pred_check_branch
          %193 = sbr.rel (%p191) target = $region24
        $region23: #{cnn_forward.5} parent=11 // pred_region
          _
        $region24: #{cnn_forward.5} parent=11 // pred_fallthru
          _
        // Predicated region
        $region25: #{cnn_forward.5} parent=11 // pred_check
          %p194 = pneg %p149
        $region26: #{cnn_forward.5} parent=11 // pred_check_branch
          %196 = sbr.rel (%p194) target = $region28
        $region27: #{cnn_forward.5} parent=11 // pred_region
          _
        $region28: #{cnn_forward.5} parent=11 // pred_fallthru
          _
      $region12: #{cnn_forward.5} parent=5 // pred_fallthru
        _
      %p197 = scmp.lt.s32.totalorder %s13, 4
      // Predicated region
      $region29: #{cnn_forward.5} parent=5 // pred_check
        %p198 = pneg %p197
      $region30: #{cnn_forward.5} parent=5 // pred_check_branch
        %200 = sbr.rel (%p198) target = $region32
      $region31: #{cnn_forward.5} parent=5 // pred_region
        // Predicated region
        $region33: #{cnn_forward.5} parent=31 // pred_check
          %p201 = pneg %p33
        $region34: #{cnn_forward.5} parent=31 // pred_check_branch
          %203 = sbr.rel (%p201) target = $region36
        $region35: #{cnn_forward.5} parent=31 // pred_region
          %s204 = sand.u32 %s23, 1
          %s205 = sand.u32 %s23, 1
          %s206 = smul.addr %s205, 416
          %s207 = scalar_lea.vmem [#allocation3], %s206
          %s208 = smul.u32 13, %s13
          %s209 = smul.addr %s208, 4
          %s210 = scalar_lea.vmem %s0, %s209
          // Predicated region
          $region37: #{cnn_forward.5} parent=35 // pred_check
            _
          $region38: #{cnn_forward.5} parent=35 // pred_check_branch
            %212 = sbr.rel (0) target = $region40
          $region39: #{cnn_forward.5} parent=35 // pred_region
            // Predicated region
            $region41: #{cnn_forward.5} parent=39 // pred_check
              _
            $region42: #{cnn_forward.5} parent=39 // pred_check_branch
              %214 = sbr.rel (0) target = $region44
            $region43: #{cnn_forward.5} parent=39 // pred_region
              %s215 = scalar_lea.vmem %s210, 48
              %s216 = scalar_lea.vmem %s207, 48 [#allocation3]
              loop: start=0, step=1, limit=1
              $region45: #{cnn_forward.5} parent=43 // loop_pre_header
                _
              $region46: #{cnn_forward.5} parent=43 // loop_header
                %s218 = sphi 0, %s222
                %p219 = scmp.ge.s32.totalorder %s218, 1
                %s223 = sphi %s210, %s210
                %s224 = sphi %s207, %s207
              $region47: #{cnn_forward.5} parent=43 // loop_header_branch
                %221 = sbr.rel (%p219) target = $region51
              $region48: #{cnn_forward.5} parent=43 // loop_body
                %v225 = vld [vmem:[%s223] sm:$0xff]
                %226 = vst [vmem:[%s224] sm:$0xff] %v225
                %v227 = vld [vmem:[%s223 + $0x8] sm:$0xff]
                %228 = vst [vmem:[%s224 + $0x8] sm:$0xff] %v227
                %v229 = vld [vmem:[%s223 + $0x10] sm:$0xff]
                %230 = vst [vmem:[%s224 + $0x10] sm:$0xff] %v229
                %v231 = vld [vmem:[%s223 + $0x18] sm:$0xff]
                %232 = vst [vmem:[%s224 + $0x18] sm:$0xff] %v231
                %v233 = vld [vmem:[%s223 + $0x20] sm:$0xff]
                %234 = vst [vmem:[%s224 + $0x20] sm:$0xff] %v233
                %v235 = vld [vmem:[%s223 + $0x28] sm:$0xff]
                %236 = vst [vmem:[%s224 + $0x28] sm:$0xff] %v235
                %v237 = vld [vmem:[%s223 + $0xd0] sm:$0xff]
                %238 = vst [vmem:[%s224 + $0x34] sm:$0xff] %v237
                %v239 = vld [vmem:[%s223 + $0xd8] sm:$0xff]
                %240 = vst [vmem:[%s224 + $0x3c] sm:$0xff] %v239
                %v241 = vld [vmem:[%s223 + $0xe0] sm:$0xff]
                %242 = vst [vmem:[%s224 + $0x44] sm:$0xff] %v241
                %v243 = vld [vmem:[%s223 + $0xe8] sm:$0xff]
                %244 = vst [vmem:[%s224 + $0x4c] sm:$0xff] %v243
                %v245 = vld [vmem:[%s223 + $0xf0] sm:$0xff]
                %246 = vst [vmem:[%s224 + $0x54] sm:$0xff] %v245
                %v247 = vld [vmem:[%s223 + $0xf8] sm:$0xff]
                %248 = vst [vmem:[%s224 + $0x5c] sm:$0xff] %v247
                %v249 = vld [vmem:[%s223 + $0x1a0] sm:$0xff]
                %250 = vst [vmem:[%s224 + $0x68] sm:$0xff] %v249
                %v251 = vld [vmem:[%s223 + $0x1a8] sm:$0xff]
                %252 = vst [vmem:[%s224 + $0x70] sm:$0xff] %v251
                %v253 = vld [vmem:[%s223 + $0x1b0] sm:$0xff]
                %254 = vst [vmem:[%s224 + $0x78] sm:$0xff] %v253
                %v255 = vld [vmem:[%s223 + $0x1b8] sm:$0xff]
                %256 = vst [vmem:[%s224 + $0x80] sm:$0xff] %v255
                %v257 = vld [vmem:[%s223 + $0x1c0] sm:$0xff]
                %258 = vst [vmem:[%s224 + $0x88] sm:$0xff] %v257
                %v259 = vld [vmem:[%s223 + $0x1c8] sm:$0xff]
                %260 = vst [vmem:[%s224 + $0x90] sm:$0xff] %v259
                %v261 = vld [vmem:[%s223 + $0x270] sm:$0xff]
                %262 = vst [vmem:[%s224 + $0x9c] sm:$0xff] %v261
                %v263 = vld [vmem:[%s223 + $0x278] sm:$0xff]
                %264 = vst [vmem:[%s224 + $0xa4] sm:$0xff] %v263
                %v265 = vld [vmem:[%s223 + $0x280] sm:$0xff]
                %266 = vst [vmem:[%s224 + $0xac] sm:$0xff] %v265
                %v267 = vld [vmem:[%s223 + $0x288] sm:$0xff]
                %268 = vst [vmem:[%s224 + $0xb4] sm:$0xff] %v267
                %v269 = vld [vmem:[%s223 + $0x290] sm:$0xff]
                %270 = vst [vmem:[%s224 + $0xbc] sm:$0xff] %v269
                %v271 = vld [vmem:[%s223 + $0x298] sm:$0xff]
                %272 = vst [vmem:[%s224 + $0xc4] sm:$0xff] %v271
                %v273 = vld [vmem:[%s223 + $0x340] sm:$0xff]
                %274 = vst [vmem:[%s224 + $0xd0] sm:$0xff] %v273
                %v275 = vld [vmem:[%s223 + $0x348] sm:$0xff]
                %276 = vst [vmem:[%s224 + $0xd8] sm:$0xff] %v275
                %v277 = vld [vmem:[%s223 + $0x350] sm:$0xff]
                %278 = vst [vmem:[%s224 + $0xe0] sm:$0xff] %v277
                %v279 = vld [vmem:[%s223 + $0x358] sm:$0xff]
                %280 = vst [vmem:[%s224 + $0xe8] sm:$0xff] %v279
                %v281 = vld [vmem:[%s223 + $0x360] sm:$0xff]
                %282 = vst [vmem:[%s224 + $0xf0] sm:$0xff] %v281
                %v283 = vld [vmem:[%s223 + $0x368] sm:$0xff]
                %284 = vst [vmem:[%s224 + $0xf8] sm:$0xff] %v283
                %v285 = vld [vmem:[%s223 + $0x410] sm:$0xff]
                %286 = vst [vmem:[%s224 + $0x104] sm:$0xff] %v285
                %v287 = vld [vmem:[%s223 + $0x418] sm:$0xff]
                %288 = vst [vmem:[%s224 + $0x10c] sm:$0xff] %v287
                %v289 = vld [vmem:[%s223 + $0x420] sm:$0xff]
                %290 = vst [vmem:[%s224 + $0x114] sm:$0xff] %v289
                %v291 = vld [vmem:[%s223 + $0x428] sm:$0xff]
                %292 = vst [vmem:[%s224 + $0x11c] sm:$0xff] %v291
                %v293 = vld [vmem:[%s223 + $0x430] sm:$0xff]
                %294 = vst [vmem:[%s224 + $0x124] sm:$0xff] %v293
                %v295 = vld [vmem:[%s223 + $0x438] sm:$0xff]
                %296 = vst [vmem:[%s224 + $0x12c] sm:$0xff] %v295
                %v297 = vld [vmem:[%s223 + $0x4e0] sm:$0xff]
                %298 = vst [vmem:[%s224 + $0x138] sm:$0xff] %v297
                %v299 = vld [vmem:[%s223 + $0x4e8] sm:$0xff]
                %300 = vst [vmem:[%s224 + $0x140] sm:$0xff] %v299
                %v301 = vld [vmem:[%s223 + $0x4f0] sm:$0xff]
                %302 = vst [vmem:[%s224 + $0x148] sm:$0xff] %v301
                %v303 = vld [vmem:[%s223 + $0x4f8] sm:$0xff]
                %304 = vst [vmem:[%s224 + $0x150] sm:$0xff] %v303
                %v305 = vld [vmem:[%s223 + $0x500] sm:$0xff]
                %306 = vst [vmem:[%s224 + $0x158] sm:$0xff] %v305
                %v307 = vld [vmem:[%s223 + $0x508] sm:$0xff]
                %308 = vst [vmem:[%s224 + $0x160] sm:$0xff] %v307
                %v309 = vld [vmem:[%s223 + $0x5b0] sm:$0xff]
                %310 = vst [vmem:[%s224 + $0x16c] sm:$0xff] %v309
                %v311 = vld [vmem:[%s223 + $0x5b8] sm:$0xff]
                %312 = vst [vmem:[%s224 + $0x174] sm:$0xff] %v311
                %v313 = vld [vmem:[%s223 + $0x5c0] sm:$0xff]
                %314 = vst [vmem:[%s224 + $0x17c] sm:$0xff] %v313
                %v315 = vld [vmem:[%s223 + $0x5c8] sm:$0xff]
                %316 = vst [vmem:[%s224 + $0x184] sm:$0xff] %v315
                %v317 = vld [vmem:[%s223 + $0x5d0] sm:$0xff]
                %318 = vst [vmem:[%s224 + $0x18c] sm:$0xff] %v317
                %v319 = vld [vmem:[%s223 + $0x5d8] sm:$0xff]
                %320 = vst [vmem:[%s224 + $0x194] sm:$0xff] %v319
              $region49: #{cnn_forward.5} parent=43 // loop_footer
                %s222 = sadd.s32 1, %s218
              $region50: #{cnn_forward.5} parent=43 // loop_footer_branch
                %217 = sbr.rel target = $region46
              $region51: #{cnn_forward.5} parent=43 // loop_exit
                _
              loop: start=0, step=1, limit=1
              $region52: #{cnn_forward.5} parent=43 // loop_pre_header
                _
              $region53: #{cnn_forward.5} parent=43 // loop_header
                %s323 = sphi 0, %s327
                %p324 = scmp.ge.s32.totalorder %s323, 1
                %s328 = sphi %s215, %s215
                %s329 = sphi %s216, %s216
              $region54: #{cnn_forward.5} parent=43 // loop_header_branch
                %326 = sbr.rel (%p324) target = $region58
              $region55: #{cnn_forward.5} parent=43 // loop_body
                %v330 = vld [vmem:[%s328] sm:$0xf]
                %331 = vst [vmem:[%s329] sm:$0xf] %v330
                %v332 = vld [vmem:[%s328 + $0xd0] sm:$0xf]
                %333 = vst [vmem:[%s329 + $0x34] sm:$0xf] %v332
                %v334 = vld [vmem:[%s328 + $0x1a0] sm:$0xf]
                %335 = vst [vmem:[%s329 + $0x68] sm:$0xf] %v334
                %v336 = vld [vmem:[%s328 + $0x270] sm:$0xf]
                %337 = vst [vmem:[%s329 + $0x9c] sm:$0xf] %v336
                %v338 = vld [vmem:[%s328 + $0x340] sm:$0xf]
                %339 = vst [vmem:[%s329 + $0xd0] sm:$0xf] %v338
                %v340 = vld [vmem:[%s328 + $0x410] sm:$0xf]
                %341 = vst [vmem:[%s329 + $0x104] sm:$0xf] %v340
                %v342 = vld [vmem:[%s328 + $0x4e0] sm:$0xf]
                %343 = vst [vmem:[%s329 + $0x138] sm:$0xf] %v342
                %v344 = vld [vmem:[%s328 + $0x5b0] sm:$0xf]
                %345 = vst [vmem:[%s329 + $0x16c] sm:$0xf] %v344
              $region56: #{cnn_forward.5} parent=43 // loop_footer
                %s327 = sadd.s32 1, %s323
              $region57: #{cnn_forward.5} parent=43 // loop_footer_branch
                %322 = sbr.rel target = $region53
              $region58: #{cnn_forward.5} parent=43 // loop_exit
                _
            $region44: #{cnn_forward.5} parent=39 // pred_fallthru
              _
          $region40: #{cnn_forward.5} parent=35 // pred_fallthru
            _
          %346 = vnop
        $region36: #{cnn_forward.5} parent=31 // pred_fallthru
          _
        // Predicated region
        $region59: #{cnn_forward.5} parent=31 // pred_check
          %p347 = pneg %p59
        $region60: #{cnn_forward.5} parent=31 // pred_check_branch
          %349 = sbr.rel (%p347) target = $region62
        $region61: #{cnn_forward.5} parent=31 // pred_region
          %s350 = smul.u32 208, %s13
          %p351 = scmp.lt.s32.totalorder %s350, 831
          %s352 = scalar_select %p351, %s350, 831
          %s353 = smul.addr %s352, 4
          %s354 = scalar_lea.vmem %s1, %s353
          %s355 = smul.u32 208, %s13
        $region62: #{cnn_forward.5} parent=31 // pred_fallthru
          _
      $region32: #{cnn_forward.5} parent=5 // pred_fallthru
        _
      %p356 = scmp.le.s32.totalorder 1, %s13
      %p357 = scmp.lt.s32.totalorder %s13, 5
      %p358 = pnand %p356, %p357
      %p359 = pneg %p358
      // Predicated region
      $region63: #{cnn_forward.5} parent=5 // pred_check
        _
      $region64: #{cnn_forward.5} parent=5 // pred_check_branch
        %361 = sbr.rel (%p358) target = $region66
      $region65: #{cnn_forward.5} parent=5 // pred_region
        %s362 = ssub.s32 %s13, 1
        %s363 = sand.u32 %s26, 1
        %s364 = sand.u32 %s26, 1
        %s365 = smul.addr %s364, 416
        %s366 = scalar_lea.vmem [#allocation3], %s365
        // Predicated region
        $region67: #{cnn_forward.5} parent=65 // pred_check
          %p367 = pneg %p39
        $region68: #{cnn_forward.5} parent=65 // pred_check_branch
          %369 = sbr.rel (%p367) target = $region70
        $region69: #{cnn_forward.5} parent=65 // pred_region
          _
        $region70: #{cnn_forward.5} parent=65 // pred_fallthru
          _
        %s370 = sand.u32 %s26, 1
        %s371 = sand.u32 %s26, 1
        %s372 = smul.addr %s371, 416
        %s373 = scalar_lea.vmem [#allocation3], %s372
        %p374 = pneg %p39
        %p375 = pneg %p36
        %s376 = smul.u32 208, %s18
        %p377 = scmp.lt.s32.totalorder %s376, 831
        %s378 = scalar_select %p377, %s376, 831
        %s379 = smul.addr %s378, 4
        %s380 = scalar_lea.vmem %s1, %s379
        %p381 = pneg %p65
        %p382 = pneg %p62
        %p383 = pneg %p86
        %p384 = pneg %p83
        %p385 = pneg %p107
        %p386 = pneg %p104
        %p387 = pneg %p128
        %p388 = pneg %p125
        %p389 = pneg %p149
        %p390 = pneg %p146
        %p391 = pneg %p170
        %p392 = pneg %p167
        %s393 = smul.u32 13, %s18
        %s394 = smul.u32 208, %s18
        %p395 = scmp.lt.s32.totalorder %s394, 831
        %s396 = scalar_select %p395, %s394, 831
        %s397 = smul.addr %s396, 4
        %s398 = scalar_lea.vmem %s1, %s397
        %s399 = smul.u32 208, %s18
        %p401 = scmp.eq.s32.totalorder %s18, 0
        // Predicated region
        $region71: #{cnn_forward.5} parent=65 // pred_check
          %p402 = pneg %p401
        $region72: #{cnn_forward.5} parent=65 // pred_check_branch
          %404 = sbr.rel (%p402) target = $region74
        $region73: #{cnn_forward.5} parent=65 // pred_region
          %405 = vst [vmem:[#allocation2] sm:$0xff] 0.0
          %406 = vst [vmem:[#allocation2 + $0x8] sm:$0xff] 0.0
          %407 = vst [vmem:[#allocation2 + $0x10] sm:$0xff] 0.0
          %408 = vst [vmem:[#allocation2 + $0x18] sm:$0xff] 0.0
          %409 = vst [vmem:[#allocation2 + $0x20] sm:$0xff] 0.0
          %410 = vst [vmem:[#allocation2 + $0x28] sm:$0xff] 0.0
          %411 = vst [vmem:[#allocation2 + $0x30] sm:$0xff] 0.0
          %412 = vst [vmem:[#allocation2 + $0x38] sm:$0xff] 0.0
        $region74: #{cnn_forward.5} parent=65 // pred_fallthru
          _
        %v413 = vld [vmem:[#allocation2] sm:$0xff]
        %v414 = vld [vmem:[#allocation2 + $0x8] sm:$0xff]
        %v415 = vld [vmem:[#allocation2 + $0x10] sm:$0xff]
        %v416 = vld [vmem:[#allocation2 + $0x18] sm:$0xff]
        %v417 = vld [vmem:[#allocation2 + $0x20] sm:$0xff]
        %v418 = vld [vmem:[#allocation2 + $0x28] sm:$0xff]
        %v419 = vld [vmem:[#allocation2 + $0x30] sm:$0xff]
        %v420 = vld [vmem:[#allocation2 + $0x38] sm:$0xff]
        %v421 = vld [vmem:[%s366] sm:$0xff]
        %v422 = vld [vmem:[%s366 + $0x8] sm:$0xff]
        %v423 = vld [vmem:[%s366 + $0x10] sm:$0xff]
        %v424 = vld [vmem:[%s366 + $0x18] sm:$0xff]
        %v425 = vld [vmem:[%s366 + $0x20] sm:$0xff]
        %v426 = vld [vmem:[%s366 + $0x28] sm:$0xff]
        %v427 = vld [vmem:[%s366 + $0x30] sm:$0xf]
        %v428 = vld [vmem:[%s366 + $0x34] sm:$0xff]
        %v429 = vld [vmem:[%s366 + $0x3c] sm:$0xff]
        %v430 = vld [vmem:[%s366 + $0x44] sm:$0xff]
        %v431 = vld [vmem:[%s366 + $0x4c] sm:$0xff]
        %v432 = vld [vmem:[%s366 + $0x54] sm:$0xff]
        %v433 = vld [vmem:[%s366 + $0x5c] sm:$0xff]
        %v434 = vld [vmem:[%s366 + $0x64] sm:$0xf]
        %v435 = vld [vmem:[%s366 + $0x68] sm:$0xff]
        %v436 = vld [vmem:[%s366 + $0x70] sm:$0xff]
        %v437 = vld [vmem:[%s366 + $0x78] sm:$0xff]
        %v438 = vld [vmem:[%s366 + $0x80] sm:$0xff]
        %v439 = vld [vmem:[%s366 + $0x88] sm:$0xff]
        %v440 = vld [vmem:[%s366 + $0x90] sm:$0xff]
        %v441 = vld [vmem:[%s366 + $0x98] sm:$0xf]
        %v442 = vld [vmem:[%s366 + $0x9c] sm:$0xff]
        %v443 = vld [vmem:[%s366 + $0xa4] sm:$0xff]
        %v444 = vld [vmem:[%s366 + $0xac] sm:$0xff]
        %v445 = vld [vmem:[%s366 + $0xb4] sm:$0xff]
        %v446 = vld [vmem:[%s366 + $0xbc] sm:$0xff]
        %v447 = vld [vmem:[%s366 + $0xc4] sm:$0xff]
        %v448 = vld [vmem:[%s366 + $0xcc] sm:$0xf]
        %v449 = vld [vmem:[%s366 + $0xd0] sm:$0xff]
        %v450 = vld [vmem:[%s366 + $0xd8] sm:$0xff]
        %v451 = vld [vmem:[%s366 + $0xe0] sm:$0xff]
        %v452 = vld [vmem:[%s366 + $0xe8] sm:$0xff]
        %v453 = vld [vmem:[%s366 + $0xf0] sm:$0xff]
        %v454 = vld [vmem:[%s366 + $0xf8] sm:$0xff]
        %v455 = vld [vmem:[%s366 + $0x100] sm:$0xf]
        %v456 = vld [vmem:[%s366 + $0x104] sm:$0xff]
        %v457 = vld [vmem:[%s366 + $0x10c] sm:$0xff]
        %v458 = vld [vmem:[%s366 + $0x114] sm:$0xff]
        %v459 = vld [vmem:[%s366 + $0x11c] sm:$0xff]
        %v460 = vld [vmem:[%s366 + $0x124] sm:$0xff]
        %v461 = vld [vmem:[%s366 + $0x12c] sm:$0xff]
        %v462 = vld [vmem:[%s366 + $0x134] sm:$0xf]
        %v463 = vld [vmem:[%s366 + $0x138] sm:$0xff]
        %v464 = vld [vmem:[%s366 + $0x140] sm:$0xff]
        %v465 = vld [vmem:[%s366 + $0x148] sm:$0xff]
        %v466 = vld [vmem:[%s366 + $0x150] sm:$0xff]
        %v467 = vld [vmem:[%s366 + $0x158] sm:$0xff]
        %v468 = vld [vmem:[%s366 + $0x160] sm:$0xff]
        %v469 = vld [vmem:[%s366 + $0x168] sm:$0xf]
        %v470 = vld [vmem:[%s366 + $0x16c] sm:$0xff]
        %v471 = vld [vmem:[%s366 + $0x174] sm:$0xff]
        %v472 = vld [vmem:[%s366 + $0x17c] sm:$0xff]
        %v473 = vld [vmem:[%s366 + $0x184] sm:$0xff]
        %v474 = vld [vmem:[%s366 + $0x18c] sm:$0xff]
        %v475 = vld [vmem:[%s366 + $0x194] sm:$0xff]
        %v476 = vld [vmem:[%s366 + $0x19c] sm:$0xf]
        %v477 = vld [vmem:[%s398] sm:$0xf]
        %v478 = vld [vmem:[%s398 + $0x4] sm:$0xf]
        %v479 = vld [vmem:[%s398 + $0x8] sm:$0xf]
        %v480 = vld [vmem:[%s398 + $0xc] sm:$0xf]
        %v481 = vld [vmem:[%s398 + $0x10] sm:$0xf]
        %v482 = vld [vmem:[%s398 + $0x14] sm:$0xf]
        %v483 = vld [vmem:[%s398 + $0x18] sm:$0xf]
        %v484 = vld [vmem:[%s398 + $0x1c] sm:$0xf]
        %v485 = vld [vmem:[%s398 + $0x20] sm:$0xf]
        %v486 = vld [vmem:[%s398 + $0x24] sm:$0xf]
        %v487 = vld [vmem:[%s398 + $0x28] sm:$0xf]
        %v488 = vld [vmem:[%s398 + $0x2c] sm:$0xf]
        %v489 = vld [vmem:[%s398 + $0x30] sm:$0xf]
        %v490 = vld [vmem:[%s398 + $0x34] sm:$0xf]
        %v491 = vld [vmem:[%s398 + $0x38] sm:$0xf]
        %v492 = vld [vmem:[%s398 + $0x3c] sm:$0xf]
        %v493 = vld [vmem:[%s398 + $0x40] sm:$0xf]
        %v494 = vld [vmem:[%s398 + $0x44] sm:$0xf]
        %v495 = vld [vmem:[%s398 + $0x48] sm:$0xf]
        %v496 = vld [vmem:[%s398 + $0x4c] sm:$0xf]
        %v497 = vld [vmem:[%s398 + $0x50] sm:$0xf]
        %v498 = vld [vmem:[%s398 + $0x54] sm:$0xf]
        %v499 = vld [vmem:[%s398 + $0x58] sm:$0xf]
        %v500 = vld [vmem:[%s398 + $0x5c] sm:$0xf]
        %v501 = vld [vmem:[%s398 + $0x60] sm:$0xf]
        %v502 = vld [vmem:[%s398 + $0x64] sm:$0xf]
        %v503 = vld [vmem:[%s398 + $0x68] sm:$0xf]
        %v504 = vld [vmem:[%s398 + $0x6c] sm:$0xf]
        %v505 = vld [vmem:[%s398 + $0x70] sm:$0xf]
        %v506 = vld [vmem:[%s398 + $0x74] sm:$0xf]
        %v507 = vld [vmem:[%s398 + $0x78] sm:$0xf]
        %v508 = vld [vmem:[%s398 + $0x7c] sm:$0xf]
        %v509 = vld [vmem:[%s398 + $0x80] sm:$0xf]
        %v510 = vld [vmem:[%s398 + $0x84] sm:$0xf]
        %v511 = vld [vmem:[%s398 + $0x88] sm:$0xf]
        %v512 = vld [vmem:[%s398 + $0x8c] sm:$0xf]
        %v513 = vld [vmem:[%s398 + $0x90] sm:$0xf]
        %v514 = vld [vmem:[%s398 + $0x94] sm:$0xf]
        %v515 = vld [vmem:[%s398 + $0x98] sm:$0xf]
        %v516 = vld [vmem:[%s398 + $0x9c] sm:$0xf]
        %v517 = vld [vmem:[%s398 + $0xa0] sm:$0xf]
        %v518 = vld [vmem:[%s398 + $0xa4] sm:$0xf]
        %v519 = vld [vmem:[%s398 + $0xa8] sm:$0xf]
        %v520 = vld [vmem:[%s398 + $0xac] sm:$0xf]
        %v521 = vld [vmem:[%s398 + $0xb0] sm:$0xf]
        %v522 = vld [vmem:[%s398 + $0xb4] sm:$0xf]
        %v523 = vld [vmem:[%s398 + $0xb8] sm:$0xf]
        %v524 = vld [vmem:[%s398 + $0xbc] sm:$0xf]
        %v525 = vld [vmem:[%s398 + $0xc0] sm:$0xf]
        %v526 = vld [vmem:[%s398 + $0xc4] sm:$0xf]
        %v527 = vld [vmem:[%s398 + $0xc8] sm:$0xf]
        %v528 = vld [vmem:[%s398 + $0xcc] sm:$0xf]
        %v529 = vld [vmem:[%s398 + $0xd0] sm:$0xf]
        %v530 = vld [vmem:[%s398 + $0xd4] sm:$0xf]
        %v531 = vld [vmem:[%s398 + $0xd8] sm:$0xf]
        %v532 = vld [vmem:[%s398 + $0xdc] sm:$0xf]
        %v533 = vld [vmem:[%s398 + $0xe0] sm:$0xf]
        %v534 = vld [vmem:[%s398 + $0xe4] sm:$0xf]
        %v535 = vld [vmem:[%s398 + $0xe8] sm:$0xf]
        %v536 = vld [vmem:[%s398 + $0xec] sm:$0xf]
        %v537 = vld [vmem:[%s398 + $0xf0] sm:$0xf]
        %v538 = vld [vmem:[%s398 + $0xf4] sm:$0xf]
        %v539 = vld [vmem:[%s398 + $0xf8] sm:$0xf]
        %v540 = vld [vmem:[%s398 + $0xfc] sm:$0xf]
        %v541 = vld [vmem:[%s398 + $0x100] sm:$0xf]
        %v542 = vld [vmem:[%s398 + $0x104] sm:$0xf]
        %v543 = vld [vmem:[%s398 + $0x108] sm:$0xf]
        %v544 = vld [vmem:[%s398 + $0x10c] sm:$0xf]
        %v545 = vld [vmem:[%s398 + $0x110] sm:$0xf]
        %v546 = vld [vmem:[%s398 + $0x114] sm:$0xf]
        %v547 = vld [vmem:[%s398 + $0x118] sm:$0xf]
        %v548 = vld [vmem:[%s398 + $0x11c] sm:$0xf]
        %v549 = vld [vmem:[%s398 + $0x120] sm:$0xf]
        %v550 = vld [vmem:[%s398 + $0x124] sm:$0xf]
        %v551 = vld [vmem:[%s398 + $0x128] sm:$0xf]
        %v552 = vld [vmem:[%s398 + $0x12c] sm:$0xf]
        %v553 = vld [vmem:[%s398 + $0x130] sm:$0xf]
        %v554 = vld [vmem:[%s398 + $0x134] sm:$0xf]
        %v555 = vld [vmem:[%s398 + $0x138] sm:$0xf]
        %v556 = vld [vmem:[%s398 + $0x13c] sm:$0xf]
        %v557 = vld [vmem:[%s398 + $0x140] sm:$0xf]
        %v558 = vld [vmem:[%s398 + $0x144] sm:$0xf]
        %v559 = vld [vmem:[%s398 + $0x148] sm:$0xf]
        %v560 = vld [vmem:[%s398 + $0x14c] sm:$0xf]
        %v561 = vld [vmem:[%s398 + $0x150] sm:$0xf]
        %v562 = vld [vmem:[%s398 + $0x154] sm:$0xf]
        %v563 = vld [vmem:[%s398 + $0x158] sm:$0xf]
        %v564 = vld [vmem:[%s398 + $0x15c] sm:$0xf]
        %v565 = vld [vmem:[%s398 + $0x160] sm:$0xf]
        %v566 = vld [vmem:[%s398 + $0x164] sm:$0xf]
        %v567 = vld [vmem:[%s398 + $0x168] sm:$0xf]
        %v568 = vld [vmem:[%s398 + $0x16c] sm:$0xf]
        %v569 = vld [vmem:[%s398 + $0x170] sm:$0xf]
        %v570 = vld [vmem:[%s398 + $0x174] sm:$0xf]
        %v571 = vld [vmem:[%s398 + $0x178] sm:$0xf]
        %v572 = vld [vmem:[%s398 + $0x17c] sm:$0xf]
        %v573 = vld [vmem:[%s398 + $0x180] sm:$0xf]
        %v574 = vld [vmem:[%s398 + $0x184] sm:$0xf]
        %v575 = vld [vmem:[%s398 + $0x188] sm:$0xf]
        %v576 = vld [vmem:[%s398 + $0x18c] sm:$0xf]
        %v577 = vld [vmem:[%s398 + $0x190] sm:$0xf]
        %v578 = vld [vmem:[%s398 + $0x194] sm:$0xf]
        %v579 = vld [vmem:[%s398 + $0x198] sm:$0xf]
        %v580 = vld [vmem:[%s398 + $0x19c] sm:$0xf]
        %v581 = vld [vmem:[%s398 + $0x1a0] sm:$0xf]
        %v582 = vld [vmem:[%s398 + $0x1a4] sm:$0xf]
        %v583 = vld [vmem:[%s398 + $0x1a8] sm:$0xf]
        %v584 = vld [vmem:[%s398 + $0x1ac] sm:$0xf]
        %v585 = vld [vmem:[%s398 + $0x1b0] sm:$0xf]
        %v586 = vld [vmem:[%s398 + $0x1b4] sm:$0xf]
        %v587 = vld [vmem:[%s398 + $0x1b8] sm:$0xf]
        %v588 = vld [vmem:[%s398 + $0x1bc] sm:$0xf]
        %v589 = vld [vmem:[%s398 + $0x1c0] sm:$0xf]
        %v590 = vld [vmem:[%s398 + $0x1c4] sm:$0xf]
        %v591 = vld [vmem:[%s398 + $0x1c8] sm:$0xf]
        %v592 = vld [vmem:[%s398 + $0x1cc] sm:$0xf]
        %v593 = vld [vmem:[%s398 + $0x1d0] sm:$0xf]
        %v594 = vld [vmem:[%s398 + $0x1d4] sm:$0xf]
        %v595 = vld [vmem:[%s398 + $0x1d8] sm:$0xf]
        %v596 = vld [vmem:[%s398 + $0x1dc] sm:$0xf]
        %v597 = vld [vmem:[%s398 + $0x1e0] sm:$0xf]
        %v598 = vld [vmem:[%s398 + $0x1e4] sm:$0xf]
        %v599 = vld [vmem:[%s398 + $0x1e8] sm:$0xf]
        %v600 = vld [vmem:[%s398 + $0x1ec] sm:$0xf]
        %v601 = vld [vmem:[%s398 + $0x1f0] sm:$0xf]
        %v602 = vld [vmem:[%s398 + $0x1f4] sm:$0xf]
        %v603 = vld [vmem:[%s398 + $0x1f8] sm:$0xf]
        %v604 = vld [vmem:[%s398 + $0x1fc] sm:$0xf]
        %v605 = vld [vmem:[%s398 + $0x200] sm:$0xf]
        %v606 = vld [vmem:[%s398 + $0x204] sm:$0xf]
        %v607 = vld [vmem:[%s398 + $0x208] sm:$0xf]
        %v608 = vld [vmem:[%s398 + $0x20c] sm:$0xf]
        %v609 = vld [vmem:[%s398 + $0x210] sm:$0xf]
        %v610 = vld [vmem:[%s398 + $0x214] sm:$0xf]
        %v611 = vld [vmem:[%s398 + $0x218] sm:$0xf]
        %v612 = vld [vmem:[%s398 + $0x21c] sm:$0xf]
        %v613 = vld [vmem:[%s398 + $0x220] sm:$0xf]
        %v614 = vld [vmem:[%s398 + $0x224] sm:$0xf]
        %v615 = vld [vmem:[%s398 + $0x228] sm:$0xf]
        %v616 = vld [vmem:[%s398 + $0x22c] sm:$0xf]
        %v617 = vld [vmem:[%s398 + $0x230] sm:$0xf]
        %v618 = vld [vmem:[%s398 + $0x234] sm:$0xf]
        %v619 = vld [vmem:[%s398 + $0x238] sm:$0xf]
        %v620 = vld [vmem:[%s398 + $0x23c] sm:$0xf]
        %v621 = vld [vmem:[%s398 + $0x240] sm:$0xf]
        %v622 = vld [vmem:[%s398 + $0x244] sm:$0xf]
        %v623 = vld [vmem:[%s398 + $0x248] sm:$0xf]
        %v624 = vld [vmem:[%s398 + $0x24c] sm:$0xf]
        %v625 = vld [vmem:[%s398 + $0x250] sm:$0xf]
        %v626 = vld [vmem:[%s398 + $0x254] sm:$0xf]
        %v627 = vld [vmem:[%s398 + $0x258] sm:$0xf]
        %v628 = vld [vmem:[%s398 + $0x25c] sm:$0xf]
        %v629 = vld [vmem:[%s398 + $0x260] sm:$0xf]
        %v630 = vld [vmem:[%s398 + $0x264] sm:$0xf]
        %v631 = vld [vmem:[%s398 + $0x268] sm:$0xf]
        %v632 = vld [vmem:[%s398 + $0x26c] sm:$0xf]
        %v633 = vld [vmem:[%s398 + $0x270] sm:$0xf]
        %v634 = vld [vmem:[%s398 + $0x274] sm:$0xf]
        %v635 = vld [vmem:[%s398 + $0x278] sm:$0xf]
        %v636 = vld [vmem:[%s398 + $0x27c] sm:$0xf]
        %v637 = vld [vmem:[%s398 + $0x280] sm:$0xf]
        %v638 = vld [vmem:[%s398 + $0x284] sm:$0xf]
        %v639 = vld [vmem:[%s398 + $0x288] sm:$0xf]
        %v640 = vld [vmem:[%s398 + $0x28c] sm:$0xf]
        %v641 = vld [vmem:[%s398 + $0x290] sm:$0xf]
        %v642 = vld [vmem:[%s398 + $0x294] sm:$0xf]
        %v643 = vld [vmem:[%s398 + $0x298] sm:$0xf]
        %v644 = vld [vmem:[%s398 + $0x29c] sm:$0xf]
        %v645 = vld [vmem:[%s398 + $0x2a0] sm:$0xf]
        %v646 = vld [vmem:[%s398 + $0x2a4] sm:$0xf]
        %v647 = vld [vmem:[%s398 + $0x2a8] sm:$0xf]
        %v648 = vld [vmem:[%s398 + $0x2ac] sm:$0xf]
        %v649 = vld [vmem:[%s398 + $0x2b0] sm:$0xf]
        %v650 = vld [vmem:[%s398 + $0x2b4] sm:$0xf]
        %v651 = vld [vmem:[%s398 + $0x2b8] sm:$0xf]
        %v652 = vld [vmem:[%s398 + $0x2bc] sm:$0xf]
        %v653 = vld [vmem:[%s398 + $0x2c0] sm:$0xf]
        %v654 = vld [vmem:[%s398 + $0x2c4] sm:$0xf]
        %v655 = vld [vmem:[%s398 + $0x2c8] sm:$0xf]
        %v656 = vld [vmem:[%s398 + $0x2cc] sm:$0xf]
        %v657 = vld [vmem:[%s398 + $0x2d0] sm:$0xf]
        %v658 = vld [vmem:[%s398 + $0x2d4] sm:$0xf]
        %v659 = vld [vmem:[%s398 + $0x2d8] sm:$0xf]
        %v660 = vld [vmem:[%s398 + $0x2dc] sm:$0xf]
        %v661 = vld [vmem:[%s398 + $0x2e0] sm:$0xf]
        %v662 = vld [vmem:[%s398 + $0x2e4] sm:$0xf]
        %v663 = vld [vmem:[%s398 + $0x2e8] sm:$0xf]
        %v664 = vld [vmem:[%s398 + $0x2ec] sm:$0xf]
        %v665 = vld [vmem:[%s398 + $0x2f0] sm:$0xf]
        %v666 = vld [vmem:[%s398 + $0x2f4] sm:$0xf]
        %v667 = vld [vmem:[%s398 + $0x2f8] sm:$0xf]
        %v668 = vld [vmem:[%s398 + $0x2fc] sm:$0xf]
        %v669 = vld [vmem:[%s398 + $0x300] sm:$0xf]
        %v670 = vld [vmem:[%s398 + $0x304] sm:$0xf]
        %v671 = vld [vmem:[%s398 + $0x308] sm:$0xf]
        %v672 = vld [vmem:[%s398 + $0x30c] sm:$0xf]
        %v673 = vld [vmem:[%s398 + $0x310] sm:$0xf]
        %v674 = vld [vmem:[%s398 + $0x314] sm:$0xf]
        %v675 = vld [vmem:[%s398 + $0x318] sm:$0xf]
        %v676 = vld [vmem:[%s398 + $0x31c] sm:$0xf]
        %v677 = vld [vmem:[%s398 + $0x320] sm:$0xf]
        %v678 = vld [vmem:[%s398 + $0x324] sm:$0xf]
        %v679 = vld [vmem:[%s398 + $0x328] sm:$0xf]
        %v680 = vld [vmem:[%s398 + $0x32c] sm:$0xf]
        %v681 = vld [vmem:[%s398 + $0x330] sm:$0xf]
        %v682 = vld [vmem:[%s398 + $0x334] sm:$0xf]
        %v683 = vld [vmem:[%s398 + $0x338] sm:$0xf]
        %v684 = vld [vmem:[%s398 + $0x33c] sm:$0xf]
        %v741 = vunpack.c.l.b16 %v421
        %v742 = vunpack.c.h.b16 %v421
        %v743 = vunpack.c.l.b16 %v422
        %v744 = vunpack.c.h.b16 %v422
        %v745 = vunpack.c.l.b16 %v423
        %v746 = vunpack.c.h.b16 %v423
        %v747 = vunpack.c.l.b16 %v424
        %v748 = vunpack.c.h.b16 %v424
        %v749 = vunpack.c.l.b16 %v425
        %v750 = vunpack.c.h.b16 %v425
        %v751 = vunpack.c.l.b16 %v426
        %v752 = vunpack.c.h.b16 %v426
        %v753 = vunpack.c.l.b16 %v427
        %v754 = vunpack.c.l.b16 %v428
        %v755 = vunpack.c.h.b16 %v428
        %v756 = vunpack.c.l.b16 %v429
        %v757 = vunpack.c.h.b16 %v429
        %v758 = vunpack.c.l.b16 %v430
        %v759 = vunpack.c.h.b16 %v430
        %v760 = vunpack.c.l.b16 %v431
        %v761 = vunpack.c.h.b16 %v431
        %v762 = vunpack.c.l.b16 %v432
        %v763 = vunpack.c.h.b16 %v432
        %v764 = vunpack.c.l.b16 %v433
        %v765 = vunpack.c.h.b16 %v433
        %v766 = vunpack.c.l.b16 %v434
        %v767 = vunpack.c.l.b16 %v435
        %v768 = vunpack.c.h.b16 %v435
        %v769 = vunpack.c.l.b16 %v436
        %v770 = vunpack.c.h.b16 %v436
        %v771 = vunpack.c.l.b16 %v437
        %v772 = vunpack.c.h.b16 %v437
        %v773 = vunpack.c.l.b16 %v438
        %v774 = vunpack.c.h.b16 %v438
        %v775 = vunpack.c.l.b16 %v439
        %v776 = vunpack.c.h.b16 %v439
        %v777 = vunpack.c.l.b16 %v440
        %v778 = vunpack.c.h.b16 %v440
        %v779 = vunpack.c.l.b16 %v441
        %v780 = vunpack.c.l.b16 %v442
        %v781 = vunpack.c.h.b16 %v442
        %v782 = vunpack.c.l.b16 %v443
        %v783 = vunpack.c.h.b16 %v443
        %v784 = vunpack.c.l.b16 %v444
        %v785 = vunpack.c.h.b16 %v444
        %v786 = vunpack.c.l.b16 %v445
        %v787 = vunpack.c.h.b16 %v445
        %v788 = vunpack.c.l.b16 %v446
        %v789 = vunpack.c.h.b16 %v446
        %v790 = vunpack.c.l.b16 %v447
        %v791 = vunpack.c.h.b16 %v447
        %v792 = vunpack.c.l.b16 %v448
        %v793 = vunpack.c.l.b16 %v449
        %v794 = vunpack.c.h.b16 %v449
        %v795 = vunpack.c.l.b16 %v450
        %v796 = vunpack.c.h.b16 %v450
        %v797 = vunpack.c.l.b16 %v451
        %v798 = vunpack.c.h.b16 %v451
        %v799 = vunpack.c.l.b16 %v452
        %v800 = vunpack.c.h.b16 %v452
        %v801 = vunpack.c.l.b16 %v453
        %v802 = vunpack.c.h.b16 %v453
        %v803 = vunpack.c.l.b16 %v454
        %v804 = vunpack.c.h.b16 %v454
        %v805 = vunpack.c.l.b16 %v455
        %v806 = vunpack.c.l.b16 %v456
        %v807 = vunpack.c.h.b16 %v456
        %v808 = vunpack.c.l.b16 %v457
        %v809 = vunpack.c.h.b16 %v457
        %v810 = vunpack.c.l.b16 %v458
        %v811 = vunpack.c.h.b16 %v458
        %v812 = vunpack.c.l.b16 %v459
        %v813 = vunpack.c.h.b16 %v459
        %v814 = vunpack.c.l.b16 %v460
        %v815 = vunpack.c.h.b16 %v460
        %v816 = vunpack.c.l.b16 %v461
        %v817 = vunpack.c.h.b16 %v461
        %v818 = vunpack.c.l.b16 %v462
        %v819 = vunpack.c.l.b16 %v463
        %v820 = vunpack.c.h.b16 %v463
        %v821 = vunpack.c.l.b16 %v464
        %v822 = vunpack.c.h.b16 %v464
        %v823 = vunpack.c.l.b16 %v465
        %v824 = vunpack.c.h.b16 %v465
        %v825 = vunpack.c.l.b16 %v466
        %v826 = vunpack.c.h.b16 %v466
        %v827 = vunpack.c.l.b16 %v467
        %v828 = vunpack.c.h.b16 %v467
        %v829 = vunpack.c.l.b16 %v468
        %v830 = vunpack.c.h.b16 %v468
        %v831 = vunpack.c.l.b16 %v469
        %v832 = vunpack.c.l.b16 %v470
        %v833 = vunpack.c.h.b16 %v470
        %v834 = vunpack.c.l.b16 %v471
        %v835 = vunpack.c.h.b16 %v471
        %v836 = vunpack.c.l.b16 %v472
        %v837 = vunpack.c.h.b16 %v472
        %v838 = vunpack.c.l.b16 %v473
        %v839 = vunpack.c.h.b16 %v473
        %v840 = vunpack.c.l.b16 %v474
        %v841 = vunpack.c.h.b16 %v474
        %v842 = vunpack.c.l.b16 %v475
        %v843 = vunpack.c.h.b16 %v475
        %v844 = vunpack.c.l.b16 %v476
        %v845 = vpack.c.b16 %v754, %v741
        %v846 = vpack.c.b16 %v755, %v742
        %v847 = vpack.c.b16 %v756, %v743
        %v848 = vpack.c.b16 %v757, %v744
        %v849 = vpack.c.b16 %v758, %v745
        %v850 = vpack.c.b16 %v759, %v746
        %v851 = vpack.c.b16 %v760, %v747
        %v852 = vpack.c.b16 %v761, %v748
        %v853 = vpack.c.b16 %v762, %v749
        %v854 = vpack.c.b16 %v763, %v750
        %v855 = vpack.c.b16 %v764, %v751
        %v856 = vpack.c.b16 %v765, %v752
        %v857 = vpack.c.b16 %v766, %v753
        %v858 = vpack.c.b16 %v780, %v767
        %v859 = vpack.c.b16 %v781, %v768
        %v860 = vpack.c.b16 %v782, %v769
        %v861 = vpack.c.b16 %v783, %v770
        %v862 = vpack.c.b16 %v784, %v771
        %v863 = vpack.c.b16 %v785, %v772
        %v864 = vpack.c.b16 %v786, %v773
        %v865 = vpack.c.b16 %v787, %v774
        %v866 = vpack.c.b16 %v788, %v775
        %v867 = vpack.c.b16 %v789, %v776
        %v868 = vpack.c.b16 %v790, %v777
        %v869 = vpack.c.b16 %v791, %v778
        %v870 = vpack.c.b16 %v792, %v779
        %v871 = vpack.c.b16 %v806, %v793
        %v872 = vpack.c.b16 %v807, %v794
        %v873 = vpack.c.b16 %v808, %v795
        %v874 = vpack.c.b16 %v809, %v796
        %v875 = vpack.c.b16 %v810, %v797
        %v876 = vpack.c.b16 %v811, %v798
        %v877 = vpack.c.b16 %v812, %v799
        %v878 = vpack.c.b16 %v813, %v800
        %v879 = vpack.c.b16 %v814, %v801
        %v880 = vpack.c.b16 %v815, %v802
        %v881 = vpack.c.b16 %v816, %v803
        %v882 = vpack.c.b16 %v817, %v804
        %v883 = vpack.c.b16 %v818, %v805
        %v884 = vpack.c.b16 %v832, %v819
        %v885 = vpack.c.b16 %v833, %v820
        %v886 = vpack.c.b16 %v834, %v821
        %v887 = vpack.c.b16 %v835, %v822
        %v888 = vpack.c.b16 %v836, %v823
        %v889 = vpack.c.b16 %v837, %v824
        %v890 = vpack.c.b16 %v838, %v825
        %v891 = vpack.c.b16 %v839, %v826
        %v892 = vpack.c.b16 %v840, %v827
        %v893 = vpack.c.b16 %v841, %v828
        %v894 = vpack.c.b16 %v842, %v829
        %v895 = vpack.c.b16 %v843, %v830
        %v896 = vpack.c.b16 %v844, %v831
        %v1157 = vunpack.c.l.b16 %v477
        %v1158 = vunpack.c.l.b16 %v478
        %v1159 = vunpack.c.l.b16 %v479
        %v1160 = vunpack.c.l.b16 %v480
        %v1161 = vunpack.c.l.b16 %v481
        %v1162 = vunpack.c.l.b16 %v482
        %v1163 = vunpack.c.l.b16 %v483
        %v1164 = vunpack.c.l.b16 %v484
        %v1165 = vunpack.c.l.b16 %v485
        %v1166 = vunpack.c.l.b16 %v486
        %v1167 = vunpack.c.l.b16 %v487
        %v1168 = vunpack.c.l.b16 %v488
        %v1169 = vunpack.c.l.b16 %v489
        %v1170 = vunpack.c.l.b16 %v490
        %v1171 = vunpack.c.l.b16 %v491
        %v1172 = vunpack.c.l.b16 %v492
        %v1173 = vunpack.c.l.b16 %v493
        %v1174 = vunpack.c.l.b16 %v494
        %v1175 = vunpack.c.l.b16 %v495
        %v1176 = vunpack.c.l.b16 %v496
        %v1177 = vunpack.c.l.b16 %v497
        %v1178 = vunpack.c.l.b16 %v498
        %v1179 = vunpack.c.l.b16 %v499
        %v1180 = vunpack.c.l.b16 %v500
        %v1181 = vunpack.c.l.b16 %v501
        %v1182 = vunpack.c.l.b16 %v502
        %v1183 = vunpack.c.l.b16 %v503
        %v1184 = vunpack.c.l.b16 %v504
        %v1185 = vunpack.c.l.b16 %v505
        %v1186 = vunpack.c.l.b16 %v506
        %v1187 = vunpack.c.l.b16 %v507
        %v1188 = vunpack.c.l.b16 %v508
        %v1189 = vunpack.c.l.b16 %v509
        %v1190 = vunpack.c.l.b16 %v510
        %v1191 = vunpack.c.l.b16 %v511
        %v1192 = vunpack.c.l.b16 %v512
        %v1193 = vunpack.c.l.b16 %v513
        %v1194 = vunpack.c.l.b16 %v514
        %v1195 = vunpack.c.l.b16 %v515
        %v1196 = vunpack.c.l.b16 %v516
        %v1197 = vunpack.c.l.b16 %v517
        %v1198 = vunpack.c.l.b16 %v518
        %v1199 = vunpack.c.l.b16 %v519
        %v1200 = vunpack.c.l.b16 %v520
        %v1201 = vunpack.c.l.b16 %v521
        %v1202 = vunpack.c.l.b16 %v522
        %v1203 = vunpack.c.l.b16 %v523
        %v1204 = vunpack.c.l.b16 %v524
        %v1205 = vunpack.c.l.b16 %v525
        %v1206 = vunpack.c.l.b16 %v526
        %v1207 = vunpack.c.l.b16 %v527
        %v1208 = vunpack.c.l.b16 %v528
        %v1209 = vunpack.c.l.b16 %v529
        %v1210 = vunpack.c.l.b16 %v530
        %v1211 = vunpack.c.l.b16 %v531
        %v1212 = vunpack.c.l.b16 %v532
        %v1213 = vunpack.c.l.b16 %v533
        %v1214 = vunpack.c.l.b16 %v534
        %v1215 = vunpack.c.l.b16 %v535
        %v1216 = vunpack.c.l.b16 %v536
        %v1217 = vunpack.c.l.b16 %v537
        %v1218 = vunpack.c.l.b16 %v538
        %v1219 = vunpack.c.l.b16 %v539
        %v1220 = vunpack.c.l.b16 %v540
        %v1221 = vunpack.c.l.b16 %v541
        %v1222 = vunpack.c.l.b16 %v542
        %v1223 = vunpack.c.l.b16 %v543
        %v1224 = vunpack.c.l.b16 %v544
        %v1225 = vunpack.c.l.b16 %v545
        %v1226 = vunpack.c.l.b16 %v546
        %v1227 = vunpack.c.l.b16 %v547
        %v1228 = vunpack.c.l.b16 %v548
        %v1229 = vunpack.c.l.b16 %v549
        %v1230 = vunpack.c.l.b16 %v550
        %v1231 = vunpack.c.l.b16 %v551
        %v1232 = vunpack.c.l.b16 %v552
        %v1233 = vunpack.c.l.b16 %v553
        %v1234 = vunpack.c.l.b16 %v554
        %v1235 = vunpack.c.l.b16 %v555
        %v1236 = vunpack.c.l.b16 %v556
        %v1237 = vunpack.c.l.b16 %v557
        %v1238 = vunpack.c.l.b16 %v558
        %v1239 = vunpack.c.l.b16 %v559
        %v1240 = vunpack.c.l.b16 %v560
        %v1241 = vunpack.c.l.b16 %v561
        %v1242 = vunpack.c.l.b16 %v562
        %v1243 = vunpack.c.l.b16 %v563
        %v1244 = vunpack.c.l.b16 %v564
        %v1245 = vunpack.c.l.b16 %v565
        %v1246 = vunpack.c.l.b16 %v566
        %v1247 = vunpack.c.l.b16 %v567
        %v1248 = vunpack.c.l.b16 %v568
        %v1249 = vunpack.c.l.b16 %v569
        %v1250 = vunpack.c.l.b16 %v570
        %v1251 = vunpack.c.l.b16 %v571
        %v1252 = vunpack.c.l.b16 %v572
        %v1253 = vunpack.c.l.b16 %v573
        %v1254 = vunpack.c.l.b16 %v574
        %v1255 = vunpack.c.l.b16 %v575
        %v1256 = vunpack.c.l.b16 %v576
        %v1257 = vunpack.c.l.b16 %v577
        %v1258 = vunpack.c.l.b16 %v578
        %v1259 = vunpack.c.l.b16 %v579
        %v1260 = vunpack.c.l.b16 %v580
        %v1261 = vunpack.c.l.b16 %v581
        %v1262 = vunpack.c.l.b16 %v582
        %v1263 = vunpack.c.l.b16 %v583
        %v1264 = vunpack.c.l.b16 %v584
        %v1265 = vunpack.c.l.b16 %v585
        %v1266 = vunpack.c.l.b16 %v586
        %v1267 = vunpack.c.l.b16 %v587
        %v1268 = vunpack.c.l.b16 %v588
        %v1269 = vunpack.c.l.b16 %v589
        %v1270 = vunpack.c.l.b16 %v590
        %v1271 = vunpack.c.l.b16 %v591
        %v1272 = vunpack.c.l.b16 %v592
        %v1273 = vunpack.c.l.b16 %v593
        %v1274 = vunpack.c.l.b16 %v594
        %v1275 = vunpack.c.l.b16 %v595
        %v1276 = vunpack.c.l.b16 %v596
        %v1277 = vunpack.c.l.b16 %v597
        %v1278 = vunpack.c.l.b16 %v598
        %v1279 = vunpack.c.l.b16 %v599
        %v1280 = vunpack.c.l.b16 %v600
        %v1281 = vunpack.c.l.b16 %v601
        %v1282 = vunpack.c.l.b16 %v602
        %v1283 = vunpack.c.l.b16 %v603
        %v1284 = vunpack.c.l.b16 %v604
        %v1285 = vunpack.c.l.b16 %v605
        %v1286 = vunpack.c.l.b16 %v606
        %v1287 = vunpack.c.l.b16 %v607
        %v1288 = vunpack.c.l.b16 %v608
        %v1289 = vunpack.c.l.b16 %v609
        %v1290 = vunpack.c.l.b16 %v610
        %v1291 = vunpack.c.l.b16 %v611
        %v1292 = vunpack.c.l.b16 %v612
        %v1293 = vunpack.c.l.b16 %v613
        %v1294 = vunpack.c.l.b16 %v614
        %v1295 = vunpack.c.l.b16 %v615
        %v1296 = vunpack.c.l.b16 %v616
        %v1297 = vunpack.c.l.b16 %v617
        %v1298 = vunpack.c.l.b16 %v618
        %v1299 = vunpack.c.l.b16 %v619
        %v1300 = vunpack.c.l.b16 %v620
        %v1301 = vunpack.c.l.b16 %v621
        %v1302 = vunpack.c.l.b16 %v622
        %v1303 = vunpack.c.l.b16 %v623
        %v1304 = vunpack.c.l.b16 %v624
        %v1305 = vunpack.c.l.b16 %v625
        %v1306 = vunpack.c.l.b16 %v626
        %v1307 = vunpack.c.l.b16 %v627
        %v1308 = vunpack.c.l.b16 %v628
        %v1309 = vunpack.c.l.b16 %v629
        %v1310 = vunpack.c.l.b16 %v630
        %v1311 = vunpack.c.l.b16 %v631
        %v1312 = vunpack.c.l.b16 %v632
        %v1313 = vunpack.c.l.b16 %v633
        %v1314 = vunpack.c.l.b16 %v634
        %v1315 = vunpack.c.l.b16 %v635
        %v1316 = vunpack.c.l.b16 %v636
        %v1317 = vunpack.c.l.b16 %v637
        %v1318 = vunpack.c.l.b16 %v638
        %v1319 = vunpack.c.l.b16 %v639
        %v1320 = vunpack.c.l.b16 %v640
        %v1321 = vunpack.c.l.b16 %v641
        %v1322 = vunpack.c.l.b16 %v642
        %v1323 = vunpack.c.l.b16 %v643
        %v1324 = vunpack.c.l.b16 %v644
        %v1325 = vunpack.c.l.b16 %v645
        %v1326 = vunpack.c.l.b16 %v646
        %v1327 = vunpack.c.l.b16 %v647
        %v1328 = vunpack.c.l.b16 %v648
        %v1329 = vunpack.c.l.b16 %v649
        %v1330 = vunpack.c.l.b16 %v650
        %v1331 = vunpack.c.l.b16 %v651
        %v1332 = vunpack.c.l.b16 %v652
        %v1333 = vunpack.c.l.b16 %v653
        %v1334 = vunpack.c.l.b16 %v654
        %v1335 = vunpack.c.l.b16 %v655
        %v1336 = vunpack.c.l.b16 %v656
        %v1337 = vunpack.c.l.b16 %v657
        %v1338 = vunpack.c.l.b16 %v658
        %v1339 = vunpack.c.l.b16 %v659
        %v1340 = vunpack.c.l.b16 %v660
        %v1341 = vunpack.c.l.b16 %v661
        %v1342 = vunpack.c.l.b16 %v662
        %v1343 = vunpack.c.l.b16 %v663
        %v1344 = vunpack.c.l.b16 %v664
        %v1345 = vunpack.c.l.b16 %v665
        %v1346 = vunpack.c.l.b16 %v666
        %v1347 = vunpack.c.l.b16 %v667
        %v1348 = vunpack.c.l.b16 %v668
        %v1349 = vunpack.c.l.b16 %v669
        %v1350 = vunpack.c.l.b16 %v670
        %v1351 = vunpack.c.l.b16 %v671
        %v1352 = vunpack.c.l.b16 %v672
        %v1353 = vunpack.c.l.b16 %v673
        %v1354 = vunpack.c.l.b16 %v674
        %v1355 = vunpack.c.l.b16 %v675
        %v1356 = vunpack.c.l.b16 %v676
        %v1357 = vunpack.c.l.b16 %v677
        %v1358 = vunpack.c.l.b16 %v678
        %v1359 = vunpack.c.l.b16 %v679
        %v1360 = vunpack.c.l.b16 %v680
        %v1361 = vunpack.c.l.b16 %v681
        %v1362 = vunpack.c.l.b16 %v682
        %v1363 = vunpack.c.l.b16 %v683
        %v1364 = vunpack.c.l.b16 %v684
        %v1365 = vpack.c.b16 %v1158, %v1157
        %v1366 = vpack.c.b16 %v1160, %v1159
        %v1367 = vpack.c.b16 %v1162, %v1161
        %v1368 = vpack.c.b16 %v1164, %v1163
        %v1369 = vpack.c.b16 %v1166, %v1165
        %v1370 = vpack.c.b16 %v1168, %v1167
        %v1371 = vpack.c.b16 %v1170, %v1169
        %v1372 = vpack.c.b16 %v1172, %v1171
        %v1373 = vpack.c.b16 %v1174, %v1173
        %v1374 = vpack.c.b16 %v1176, %v1175
        %v1375 = vpack.c.b16 %v1178, %v1177
        %v1376 = vpack.c.b16 %v1180, %v1179
        %v1377 = vpack.c.b16 %v1182, %v1181
        %v1378 = vpack.c.b16 %v1184, %v1183
        %v1379 = vpack.c.b16 %v1186, %v1185
        %v1380 = vpack.c.b16 %v1188, %v1187
        %v1381 = vpack.c.b16 %v1190, %v1189
        %v1382 = vpack.c.b16 %v1192, %v1191
        %v1383 = vpack.c.b16 %v1194, %v1193
        %v1384 = vpack.c.b16 %v1196, %v1195
        %v1385 = vpack.c.b16 %v1198, %v1197
        %v1386 = vpack.c.b16 %v1200, %v1199
        %v1387 = vpack.c.b16 %v1202, %v1201
        %v1388 = vpack.c.b16 %v1204, %v1203
        %v1389 = vpack.c.b16 %v1206, %v1205
        %v1390 = vpack.c.b16 %v1208, %v1207
        %v1391 = vpack.c.b16 %v1210, %v1209
        %v1392 = vpack.c.b16 %v1212, %v1211
        %v1393 = vpack.c.b16 %v1214, %v1213
        %v1394 = vpack.c.b16 %v1216, %v1215
        %v1395 = vpack.c.b16 %v1218, %v1217
        %v1396 = vpack.c.b16 %v1220, %v1219
        %v1397 = vpack.c.b16 %v1222, %v1221
        %v1398 = vpack.c.b16 %v1224, %v1223
        %v1399 = vpack.c.b16 %v1226, %v1225
        %v1400 = vpack.c.b16 %v1228, %v1227
        %v1401 = vpack.c.b16 %v1230, %v1229
        %v1402 = vpack.c.b16 %v1232, %v1231
        %v1403 = vpack.c.b16 %v1234, %v1233
        %v1404 = vpack.c.b16 %v1236, %v1235
        %v1405 = vpack.c.b16 %v1238, %v1237
        %v1406 = vpack.c.b16 %v1240, %v1239
        %v1407 = vpack.c.b16 %v1242, %v1241
        %v1408 = vpack.c.b16 %v1244, %v1243
        %v1409 = vpack.c.b16 %v1246, %v1245
        %v1410 = vpack.c.b16 %v1248, %v1247
        %v1411 = vpack.c.b16 %v1250, %v1249
        %v1412 = vpack.c.b16 %v1252, %v1251
        %v1413 = vpack.c.b16 %v1254, %v1253
        %v1414 = vpack.c.b16 %v1256, %v1255
        %v1415 = vpack.c.b16 %v1258, %v1257
        %v1416 = vpack.c.b16 %v1260, %v1259
        %v1417 = vpack.c.b16 %v1262, %v1261
        %v1418 = vpack.c.b16 %v1264, %v1263
        %v1419 = vpack.c.b16 %v1266, %v1265
        %v1420 = vpack.c.b16 %v1268, %v1267
        %v1421 = vpack.c.b16 %v1270, %v1269
        %v1422 = vpack.c.b16 %v1272, %v1271
        %v1423 = vpack.c.b16 %v1274, %v1273
        %v1424 = vpack.c.b16 %v1276, %v1275
        %v1425 = vpack.c.b16 %v1278, %v1277
        %v1426 = vpack.c.b16 %v1280, %v1279
        %v1427 = vpack.c.b16 %v1282, %v1281
        %v1428 = vpack.c.b16 %v1284, %v1283
        %v1429 = vpack.c.b16 %v1286, %v1285
        %v1430 = vpack.c.b16 %v1288, %v1287
        %v1431 = vpack.c.b16 %v1290, %v1289
        %v1432 = vpack.c.b16 %v1292, %v1291
        %v1433 = vpack.c.b16 %v1294, %v1293
        %v1434 = vpack.c.b16 %v1296, %v1295
        %v1435 = vpack.c.b16 %v1298, %v1297
        %v1436 = vpack.c.b16 %v1300, %v1299
        %v1437 = vpack.c.b16 %v1302, %v1301
        %v1438 = vpack.c.b16 %v1304, %v1303
        %v1439 = vpack.c.b16 %v1306, %v1305
        %v1440 = vpack.c.b16 %v1308, %v1307
        %v1441 = vpack.c.b16 %v1310, %v1309
        %v1442 = vpack.c.b16 %v1312, %v1311
        %v1443 = vpack.c.b16 %v1314, %v1313
        %v1444 = vpack.c.b16 %v1316, %v1315
        %v1445 = vpack.c.b16 %v1318, %v1317
        %v1446 = vpack.c.b16 %v1320, %v1319
        %v1447 = vpack.c.b16 %v1322, %v1321
        %v1448 = vpack.c.b16 %v1324, %v1323
        %v1449 = vpack.c.b16 %v1326, %v1325
        %v1450 = vpack.c.b16 %v1328, %v1327
        %v1451 = vpack.c.b16 %v1330, %v1329
        %v1452 = vpack.c.b16 %v1332, %v1331
        %v1453 = vpack.c.b16 %v1334, %v1333
        %v1454 = vpack.c.b16 %v1336, %v1335
        %v1455 = vpack.c.b16 %v1338, %v1337
        %v1456 = vpack.c.b16 %v1340, %v1339
        %v1457 = vpack.c.b16 %v1342, %v1341
        %v1458 = vpack.c.b16 %v1344, %v1343
        %v1459 = vpack.c.b16 %v1346, %v1345
        %v1460 = vpack.c.b16 %v1348, %v1347
        %v1461 = vpack.c.b16 %v1350, %v1349
        %v1462 = vpack.c.b16 %v1352, %v1351
        %v1463 = vpack.c.b16 %v1354, %v1353
        %v1464 = vpack.c.b16 %v1356, %v1355
        %v1465 = vpack.c.b16 %v1358, %v1357
        %v1466 = vpack.c.b16 %v1360, %v1359
        %v1467 = vpack.c.b16 %v1362, %v1361
        %v1468 = vpack.c.b16 %v1364, %v1363
        %1573 = vmatprep.subr.bf16.mxu0 0
        %1574 = vmatpush1.bf16.msra.mxu0 %v1365
        %1575 = vmatprep.subr.bf16.mxu0 0
        %1576 = vmatpush1.bf16.msra.mxu0 %v1366
        %1577 = vmatprep.subr.bf16.mxu0 0
        %1578 = vmatpush1.bf16.msra.mxu0 %v1367
        %1579 = vmatprep.subr.bf16.mxu0 0
        %1580 = vmatpush1.bf16.msra.mxu0 %v1368
        %1581 = vmatprep.subr.bf16.mxu0 0
        %1582 = vmatpush1.bf16.msra.mxu0 %v1369
        %1583 = vmatprep.subr.bf16.mxu0 0
        %1584 = vmatpush1.bf16.msra.mxu0 %v1370
        %1585 = vmatprep.subr.bf16.mxu0 0
        %1586 = vmatpush1.bf16.msra.mxu0 %v1371
        %1587 = vmatprep.subr.bf16.mxu0 0
        %1588 = vmatpush1.bf16.msra.mxu0 %v1372
        %1589 = vmatprep.subr.bf16.mxu0 0
        %1590 = vmatpush1.bf16.msra.mxu0 %v1373
        %1591 = vmatprep.subr.bf16.mxu0 0
        %1592 = vmatpush1.bf16.msra.mxu0 %v1374
        %1593 = vmatprep.subr.bf16.mxu0 0
        %1594 = vmatpush1.bf16.msra.mxu0 %v1375
        %1595 = vmatprep.subr.bf16.mxu0 0
        %1596 = vmatpush1.bf16.msra.mxu0 %v1376
        %1597 = vmatprep.subr.bf16.mxu0 0
        %1598 = vmatpush1.bf16.msra.mxu0 %v1377
        %1599 = vmatprep.subr.bf16.mxu0 0
        %1600 = vmatpush1.bf16.msra.mxu0 %v1378
        %1601 = vmatprep.subr.bf16.mxu0 0
        %1602 = vmatpush1.bf16.msra.mxu0 %v1379
        %1603 = vmatprep.subr.bf16.mxu0 0
        %1604 = vmatpush1.bf16.msra.mxu0 %v1380
        %1605 = vmatprep.mubr.bf16.mxu0 %v846
        %1606 = vmatmul.mubr.bf16.gmra.mrb[0].mxu0 %v845
        %v1607 = vpop.f32.mrb[0].mxu0
        %v1608 = vadd.f32 0.0, %v1607
        %v1609 = vpop.f32.mrb[0].mxu0
        %v1610 = vpop.f32.mrb[0].mxu0
        %v1611 = vadd.f32 0.0, %v1610
        %v1612 = vpop.f32.mrb[0].mxu0
        %1613 = vmatprep.mubr.bf16.mxu0 %v859
        %1614 = vmatmul.mubr.bf16.gmra.mrb[0].mxu0 %v858
        %v1615 = vpop.f32.mrb[0].mxu0
        %v1616 = vadd.f32 0.0, %v1615
        %v1617 = vpop.f32.mrb[0].mxu0
        %v1618 = vpop.f32.mrb[0].mxu0
        %v1619 = vadd.f32 0.0, %v1618
        %v1620 = vpop.f32.mrb[0].mxu0
        %1621 = vmatprep.mubr.bf16.mxu0 %v872
        %1622 = vmatmul.mubr.bf16.gmra.mrb[0].mxu0 %v871
        %v1623 = vpop.f32.mrb[0].mxu0
        %v1624 = vadd.f32 0.0, %v1623
        %v1625 = vpop.f32.mrb[0].mxu0
        %v1626 = vpop.f32.mrb[0].mxu0
        %v1627 = vadd.f32 0.0, %v1626
        %v1628 = vpop.f32.mrb[0].mxu0
        %1629 = vmatprep.mubr.bf16.mxu0 %v885
        %1630 = vmatmul.mubr.bf16.gmra.mrb[0].mxu0 %v884
        %v1631 = vpop.f32.mrb[0].mxu0
        %v1632 = vadd.f32 0.0, %v1631
        %v1633 = vpop.f32.mrb[0].mxu0
        %v1634 = vpop.f32.mrb[0].mxu0
        %v1635 = vadd.f32 0.0, %v1634
        %v1636 = vpop.f32.mrb[0].mxu0
        %1637 = vdwg.mxu0
        %1638 = vmatprep.subr.bf16.mxu0 0
        %1639 = vmatpush1.bf16.msra.mxu0 %v1381
        %1640 = vmatprep.subr.bf16.mxu0 0
        %1641 = vmatpush1.bf16.msra.mxu0 %v1382
        %1642 = vmatprep.subr.bf16.mxu0 0
        %1643 = vmatpush1.bf16.msra.mxu0 %v1383
        %1644 = vmatprep.subr.bf16.mxu0 0
        %1645 = vmatpush1.bf16.msra.mxu0 %v1384
        %1646 = vmatprep.subr.bf16.mxu0 0
        %1647 = vmatpush1.bf16.msra.mxu0 %v1385
        %1648 = vmatprep.subr.bf16.mxu0 0
        %1649 = vmatpush1.bf16.msra.mxu0 %v1386
        %1650 = vmatprep.subr.bf16.mxu0 0
        %1651 = vmatpush1.bf16.msra.mxu0 %v1387
        %1652 = vmatprep.subr.bf16.mxu0 0
        %1653 = vmatpush1.bf16.msra.mxu0 %v1388
        %1654 = vmatprep.subr.bf16.mxu0 0
        %1655 = vmatpush1.bf16.msra.mxu0 %v1389
        %1656 = vmatprep.subr.bf16.mxu0 0
        %1657 = vmatpush1.bf16.msra.mxu0 %v1390
        %1658 = vmatprep.subr.bf16.mxu0 0
        %1659 = vmatpush1.bf16.msra.mxu0 %v1391
        %1660 = vmatprep.subr.bf16.mxu0 0
        %1661 = vmatpush1.bf16.msra.mxu0 %v1392
        %1662 = vmatprep.subr.bf16.mxu0 0
        %1663 = vmatpush1.bf16.msra.mxu0 %v1393
        %1664 = vmatprep.subr.bf16.mxu0 0
        %1665 = vmatpush1.bf16.msra.mxu0 %v1394
        %1666 = vmatprep.subr.bf16.mxu0 0
        %1667 = vmatpush1.bf16.msra.mxu0 %v1395
        %1668 = vmatprep.subr.bf16.mxu0 0
        %1669 = vmatpush1.bf16.msra.mxu0 %v1396
        %1670 = vmatprep.mubr.bf16.mxu0 %v848
        %1671 = vmatmul.mubr.bf16.gmra.mrb[0].mxu0 %v847
        %v1672 = vpop.f32.mrb[0].mxu0
        %v1673 = vadd.f32 %v1608, %v1672
        %v1674 = vpop.f32.mrb[0].mxu0
        %v1675 = vpop.f32.mrb[0].mxu0
        %v1676 = vadd.f32 %v1611, %v1675
        %v1677 = vpop.f32.mrb[0].mxu0
        %1678 = vmatprep.mubr.bf16.mxu0 %v861
        %1679 = vmatmul.mubr.bf16.gmra.mrb[0].mxu0 %v860
        %v1680 = vpop.f32.mrb[0].mxu0
        %v1681 = vadd.f32 %v1616, %v1680
        %v1682 = vpop.f32.mrb[0].mxu0
        %v1683 = vpop.f32.mrb[0].mxu0
        %v1684 = vadd.f32 %v1619, %v1683
        %v1685 = vpop.f32.mrb[0].mxu0
        %1686 = vmatprep.mubr.bf16.mxu0 %v874
        %1687 = vmatmul.mubr.bf16.gmra.mrb[0].mxu0 %v873
        %v1688 = vpop.f32.mrb[0].mxu0
        %v1689 = vadd.f32 %v1624, %v1688
        %v1690 = vpop.f32.mrb[0].mxu0
        %v1691 = vpop.f32.mrb[0].mxu0
        %v1692 = vadd.f32 %v1627, %v1691
        %v1693 = vpop.f32.mrb[0].mxu0
        %1694 = vmatprep.mubr.bf16.mxu0 %v887
        %1695 = vmatmul.mubr.bf16.gmra.mrb[0].mxu0 %v886
        %v1696 = vpop.f32.mrb[0].mxu0
        %v1697 = vadd.f32 %v1632, %v1696
        %v1698 = vpop.f32.mrb[0].mxu0
        %v1699 = vpop.f32.mrb[0].mxu0
        %v1700 = vadd.f32 %v1635, %v1699
        %v1701 = vpop.f32.mrb[0].mxu0
        %1702 = vdwg.mxu0
        %1703 = vmatprep.subr.bf16.mxu0 0
        %1704 = vmatpush1.bf16.msra.mxu0 %v1397
        %1705 = vmatprep.subr.bf16.mxu0 0
        %1706 = vmatpush1.bf16.msra.mxu0 %v1398
        %1707 = vmatprep.subr.bf16.mxu0 0
        %1708 = vmatpush1.bf16.msra.mxu0 %v1399
        %1709 = vmatprep.subr.bf16.mxu0 0
        %1710 = vmatpush1.bf16.msra.mxu0 %v1400
        %1711 = vmatprep.subr.bf16.mxu0 0
        %1712 = vmatpush1.bf16.msra.mxu0 %v1401
        %1713 = vmatprep.subr.bf16.mxu0 0
        %1714 = vmatpush1.bf16.msra.mxu0 %v1402
        %1715 = vmatprep.subr.bf16.mxu0 0
        %1716 = vmatpush1.bf16.msra.mxu0 %v1403
        %1717 = vmatprep.subr.bf16.mxu0 0
        %1718 = vmatpush1.bf16.msra.mxu0 %v1404
        %1719 = vmatprep.subr.bf16.mxu0 0
        %1720 = vmatpush1.bf16.msra.mxu0 %v1405
        %1721 = vmatprep.subr.bf16.mxu0 0
        %1722 = vmatpush1.bf16.msra.mxu0 %v1406
        %1723 = vmatprep.subr.bf16.mxu0 0
        %1724 = vmatpush1.bf16.msra.mxu0 %v1407
        %1725 = vmatprep.subr.bf16.mxu0 0
        %1726 = vmatpush1.bf16.msra.mxu0 %v1408
        %1727 = vmatprep.subr.bf16.mxu0 0
        %1728 = vmatpush1.bf16.msra.mxu0 %v1409
        %1729 = vmatprep.subr.bf16.mxu0 0
        %1730 = vmatpush1.bf16.msra.mxu0 %v1410
        %1731 = vmatprep.subr.bf16.mxu0 0
        %1732 = vmatpush1.bf16.msra.mxu0 %v1411
        %1733 = vmatprep.subr.bf16.mxu0 0
        %1734 = vmatpush1.bf16.msra.mxu0 %v1412
        %1735 = vmatprep.mubr.bf16.mxu0 %v850
        %1736 = vmatmul.mubr.bf16.gmra.mrb[0].mxu0 %v849
        %v1737 = vpop.f32.mrb[0].mxu0
        %v1738 = vadd.f32 %v1673, %v1737
        %v1739 = vpop.f32.mrb[0].mxu0
        %v1740 = vpop.f32.mrb[0].mxu0
        %v1741 = vadd.f32 %v1676, %v1740
        %v1742 = vpop.f32.mrb[0].mxu0
        %1743 = vmatprep.mubr.bf16.mxu0 %v863
        %1744 = vmatmul.mubr.bf16.gmra.mrb[0].mxu0 %v862
        %v1745 = vpop.f32.mrb[0].mxu0
        %v1746 = vadd.f32 %v1681, %v1745
        %v1747 = vpop.f32.mrb[0].mxu0
        %v1748 = vpop.f32.mrb[0].mxu0
        %v1749 = vadd.f32 %v1684, %v1748
        %v1750 = vpop.f32.mrb[0].mxu0
        %1751 = vmatprep.mubr.bf16.mxu0 %v876
        %1752 = vmatmul.mubr.bf16.gmra.mrb[0].mxu0 %v875
        %v1753 = vpop.f32.mrb[0].mxu0
        %v1754 = vadd.f32 %v1689, %v1753
        %v1755 = vpop.f32.mrb[0].mxu0
        %v1756 = vpop.f32.mrb[0].mxu0
        %v1757 = vadd.f32 %v1692, %v1756
        %v1758 = vpop.f32.mrb[0].mxu0
        %1759 = vmatprep.mubr.bf16.mxu0 %v889
        %1760 = vmatmul.mubr.bf16.gmra.mrb[0].mxu0 %v888
        %v1761 = vpop.f32.mrb[0].mxu0
        %v1762 = vadd.f32 %v1697, %v1761
        %v1763 = vpop.f32.mrb[0].mxu0
        %v1764 = vpop.f32.mrb[0].mxu0
        %v1765 = vadd.f32 %v1700, %v1764
        %v1766 = vpop.f32.mrb[0].mxu0
        %1767 = vdwg.mxu0
        %1768 = vmatprep.subr.bf16.mxu0 0
        %1769 = vmatpush1.bf16.msra.mxu0 %v1413
        %1770 = vmatprep.subr.bf16.mxu0 0
        %1771 = vmatpush1.bf16.msra.mxu0 %v1414
        %1772 = vmatprep.subr.bf16.mxu0 0
        %1773 = vmatpush1.bf16.msra.mxu0 %v1415
        %1774 = vmatprep.subr.bf16.mxu0 0
        %1775 = vmatpush1.bf16.msra.mxu0 %v1416
        %1776 = vmatprep.subr.bf16.mxu0 0
        %1777 = vmatpush1.bf16.msra.mxu0 %v1417
        %1778 = vmatprep.subr.bf16.mxu0 0
        %1779 = vmatpush1.bf16.msra.mxu0 %v1418
        %1780 = vmatprep.subr.bf16.mxu0 0
        %1781 = vmatpush1.bf16.msra.mxu0 %v1419
        %1782 = vmatprep.subr.bf16.mxu0 0
        %1783 = vmatpush1.bf16.msra.mxu0 %v1420
        %1784 = vmatprep.subr.bf16.mxu0 0
        %1785 = vmatpush1.bf16.msra.mxu0 %v1421
        %1786 = vmatprep.subr.bf16.mxu0 0
        %1787 = vmatpush1.bf16.msra.mxu0 %v1422
        %1788 = vmatprep.subr.bf16.mxu0 0
        %1789 = vmatpush1.bf16.msra.mxu0 %v1423
        %1790 = vmatprep.subr.bf16.mxu0 0
        %1791 = vmatpush1.bf16.msra.mxu0 %v1424
        %1792 = vmatprep.subr.bf16.mxu0 0
        %1793 = vmatpush1.bf16.msra.mxu0 %v1425
        %1794 = vmatprep.subr.bf16.mxu0 0
        %1795 = vmatpush1.bf16.msra.mxu0 %v1426
        %1796 = vmatprep.subr.bf16.mxu0 0
        %1797 = vmatpush1.bf16.msra.mxu0 %v1427
        %1798 = vmatprep.subr.bf16.mxu0 0
        %1799 = vmatpush1.bf16.msra.mxu0 %v1428
        %1800 = vmatprep.mubr.bf16.mxu0 %v852
        %1801 = vmatmul.mubr.bf16.gmra.mrb[0].mxu0 %v851
        %v1802 = vpop.f32.mrb[0].mxu0
        %v1803 = vadd.f32 %v1738, %v1802
        %v1804 = vpop.f32.mrb[0].mxu0
        %v1805 = vpop.f32.mrb[0].mxu0
        %v1806 = vadd.f32 %v1741, %v1805
        %v1807 = vpop.f32.mrb[0].mxu0
        %1808 = vmatprep.mubr.bf16.mxu0 %v865
        %1809 = vmatmul.mubr.bf16.gmra.mrb[0].mxu0 %v864
        %v1810 = vpop.f32.mrb[0].mxu0
        %v1811 = vadd.f32 %v1746, %v1810
        %v1812 = vpop.f32.mrb[0].mxu0
        %v1813 = vpop.f32.mrb[0].mxu0
        %v1814 = vadd.f32 %v1749, %v1813
        %v1815 = vpop.f32.mrb[0].mxu0
        %1816 = vmatprep.mubr.bf16.mxu0 %v878
        %1817 = vmatmul.mubr.bf16.gmra.mrb[0].mxu0 %v877
        %v1818 = vpop.f32.mrb[0].mxu0
        %v1819 = vadd.f32 %v1754, %v1818
        %v1820 = vpop.f32.mrb[0].mxu0
        %v1821 = vpop.f32.mrb[0].mxu0
        %v1822 = vadd.f32 %v1757, %v1821
        %v1823 = vpop.f32.mrb[0].mxu0
        %1824 = vmatprep.mubr.bf16.mxu0 %v891
        %1825 = vmatmul.mubr.bf16.gmra.mrb[0].mxu0 %v890
        %v1826 = vpop.f32.mrb[0].mxu0
        %v1827 = vadd.f32 %v1762, %v1826
        %v1828 = vpop.f32.mrb[0].mxu0
        %v1829 = vpop.f32.mrb[0].mxu0
        %v1830 = vadd.f32 %v1765, %v1829
        %v1831 = vpop.f32.mrb[0].mxu0
        %1832 = vdwg.mxu0
        %1833 = vmatprep.subr.bf16.mxu0 0
        %1834 = vmatpush1.bf16.msra.mxu0 %v1429
        %1835 = vmatprep.subr.bf16.mxu0 0
        %1836 = vmatpush1.bf16.msra.mxu0 %v1430
        %1837 = vmatprep.subr.bf16.mxu0 0
        %1838 = vmatpush1.bf16.msra.mxu0 %v1431
        %1839 = vmatprep.subr.bf16.mxu0 0
        %1840 = vmatpush1.bf16.msra.mxu0 %v1432
        %1841 = vmatprep.subr.bf16.mxu0 0
        %1842 = vmatpush1.bf16.msra.mxu0 %v1433
        %1843 = vmatprep.subr.bf16.mxu0 0
        %1844 = vmatpush1.bf16.msra.mxu0 %v1434
        %1845 = vmatprep.subr.bf16.mxu0 0
        %1846 = vmatpush1.bf16.msra.mxu0 %v1435
        %1847 = vmatprep.subr.bf16.mxu0 0
        %1848 = vmatpush1.bf16.msra.mxu0 %v1436
        %1849 = vmatprep.subr.bf16.mxu0 0
        %1850 = vmatpush1.bf16.msra.mxu0 %v1437
        %1851 = vmatprep.subr.bf16.mxu0 0
        %1852 = vmatpush1.bf16.msra.mxu0 %v1438
        %1853 = vmatprep.subr.bf16.mxu0 0
        %1854 = vmatpush1.bf16.msra.mxu0 %v1439
        %1855 = vmatprep.subr.bf16.mxu0 0
        %1856 = vmatpush1.bf16.msra.mxu0 %v1440
        %1857 = vmatprep.subr.bf16.mxu0 0
        %1858 = vmatpush1.bf16.msra.mxu0 %v1441
        %1859 = vmatprep.subr.bf16.mxu0 0
        %1860 = vmatpush1.bf16.msra.mxu0 %v1442
        %1861 = vmatprep.subr.bf16.mxu0 0
        %1862 = vmatpush1.bf16.msra.mxu0 %v1443
        %1863 = vmatprep.subr.bf16.mxu0 0
        %1864 = vmatpush1.bf16.msra.mxu0 %v1444
        %1865 = vmatprep.mubr.bf16.mxu0 %v854
        %1866 = vmatmul.mubr.bf16.gmra.mrb[0].mxu0 %v853
        %v1867 = vpop.f32.mrb[0].mxu0
        %v1868 = vadd.f32 %v1803, %v1867
        %v1869 = vpop.f32.mrb[0].mxu0
        %v1870 = vpop.f32.mrb[0].mxu0
        %v1871 = vadd.f32 %v1806, %v1870
        %v1872 = vpop.f32.mrb[0].mxu0
        %1873 = vmatprep.mubr.bf16.mxu0 %v867
        %1874 = vmatmul.mubr.bf16.gmra.mrb[0].mxu0 %v866
        %v1875 = vpop.f32.mrb[0].mxu0
        %v1876 = vadd.f32 %v1811, %v1875
        %v1877 = vpop.f32.mrb[0].mxu0
        %v1878 = vpop.f32.mrb[0].mxu0
        %v1879 = vadd.f32 %v1814, %v1878
        %v1880 = vpop.f32.mrb[0].mxu0
        %1881 = vmatprep.mubr.bf16.mxu0 %v880
        %1882 = vmatmul.mubr.bf16.gmra.mrb[0].mxu0 %v879
        %v1883 = vpop.f32.mrb[0].mxu0
        %v1884 = vadd.f32 %v1819, %v1883
        %v1885 = vpop.f32.mrb[0].mxu0
        %v1886 = vpop.f32.mrb[0].mxu0
        %v1887 = vadd.f32 %v1822, %v1886
        %v1888 = vpop.f32.mrb[0].mxu0
        %1889 = vmatprep.mubr.bf16.mxu0 %v893
        %1890 = vmatmul.mubr.bf16.gmra.mrb[0].mxu0 %v892
        %v1891 = vpop.f32.mrb[0].mxu0
        %v1892 = vadd.f32 %v1827, %v1891
        %v1893 = vpop.f32.mrb[0].mxu0
        %v1894 = vpop.f32.mrb[0].mxu0
        %v1895 = vadd.f32 %v1830, %v1894
        %v1896 = vpop.f32.mrb[0].mxu0
        %1897 = vdwg.mxu0
        %1898 = vmatprep.subr.bf16.mxu0 0
        %1899 = vmatpush1.bf16.msra.mxu0 %v1445
        %1900 = vmatprep.subr.bf16.mxu0 0
        %1901 = vmatpush1.bf16.msra.mxu0 %v1446
        %1902 = vmatprep.subr.bf16.mxu0 0
        %1903 = vmatpush1.bf16.msra.mxu0 %v1447
        %1904 = vmatprep.subr.bf16.mxu0 0
        %1905 = vmatpush1.bf16.msra.mxu0 %v1448
        %1906 = vmatprep.subr.bf16.mxu0 0
        %1907 = vmatpush1.bf16.msra.mxu0 %v1449
        %1908 = vmatprep.subr.bf16.mxu0 0
        %1909 = vmatpush1.bf16.msra.mxu0 %v1450
        %1910 = vmatprep.subr.bf16.mxu0 0
        %1911 = vmatpush1.bf16.msra.mxu0 %v1451
        %1912 = vmatprep.subr.bf16.mxu0 0
        %1913 = vmatpush1.bf16.msra.mxu0 %v1452
        %1914 = vmatprep.subr.bf16.mxu0 0
        %1915 = vmatpush1.bf16.msra.mxu0 %v1453
        %1916 = vmatprep.subr.bf16.mxu0 0
        %1917 = vmatpush1.bf16.msra.mxu0 %v1454
        %1918 = vmatprep.subr.bf16.mxu0 0
        %1919 = vmatpush1.bf16.msra.mxu0 %v1455
        %1920 = vmatprep.subr.bf16.mxu0 0
        %1921 = vmatpush1.bf16.msra.mxu0 %v1456
        %1922 = vmatprep.subr.bf16.mxu0 0
        %1923 = vmatpush1.bf16.msra.mxu0 %v1457
        %1924 = vmatprep.subr.bf16.mxu0 0
        %1925 = vmatpush1.bf16.msra.mxu0 %v1458
        %1926 = vmatprep.subr.bf16.mxu0 0
        %1927 = vmatpush1.bf16.msra.mxu0 %v1459
        %1928 = vmatprep.subr.bf16.mxu0 0
        %1929 = vmatpush1.bf16.msra.mxu0 %v1460
        %1930 = vmatprep.mubr.bf16.mxu0 %v856
        %1931 = vmatmul.mubr.bf16.gmra.mrb[0].mxu0 %v855
        %v1932 = vpop.f32.mrb[0].mxu0
        %v1933 = vadd.f32 %v1868, %v1932
        %v1934 = vpop.f32.mrb[0].mxu0
        %v1935 = vpop.f32.mrb[0].mxu0
        %v1936 = vadd.f32 %v1871, %v1935
        %v1937 = vpop.f32.mrb[0].mxu0
        %1938 = vmatprep.mubr.bf16.mxu0 %v869
        %1939 = vmatmul.mubr.bf16.gmra.mrb[0].mxu0 %v868
        %v1940 = vpop.f32.mrb[0].mxu0
        %v1941 = vadd.f32 %v1876, %v1940
        %v1942 = vpop.f32.mrb[0].mxu0
        %v1943 = vpop.f32.mrb[0].mxu0
        %v1944 = vadd.f32 %v1879, %v1943
        %v1945 = vpop.f32.mrb[0].mxu0
        %1946 = vmatprep.mubr.bf16.mxu0 %v882
        %1947 = vmatmul.mubr.bf16.gmra.mrb[0].mxu0 %v881
        %v1948 = vpop.f32.mrb[0].mxu0
        %v1949 = vadd.f32 %v1884, %v1948
        %v1950 = vpop.f32.mrb[0].mxu0
        %v1951 = vpop.f32.mrb[0].mxu0
        %v1952 = vadd.f32 %v1887, %v1951
        %v1953 = vpop.f32.mrb[0].mxu0
        %1954 = vmatprep.mubr.bf16.mxu0 %v895
        %1955 = vmatmul.mubr.bf16.gmra.mrb[0].mxu0 %v894
        %v1956 = vpop.f32.mrb[0].mxu0
        %v1957 = vadd.f32 %v1892, %v1956
        %v1958 = vpop.f32.mrb[0].mxu0
        %v1959 = vpop.f32.mrb[0].mxu0
        %v1960 = vadd.f32 %v1895, %v1959
        %v1961 = vpop.f32.mrb[0].mxu0
        %1962 = vdwg.mxu0
        %1963 = vmatprep.subr.bf16.mxu0 0
        %1964 = vmatpush1.bf16.msra.mxu0 %v1461
        %1965 = vmatprep.subr.bf16.mxu0 0
        %1966 = vmatpush1.bf16.msra.mxu0 %v1462
        %1967 = vmatprep.subr.bf16.mxu0 0
        %1968 = vmatpush1.bf16.msra.mxu0 %v1463
        %1969 = vmatprep.subr.bf16.mxu0 0
        %1970 = vmatpush1.bf16.msra.mxu0 %v1464
        %1971 = vmatprep.subr.bf16.mxu0 0
        %1972 = vmatpush1.bf16.msra.mxu0 %v1465
        %1973 = vmatprep.subr.bf16.mxu0 0
        %1974 = vmatpush1.bf16.msra.mxu0 %v1466
        %1975 = vmatprep.subr.bf16.mxu0 0
        %1976 = vmatpush1.bf16.msra.mxu0 %v1467
        %1977 = vmatprep.subr.bf16.mxu0 0
        %1978 = vmatpush1.bf16.msra.mxu0 %v1468
        %1979 = vmatprep.subr.bf16.mxu0 0
        %1980 = vmatpush1.bf16.msra.mxu0 0
        %1981 = vmatprep.subr.bf16.mxu0 0
        %1982 = vmatpush1.bf16.msra.mxu0 0
        %1983 = vmatprep.subr.bf16.mxu0 0
        %1984 = vmatpush1.bf16.msra.mxu0 0
        %1985 = vmatprep.subr.bf16.mxu0 0
        %1986 = vmatpush1.bf16.msra.mxu0 0
        %1987 = vmatprep.subr.bf16.mxu0 0
        %1988 = vmatpush1.bf16.msra.mxu0 0
        %1989 = vmatprep.subr.bf16.mxu0 0
        %1990 = vmatpush1.bf16.msra.mxu0 0
        %1991 = vmatprep.subr.bf16.mxu0 0
        %1992 = vmatpush1.bf16.msra.mxu0 0
        %1993 = vmatprep.subr.bf16.mxu0 0
        %1994 = vmatpush1.bf16.msra.mxu0 0
        %1995 = vmatprep.mubr.bf16.mxu0 0
        %1996 = vmatmul.mubr.bf16.gmra.mrb[0].mxu0 %v857
        %v1997 = vpop.f32.mrb[0].mxu0
        %v1998 = vadd.f32 %v1933, %v1997
        %v1999 = vpop.f32.mrb[0].mxu0
        %v2000 = vpop.f32.mrb[0].mxu0
        %v2001 = vadd.f32 %v1936, %v2000
        %v2002 = vpop.f32.mrb[0].mxu0
        %2003 = vmatprep.mubr.bf16.mxu0 0
        %2004 = vmatmul.mubr.bf16.gmra.mrb[0].mxu0 %v870
        %v2005 = vpop.f32.mrb[0].mxu0
        %v2006 = vadd.f32 %v1941, %v2005
        %v2007 = vpop.f32.mrb[0].mxu0
        %v2008 = vpop.f32.mrb[0].mxu0
        %v2009 = vadd.f32 %v1944, %v2008
        %v2010 = vpop.f32.mrb[0].mxu0
        %2011 = vmatprep.mubr.bf16.mxu0 0
        %2012 = vmatmul.mubr.bf16.gmra.mrb[0].mxu0 %v883
        %v2013 = vpop.f32.mrb[0].mxu0
        %v2014 = vadd.f32 %v1949, %v2013
        %v2015 = vpop.f32.mrb[0].mxu0
        %v2016 = vpop.f32.mrb[0].mxu0
        %v2017 = vadd.f32 %v1952, %v2016
        %v2018 = vpop.f32.mrb[0].mxu0
        %2019 = vmatprep.mubr.bf16.mxu0 0
        %2020 = vmatmul.mubr.bf16.gmra.mrb[0].mxu0 %v896
        %v2021 = vpop.f32.mrb[0].mxu0
        %v2022 = vadd.f32 %v1957, %v2021
        %v2023 = vpop.f32.mrb[0].mxu0
        %v2024 = vpop.f32.mrb[0].mxu0
        %v2025 = vadd.f32 %v1960, %v2024
        %v2026 = vpop.f32.mrb[0].mxu0
        %2027 = vdwg.mxu0
        %v2028 = vadd.f32 %v413, %v1998
        %v2029 = vadd.f32 %v414, %v2001
        %v2030 = vadd.f32 %v415, %v2006
        %v2031 = vadd.f32 %v416, %v2009
        %v2032 = vadd.f32 %v417, %v2014
        %v2033 = vadd.f32 %v418, %v2017
        %v2034 = vadd.f32 %v419, %v2022
        %v2035 = vadd.f32 %v420, %v2025
        %2036 = vst [vmem:[#allocation2] sm:$0xff] %v2028
        %2037 = vst [vmem:[#allocation2 + $0x8] sm:$0xff] %v2029
        %2038 = vst [vmem:[#allocation2 + $0x10] sm:$0xff] %v2030
        %2039 = vst [vmem:[#allocation2 + $0x18] sm:$0xff] %v2031
        %2040 = vst [vmem:[#allocation2 + $0x20] sm:$0xff] %v2032
        %2041 = vst [vmem:[#allocation2 + $0x28] sm:$0xff] %v2033
        %2042 = vst [vmem:[#allocation2 + $0x30] sm:$0xff] %v2034
        %2043 = vst [vmem:[#allocation2 + $0x38] sm:$0xff] %v2035
        %p2044 = scmp.eq.s32.totalorder %s18, 3
        // Predicated region
        $region75: #{cnn_forward.5} parent=65 // pred_check
          %p2045 = pneg %p2044
        $region76: #{cnn_forward.5} parent=65 // pred_check_branch
          %2047 = sbr.rel (%p2045) target = $region78
        $region77: #{cnn_forward.5} parent=65 // pred_region
          %v2048 = vld [vmem:[#allocation2] sm:$0xff]
          %v2049 = vld [vmem:[#allocation2 + $0x8] sm:$0xff]
          %v2050 = vld [vmem:[#allocation2 + $0x10] sm:$0xff]
          %v2051 = vld [vmem:[#allocation2 + $0x18] sm:$0xff]
          %v2052 = vld [vmem:[#allocation2 + $0x20] sm:$0xff]
          %v2053 = vld [vmem:[#allocation2 + $0x28] sm:$0xff]
          %v2054 = vld [vmem:[#allocation2 + $0x30] sm:$0xff]
          %v2055 = vld [vmem:[#allocation2 + $0x38] sm:$0xff]
          %v2056 = vadd.f32 %v2048, %v2049
          %v2057 = vadd.f32 %v2056, %v2050
          %v2058 = vadd.f32 %v2057, %v2051
          %v2059 = vrot.slane %v2058, 4
          %v2060 = vadd.f32 %v2058, %v2059
          %v2061 = vrot.slane %v2060, 2
          %v2062 = vadd.f32 %v2060, %v2061
          %v2063 = vrot.slane %v2062, 1
          %v2064 = vadd.f32 %v2062, %v2063
          %v2065 = vadd.f32 %v2052, %v2053
          %v2066 = vadd.f32 %v2065, %v2054
          %v2067 = vadd.f32 %v2066, %v2055
          %v2068 = vrot.slane %v2067, 4
          %v2069 = vadd.f32 %v2067, %v2068
          %v2070 = vrot.slane %v2069, 2
          %v2071 = vadd.f32 %v2069, %v2070
          %v2072 = vrot.slane %v2071, 1
          %v2073 = vadd.f32 %v2071, %v2072
          %v2074 = vmul.f32 %v2064, 0.037037037
          %v2075 = vmul.f32 %v2073, 0.037037037
          %v2076 = vld [vmem:[%s2] sm:$0xff]
          %v2077 = vld [vmem:[%s2 + $0x8] sm:$0xff]
          %v2078 = vld [vmem:[%s2 + $0x10] sm:$0xff]
          %v2079 = vld [vmem:[%s2 + $0x18] sm:$0xff]
          %v2080 = vld [vmem:[%s2 + $0x20] sm:$0xff]
          %v2081 = vld [vmem:[%s2 + $0x28] sm:$0xff]
          %v2082 = vld [vmem:[%s2 + $0x30] sm:$0xff]
          %v2083 = vld [vmem:[%s2 + $0x38] sm:$0xff]
          %v2084 = vld [vmem:[%s2 + $0x40] sm:$0xff]
          %v2085 = vld [vmem:[%s2 + $0x48] sm:$0xff]
          %v2086 = vld [vmem:[%s2 + $0x50] sm:$0xff]
          %v2087 = vld [vmem:[%s2 + $0x58] sm:$0xff]
          %v2088 = vld [vmem:[%s2 + $0x60] sm:$0xff]
          %v2089 = vld [vmem:[%s2 + $0x68] sm:$0xff]
          %v2090 = vld [vmem:[%s2 + $0x70] sm:$0xff]
          %v2091 = vld [vmem:[%s2 + $0x78] sm:$0xff]
          %v2092 = vld [vmem:[%s3] sm:$0x1]
          %v2094 = vlaneseq
          %v2095 = vshrl.u32 %v2094, 7
          %v2096 = vsub.s32 0, %v2095
          %v2097 = vrot.slane %v2092, %v2096
          %vm2101 = vcmask 1041409
          %v2102 = vsel %vm2101, %v2075, %v2074
          %2104 = vmatprep.subr.mxu0 0.0
          %2105 = vmatpush1.msra.mxu0 %v2076
          %2106 = vmatprep.subr.mxu0 0.0
          %2107 = vmatpush1.msra.mxu0 %v2077
          %2108 = vmatprep.subr.mxu0 0.0
          %2109 = vmatpush1.msra.mxu0 %v2078
          %2110 = vmatprep.subr.mxu0 0.0
          %2111 = vmatpush1.msra.mxu0 %v2079
          %2112 = vmatprep.subr.mxu0 0.0
          %2113 = vmatpush1.msra.mxu0 %v2080
          %2114 = vmatprep.subr.mxu0 0.0
          %2115 = vmatpush1.msra.mxu0 %v2081
          %2116 = vmatprep.subr.mxu0 0.0
          %2117 = vmatpush1.msra.mxu0 %v2082
          %2118 = vmatprep.subr.mxu0 0.0
          %2119 = vmatpush1.msra.mxu0 %v2083
          %2120 = vmatprep.subr.mxu0 0.0
          %2121 = vmatpush1.msra.mxu0 %v2084
          %2122 = vmatprep.subr.mxu0 0.0
          %2123 = vmatpush1.msra.mxu0 %v2085
          %2124 = vmatprep.subr.mxu0 0.0
          %2125 = vmatpush1.msra.mxu0 %v2086
          %2126 = vmatprep.subr.mxu0 0.0
          %2127 = vmatpush1.msra.mxu0 %v2087
          %2128 = vmatprep.subr.mxu0 0.0
          %2129 = vmatpush1.msra.mxu0 %v2088
          %2130 = vmatprep.subr.mxu0 0.0
          %2131 = vmatpush1.msra.mxu0 %v2089
          %2132 = vmatprep.subr.mxu0 0.0
          %2133 = vmatpush1.msra.mxu0 %v2090
          %2134 = vmatprep.subr.mxu0 0.0
          %2135 = vmatpush1.msra.mxu0 %v2091
          %2136 = vmatprep.subr.mxu0 0.0
          %2137 = vmatpush1.msra.mxu0 0.0
          %2138 = vmatprep.subr.mxu0 0.0
          %2139 = vmatpush1.msra.mxu0 0.0
          %2140 = vmatprep.subr.mxu0 0.0
          %2141 = vmatpush1.msra.mxu0 0.0
          %2142 = vmatprep.subr.mxu0 0.0
          %2143 = vmatpush1.msra.mxu0 0.0
          %2144 = vmatprep.subr.mxu0 0.0
          %2145 = vmatpush1.msra.mxu0 0.0
          %2146 = vmatprep.subr.mxu0 0.0
          %2147 = vmatpush1.msra.mxu0 0.0
          %2148 = vmatprep.subr.mxu0 0.0
          %2149 = vmatpush1.msra.mxu0 0.0
          %2150 = vmatprep.subr.mxu0 0.0
          %2151 = vmatpush1.msra.mxu0 0.0
          %2152 = vmatprep.subr.mxu0 0.0
          %2153 = vmatpush1.msra.mxu0 0.0
          %2154 = vmatprep.subr.mxu0 0.0
          %2155 = vmatpush1.msra.mxu0 0.0
          %2156 = vmatprep.subr.mxu0 0.0
          %2157 = vmatpush1.msra.mxu0 0.0
          %2158 = vmatprep.subr.mxu0 0.0
          %2159 = vmatpush1.msra.mxu0 0.0
          %2160 = vmatprep.subr.mxu0 0.0
          %2161 = vmatpush1.msra.mxu0 0.0
          %2162 = vmatprep.subr.mxu0 0.0
          %2163 = vmatpush1.msra.mxu0 0.0
          %2164 = vmatprep.subr.mxu0 0.0
          %2165 = vmatpush1.msra.mxu0 0.0
          %2166 = vmatprep.subr.mxu0 0.0
          %2167 = vmatpush1.msra.mxu0 0.0
          %2168 = vmatprep.mubr.f32.mxu0 0.0
          %2169 = vmatmul.mubr.f32.gmra.mrb[0].mxu0 %v2102
          %v2170 = vpop.f32.mrb[0].mxu0
          %v2171 = vadd.f32 %v2097, %v2170
          %v2172 = vpop.f32.mrb[0].mxu0
          %2173 = vdwg.mxu0
          %v2174 = vmax.f32 %v2171, 0.0
          %v2175 = vld [vmem:[%s4] sm:$0xff]
          %v2176 = vld [vmem:[%s4 + $0x8] sm:$0xff]
          %v2177 = vld [vmem:[%s4 + $0x10] sm:$0xff]
          %v2178 = vld [vmem:[%s4 + $0x18] sm:$0xff]
          %v2179 = vld [vmem:[%s4 + $0x20] sm:$0xff]
          %v2180 = vld [vmem:[%s4 + $0x28] sm:$0xff]
          %v2181 = vld [vmem:[%s4 + $0x30] sm:$0xff]
          %v2182 = vld [vmem:[%s4 + $0x38] sm:$0xff]
          %v2183 = vld [vmem:[%s4 + $0x40] sm:$0xff]
          %v2184 = vld [vmem:[%s4 + $0x48] sm:$0xff]
          %v2185 = vld [vmem:[%s4 + $0x50] sm:$0xff]
          %v2186 = vld [vmem:[%s4 + $0x58] sm:$0xff]
          %v2187 = vld [vmem:[%s4 + $0x60] sm:$0xff]
          %v2188 = vld [vmem:[%s4 + $0x68] sm:$0xff]
          %v2189 = vld [vmem:[%s4 + $0x70] sm:$0xff]
          %v2190 = vld [vmem:[%s4 + $0x78] sm:$0xff]
          %v2191 = vld [vmem:[%s5] sm:$0x1]
          %v2193 = vlaneseq
          %v2194 = vshrl.u32 %v2193, 7
          %v2195 = vsub.s32 0, %v2194
          %v2196 = vrot.slane %v2191, %v2195
          %2198 = vmatprep.subr.mxu0 0.0
          %2199 = vmatpush1.msra.mxu0 %v2175
          %2200 = vmatprep.subr.mxu0 0.0
          %2201 = vmatpush1.msra.mxu0 %v2176
          %2202 = vmatprep.subr.mxu0 0.0
          %2203 = vmatpush1.msra.mxu0 %v2177
          %2204 = vmatprep.subr.mxu0 0.0
          %2205 = vmatpush1.msra.mxu0 %v2178
          %2206 = vmatprep.subr.mxu0 0.0
          %2207 = vmatpush1.msra.mxu0 %v2179
          %2208 = vmatprep.subr.mxu0 0.0
          %2209 = vmatpush1.msra.mxu0 %v2180
          %2210 = vmatprep.subr.mxu0 0.0
          %2211 = vmatpush1.msra.mxu0 %v2181
          %2212 = vmatprep.subr.mxu0 0.0
          %2213 = vmatpush1.msra.mxu0 %v2182
          %2214 = vmatprep.subr.mxu0 0.0
          %2215 = vmatpush1.msra.mxu0 %v2183
          %2216 = vmatprep.subr.mxu0 0.0
          %2217 = vmatpush1.msra.mxu0 %v2184
          %2218 = vmatprep.subr.mxu0 0.0
          %2219 = vmatpush1.msra.mxu0 %v2185
          %2220 = vmatprep.subr.mxu0 0.0
          %2221 = vmatpush1.msra.mxu0 %v2186
          %2222 = vmatprep.subr.mxu0 0.0
          %2223 = vmatpush1.msra.mxu0 %v2187
          %2224 = vmatprep.subr.mxu0 0.0
          %2225 = vmatpush1.msra.mxu0 %v2188
          %2226 = vmatprep.subr.mxu0 0.0
          %2227 = vmatpush1.msra.mxu0 %v2189
          %2228 = vmatprep.subr.mxu0 0.0
          %2229 = vmatpush1.msra.mxu0 %v2190
          %2230 = vmatprep.subr.mxu0 0.0
          %2231 = vmatpush1.msra.mxu0 0.0
          %2232 = vmatprep.subr.mxu0 0.0
          %2233 = vmatpush1.msra.mxu0 0.0
          %2234 = vmatprep.subr.mxu0 0.0
          %2235 = vmatpush1.msra.mxu0 0.0
          %2236 = vmatprep.subr.mxu0 0.0
          %2237 = vmatpush1.msra.mxu0 0.0
          %2238 = vmatprep.subr.mxu0 0.0
          %2239 = vmatpush1.msra.mxu0 0.0
          %2240 = vmatprep.subr.mxu0 0.0
          %2241 = vmatpush1.msra.mxu0 0.0
          %2242 = vmatprep.subr.mxu0 0.0
          %2243 = vmatpush1.msra.mxu0 0.0
          %2244 = vmatprep.subr.mxu0 0.0
          %2245 = vmatpush1.msra.mxu0 0.0
          %2246 = vmatprep.subr.mxu0 0.0
          %2247 = vmatpush1.msra.mxu0 0.0
          %2248 = vmatprep.subr.mxu0 0.0
          %2249 = vmatpush1.msra.mxu0 0.0
          %2250 = vmatprep.subr.mxu0 0.0
          %2251 = vmatpush1.msra.mxu0 0.0
          %2252 = vmatprep.subr.mxu0 0.0
          %2253 = vmatpush1.msra.mxu0 0.0
          %2254 = vmatprep.subr.mxu0 0.0
          %2255 = vmatpush1.msra.mxu0 0.0
          %2256 = vmatprep.subr.mxu0 0.0
          %2257 = vmatpush1.msra.mxu0 0.0
          %2258 = vmatprep.subr.mxu0 0.0
          %2259 = vmatpush1.msra.mxu0 0.0
          %2260 = vmatprep.subr.mxu0 0.0
          %2261 = vmatpush1.msra.mxu0 0.0
          %2262 = vmatprep.mubr.f32.mxu0 0.0
          %2263 = vmatmul.mubr.f32.gmra.mrb[0].mxu0 %v2174
          %v2264 = vpop.f32.mrb[0].mxu0
          %v2265 = vadd.f32 %v2196, %v2264
          %v2266 = vpop.f32.mrb[0].mxu0
          %2267 = vdwg.mxu0
          %2268 = vst [vmem:[#allocation4] sm:$0x3] %v2265
        $region78: #{cnn_forward.5} parent=65 // pred_fallthru
          _
        // Predicated region
        $region79: #{cnn_forward.5} parent=65 // pred_check
          %p2269 = pneg %p167
        $region80: #{cnn_forward.5} parent=65 // pred_check_branch
          %2271 = sbr.rel (%p2269) target = $region82
        $region81: #{cnn_forward.5} parent=65 // pred_region
          %s2273 = ssub.s32 32, 32
          %2274 = vsyncadd [#allocation5], %s2273
          %s2276 = sshll.u32 [#allocation4], 4
          %s2277 = int_to_ptr.vmem [resolvable:$true] %s2276
          %2279 = dma.vmem_to_hbm [thread:$0]  %s2277, 32, %s6, [#allocation5]
        $region82: #{cnn_forward.5} parent=65 // pred_fallthru
          _
        // Predicated region
        $region83: #{cnn_forward.5} parent=65 // pred_check
          %p2280 = pneg %p167
        $region84: #{cnn_forward.5} parent=65 // pred_check_branch
          %2282 = sbr.rel (%p2280) target = $region86
        $region85: #{cnn_forward.5} parent=65 // pred_region
          %2283 = dma.done [#allocation5], 32
        $region86: #{cnn_forward.5} parent=65 // pred_fallthru
          _
      $region66: #{cnn_forward.5} parent=5 // pred_fallthru
        _
      %p2284 = scmp.le.s32.totalorder 2, %s13
      // Predicated region
      $region87: #{cnn_forward.5} parent=5 // pred_check
        %p2285 = pneg %p2284
      $region88: #{cnn_forward.5} parent=5 // pred_check_branch
        %2287 = sbr.rel (%p2285) target = $region90
      $region89: #{cnn_forward.5} parent=5 // pred_region
        %s2288 = ssub.s32 %s13, 2
      $region90: #{cnn_forward.5} parent=5 // pred_fallthru
        _
    $region6: #{cnn_forward.5} parent=1 // loop_footer
      %s17 = sadd.s32 1, %s13
    $region7: #{cnn_forward.5} parent=1 // loop_footer_branch
      %12 = sbr.rel target = $region3
    $region8: #{cnn_forward.5} parent=1 // loop_exit
      _
    %2289 = vsyncpa [#allocation5], 1
    %s2290 = scalar_lea.sflag [#allocation5], 1
    %2291 = vsyncpa %s2290, 1

</llo_original>
